<compile_context>
chip_gen: v6e
topology: v6e:2x2x1
jax: 0.10.0
libtpu: 0.0.40
codegen_flags: <defaults>
</compile_context>

<pallas_src>
import jax
import jax.numpy as jnp
from jax.experimental import pallas as pl
from jax.experimental.pallas import tpu as pltpu


# ------------------------------ Pallas kernel ------------------------------

def _policy_kernel(xp_ref, aflat_ref, w1_ref, b1_ref, w2_ref, b2_ref,
                   wf1x_ref, wf1a_ref, bf1_ref, wh_ref, bh_ref,
                   out_ref, h1p_ref, h2s_ref, xflat_ref):
    B, Hp, Wp, Cin = xp_ref.shape
    H, W = Hp - 2, Wp - 2
    HW = H * W
    C1 = w1_ref.shape[2]          # 32
    C2 = w2_ref.shape[2]          # 64
    bf16 = jnp.bfloat16

    # ---- conv1 (3x3, stride 1, pad 1): 9 accumulated dots over shifted views
    acc1 = jnp.zeros((B * HW, C1), jnp.float32)
    for k in range(9):
        dy, dx = k // 3, k % 3
        patch = xp_ref[:, dy:dy + H, dx:dx + W, :].reshape(B * HW, Cin)
        acc1 = acc1 + jnp.dot(patch.astype(bf16), w1_ref[k],
                              preferred_element_type=jnp.float32)
    h1 = jnp.maximum(acc1 + b1_ref[...], 0.0)            # (B*HW, C1) f32

    # Zero-padded h1 stays in VMEM scratch (conv2's input tile).
    h1p_ref[...] = jnp.zeros(h1p_ref.shape, h1p_ref.dtype)
    h1p_ref[:, 1:1 + H, 1:1 + W, :] = h1.reshape(B, H, W, C1)

    # ---- conv2 (3x3, stride 1, pad 1): same shifted-view scheme ------------
    acc2 = jnp.zeros((B * HW, C2), jnp.float32)
    for k in range(9):
        dy, dx = k // 3, k % 3
        patch = h1p_ref[:, dy:dy + H, dx:dx + W, :].reshape(B * HW, C1)
        acc2 = acc2 + jnp.dot(patch.astype(bf16), w2_ref[k],
                              preferred_element_type=jnp.float32)
    h2 = jnp.maximum(acc2 + b2_ref[...], 0.0)            # (B*HW, C2) f32

    # ---- in-kernel relayout: one fc1 row per batch element -----------------
    # xflat[b, p*C2 + c] = h2[b*HW + p, c]; wf1x was pre-reordered to match,
    # so the result equals torch's cat([conv_out, action], dim=1).view(B, -1)
    # contribution of the conv part.
    h2s_ref[...] = h2.reshape(B, HW, C2)
    for p in range(HW):
        xflat_ref[:, p * C2:(p + 1) * C2] = h2s_ref[:, p, :]

    # ---- fc1 + ReLU + fused [mu | log_std] head, all on the MXU ------------
    z = jnp.dot(xflat_ref[...].astype(bf16), wf1x_ref[...],
                preferred_element_type=jnp.float32)
    z = z + jnp.dot(aflat_ref[...].astype(bf16), wf1a_ref[...],
                    preferred_element_type=jnp.float32)
    y = jnp.maximum(z + bf1_ref[...], 0.0)               # (B, 256) f32
    out_ref[...] = jnp.dot(y, wh_ref[...],
                           preferred_element_type=jnp.float32) + bh_ref[...]


# ------------------------------- call wrapper -------------------------------

def _vmem():
    return pl.BlockSpec(memory_space=pltpu.MemorySpace.VMEM)


def _fused_policy_call(xp, aflat, prep):
    w1k, b1, w2k, b2, wf1x, wf1a, bf1, wh, bh = prep
    B, Hp, Wp, _ = xp.shape
    H, W = Hp - 2, Wp - 2
    C1, C2 = w1k.shape[2], w2k.shape[2]
    return pl.pallas_call(
        _policy_kernel,
        out_shape=jax.ShapeDtypeStruct((B, wh.shape[1]), jnp.float32),
        in_specs=[_vmem()] * 11,
        out_specs=_vmem(),
        scratch_shapes=[
            pltpu.VMEM((B, H + 2, W + 2, C1), jnp.float32),   # zero-padded h1
            pltpu.VMEM((B, H * W, C2), jnp.float32),          # h2 (pixels, channels)
            pltpu.VMEM((B, H * W * C2), jnp.float32),         # fc1 lhs (conv part)
        ],
    )(xp, aflat, w1k, b1, w2k, b2, wf1x, wf1a, bf1, wh, bh)


# -------------------- one-time parameter preprocessing ----------------------

def prepare_params(params):
    """Reorder / cast the torch-layout weights ONCE (outside the forward jit)."""
    w1, b1, w2, b2, wf1, bf1, wmu, bmu, wls, bls = params
    C1, Cin = w1.shape[0], w1.shape[1]
    C2 = w2.shape[0]
    A = wmu.shape[0]
    Dh = wf1.shape[0]                       # 256
    HW = wf1.shape[1] // C2 - A             # module only consistent when HW == C2
    assert HW * (C2 + A) == wf1.shape[1]

    # conv weights (Cout, Cin, 3, 3) -> (9, Cin, Cout) with tap k = ky*3 + kx.
    w1k = jnp.transpose(w1, (2, 3, 1, 0)).reshape(9, Cin, C1).astype(jnp.bfloat16)
    w2k = jnp.transpose(w2, (2, 3, 1, 0)).reshape(9, C1, C2).astype(jnp.bfloat16)

    # fc1: torch NCHW flat index of conv part = c*HW + p ; kernel uses p*C2 + c.
    wf1x = jnp.transpose(wf1[:, :C2 * HW].reshape(Dh, C2, HW), (2, 1, 0))
    wf1x = wf1x.reshape(HW * C2, Dh).astype(jnp.bfloat16)     # (HW*C2, 256)
    wf1a = jnp.transpose(wf1[:, C2 * HW:]).astype(jnp.bfloat16)  # (A*HW, 256)

    # fused mu | log_std head.
    wh = jnp.concatenate([wmu.T, wls.T], axis=1).astype(jnp.float32)   # (256, 2A)
    bh = jnp.concatenate([bmu, bls]).reshape(1, 2 * A).astype(jnp.float32)

    return (w1k, b1.reshape(1, C1).astype(jnp.float32),
            w2k, b2.reshape(1, C2).astype(jnp.float32),
            wf1x, wf1a, bf1.reshape(1, Dh).astype(jnp.float32),
            wh, bh)


@jax.jit
def cnn_policy_forward(x, action, prep):
    """x: (B, Cin, H, W) NCHW; action: (B, A, H, W). Returns (mu, log_std)."""
    B, Cin, H, W = x.shape
    A = action.shape[1]
    # fc1 layout only consistent when H*W == 64 (as in the torch module).
    assert prep[4].shape[0] == H * W * prep[2].shape[2]
    xp = jnp.pad(jnp.transpose(x, (0, 2, 3, 1)),
                 ((0, 0), (1, 1), (1, 1), (0, 0)))              # (B, H+2, W+2, Cin)
    aflat = action.reshape(B, A * H * W)                        # torch order a*HW + p
    out = _fused_policy_call(xp, aflat, prep)
    return out[:, :A], out[:, A:]


# ---------------------------- pure-JAX reference ----------------------------

def reference_forward(x, action, params):
    w1, b1, w2, b2, wf1, bf1, wmu, bmu, wls, bls = params
    dn = ('NCHW', 'OIHW', 'NCHW')
    h1 = jax.lax.conv_general_dilated(x, w1, (1, 1), ((1, 1), (1, 1)),
                                      dimension_numbers=dn)
    h1 = jax.nn.relu(h1 + b1[None, :, None, None])
    h2 = jax.lax.conv_general_dilated(h1, w2, (1, 1), ((1, 1), (1, 1)),
                                      dimension_numbers=dn)
    h2 = jax.nn.relu(h2 + b2[None, :, None, None])
    flat = jnp.concatenate([h2, action], axis=1).reshape(x.shape[0], -1)
    y = jax.nn.relu(jnp.dot(flat, wf1.T) + bf1)
    mu = jnp.dot(y, wmu.T) + bmu
    ls = jnp.dot(y, wls.T) + bls
    return mu, ls


# ---------------------------------- main ------------------------------------

if __name__ == "__main__":
    # state_dim = (4, 8, 8), action_dim = 2.  The torch module's cat(dim=1)+view
    # only matches fc1's in_features when H*W == 64, hence 8x8 spatial.
    B, Cin, H, W, A = 2, 4, 8, 8, 2

    key = jax.random.PRNGKey(0)
    keys = jax.random.split(key, 12)

    def uinit(k, shape, fan_in):
        bound = 1.0 / jnp.sqrt(jnp.float32(fan_in))
        return jax.random.uniform(k, shape, jnp.float32, -bound, bound)

    fin1 = 64 * (H * W + A)
    w1 = uinit(keys[0], (32, Cin, 3, 3), Cin * 9)
    b1 = uinit(keys[1], (32,), Cin * 9)
    w2 = uinit(keys[2], (64, 32, 3, 3), 32 * 9)
    b2 = uinit(keys[3], (64,), 32 * 9)
    wf1 = uinit(keys[4], (256, fin1), fin1)
    bf1 = uinit(keys[5], (256,), fin1)
    wmu = uinit(keys[6], (A, 256), 256)
    bmu = uinit(keys[7], (A,), 256)
    wls = uinit(keys[8], (A, 256), 256)
    bls = uinit(keys[9], (A,), 256)
    params = (w1, b1, w2, b2, wf1, bf1, wmu, bmu, wls, bls)

    # One-time weight preprocessing (kept out of the per-step forward).
    prep = jax.tree_util.tree_map(jax.block_until_ready, prepare_params(params))

    x = jax.random.normal(keys[10], (B, Cin, H, W), jnp.float32)
    action = jax.random.normal(keys[11], (B, A, H, W), jnp.float32)

    mu, log_std = cnn_policy_forward(x, action, prep)
    jax.block_until_ready((mu, log_std))

    mu_ref, ls_ref = reference_forward(x, action, params)
    assert mu.shape == (B, A) and log_std.shape == (B, A)
    # Kernel uses bf16 weights / single-pass MXU; reference holds f32 params,
    # so allow ~1e-2 slack (real indexing bugs would be O(0.1)+).
    assert jnp.allclose(mu, mu_ref, rtol=1e-2, atol=1e-2)
    assert jnp.allclose(log_std, ls_ref, rtol=1e-2, atol=1e-2)

    print("KERNEL_OK")
</pallas_src>

<mosaic_0001>
module attributes {stable_mosaic.version = 11 : i64} {
  func.func @_policy_kernel(%arg0: memref<2x10x10x4xf32, #tpu.memory_space<vmem>>, %arg1: memref<2x128xf32, #tpu.memory_space<vmem>>, %arg2: memref<9x4x32xbf16, #tpu.memory_space<vmem>>, %arg3: memref<1x32xf32, #tpu.memory_space<vmem>>, %arg4: memref<9x32x64xbf16, #tpu.memory_space<vmem>>, %arg5: memref<1x64xf32, #tpu.memory_space<vmem>>, %arg6: memref<4096x256xbf16, #tpu.memory_space<vmem>>, %arg7: memref<128x256xbf16, #tpu.memory_space<vmem>>, %arg8: memref<1x256xf32, #tpu.memory_space<vmem>>, %arg9: memref<256x4xf32, #tpu.memory_space<vmem>>, %arg10: memref<1x4xf32, #tpu.memory_space<vmem>>, %arg11: memref<2x4xf32, #tpu.memory_space<vmem>>, %arg12: memref<2x10x10x32xf32, #tpu.memory_space<vmem>>, %arg13: memref<2x64x64xf32, #tpu.memory_space<vmem>>, %arg14: memref<2x4096xf32, #tpu.memory_space<vmem>>) attributes {dimension_semantics = [], scalar_prefetch = 0 : i64, scratch_operands = 3 : i64, tpu.core_type = #tpu.core_type<tc>} {
    %cst = arith.constant 0.000000e+00 : f32
    %0 = vector.broadcast %cst : f32 to vector<128x32xf32>
    %c0 = arith.constant 0 : index
    %c0_0 = arith.constant 0 : index
    %c0_1 = arith.constant 0 : index
    %c0_2 = arith.constant 0 : index
    %1 = vector.load %arg0[%c0, %c0_0, %c0_1, %c0_2] : memref<2x10x10x4xf32, #tpu.memory_space<vmem>>, vector<2x8x8x4xf32>
    %2 = vector.shape_cast %1 : vector<2x8x8x4xf32> to vector<128x4xf32>
    %3 = arith.truncf %2 : vector<128x4xf32> to vector<128x4xbf16>
    %c0_3 = arith.constant 0 : index
    %c0_4 = arith.constant 0 : index
    %c0_5 = arith.constant 0 : index
    %4 = vector.load %arg2[%c0_3, %c0_4, %c0_5] : memref<9x4x32xbf16, #tpu.memory_space<vmem>>, vector<1x4x32xbf16>
    %5 = vector.shape_cast %4 : vector<1x4x32xbf16> to vector<4x32xbf16>
    %cst_6 = arith.constant dense<0.000000e+00> : vector<128x32xf32>
    %6 = tpu.matmul %3, %5, %cst_6 {dimension_numbers = #tpu.dot_dimension_numbers<[1], [0], [0], [1], [0, 0, 1, 1], [], []>} : vector<128x4xbf16>, vector<4x32xbf16>, vector<128x32xf32> -> vector<128x32xf32>
    %7 = arith.addf %0, %6 : vector<128x32xf32>
    %c0_7 = arith.constant 0 : index
    %c0_8 = arith.constant 0 : index
    %c1 = arith.constant 1 : index
    %c0_9 = arith.constant 0 : index
    %8 = vector.load %arg0[%c0_7, %c0_8, %c1, %c0_9] : memref<2x10x10x4xf32, #tpu.memory_space<vmem>>, vector<2x8x8x4xf32>
    %9 = vector.shape_cast %8 : vector<2x8x8x4xf32> to vector<128x4xf32>
    %10 = arith.truncf %9 : vector<128x4xf32> to vector<128x4xbf16>
    %c1_10 = arith.constant 1 : index
    %c0_11 = arith.constant 0 : index
    %c0_12 = arith.constant 0 : index
    %11 = vector.load %arg2[%c1_10, %c0_11, %c0_12] : memref<9x4x32xbf16, #tpu.memory_space<vmem>>, vector<1x4x32xbf16>
    %12 = vector.shape_cast %11 : vector<1x4x32xbf16> to vector<4x32xbf16>
    %cst_13 = arith.constant dense<0.000000e+00> : vector<128x32xf32>
    %13 = tpu.matmul %10, %12, %cst_13 {dimension_numbers = #tpu.dot_dimension_numbers<[1], [0], [0], [1], [0, 0, 1, 1], [], []>} : vector<128x4xbf16>, vector<4x32xbf16>, vector<128x32xf32> -> vector<128x32xf32>
    %14 = arith.addf %7, %13 : vector<128x32xf32>
    %c0_14 = arith.constant 0 : index
    %c0_15 = arith.constant 0 : index
    %c2 = arith.constant 2 : index
    %c0_16 = arith.constant 0 : index
    %15 = vector.load %arg0[%c0_14, %c0_15, %c2, %c0_16] : memref<2x10x10x4xf32, #tpu.memory_space<vmem>>, vector<2x8x8x4xf32>
    %16 = vector.shape_cast %15 : vector<2x8x8x4xf32> to vector<128x4xf32>
    %17 = arith.truncf %16 : vector<128x4xf32> to vector<128x4xbf16>
    %c2_17 = arith.constant 2 : index
    %c0_18 = arith.constant 0 : index
    %c0_19 = arith.constant 0 : index
    %18 = vector.load %arg2[%c2_17, %c0_18, %c0_19] : memref<9x4x32xbf16, #tpu.memory_space<vmem>>, vector<1x4x32xbf16>
    %19 = vector.shape_cast %18 : vector<1x4x32xbf16> to vector<4x32xbf16>
    %cst_20 = arith.constant dense<0.000000e+00> : vector<128x32xf32>
    %20 = tpu.matmul %17, %19, %cst_20 {dimension_numbers = #tpu.dot_dimension_numbers<[1], [0], [0], [1], [0, 0, 1, 1], [], []>} : vector<128x4xbf16>, vector<4x32xbf16>, vector<128x32xf32> -> vector<128x32xf32>
    %21 = arith.addf %14, %20 : vector<128x32xf32>
    %c0_21 = arith.constant 0 : index
    %c1_22 = arith.constant 1 : index
    %c0_23 = arith.constant 0 : index
    %c0_24 = arith.constant 0 : index
    %22 = vector.load %arg0[%c0_21, %c1_22, %c0_23, %c0_24] : memref<2x10x10x4xf32, #tpu.memory_space<vmem>>, vector<2x8x8x4xf32>
    %23 = vector.shape_cast %22 : vector<2x8x8x4xf32> to vector<128x4xf32>
    %24 = arith.truncf %23 : vector<128x4xf32> to vector<128x4xbf16>
    %c3 = arith.constant 3 : index
    %c0_25 = arith.constant 0 : index
    %c0_26 = arith.constant 0 : index
    %25 = vector.load %arg2[%c3, %c0_25, %c0_26] : memref<9x4x32xbf16, #tpu.memory_space<vmem>>, vector<1x4x32xbf16>
    %26 = vector.shape_cast %25 : vector<1x4x32xbf16> to vector<4x32xbf16>
    %cst_27 = arith.constant dense<0.000000e+00> : vector<128x32xf32>
    %27 = tpu.matmul %24, %26, %cst_27 {dimension_numbers = #tpu.dot_dimension_numbers<[1], [0], [0], [1], [0, 0, 1, 1], [], []>} : vector<128x4xbf16>, vector<4x32xbf16>, vector<128x32xf32> -> vector<128x32xf32>
    %28 = arith.addf %21, %27 : vector<128x32xf32>
    %c0_28 = arith.constant 0 : index
    %c1_29 = arith.constant 1 : index
    %c1_30 = arith.constant 1 : index
    %c0_31 = arith.constant 0 : index
    %29 = vector.load %arg0[%c0_28, %c1_29, %c1_30, %c0_31] : memref<2x10x10x4xf32, #tpu.memory_space<vmem>>, vector<2x8x8x4xf32>
    %30 = vector.shape_cast %29 : vector<2x8x8x4xf32> to vector<128x4xf32>
    %31 = arith.truncf %30 : vector<128x4xf32> to vector<128x4xbf16>
    %c4 = arith.constant 4 : index
    %c0_32 = arith.constant 0 : index
    %c0_33 = arith.constant 0 : index
    %32 = vector.load %arg2[%c4, %c0_32, %c0_33] : memref<9x4x32xbf16, #tpu.memory_space<vmem>>, vector<1x4x32xbf16>
    %33 = vector.shape_cast %32 : vector<1x4x32xbf16> to vector<4x32xbf16>
    %cst_34 = arith.constant dense<0.000000e+00> : vector<128x32xf32>
    %34 = tpu.matmul %31, %33, %cst_34 {dimension_numbers = #tpu.dot_dimension_numbers<[1], [0], [0], [1], [0, 0, 1, 1], [], []>} : vector<128x4xbf16>, vector<4x32xbf16>, vector<128x32xf32> -> vector<128x32xf32>
    %35 = arith.addf %28, %34 : vector<128x32xf32>
    %c0_35 = arith.constant 0 : index
    %c1_36 = arith.constant 1 : index
    %c2_37 = arith.constant 2 : index
    %c0_38 = arith.constant 0 : index
    %36 = vector.load %arg0[%c0_35, %c1_36, %c2_37, %c0_38] : memref<2x10x10x4xf32, #tpu.memory_space<vmem>>, vector<2x8x8x4xf32>
    %37 = vector.shape_cast %36 : vector<2x8x8x4xf32> to vector<128x4xf32>
    %38 = arith.truncf %37 : vector<128x4xf32> to vector<128x4xbf16>
    %c5 = arith.constant 5 : index
    %c0_39 = arith.constant 0 : index
    %c0_40 = arith.constant 0 : index
    %39 = vector.load %arg2[%c5, %c0_39, %c0_40] : memref<9x4x32xbf16, #tpu.memory_space<vmem>>, vector<1x4x32xbf16>
    %40 = vector.shape_cast %39 : vector<1x4x32xbf16> to vector<4x32xbf16>
    %cst_41 = arith.constant dense<0.000000e+00> : vector<128x32xf32>
    %41 = tpu.matmul %38, %40, %cst_41 {dimension_numbers = #tpu.dot_dimension_numbers<[1], [0], [0], [1], [0, 0, 1, 1], [], []>} : vector<128x4xbf16>, vector<4x32xbf16>, vector<128x32xf32> -> vector<128x32xf32>
    %42 = arith.addf %35, %41 : vector<128x32xf32>
    %c0_42 = arith.constant 0 : index
    %c2_43 = arith.constant 2 : index
    %c0_44 = arith.constant 0 : index
    %c0_45 = arith.constant 0 : index
    %43 = vector.load %arg0[%c0_42, %c2_43, %c0_44, %c0_45] : memref<2x10x10x4xf32, #tpu.memory_space<vmem>>, vector<2x8x8x4xf32>
    %44 = vector.shape_cast %43 : vector<2x8x8x4xf32> to vector<128x4xf32>
    %45 = arith.truncf %44 : vector<128x4xf32> to vector<128x4xbf16>
    %c6 = arith.constant 6 : index
    %c0_46 = arith.constant 0 : index
    %c0_47 = arith.constant 0 : index
    %46 = vector.load %arg2[%c6, %c0_46, %c0_47] : memref<9x4x32xbf16, #tpu.memory_space<vmem>>, vector<1x4x32xbf16>
    %47 = vector.shape_cast %46 : vector<1x4x32xbf16> to vector<4x32xbf16>
    %cst_48 = arith.constant dense<0.000000e+00> : vector<128x32xf32>
    %48 = tpu.matmul %45, %47, %cst_48 {dimension_numbers = #tpu.dot_dimension_numbers<[1], [0], [0], [1], [0, 0, 1, 1], [], []>} : vector<128x4xbf16>, vector<4x32xbf16>, vector<128x32xf32> -> vector<128x32xf32>
    %49 = arith.addf %42, %48 : vector<128x32xf32>
    %c0_49 = arith.constant 0 : index
    %c2_50 = arith.constant 2 : index
    %c1_51 = arith.constant 1 : index
    %c0_52 = arith.constant 0 : index
    %50 = vector.load %arg0[%c0_49, %c2_50, %c1_51, %c0_52] : memref<2x10x10x4xf32, #tpu.memory_space<vmem>>, vector<2x8x8x4xf32>
    %51 = vector.shape_cast %50 : vector<2x8x8x4xf32> to vector<128x4xf32>
    %52 = arith.truncf %51 : vector<128x4xf32> to vector<128x4xbf16>
    %c7 = arith.constant 7 : index
    %c0_53 = arith.constant 0 : index
    %c0_54 = arith.constant 0 : index
    %53 = vector.load %arg2[%c7, %c0_53, %c0_54] : memref<9x4x32xbf16, #tpu.memory_space<vmem>>, vector<1x4x32xbf16>
    %54 = vector.shape_cast %53 : vector<1x4x32xbf16> to vector<4x32xbf16>
    %cst_55 = arith.constant dense<0.000000e+00> : vector<128x32xf32>
    %55 = tpu.matmul %52, %54, %cst_55 {dimension_numbers = #tpu.dot_dimension_numbers<[1], [0], [0], [1], [0, 0, 1, 1], [], []>} : vector<128x4xbf16>, vector<4x32xbf16>, vector<128x32xf32> -> vector<128x32xf32>
    %56 = arith.addf %49, %55 : vector<128x32xf32>
    %c0_56 = arith.constant 0 : index
    %c2_57 = arith.constant 2 : index
    %c2_58 = arith.constant 2 : index
    %c0_59 = arith.constant 0 : index
    %57 = vector.load %arg0[%c0_56, %c2_57, %c2_58, %c0_59] : memref<2x10x10x4xf32, #tpu.memory_space<vmem>>, vector<2x8x8x4xf32>
    %58 = vector.shape_cast %57 : vector<2x8x8x4xf32> to vector<128x4xf32>
    %59 = arith.truncf %58 : vector<128x4xf32> to vector<128x4xbf16>
    %c8 = arith.constant 8 : index
    %c0_60 = arith.constant 0 : index
    %c0_61 = arith.constant 0 : index
    %60 = vector.load %arg2[%c8, %c0_60, %c0_61] : memref<9x4x32xbf16, #tpu.memory_space<vmem>>, vector<1x4x32xbf16>
    %61 = vector.shape_cast %60 : vector<1x4x32xbf16> to vector<4x32xbf16>
    %cst_62 = arith.constant dense<0.000000e+00> : vector<128x32xf32>
    %62 = tpu.matmul %59, %61, %cst_62 {dimension_numbers = #tpu.dot_dimension_numbers<[1], [0], [0], [1], [0, 0, 1, 1], [], []>} : vector<128x4xbf16>, vector<4x32xbf16>, vector<128x32xf32> -> vector<128x32xf32>
    %63 = arith.addf %56, %62 : vector<128x32xf32>
    %c0_63 = arith.constant 0 : index
    %c0_64 = arith.constant 0 : index
    %64 = vector.load %arg3[%c0_63, %c0_64] : memref<1x32xf32, #tpu.memory_space<vmem>>, vector<1x32xf32>
    %65 = vector.broadcast %64 : vector<1x32xf32> to vector<128x32xf32>
    %66 = arith.addf %63, %65 : vector<128x32xf32>
    %cst_65 = arith.constant 0.000000e+00 : f32
    %67 = vector.broadcast %cst_65 : f32 to vector<128x32xf32>
    %68 = arith.maximumf %66, %67 : vector<128x32xf32>
    %cst_66 = arith.constant 0.000000e+00 : f32
    %69 = vector.broadcast %cst_66 : f32 to vector<2x10x10x32xf32>
    %c0_67 = arith.constant 0 : index
    %c0_68 = arith.constant 0 : index
    %c0_69 = arith.constant 0 : index
    %c0_70 = arith.constant 0 : index
    %70 = vector.load %arg12[%c0_67, %c0_68, %c0_69, %c0_70] : memref<2x10x10x32xf32, #tpu.memory_space<vmem>>, vector<2x10x10x32xf32>
    tpu.vector_store %arg12[%c0_67, %c0_68, %c0_69, %c0_70], %69 {strides = array<i32>} : memref<2x10x10x32xf32, #tpu.memory_space<vmem>>, vector<2x10x10x32xf32>,
    %71 = vector.shape_cast %68 : vector<128x32xf32> to vector<2x8x8x32xf32>
    %c0_71 = arith.constant 0 : index
    %c1_72 = arith.constant 1 : index
    %c1_73 = arith.constant 1 : index
    %c0_74 = arith.constant 0 : index
    %72 = vector.load %arg12[%c0_71, %c1_72, %c1_73, %c0_74] : memref<2x10x10x32xf32, #tpu.memory_space<vmem>>, vector<2x8x8x32xf32>
    tpu.vector_store %arg12[%c0_71, %c1_72, %c1_73, %c0_74], %71 {strides = array<i32>} : memref<2x10x10x32xf32, #tpu.memory_space<vmem>>, vector<2x8x8x32xf32>,
    %cst_75 = arith.constant 0.000000e+00 : f32
    %73 = vector.broadcast %cst_75 : f32 to vector<128x64xf32>
    %c0_76 = arith.constant 0 : index
    %c0_77 = arith.constant 0 : index
    %c0_78 = arith.constant 0 : index
    %c0_79 = arith.constant 0 : index
    %74 = vector.load %arg12[%c0_76, %c0_77, %c0_78, %c0_79] : memref<2x10x10x32xf32, #tpu.memory_space<vmem>>, vector<2x8x8x32xf32>
    %75 = vector.shape_cast %74 : vector<2x8x8x32xf32> to vector<128x32xf32>
    %76 = arith.truncf %75 : vector<128x32xf32> to vector<128x32xbf16>
    %c0_80 = arith.constant 0 : index
    %c0_81 = arith.constant 0 : index
    %c0_82 = arith.constant 0 : index
    %77 = vector.load %arg4[%c0_80, %c0_81, %c0_82] : memref<9x32x64xbf16, #tpu.memory_space<vmem>>, vector<1x32x64xbf16>
    %78 = vector.shape_cast %77 : vector<1x32x64xbf16> to vector<32x64xbf16>
    %cst_83 = arith.constant dense<0.000000e+00> : vector<128x64xf32>
    %79 = tpu.matmul %76, %78, %cst_83 {dimension_numbers = #tpu.dot_dimension_numbers<[1], [0], [0], [1], [0, 0, 1, 1], [], []>} : vector<128x32xbf16>, vector<32x64xbf16>, vector<128x64xf32> -> vector<128x64xf32>
    %80 = arith.addf %73, %79 : vector<128x64xf32>
    %c0_84 = arith.constant 0 : index
    %c0_85 = arith.constant 0 : index
    %c1_86 = arith.constant 1 : index
    %c0_87 = arith.constant 0 : index
    %81 = vector.load %arg12[%c0_84, %c0_85, %c1_86, %c0_87] : memref<2x10x10x32xf32, #tpu.memory_space<vmem>>, vector<2x8x8x32xf32>
    %82 = vector.shape_cast %81 : vector<2x8x8x32xf32> to vector<128x32xf32>
    %83 = arith.truncf %82 : vector<128x32xf32> to vector<128x32xbf16>
    %c1_88 = arith.constant 1 : index
    %c0_89 = arith.constant 0 : index
    %c0_90 = arith.constant 0 : index
    %84 = vector.load %arg4[%c1_88, %c0_89, %c0_90] : memref<9x32x64xbf16, #tpu.memory_space<vmem>>, vector<1x32x64xbf16>
    %85 = vector.shape_cast %84 : vector<1x32x64xbf16> to vector<32x64xbf16>
    %cst_91 = arith.constant dense<0.000000e+00> : vector<128x64xf32>
    %86 = tpu.matmul %83, %85, %cst_91 {dimension_numbers = #tpu.dot_dimension_numbers<[1], [0], [0], [1], [0, 0, 1, 1], [], []>} : vector<128x32xbf16>, vector<32x64xbf16>, vector<128x64xf32> -> vector<128x64xf32>
    %87 = arith.addf %80, %86 : vector<128x64xf32>
    %c0_92 = arith.constant 0 : index
    %c0_93 = arith.constant 0 : index
    %c2_94 = arith.constant 2 : index
    %c0_95 = arith.constant 0 : index
    %88 = vector.load %arg12[%c0_92, %c0_93, %c2_94, %c0_95] : memref<2x10x10x32xf32, #tpu.memory_space<vmem>>, vector<2x8x8x32xf32>
    %89 = vector.shape_cast %88 : vector<2x8x8x32xf32> to vector<128x32xf32>
    %90 = arith.truncf %89 : vector<128x32xf32> to vector<128x32xbf16>
    %c2_96 = arith.constant 2 : index
    %c0_97 = arith.constant 0 : index
    %c0_98 = arith.constant 0 : index
    %91 = vector.load %arg4[%c2_96, %c0_97, %c0_98] : memref<9x32x64xbf16, #tpu.memory_space<vmem>>, vector<1x32x64xbf16>
    %92 = vector.shape_cast %91 : vector<1x32x64xbf16> to vector<32x64xbf16>
    %cst_99 = arith.constant dense<0.000000e+00> : vector<128x64xf32>
    %93 = tpu.matmul %90, %92, %cst_99 {dimension_numbers = #tpu.dot_dimension_numbers<[1], [0], [0], [1], [0, 0, 1, 1], [], []>} : vector<128x32xbf16>, vector<32x64xbf16>, vector<128x64xf32> -> vector<128x64xf32>
    %94 = arith.addf %87, %93 : vector<128x64xf32>
    %c0_100 = arith.constant 0 : index
    %c1_101 = arith.constant 1 : index
    %c0_102 = arith.constant 0 : index
    %c0_103 = arith.constant 0 : index
    %95 = vector.load %arg12[%c0_100, %c1_101, %c0_102, %c0_103] : memref<2x10x10x32xf32, #tpu.memory_space<vmem>>, vector<2x8x8x32xf32>
    %96 = vector.shape_cast %95 : vector<2x8x8x32xf32> to vector<128x32xf32>
    %97 = arith.truncf %96 : vector<128x32xf32> to vector<128x32xbf16>
    %c3_104 = arith.constant 3 : index
    %c0_105 = arith.constant 0 : index
    %c0_106 = arith.constant 0 : index
    %98 = vector.load %arg4[%c3_104, %c0_105, %c0_106] : memref<9x32x64xbf16, #tpu.memory_space<vmem>>, vector<1x32x64xbf16>
    %99 = vector.shape_cast %98 : vector<1x32x64xbf16> to vector<32x64xbf16>
    %cst_107 = arith.constant dense<0.000000e+00> : vector<128x64xf32>
    %100 = tpu.matmul %97, %99, %cst_107 {dimension_numbers = #tpu.dot_dimension_numbers<[1], [0], [0], [1], [0, 0, 1, 1], [], []>} : vector<128x32xbf16>, vector<32x64xbf16>, vector<128x64xf32> -> vector<128x64xf32>
    %101 = arith.addf %94, %100 : vector<128x64xf32>
    %c0_108 = arith.constant 0 : index
    %c1_109 = arith.constant 1 : index
    %c1_110 = arith.constant 1 : index
    %c0_111 = arith.constant 0 : index
    %102 = vector.load %arg12[%c0_108, %c1_109, %c1_110, %c0_111] : memref<2x10x10x32xf32, #tpu.memory_space<vmem>>, vector<2x8x8x32xf32>
    %103 = vector.shape_cast %102 : vector<2x8x8x32xf32> to vector<128x32xf32>
    %104 = arith.truncf %103 : vector<128x32xf32> to vector<128x32xbf16>
    %c4_112 = arith.constant 4 : index
    %c0_113 = arith.constant 0 : index
    %c0_114 = arith.constant 0 : index
    %105 = vector.load %arg4[%c4_112, %c0_113, %c0_114] : memref<9x32x64xbf16, #tpu.memory_space<vmem>>, vector<1x32x64xbf16>
    %106 = vector.shape_cast %105 : vector<1x32x64xbf16> to vector<32x64xbf16>
    %cst_115 = arith.constant dense<0.000000e+00> : vector<128x64xf32>
    %107 = tpu.matmul %104, %106, %cst_115 {dimension_numbers = #tpu.dot_dimension_numbers<[1], [0], [0], [1], [0, 0, 1, 1], [], []>} : vector<128x32xbf16>, vector<32x64xbf16>, vector<128x64xf32> -> vector<128x64xf32>
    %108 = arith.addf %101, %107 : vector<128x64xf32>
    %c0_116 = arith.constant 0 : index
    %c1_117 = arith.constant 1 : index
    %c2_118 = arith.constant 2 : index
    %c0_119 = arith.constant 0 : index
    %109 = vector.load %arg12[%c0_116, %c1_117, %c2_118, %c0_119] : memref<2x10x10x32xf32, #tpu.memory_space<vmem>>, vector<2x8x8x32xf32>
    %110 = vector.shape_cast %109 : vector<2x8x8x32xf32> to vector<128x32xf32>
    %111 = arith.truncf %110 : vector<128x32xf32> to vector<128x32xbf16>
    %c5_120 = arith.constant 5 : index
    %c0_121 = arith.constant 0 : index
    %c0_122 = arith.constant 0 : index
    %112 = vector.load %arg4[%c5_120, %c0_121, %c0_122] : memref<9x32x64xbf16, #tpu.memory_space<vmem>>, vector<1x32x64xbf16>
    %113 = vector.shape_cast %112 : vector<1x32x64xbf16> to vector<32x64xbf16>
    %cst_123 = arith.constant dense<0.000000e+00> : vector<128x64xf32>
    %114 = tpu.matmul %111, %113, %cst_123 {dimension_numbers = #tpu.dot_dimension_numbers<[1], [0], [0], [1], [0, 0, 1, 1], [], []>} : vector<128x32xbf16>, vector<32x64xbf16>, vector<128x64xf32> -> vector<128x64xf32>
    %115 = arith.addf %108, %114 : vector<128x64xf32>
    %c0_124 = arith.constant 0 : index
    %c2_125 = arith.constant 2 : index
    %c0_126 = arith.constant 0 : index
    %c0_127 = arith.constant 0 : index
    %116 = vector.load %arg12[%c0_124, %c2_125, %c0_126, %c0_127] : memref<2x10x10x32xf32, #tpu.memory_space<vmem>>, vector<2x8x8x32xf32>
    %117 = vector.shape_cast %116 : vector<2x8x8x32xf32> to vector<128x32xf32>
    %118 = arith.truncf %117 : vector<128x32xf32> to vector<128x32xbf16>
    %c6_128 = arith.constant 6 : index
    %c0_129 = arith.constant 0 : index
    %c0_130 = arith.constant 0 : index
    %119 = vector.load %arg4[%c6_128, %c0_129, %c0_130] : memref<9x32x64xbf16, #tpu.memory_space<vmem>>, vector<1x32x64xbf16>
    %120 = vector.shape_cast %119 : vector<1x32x64xbf16> to vector<32x64xbf16>
    %cst_131 = arith.constant dense<0.000000e+00> : vector<128x64xf32>
    %121 = tpu.matmul %118, %120, %cst_131 {dimension_numbers = #tpu.dot_dimension_numbers<[1], [0], [0], [1], [0, 0, 1, 1], [], []>} : vector<128x32xbf16>, vector<32x64xbf16>, vector<128x64xf32> -> vector<128x64xf32>
    %122 = arith.addf %115, %121 : vector<128x64xf32>
    %c0_132 = arith.constant 0 : index
    %c2_133 = arith.constant 2 : index
    %c1_134 = arith.constant 1 : index
    %c0_135 = arith.constant 0 : index
    %123 = vector.load %arg12[%c0_132, %c2_133, %c1_134, %c0_135] : memref<2x10x10x32xf32, #tpu.memory_space<vmem>>, vector<2x8x8x32xf32>
    %124 = vector.shape_cast %123 : vector<2x8x8x32xf32> to vector<128x32xf32>
    %125 = arith.truncf %124 : vector<128x32xf32> to vector<128x32xbf16>
    %c7_136 = arith.constant 7 : index
    %c0_137 = arith.constant 0 : index
    %c0_138 = arith.constant 0 : index
    %126 = vector.load %arg4[%c7_136, %c0_137, %c0_138] : memref<9x32x64xbf16, #tpu.memory_space<vmem>>, vector<1x32x64xbf16>
    %127 = vector.shape_cast %126 : vector<1x32x64xbf16> to vector<32x64xbf16>
    %cst_139 = arith.constant dense<0.000000e+00> : vector<128x64xf32>
    %128 = tpu.matmul %125, %127, %cst_139 {dimension_numbers = #tpu.dot_dimension_numbers<[1], [0], [0], [1], [0, 0, 1, 1], [], []>} : vector<128x32xbf16>, vector<32x64xbf16>, vector<128x64xf32> -> vector<128x64xf32>
    %129 = arith.addf %122, %128 : vector<128x64xf32>
    %c0_140 = arith.constant 0 : index
    %c2_141 = arith.constant 2 : index
    %c2_142 = arith.constant 2 : index
    %c0_143 = arith.constant 0 : index
    %130 = vector.load %arg12[%c0_140, %c2_141, %c2_142, %c0_143] : memref<2x10x10x32xf32, #tpu.memory_space<vmem>>, vector<2x8x8x32xf32>
    %131 = vector.shape_cast %130 : vector<2x8x8x32xf32> to vector<128x32xf32>
    %132 = arith.truncf %131 : vector<128x32xf32> to vector<128x32xbf16>
    %c8_144 = arith.constant 8 : index
    %c0_145 = arith.constant 0 : index
    %c0_146 = arith.constant 0 : index
    %133 = vector.load %arg4[%c8_144, %c0_145, %c0_146] : memref<9x32x64xbf16, #tpu.memory_space<vmem>>, vector<1x32x64xbf16>
    %134 = vector.shape_cast %133 : vector<1x32x64xbf16> to vector<32x64xbf16>
    %cst_147 = arith.constant dense<0.000000e+00> : vector<128x64xf32>
    %135 = tpu.matmul %132, %134, %cst_147 {dimension_numbers = #tpu.dot_dimension_numbers<[1], [0], [0], [1], [0, 0, 1, 1], [], []>} : vector<128x32xbf16>, vector<32x64xbf16>, vector<128x64xf32> -> vector<128x64xf32>
    %136 = arith.addf %129, %135 : vector<128x64xf32>
    %c0_148 = arith.constant 0 : index
    %c0_149 = arith.constant 0 : index
    %137 = vector.load %arg5[%c0_148, %c0_149] : memref<1x64xf32, #tpu.memory_space<vmem>>, vector<1x64xf32>
    %138 = vector.broadcast %137 : vector<1x64xf32> to vector<128x64xf32>
    %139 = arith.addf %136, %138 : vector<128x64xf32>
    %cst_150 = arith.constant 0.000000e+00 : f32
    %140 = vector.broadcast %cst_150 : f32 to vector<128x64xf32>
    %141 = arith.maximumf %139, %140 : vector<128x64xf32>
    %142 = vector.shape_cast %141 : vector<128x64xf32> to vector<2x64x64xf32>
    %c0_151 = arith.constant 0 : index
    %c0_152 = arith.constant 0 : index
    %c0_153 = arith.constant 0 : index
    %143 = vector.load %arg13[%c0_151, %c0_152, %c0_153] : memref<2x64x64xf32, #tpu.memory_space<vmem>>, vector<2x64x64xf32>
    tpu.vector_store %arg13[%c0_151, %c0_152, %c0_153], %142 {strides = array<i32>} : memref<2x64x64xf32, #tpu.memory_space<vmem>>, vector<2x64x64xf32>,
    %c0_154 = arith.constant 0 : index
    %c0_155 = arith.constant 0 : index
    %c0_156 = arith.constant 0 : index
    %144 = vector.load %arg13[%c0_154, %c0_155, %c0_156] : memref<2x64x64xf32, #tpu.memory_space<vmem>>, vector<2x1x64xf32>
    %145 = vector.shape_cast %144 : vector<2x1x64xf32> to vector<2x64xf32>
    %c0_157 = arith.constant 0 : index
    %c0_158 = arith.constant 0 : index
    %146 = vector.load %arg14[%c0_157, %c0_158] : memref<2x4096xf32, #tpu.memory_space<vmem>>, vector<2x64xf32>
    tpu.vector_store %arg14[%c0_157, %c0_158], %145 {strides = array<i32>} : memref<2x4096xf32, #tpu.memory_space<vmem>>, vector<2x64xf32>,
    %c0_159 = arith.constant 0 : index
    %c1_160 = arith.constant 1 : index
    %c0_161 = arith.constant 0 : index
    %147 = vector.load %arg13[%c0_159, %c1_160, %c0_161] : memref<2x64x64xf32, #tpu.memory_space<vmem>>, vector<2x1x64xf32>
    %148 = vector.shape_cast %147 : vector<2x1x64xf32> to vector<2x64xf32>
    %c0_162 = arith.constant 0 : index
    %c64 = arith.constant 64 : index
    %149 = vector.load %arg14[%c0_162, %c64] : memref<2x4096xf32, #tpu.memory_space<vmem>>, vector<2x64xf32>
    tpu.vector_store %arg14[%c0_162, %c64], %148 {strides = array<i32>} : memref<2x4096xf32, #tpu.memory_space<vmem>>, vector<2x64xf32>,
    %c0_163 = arith.constant 0 : index
    %c2_164 = arith.constant 2 : index
    %c0_165 = arith.constant 0 : index
    %150 = vector.load %arg13[%c0_163, %c2_164, %c0_165] : memref<2x64x64xf32, #tpu.memory_space<vmem>>, vector<2x1x64xf32>
    %151 = vector.shape_cast %150 : vector<2x1x64xf32> to vector<2x64xf32>
    %c0_166 = arith.constant 0 : index
    %c128 = arith.constant 128 : index
    %152 = vector.load %arg14[%c0_166, %c128] : memref<2x4096xf32, #tpu.memory_space<vmem>>, vector<2x64xf32>
    tpu.vector_store %arg14[%c0_166, %c128], %151 {strides = array<i32>} : memref<2x4096xf32, #tpu.memory_space<vmem>>, vector<2x64xf32>,
    %c0_167 = arith.constant 0 : index
    %c3_168 = arith.constant 3 : index
    %c0_169 = arith.constant 0 : index
    %153 = vector.load %arg13[%c0_167, %c3_168, %c0_169] : memref<2x64x64xf32, #tpu.memory_space<vmem>>, vector<2x1x64xf32>
    %154 = vector.shape_cast %153 : vector<2x1x64xf32> to vector<2x64xf32>
    %c0_170 = arith.constant 0 : index
    %c192 = arith.constant 192 : index
    %155 = vector.load %arg14[%c0_170, %c192] : memref<2x4096xf32, #tpu.memory_space<vmem>>, vector<2x64xf32>
    tpu.vector_store %arg14[%c0_170, %c192], %154 {strides = array<i32>} : memref<2x4096xf32, #tpu.memory_space<vmem>>, vector<2x64xf32>,
    %c0_171 = arith.constant 0 : index
    %c4_172 = arith.constant 4 : index
    %c0_173 = arith.constant 0 : index
    %156 = vector.load %arg13[%c0_171, %c4_172, %c0_173] : memref<2x64x64xf32, #tpu.memory_space<vmem>>, vector<2x1x64xf32>
    %157 = vector.shape_cast %156 : vector<2x1x64xf32> to vector<2x64xf32>
    %c0_174 = arith.constant 0 : index
    %c256 = arith.constant 256 : index
    %158 = vector.load %arg14[%c0_174, %c256] : memref<2x4096xf32, #tpu.memory_space<vmem>>, vector<2x64xf32>
    tpu.vector_store %arg14[%c0_174, %c256], %157 {strides = array<i32>} : memref<2x4096xf32, #tpu.memory_space<vmem>>, vector<2x64xf32>,
    %c0_175 = arith.constant 0 : index
    %c5_176 = arith.constant 5 : index
    %c0_177 = arith.constant 0 : index
    %159 = vector.load %arg13[%c0_175, %c5_176, %c0_177] : memref<2x64x64xf32, #tpu.memory_space<vmem>>, vector<2x1x64xf32>
    %160 = vector.shape_cast %159 : vector<2x1x64xf32> to vector<2x64xf32>
    %c0_178 = arith.constant 0 : index
    %c320 = arith.constant 320 : index
    %161 = vector.load %arg14[%c0_178, %c320] : memref<2x4096xf32, #tpu.memory_space<vmem>>, vector<2x64xf32>
    tpu.vector_store %arg14[%c0_178, %c320], %160 {strides = array<i32>} : memref<2x4096xf32, #tpu.memory_space<vmem>>, vector<2x64xf32>,
    %c0_179 = arith.constant 0 : index
    %c6_180 = arith.constant 6 : index
    %c0_181 = arith.constant 0 : index
    %162 = vector.load %arg13[%c0_179, %c6_180, %c0_181] : memref<2x64x64xf32, #tpu.memory_space<vmem>>, vector<2x1x64xf32>
    %163 = vector.shape_cast %162 : vector<2x1x64xf32> to vector<2x64xf32>
    %c0_182 = arith.constant 0 : index
    %c384 = arith.constant 384 : index
    %164 = vector.load %arg14[%c0_182, %c384] : memref<2x4096xf32, #tpu.memory_space<vmem>>, vector<2x64xf32>
    tpu.vector_store %arg14[%c0_182, %c384], %163 {strides = array<i32>} : memref<2x4096xf32, #tpu.memory_space<vmem>>, vector<2x64xf32>,
    %c0_183 = arith.constant 0 : index
    %c7_184 = arith.constant 7 : index
    %c0_185 = arith.constant 0 : index
    %165 = vector.load %arg13[%c0_183, %c7_184, %c0_185] : memref<2x64x64xf32, #tpu.memory_space<vmem>>, vector<2x1x64xf32>
    %166 = vector.shape_cast %165 : vector<2x1x64xf32> to vector<2x64xf32>
    %c0_186 = arith.constant 0 : index
    %c448 = arith.constant 448 : index
    %167 = vector.load %arg14[%c0_186, %c448] : memref<2x4096xf32, #tpu.memory_space<vmem>>, vector<2x64xf32>
    tpu.vector_store %arg14[%c0_186, %c448], %166 {strides = array<i32>} : memref<2x4096xf32, #tpu.memory_space<vmem>>, vector<2x64xf32>,
    %c0_187 = arith.constant 0 : index
    %c8_188 = arith.constant 8 : index
    %c0_189 = arith.constant 0 : index
    %168 = vector.load %arg13[%c0_187, %c8_188, %c0_189] : memref<2x64x64xf32, #tpu.memory_space<vmem>>, vector<2x1x64xf32>
    %169 = vector.shape_cast %168 : vector<2x1x64xf32> to vector<2x64xf32>
    %c0_190 = arith.constant 0 : index
    %c512 = arith.constant 512 : index
    %170 = vector.load %arg14[%c0_190, %c512] : memref<2x4096xf32, #tpu.memory_space<vmem>>, vector<2x64xf32>
    tpu.vector_store %arg14[%c0_190, %c512], %169 {strides = array<i32>} : memref<2x4096xf32, #tpu.memory_space<vmem>>, vector<2x64xf32>,
    %c0_191 = arith.constant 0 : index
    %c9 = arith.constant 9 : index
    %c0_192 = arith.constant 0 : index
    %171 = vector.load %arg13[%c0_191, %c9, %c0_192] : memref<2x64x64xf32, #tpu.memory_space<vmem>>, vector<2x1x64xf32>
    %172 = vector.shape_cast %171 : vector<2x1x64xf32> to vector<2x64xf32>
    %c0_193 = arith.constant 0 : index
    %c576 = arith.constant 576 : index
    %173 = vector.load %arg14[%c0_193, %c576] : memref<2x4096xf32, #tpu.memory_space<vmem>>, vector<2x64xf32>
    tpu.vector_store %arg14[%c0_193, %c576], %172 {strides = array<i32>} : memref<2x4096xf32, #tpu.memory_space<vmem>>, vector<2x64xf32>,
    %c0_194 = arith.constant 0 : index
    %c10 = arith.constant 10 : index
    %c0_195 = arith.constant 0 : index
    %174 = vector.load %arg13[%c0_194, %c10, %c0_195] : memref<2x64x64xf32, #tpu.memory_space<vmem>>, vector<2x1x64xf32>
    %175 = vector.shape_cast %174 : vector<2x1x64xf32> to vector<2x64xf32>
    %c0_196 = arith.constant 0 : index
    %c640 = arith.constant 640 : index
    %176 = vector.load %arg14[%c0_196, %c640] : memref<2x4096xf32, #tpu.memory_space<vmem>>, vector<2x64xf32>
    tpu.vector_store %arg14[%c0_196, %c640], %175 {strides = array<i32>} : memref<2x4096xf32, #tpu.memory_space<vmem>>, vector<2x64xf32>,
    %c0_197 = arith.constant 0 : index
    %c11 = arith.constant 11 : index
    %c0_198 = arith.constant 0 : index
    %177 = vector.load %arg13[%c0_197, %c11, %c0_198] : memref<2x64x64xf32, #tpu.memory_space<vmem>>, vector<2x1x64xf32>
    %178 = vector.shape_cast %177 : vector<2x1x64xf32> to vector<2x64xf32>
    %c0_199 = arith.constant 0 : index
    %c704 = arith.constant 704 : index
    %179 = vector.load %arg14[%c0_199, %c704] : memref<2x4096xf32, #tpu.memory_space<vmem>>, vector<2x64xf32>
    tpu.vector_store %arg14[%c0_199, %c704], %178 {strides = array<i32>} : memref<2x4096xf32, #tpu.memory_space<vmem>>, vector<2x64xf32>,
    %c0_200 = arith.constant 0 : index
    %c12 = arith.constant 12 : index
    %c0_201 = arith.constant 0 : index
    %180 = vector.load %arg13[%c0_200, %c12, %c0_201] : memref<2x64x64xf32, #tpu.memory_space<vmem>>, vector<2x1x64xf32>
    %181 = vector.shape_cast %180 : vector<2x1x64xf32> to vector<2x64xf32>
    %c0_202 = arith.constant 0 : index
    %c768 = arith.constant 768 : index
    %182 = vector.load %arg14[%c0_202, %c768] : memref<2x4096xf32, #tpu.memory_space<vmem>>, vector<2x64xf32>
    tpu.vector_store %arg14[%c0_202, %c768], %181 {strides = array<i32>} : memref<2x4096xf32, #tpu.memory_space<vmem>>, vector<2x64xf32>,
    %c0_203 = arith.constant 0 : index
    %c13 = arith.constant 13 : index
    %c0_204 = arith.constant 0 : index
    %183 = vector.load %arg13[%c0_203, %c13, %c0_204] : memref<2x64x64xf32, #tpu.memory_space<vmem>>, vector<2x1x64xf32>
    %184 = vector.shape_cast %183 : vector<2x1x64xf32> to vector<2x64xf32>
    %c0_205 = arith.constant 0 : index
    %c832 = arith.constant 832 : index
    %185 = vector.load %arg14[%c0_205, %c832] : memref<2x4096xf32, #tpu.memory_space<vmem>>, vector<2x64xf32>
    tpu.vector_store %arg14[%c0_205, %c832], %184 {strides = array<i32>} : memref<2x4096xf32, #tpu.memory_space<vmem>>, vector<2x64xf32>,
    %c0_206 = arith.constant 0 : index
    %c14 = arith.constant 14 : index
    %c0_207 = arith.constant 0 : index
    %186 = vector.load %arg13[%c0_206, %c14, %c0_207] : memref<2x64x64xf32, #tpu.memory_space<vmem>>, vector<2x1x64xf32>
    %187 = vector.shape_cast %186 : vector<2x1x64xf32> to vector<2x64xf32>
    %c0_208 = arith.constant 0 : index
    %c896 = arith.constant 896 : index
    %188 = vector.load %arg14[%c0_208, %c896] : memref<2x4096xf32, #tpu.memory_space<vmem>>, vector<2x64xf32>
    tpu.vector_store %arg14[%c0_208, %c896], %187 {strides = array<i32>} : memref<2x4096xf32, #tpu.memory_space<vmem>>, vector<2x64xf32>,
    %c0_209 = arith.constant 0 : index
    %c15 = arith.constant 15 : index
    %c0_210 = arith.constant 0 : index
    %189 = vector.load %arg13[%c0_209, %c15, %c0_210] : memref<2x64x64xf32, #tpu.memory_space<vmem>>, vector<2x1x64xf32>
    %190 = vector.shape_cast %189 : vector<2x1x64xf32> to vector<2x64xf32>
    %c0_211 = arith.constant 0 : index
    %c960 = arith.constant 960 : index
    %191 = vector.load %arg14[%c0_211, %c960] : memref<2x4096xf32, #tpu.memory_space<vmem>>, vector<2x64xf32>
    tpu.vector_store %arg14[%c0_211, %c960], %190 {strides = array<i32>} : memref<2x4096xf32, #tpu.memory_space<vmem>>, vector<2x64xf32>,
    %c0_212 = arith.constant 0 : index
    %c16 = arith.constant 16 : index
    %c0_213 = arith.constant 0 : index
    %192 = vector.load %arg13[%c0_212, %c16, %c0_213] : memref<2x64x64xf32, #tpu.memory_space<vmem>>, vector<2x1x64xf32>
    %193 = vector.shape_cast %192 : vector<2x1x64xf32> to vector<2x64xf32>
    %c0_214 = arith.constant 0 : index
    %c1024 = arith.constant 1024 : index
    %194 = vector.load %arg14[%c0_214, %c1024] : memref<2x4096xf32, #tpu.memory_space<vmem>>, vector<2x64xf32>
    tpu.vector_store %arg14[%c0_214, %c1024], %193 {strides = array<i32>} : memref<2x4096xf32, #tpu.memory_space<vmem>>, vector<2x64xf32>,
    %c0_215 = arith.constant 0 : index
    %c17 = arith.constant 17 : index
    %c0_216 = arith.constant 0 : index
    %195 = vector.load %arg13[%c0_215, %c17, %c0_216] : memref<2x64x64xf32, #tpu.memory_space<vmem>>, vector<2x1x64xf32>
    %196 = vector.shape_cast %195 : vector<2x1x64xf32> to vector<2x64xf32>
    %c0_217 = arith.constant 0 : index
    %c1088 = arith.constant 1088 : index
    %197 = vector.load %arg14[%c0_217, %c1088] : memref<2x4096xf32, #tpu.memory_space<vmem>>, vector<2x64xf32>
    tpu.vector_store %arg14[%c0_217, %c1088], %196 {strides = array<i32>} : memref<2x4096xf32, #tpu.memory_space<vmem>>, vector<2x64xf32>,
    %c0_218 = arith.constant 0 : index
    %c18 = arith.constant 18 : index
    %c0_219 = arith.constant 0 : index
    %198 = vector.load %arg13[%c0_218, %c18, %c0_219] : memref<2x64x64xf32, #tpu.memory_space<vmem>>, vector<2x1x64xf32>
    %199 = vector.shape_cast %198 : vector<2x1x64xf32> to vector<2x64xf32>
    %c0_220 = arith.constant 0 : index
    %c1152 = arith.constant 1152 : index
    %200 = vector.load %arg14[%c0_220, %c1152] : memref<2x4096xf32, #tpu.memory_space<vmem>>, vector<2x64xf32>
    tpu.vector_store %arg14[%c0_220, %c1152], %199 {strides = array<i32>} : memref<2x4096xf32, #tpu.memory_space<vmem>>, vector<2x64xf32>,
    %c0_221 = arith.constant 0 : index
    %c19 = arith.constant 19 : index
    %c0_222 = arith.constant 0 : index
    %201 = vector.load %arg13[%c0_221, %c19, %c0_222] : memref<2x64x64xf32, #tpu.memory_space<vmem>>, vector<2x1x64xf32>
    %202 = vector.shape_cast %201 : vector<2x1x64xf32> to vector<2x64xf32>
    %c0_223 = arith.constant 0 : index
    %c1216 = arith.constant 1216 : index
    %203 = vector.load %arg14[%c0_223, %c1216] : memref<2x4096xf32, #tpu.memory_space<vmem>>, vector<2x64xf32>
    tpu.vector_store %arg14[%c0_223, %c1216], %202 {strides = array<i32>} : memref<2x4096xf32, #tpu.memory_space<vmem>>, vector<2x64xf32>,
    %c0_224 = arith.constant 0 : index
    %c20 = arith.constant 20 : index
    %c0_225 = arith.constant 0 : index
    %204 = vector.load %arg13[%c0_224, %c20, %c0_225] : memref<2x64x64xf32, #tpu.memory_space<vmem>>, vector<2x1x64xf32>
    %205 = vector.shape_cast %204 : vector<2x1x64xf32> to vector<2x64xf32>
    %c0_226 = arith.constant 0 : index
    %c1280 = arith.constant 1280 : index
    %206 = vector.load %arg14[%c0_226, %c1280] : memref<2x4096xf32, #tpu.memory_space<vmem>>, vector<2x64xf32>
    tpu.vector_store %arg14[%c0_226, %c1280], %205 {strides = array<i32>} : memref<2x4096xf32, #tpu.memory_space<vmem>>, vector<2x64xf32>,
    %c0_227 = arith.constant 0 : index
    %c21 = arith.constant 21 : index
    %c0_228 = arith.constant 0 : index
    %207 = vector.load %arg13[%c0_227, %c21, %c0_228] : memref<2x64x64xf32, #tpu.memory_space<vmem>>, vector<2x1x64xf32>
    %208 = vector.shape_cast %207 : vector<2x1x64xf32> to vector<2x64xf32>
    %c0_229 = arith.constant 0 : index
    %c1344 = arith.constant 1344 : index
    %209 = vector.load %arg14[%c0_229, %c1344] : memref<2x4096xf32, #tpu.memory_space<vmem>>, vector<2x64xf32>
    tpu.vector_store %arg14[%c0_229, %c1344], %208 {strides = array<i32>} : memref<2x4096xf32, #tpu.memory_space<vmem>>, vector<2x64xf32>,
    %c0_230 = arith.constant 0 : index
    %c22 = arith.constant 22 : index
    %c0_231 = arith.constant 0 : index
    %210 = vector.load %arg13[%c0_230, %c22, %c0_231] : memref<2x64x64xf32, #tpu.memory_space<vmem>>, vector<2x1x64xf32>
    %211 = vector.shape_cast %210 : vector<2x1x64xf32> to vector<2x64xf32>
    %c0_232 = arith.constant 0 : index
    %c1408 = arith.constant 1408 : index
    %212 = vector.load %arg14[%c0_232, %c1408] : memref<2x4096xf32, #tpu.memory_space<vmem>>, vector<2x64xf32>
    tpu.vector_store %arg14[%c0_232, %c1408], %211 {strides = array<i32>} : memref<2x4096xf32, #tpu.memory_space<vmem>>, vector<2x64xf32>,
    %c0_233 = arith.constant 0 : index
    %c23 = arith.constant 23 : index
    %c0_234 = arith.constant 0 : index
    %213 = vector.load %arg13[%c0_233, %c23, %c0_234] : memref<2x64x64xf32, #tpu.memory_space<vmem>>, vector<2x1x64xf32>
    %214 = vector.shape_cast %213 : vector<2x1x64xf32> to vector<2x64xf32>
    %c0_235 = arith.constant 0 : index
    %c1472 = arith.constant 1472 : index
    %215 = vector.load %arg14[%c0_235, %c1472] : memref<2x4096xf32, #tpu.memory_space<vmem>>, vector<2x64xf32>
    tpu.vector_store %arg14[%c0_235, %c1472], %214 {strides = array<i32>} : memref<2x4096xf32, #tpu.memory_space<vmem>>, vector<2x64xf32>,
    %c0_236 = arith.constant 0 : index
    %c24 = arith.constant 24 : index
    %c0_237 = arith.constant 0 : index
    %216 = vector.load %arg13[%c0_236, %c24, %c0_237] : memref<2x64x64xf32, #tpu.memory_space<vmem>>, vector<2x1x64xf32>
    %217 = vector.shape_cast %216 : vector<2x1x64xf32> to vector<2x64xf32>
    %c0_238 = arith.constant 0 : index
    %c1536 = arith.constant 1536 : index
    %218 = vector.load %arg14[%c0_238, %c1536] : memref<2x4096xf32, #tpu.memory_space<vmem>>, vector<2x64xf32>
    tpu.vector_store %arg14[%c0_238, %c1536], %217 {strides = array<i32>} : memref<2x4096xf32, #tpu.memory_space<vmem>>, vector<2x64xf32>,
    %c0_239 = arith.constant 0 : index
    %c25 = arith.constant 25 : index
    %c0_240 = arith.constant 0 : index
    %219 = vector.load %arg13[%c0_239, %c25, %c0_240] : memref<2x64x64xf32, #tpu.memory_space<vmem>>, vector<2x1x64xf32>
    %220 = vector.shape_cast %219 : vector<2x1x64xf32> to vector<2x64xf32>
    %c0_241 = arith.constant 0 : index
    %c1600 = arith.constant 1600 : index
    %221 = vector.load %arg14[%c0_241, %c1600] : memref<2x4096xf32, #tpu.memory_space<vmem>>, vector<2x64xf32>
    tpu.vector_store %arg14[%c0_241, %c1600], %220 {strides = array<i32>} : memref<2x4096xf32, #tpu.memory_space<vmem>>, vector<2x64xf32>,
    %c0_242 = arith.constant 0 : index
    %c26 = arith.constant 26 : index
    %c0_243 = arith.constant 0 : index
    %222 = vector.load %arg13[%c0_242, %c26, %c0_243] : memref<2x64x64xf32, #tpu.memory_space<vmem>>, vector<2x1x64xf32>
    %223 = vector.shape_cast %222 : vector<2x1x64xf32> to vector<2x64xf32>
    %c0_244 = arith.constant 0 : index
    %c1664 = arith.constant 1664 : index
    %224 = vector.load %arg14[%c0_244, %c1664] : memref<2x4096xf32, #tpu.memory_space<vmem>>, vector<2x64xf32>
    tpu.vector_store %arg14[%c0_244, %c1664], %223 {strides = array<i32>} : memref<2x4096xf32, #tpu.memory_space<vmem>>, vector<2x64xf32>,
    %c0_245 = arith.constant 0 : index
    %c27 = arith.constant 27 : index
    %c0_246 = arith.constant 0 : index
    %225 = vector.load %arg13[%c0_245, %c27, %c0_246] : memref<2x64x64xf32, #tpu.memory_space<vmem>>, vector<2x1x64xf32>
    %226 = vector.shape_cast %225 : vector<2x1x64xf32> to vector<2x64xf32>
    %c0_247 = arith.constant 0 : index
    %c1728 = arith.constant 1728 : index
    %227 = vector.load %arg14[%c0_247, %c1728] : memref<2x4096xf32, #tpu.memory_space<vmem>>, vector<2x64xf32>
    tpu.vector_store %arg14[%c0_247, %c1728], %226 {strides = array<i32>} : memref<2x4096xf32, #tpu.memory_space<vmem>>, vector<2x64xf32>,
    %c0_248 = arith.constant 0 : index
    %c28 = arith.constant 28 : index
    %c0_249 = arith.constant 0 : index
    %228 = vector.load %arg13[%c0_248, %c28, %c0_249] : memref<2x64x64xf32, #tpu.memory_space<vmem>>, vector<2x1x64xf32>
    %229 = vector.shape_cast %228 : vector<2x1x64xf32> to vector<2x64xf32>
    %c0_250 = arith.constant 0 : index
    %c1792 = arith.constant 1792 : index
    %230 = vector.load %arg14[%c0_250, %c1792] : memref<2x4096xf32, #tpu.memory_space<vmem>>, vector<2x64xf32>
    tpu.vector_store %arg14[%c0_250, %c1792], %229 {strides = array<i32>} : memref<2x4096xf32, #tpu.memory_space<vmem>>, vector<2x64xf32>,
    %c0_251 = arith.constant 0 : index
    %c29 = arith.constant 29 : index
    %c0_252 = arith.constant 0 : index
    %231 = vector.load %arg13[%c0_251, %c29, %c0_252] : memref<2x64x64xf32, #tpu.memory_space<vmem>>, vector<2x1x64xf32>
    %232 = vector.shape_cast %231 : vector<2x1x64xf32> to vector<2x64xf32>
    %c0_253 = arith.constant 0 : index
    %c1856 = arith.constant 1856 : index
    %233 = vector.load %arg14[%c0_253, %c1856] : memref<2x4096xf32, #tpu.memory_space<vmem>>, vector<2x64xf32>
    tpu.vector_store %arg14[%c0_253, %c1856], %232 {strides = array<i32>} : memref<2x4096xf32, #tpu.memory_space<vmem>>, vector<2x64xf32>,
    %c0_254 = arith.constant 0 : index
    %c30 = arith.constant 30 : index
    %c0_255 = arith.constant 0 : index
    %234 = vector.load %arg13[%c0_254, %c30, %c0_255] : memref<2x64x64xf32, #tpu.memory_space<vmem>>, vector<2x1x64xf32>
    %235 = vector.shape_cast %234 : vector<2x1x64xf32> to vector<2x64xf32>
    %c0_256 = arith.constant 0 : index
    %c1920 = arith.constant 1920 : index
    %236 = vector.load %arg14[%c0_256, %c1920] : memref<2x4096xf32, #tpu.memory_space<vmem>>, vector<2x64xf32>
    tpu.vector_store %arg14[%c0_256, %c1920], %235 {strides = array<i32>} : memref<2x4096xf32, #tpu.memory_space<vmem>>, vector<2x64xf32>,
    %c0_257 = arith.constant 0 : index
    %c31 = arith.constant 31 : index
    %c0_258 = arith.constant 0 : index
    %237 = vector.load %arg13[%c0_257, %c31, %c0_258] : memref<2x64x64xf32, #tpu.memory_space<vmem>>, vector<2x1x64xf32>
    %238 = vector.shape_cast %237 : vector<2x1x64xf32> to vector<2x64xf32>
    %c0_259 = arith.constant 0 : index
    %c1984 = arith.constant 1984 : index
    %239 = vector.load %arg14[%c0_259, %c1984] : memref<2x4096xf32, #tpu.memory_space<vmem>>, vector<2x64xf32>
    tpu.vector_store %arg14[%c0_259, %c1984], %238 {strides = array<i32>} : memref<2x4096xf32, #tpu.memory_space<vmem>>, vector<2x64xf32>,
    %c0_260 = arith.constant 0 : index
    %c32 = arith.constant 32 : index
    %c0_261 = arith.constant 0 : index
    %240 = vector.load %arg13[%c0_260, %c32, %c0_261] : memref<2x64x64xf32, #tpu.memory_space<vmem>>, vector<2x1x64xf32>
    %241 = vector.shape_cast %240 : vector<2x1x64xf32> to vector<2x64xf32>
    %c0_262 = arith.constant 0 : index
    %c2048 = arith.constant 2048 : index
    %242 = vector.load %arg14[%c0_262, %c2048] : memref<2x4096xf32, #tpu.memory_space<vmem>>, vector<2x64xf32>
    tpu.vector_store %arg14[%c0_262, %c2048], %241 {strides = array<i32>} : memref<2x4096xf32, #tpu.memory_space<vmem>>, vector<2x64xf32>,
    %c0_263 = arith.constant 0 : index
    %c33 = arith.constant 33 : index
    %c0_264 = arith.constant 0 : index
    %243 = vector.load %arg13[%c0_263, %c33, %c0_264] : memref<2x64x64xf32, #tpu.memory_space<vmem>>, vector<2x1x64xf32>
    %244 = vector.shape_cast %243 : vector<2x1x64xf32> to vector<2x64xf32>
    %c0_265 = arith.constant 0 : index
    %c2112 = arith.constant 2112 : index
    %245 = vector.load %arg14[%c0_265, %c2112] : memref<2x4096xf32, #tpu.memory_space<vmem>>, vector<2x64xf32>
    tpu.vector_store %arg14[%c0_265, %c2112], %244 {strides = array<i32>} : memref<2x4096xf32, #tpu.memory_space<vmem>>, vector<2x64xf32>,
    %c0_266 = arith.constant 0 : index
    %c34 = arith.constant 34 : index
    %c0_267 = arith.constant 0 : index
    %246 = vector.load %arg13[%c0_266, %c34, %c0_267] : memref<2x64x64xf32, #tpu.memory_space<vmem>>, vector<2x1x64xf32>
    %247 = vector.shape_cast %246 : vector<2x1x64xf32> to vector<2x64xf32>
    %c0_268 = arith.constant 0 : index
    %c2176 = arith.constant 2176 : index
    %248 = vector.load %arg14[%c0_268, %c2176] : memref<2x4096xf32, #tpu.memory_space<vmem>>, vector<2x64xf32>
    tpu.vector_store %arg14[%c0_268, %c2176], %247 {strides = array<i32>} : memref<2x4096xf32, #tpu.memory_space<vmem>>, vector<2x64xf32>,
    %c0_269 = arith.constant 0 : index
    %c35 = arith.constant 35 : index
    %c0_270 = arith.constant 0 : index
    %249 = vector.load %arg13[%c0_269, %c35, %c0_270] : memref<2x64x64xf32, #tpu.memory_space<vmem>>, vector<2x1x64xf32>
    %250 = vector.shape_cast %249 : vector<2x1x64xf32> to vector<2x64xf32>
    %c0_271 = arith.constant 0 : index
    %c2240 = arith.constant 2240 : index
    %251 = vector.load %arg14[%c0_271, %c2240] : memref<2x4096xf32, #tpu.memory_space<vmem>>, vector<2x64xf32>
    tpu.vector_store %arg14[%c0_271, %c2240], %250 {strides = array<i32>} : memref<2x4096xf32, #tpu.memory_space<vmem>>, vector<2x64xf32>,
    %c0_272 = arith.constant 0 : index
    %c36 = arith.constant 36 : index
    %c0_273 = arith.constant 0 : index
    %252 = vector.load %arg13[%c0_272, %c36, %c0_273] : memref<2x64x64xf32, #tpu.memory_space<vmem>>, vector<2x1x64xf32>
    %253 = vector.shape_cast %252 : vector<2x1x64xf32> to vector<2x64xf32>
    %c0_274 = arith.constant 0 : index
    %c2304 = arith.constant 2304 : index
    %254 = vector.load %arg14[%c0_274, %c2304] : memref<2x4096xf32, #tpu.memory_space<vmem>>, vector<2x64xf32>
    tpu.vector_store %arg14[%c0_274, %c2304], %253 {strides = array<i32>} : memref<2x4096xf32, #tpu.memory_space<vmem>>, vector<2x64xf32>,
    %c0_275 = arith.constant 0 : index
    %c37 = arith.constant 37 : index
    %c0_276 = arith.constant 0 : index
    %255 = vector.load %arg13[%c0_275, %c37, %c0_276] : memref<2x64x64xf32, #tpu.memory_space<vmem>>, vector<2x1x64xf32>
    %256 = vector.shape_cast %255 : vector<2x1x64xf32> to vector<2x64xf32>
    %c0_277 = arith.constant 0 : index
    %c2368 = arith.constant 2368 : index
    %257 = vector.load %arg14[%c0_277, %c2368] : memref<2x4096xf32, #tpu.memory_space<vmem>>, vector<2x64xf32>
    tpu.vector_store %arg14[%c0_277, %c2368], %256 {strides = array<i32>} : memref<2x4096xf32, #tpu.memory_space<vmem>>, vector<2x64xf32>,
    %c0_278 = arith.constant 0 : index
    %c38 = arith.constant 38 : index
    %c0_279 = arith.constant 0 : index
    %258 = vector.load %arg13[%c0_278, %c38, %c0_279] : memref<2x64x64xf32, #tpu.memory_space<vmem>>, vector<2x1x64xf32>
    %259 = vector.shape_cast %258 : vector<2x1x64xf32> to vector<2x64xf32>
    %c0_280 = arith.constant 0 : index
    %c2432 = arith.constant 2432 : index
    %260 = vector.load %arg14[%c0_280, %c2432] : memref<2x4096xf32, #tpu.memory_space<vmem>>, vector<2x64xf32>
    tpu.vector_store %arg14[%c0_280, %c2432], %259 {strides = array<i32>} : memref<2x4096xf32, #tpu.memory_space<vmem>>, vector<2x64xf32>,
    %c0_281 = arith.constant 0 : index
    %c39 = arith.constant 39 : index
    %c0_282 = arith.constant 0 : index
    %261 = vector.load %arg13[%c0_281, %c39, %c0_282] : memref<2x64x64xf32, #tpu.memory_space<vmem>>, vector<2x1x64xf32>
    %262 = vector.shape_cast %261 : vector<2x1x64xf32> to vector<2x64xf32>
    %c0_283 = arith.constant 0 : index
    %c2496 = arith.constant 2496 : index
    %263 = vector.load %arg14[%c0_283, %c2496] : memref<2x4096xf32, #tpu.memory_space<vmem>>, vector<2x64xf32>
    tpu.vector_store %arg14[%c0_283, %c2496], %262 {strides = array<i32>} : memref<2x4096xf32, #tpu.memory_space<vmem>>, vector<2x64xf32>,
    %c0_284 = arith.constant 0 : index
    %c40 = arith.constant 40 : index
    %c0_285 = arith.constant 0 : index
    %264 = vector.load %arg13[%c0_284, %c40, %c0_285] : memref<2x64x64xf32, #tpu.memory_space<vmem>>, vector<2x1x64xf32>
    %265 = vector.shape_cast %264 : vector<2x1x64xf32> to vector<2x64xf32>
    %c0_286 = arith.constant 0 : index
    %c2560 = arith.constant 2560 : index
    %266 = vector.load %arg14[%c0_286, %c2560] : memref<2x4096xf32, #tpu.memory_space<vmem>>, vector<2x64xf32>
    tpu.vector_store %arg14[%c0_286, %c2560], %265 {strides = array<i32>} : memref<2x4096xf32, #tpu.memory_space<vmem>>, vector<2x64xf32>,
    %c0_287 = arith.constant 0 : index
    %c41 = arith.constant 41 : index
    %c0_288 = arith.constant 0 : index
    %267 = vector.load %arg13[%c0_287, %c41, %c0_288] : memref<2x64x64xf32, #tpu.memory_space<vmem>>, vector<2x1x64xf32>
    %268 = vector.shape_cast %267 : vector<2x1x64xf32> to vector<2x64xf32>
    %c0_289 = arith.constant 0 : index
    %c2624 = arith.constant 2624 : index
    %269 = vector.load %arg14[%c0_289, %c2624] : memref<2x4096xf32, #tpu.memory_space<vmem>>, vector<2x64xf32>
    tpu.vector_store %arg14[%c0_289, %c2624], %268 {strides = array<i32>} : memref<2x4096xf32, #tpu.memory_space<vmem>>, vector<2x64xf32>,
    %c0_290 = arith.constant 0 : index
    %c42 = arith.constant 42 : index
    %c0_291 = arith.constant 0 : index
    %270 = vector.load %arg13[%c0_290, %c42, %c0_291] : memref<2x64x64xf32, #tpu.memory_space<vmem>>, vector<2x1x64xf32>
    %271 = vector.shape_cast %270 : vector<2x1x64xf32> to vector<2x64xf32>
    %c0_292 = arith.constant 0 : index
    %c2688 = arith.constant 2688 : index
    %272 = vector.load %arg14[%c0_292, %c2688] : memref<2x4096xf32, #tpu.memory_space<vmem>>, vector<2x64xf32>
    tpu.vector_store %arg14[%c0_292, %c2688], %271 {strides = array<i32>} : memref<2x4096xf32, #tpu.memory_space<vmem>>, vector<2x64xf32>,
    %c0_293 = arith.constant 0 : index
    %c43 = arith.constant 43 : index
    %c0_294 = arith.constant 0 : index
    %273 = vector.load %arg13[%c0_293, %c43, %c0_294] : memref<2x64x64xf32, #tpu.memory_space<vmem>>, vector<2x1x64xf32>
    %274 = vector.shape_cast %273 : vector<2x1x64xf32> to vector<2x64xf32>
    %c0_295 = arith.constant 0 : index
    %c2752 = arith.constant 2752 : index
    %275 = vector.load %arg14[%c0_295, %c2752] : memref<2x4096xf32, #tpu.memory_space<vmem>>, vector<2x64xf32>
    tpu.vector_store %arg14[%c0_295, %c2752], %274 {strides = array<i32>} : memref<2x4096xf32, #tpu.memory_space<vmem>>, vector<2x64xf32>,
    %c0_296 = arith.constant 0 : index
    %c44 = arith.constant 44 : index
    %c0_297 = arith.constant 0 : index
    %276 = vector.load %arg13[%c0_296, %c44, %c0_297] : memref<2x64x64xf32, #tpu.memory_space<vmem>>, vector<2x1x64xf32>
    %277 = vector.shape_cast %276 : vector<2x1x64xf32> to vector<2x64xf32>
    %c0_298 = arith.constant 0 : index
    %c2816 = arith.constant 2816 : index
    %278 = vector.load %arg14[%c0_298, %c2816] : memref<2x4096xf32, #tpu.memory_space<vmem>>, vector<2x64xf32>
    tpu.vector_store %arg14[%c0_298, %c2816], %277 {strides = array<i32>} : memref<2x4096xf32, #tpu.memory_space<vmem>>, vector<2x64xf32>,
    %c0_299 = arith.constant 0 : index
    %c45 = arith.constant 45 : index
    %c0_300 = arith.constant 0 : index
    %279 = vector.load %arg13[%c0_299, %c45, %c0_300] : memref<2x64x64xf32, #tpu.memory_space<vmem>>, vector<2x1x64xf32>
    %280 = vector.shape_cast %279 : vector<2x1x64xf32> to vector<2x64xf32>
    %c0_301 = arith.constant 0 : index
    %c2880 = arith.constant 2880 : index
    %281 = vector.load %arg14[%c0_301, %c2880] : memref<2x4096xf32, #tpu.memory_space<vmem>>, vector<2x64xf32>
    tpu.vector_store %arg14[%c0_301, %c2880], %280 {strides = array<i32>} : memref<2x4096xf32, #tpu.memory_space<vmem>>, vector<2x64xf32>,
    %c0_302 = arith.constant 0 : index
    %c46 = arith.constant 46 : index
    %c0_303 = arith.constant 0 : index
    %282 = vector.load %arg13[%c0_302, %c46, %c0_303] : memref<2x64x64xf32, #tpu.memory_space<vmem>>, vector<2x1x64xf32>
    %283 = vector.shape_cast %282 : vector<2x1x64xf32> to vector<2x64xf32>
    %c0_304 = arith.constant 0 : index
    %c2944 = arith.constant 2944 : index
    %284 = vector.load %arg14[%c0_304, %c2944] : memref<2x4096xf32, #tpu.memory_space<vmem>>, vector<2x64xf32>
    tpu.vector_store %arg14[%c0_304, %c2944], %283 {strides = array<i32>} : memref<2x4096xf32, #tpu.memory_space<vmem>>, vector<2x64xf32>,
    %c0_305 = arith.constant 0 : index
    %c47 = arith.constant 47 : index
    %c0_306 = arith.constant 0 : index
    %285 = vector.load %arg13[%c0_305, %c47, %c0_306] : memref<2x64x64xf32, #tpu.memory_space<vmem>>, vector<2x1x64xf32>
    %286 = vector.shape_cast %285 : vector<2x1x64xf32> to vector<2x64xf32>
    %c0_307 = arith.constant 0 : index
    %c3008 = arith.constant 3008 : index
    %287 = vector.load %arg14[%c0_307, %c3008] : memref<2x4096xf32, #tpu.memory_space<vmem>>, vector<2x64xf32>
    tpu.vector_store %arg14[%c0_307, %c3008], %286 {strides = array<i32>} : memref<2x4096xf32, #tpu.memory_space<vmem>>, vector<2x64xf32>,
    %c0_308 = arith.constant 0 : index
    %c48 = arith.constant 48 : index
    %c0_309 = arith.constant 0 : index
    %288 = vector.load %arg13[%c0_308, %c48, %c0_309] : memref<2x64x64xf32, #tpu.memory_space<vmem>>, vector<2x1x64xf32>
    %289 = vector.shape_cast %288 : vector<2x1x64xf32> to vector<2x64xf32>
    %c0_310 = arith.constant 0 : index
    %c3072 = arith.constant 3072 : index
    %290 = vector.load %arg14[%c0_310, %c3072] : memref<2x4096xf32, #tpu.memory_space<vmem>>, vector<2x64xf32>
    tpu.vector_store %arg14[%c0_310, %c3072], %289 {strides = array<i32>} : memref<2x4096xf32, #tpu.memory_space<vmem>>, vector<2x64xf32>,
    %c0_311 = arith.constant 0 : index
    %c49 = arith.constant 49 : index
    %c0_312 = arith.constant 0 : index
    %291 = vector.load %arg13[%c0_311, %c49, %c0_312] : memref<2x64x64xf32, #tpu.memory_space<vmem>>, vector<2x1x64xf32>
    %292 = vector.shape_cast %291 : vector<2x1x64xf32> to vector<2x64xf32>
    %c0_313 = arith.constant 0 : index
    %c3136 = arith.constant 3136 : index
    %293 = vector.load %arg14[%c0_313, %c3136] : memref<2x4096xf32, #tpu.memory_space<vmem>>, vector<2x64xf32>
    tpu.vector_store %arg14[%c0_313, %c3136], %292 {strides = array<i32>} : memref<2x4096xf32, #tpu.memory_space<vmem>>, vector<2x64xf32>,
    %c0_314 = arith.constant 0 : index
    %c50 = arith.constant 50 : index
    %c0_315 = arith.constant 0 : index
    %294 = vector.load %arg13[%c0_314, %c50, %c0_315] : memref<2x64x64xf32, #tpu.memory_space<vmem>>, vector<2x1x64xf32>
    %295 = vector.shape_cast %294 : vector<2x1x64xf32> to vector<2x64xf32>
    %c0_316 = arith.constant 0 : index
    %c3200 = arith.constant 3200 : index
    %296 = vector.load %arg14[%c0_316, %c3200] : memref<2x4096xf32, #tpu.memory_space<vmem>>, vector<2x64xf32>
    tpu.vector_store %arg14[%c0_316, %c3200], %295 {strides = array<i32>} : memref<2x4096xf32, #tpu.memory_space<vmem>>, vector<2x64xf32>,
    %c0_317 = arith.constant 0 : index
    %c51 = arith.constant 51 : index
    %c0_318 = arith.constant 0 : index
    %297 = vector.load %arg13[%c0_317, %c51, %c0_318] : memref<2x64x64xf32, #tpu.memory_space<vmem>>, vector<2x1x64xf32>
    %298 = vector.shape_cast %297 : vector<2x1x64xf32> to vector<2x64xf32>
    %c0_319 = arith.constant 0 : index
    %c3264 = arith.constant 3264 : index
    %299 = vector.load %arg14[%c0_319, %c3264] : memref<2x4096xf32, #tpu.memory_space<vmem>>, vector<2x64xf32>
    tpu.vector_store %arg14[%c0_319, %c3264], %298 {strides = array<i32>} : memref<2x4096xf32, #tpu.memory_space<vmem>>, vector<2x64xf32>,
    %c0_320 = arith.constant 0 : index
    %c52 = arith.constant 52 : index
    %c0_321 = arith.constant 0 : index
    %300 = vector.load %arg13[%c0_320, %c52, %c0_321] : memref<2x64x64xf32, #tpu.memory_space<vmem>>, vector<2x1x64xf32>
    %301 = vector.shape_cast %300 : vector<2x1x64xf32> to vector<2x64xf32>
    %c0_322 = arith.constant 0 : index
    %c3328 = arith.constant 3328 : index
    %302 = vector.load %arg14[%c0_322, %c3328] : memref<2x4096xf32, #tpu.memory_space<vmem>>, vector<2x64xf32>
    tpu.vector_store %arg14[%c0_322, %c3328], %301 {strides = array<i32>} : memref<2x4096xf32, #tpu.memory_space<vmem>>, vector<2x64xf32>,
    %c0_323 = arith.constant 0 : index
    %c53 = arith.constant 53 : index
    %c0_324 = arith.constant 0 : index
    %303 = vector.load %arg13[%c0_323, %c53, %c0_324] : memref<2x64x64xf32, #tpu.memory_space<vmem>>, vector<2x1x64xf32>
    %304 = vector.shape_cast %303 : vector<2x1x64xf32> to vector<2x64xf32>
    %c0_325 = arith.constant 0 : index
    %c3392 = arith.constant 3392 : index
    %305 = vector.load %arg14[%c0_325, %c3392] : memref<2x4096xf32, #tpu.memory_space<vmem>>, vector<2x64xf32>
    tpu.vector_store %arg14[%c0_325, %c3392], %304 {strides = array<i32>} : memref<2x4096xf32, #tpu.memory_space<vmem>>, vector<2x64xf32>,
    %c0_326 = arith.constant 0 : index
    %c54 = arith.constant 54 : index
    %c0_327 = arith.constant 0 : index
    %306 = vector.load %arg13[%c0_326, %c54, %c0_327] : memref<2x64x64xf32, #tpu.memory_space<vmem>>, vector<2x1x64xf32>
    %307 = vector.shape_cast %306 : vector<2x1x64xf32> to vector<2x64xf32>
    %c0_328 = arith.constant 0 : index
    %c3456 = arith.constant 3456 : index
    %308 = vector.load %arg14[%c0_328, %c3456] : memref<2x4096xf32, #tpu.memory_space<vmem>>, vector<2x64xf32>
    tpu.vector_store %arg14[%c0_328, %c3456], %307 {strides = array<i32>} : memref<2x4096xf32, #tpu.memory_space<vmem>>, vector<2x64xf32>,
    %c0_329 = arith.constant 0 : index
    %c55 = arith.constant 55 : index
    %c0_330 = arith.constant 0 : index
    %309 = vector.load %arg13[%c0_329, %c55, %c0_330] : memref<2x64x64xf32, #tpu.memory_space<vmem>>, vector<2x1x64xf32>
    %310 = vector.shape_cast %309 : vector<2x1x64xf32> to vector<2x64xf32>
    %c0_331 = arith.constant 0 : index
    %c3520 = arith.constant 3520 : index
    %311 = vector.load %arg14[%c0_331, %c3520] : memref<2x4096xf32, #tpu.memory_space<vmem>>, vector<2x64xf32>
    tpu.vector_store %arg14[%c0_331, %c3520], %310 {strides = array<i32>} : memref<2x4096xf32, #tpu.memory_space<vmem>>, vector<2x64xf32>,
    %c0_332 = arith.constant 0 : index
    %c56 = arith.constant 56 : index
    %c0_333 = arith.constant 0 : index
    %312 = vector.load %arg13[%c0_332, %c56, %c0_333] : memref<2x64x64xf32, #tpu.memory_space<vmem>>, vector<2x1x64xf32>
    %313 = vector.shape_cast %312 : vector<2x1x64xf32> to vector<2x64xf32>
    %c0_334 = arith.constant 0 : index
    %c3584 = arith.constant 3584 : index
    %314 = vector.load %arg14[%c0_334, %c3584] : memref<2x4096xf32, #tpu.memory_space<vmem>>, vector<2x64xf32>
    tpu.vector_store %arg14[%c0_334, %c3584], %313 {strides = array<i32>} : memref<2x4096xf32, #tpu.memory_space<vmem>>, vector<2x64xf32>,
    %c0_335 = arith.constant 0 : index
    %c57 = arith.constant 57 : index
    %c0_336 = arith.constant 0 : index
    %315 = vector.load %arg13[%c0_335, %c57, %c0_336] : memref<2x64x64xf32, #tpu.memory_space<vmem>>, vector<2x1x64xf32>
    %316 = vector.shape_cast %315 : vector<2x1x64xf32> to vector<2x64xf32>
    %c0_337 = arith.constant 0 : index
    %c3648 = arith.constant 3648 : index
    %317 = vector.load %arg14[%c0_337, %c3648] : memref<2x4096xf32, #tpu.memory_space<vmem>>, vector<2x64xf32>
    tpu.vector_store %arg14[%c0_337, %c3648], %316 {strides = array<i32>} : memref<2x4096xf32, #tpu.memory_space<vmem>>, vector<2x64xf32>,
    %c0_338 = arith.constant 0 : index
    %c58 = arith.constant 58 : index
    %c0_339 = arith.constant 0 : index
    %318 = vector.load %arg13[%c0_338, %c58, %c0_339] : memref<2x64x64xf32, #tpu.memory_space<vmem>>, vector<2x1x64xf32>
    %319 = vector.shape_cast %318 : vector<2x1x64xf32> to vector<2x64xf32>
    %c0_340 = arith.constant 0 : index
    %c3712 = arith.constant 3712 : index
    %320 = vector.load %arg14[%c0_340, %c3712] : memref<2x4096xf32, #tpu.memory_space<vmem>>, vector<2x64xf32>
    tpu.vector_store %arg14[%c0_340, %c3712], %319 {strides = array<i32>} : memref<2x4096xf32, #tpu.memory_space<vmem>>, vector<2x64xf32>,
    %c0_341 = arith.constant 0 : index
    %c59 = arith.constant 59 : index
    %c0_342 = arith.constant 0 : index
    %321 = vector.load %arg13[%c0_341, %c59, %c0_342] : memref<2x64x64xf32, #tpu.memory_space<vmem>>, vector<2x1x64xf32>
    %322 = vector.shape_cast %321 : vector<2x1x64xf32> to vector<2x64xf32>
    %c0_343 = arith.constant 0 : index
    %c3776 = arith.constant 3776 : index
    %323 = vector.load %arg14[%c0_343, %c3776] : memref<2x4096xf32, #tpu.memory_space<vmem>>, vector<2x64xf32>
    tpu.vector_store %arg14[%c0_343, %c3776], %322 {strides = array<i32>} : memref<2x4096xf32, #tpu.memory_space<vmem>>, vector<2x64xf32>,
    %c0_344 = arith.constant 0 : index
    %c60 = arith.constant 60 : index
    %c0_345 = arith.constant 0 : index
    %324 = vector.load %arg13[%c0_344, %c60, %c0_345] : memref<2x64x64xf32, #tpu.memory_space<vmem>>, vector<2x1x64xf32>
    %325 = vector.shape_cast %324 : vector<2x1x64xf32> to vector<2x64xf32>
    %c0_346 = arith.constant 0 : index
    %c3840 = arith.constant 3840 : index
    %326 = vector.load %arg14[%c0_346, %c3840] : memref<2x4096xf32, #tpu.memory_space<vmem>>, vector<2x64xf32>
    tpu.vector_store %arg14[%c0_346, %c3840], %325 {strides = array<i32>} : memref<2x4096xf32, #tpu.memory_space<vmem>>, vector<2x64xf32>,
    %c0_347 = arith.constant 0 : index
    %c61 = arith.constant 61 : index
    %c0_348 = arith.constant 0 : index
    %327 = vector.load %arg13[%c0_347, %c61, %c0_348] : memref<2x64x64xf32, #tpu.memory_space<vmem>>, vector<2x1x64xf32>
    %328 = vector.shape_cast %327 : vector<2x1x64xf32> to vector<2x64xf32>
    %c0_349 = arith.constant 0 : index
    %c3904 = arith.constant 3904 : index
    %329 = vector.load %arg14[%c0_349, %c3904] : memref<2x4096xf32, #tpu.memory_space<vmem>>, vector<2x64xf32>
    tpu.vector_store %arg14[%c0_349, %c3904], %328 {strides = array<i32>} : memref<2x4096xf32, #tpu.memory_space<vmem>>, vector<2x64xf32>,
    %c0_350 = arith.constant 0 : index
    %c62 = arith.constant 62 : index
    %c0_351 = arith.constant 0 : index
    %330 = vector.load %arg13[%c0_350, %c62, %c0_351] : memref<2x64x64xf32, #tpu.memory_space<vmem>>, vector<2x1x64xf32>
    %331 = vector.shape_cast %330 : vector<2x1x64xf32> to vector<2x64xf32>
    %c0_352 = arith.constant 0 : index
    %c3968 = arith.constant 3968 : index
    %332 = vector.load %arg14[%c0_352, %c3968] : memref<2x4096xf32, #tpu.memory_space<vmem>>, vector<2x64xf32>
    tpu.vector_store %arg14[%c0_352, %c3968], %331 {strides = array<i32>} : memref<2x4096xf32, #tpu.memory_space<vmem>>, vector<2x64xf32>,
    %c0_353 = arith.constant 0 : index
    %c63 = arith.constant 63 : index
    %c0_354 = arith.constant 0 : index
    %333 = vector.load %arg13[%c0_353, %c63, %c0_354] : memref<2x64x64xf32, #tpu.memory_space<vmem>>, vector<2x1x64xf32>
    %334 = vector.shape_cast %333 : vector<2x1x64xf32> to vector<2x64xf32>
    %c0_355 = arith.constant 0 : index
    %c4032 = arith.constant 4032 : index
    %335 = vector.load %arg14[%c0_355, %c4032] : memref<2x4096xf32, #tpu.memory_space<vmem>>, vector<2x64xf32>
    tpu.vector_store %arg14[%c0_355, %c4032], %334 {strides = array<i32>} : memref<2x4096xf32, #tpu.memory_space<vmem>>, vector<2x64xf32>,
    %c0_356 = arith.constant 0 : index
    %c0_357 = arith.constant 0 : index
    %336 = vector.load %arg14[%c0_356, %c0_357] : memref<2x4096xf32, #tpu.memory_space<vmem>>, vector<2x4096xf32>
    %337 = arith.truncf %336 : vector<2x4096xf32> to vector<2x4096xbf16>
    %c0_358 = arith.constant 0 : index
    %c0_359 = arith.constant 0 : index
    %338 = vector.load %arg6[%c0_358, %c0_359] : memref<4096x256xbf16, #tpu.memory_space<vmem>>, vector<4096x256xbf16>
    %cst_360 = arith.constant dense<0.000000e+00> : vector<2x256xf32>
    %339 = tpu.matmul %337, %338, %cst_360 {dimension_numbers = #tpu.dot_dimension_numbers<[1], [0], [0], [1], [0, 0, 1, 1], [], []>} : vector<2x4096xbf16>, vector<4096x256xbf16>, vector<2x256xf32> -> vector<2x256xf32>
    %c0_361 = arith.constant 0 : index
    %c0_362 = arith.constant 0 : index
    %340 = vector.load %arg1[%c0_361, %c0_362] : memref<2x128xf32, #tpu.memory_space<vmem>>, vector<2x128xf32>
    %341 = arith.truncf %340 : vector<2x128xf32> to vector<2x128xbf16>
    %c0_363 = arith.constant 0 : index
    %c0_364 = arith.constant 0 : index
    %342 = vector.load %arg7[%c0_363, %c0_364] : memref<128x256xbf16, #tpu.memory_space<vmem>>, vector<128x256xbf16>
    %cst_365 = arith.constant dense<0.000000e+00> : vector<2x256xf32>
    %343 = tpu.matmul %341, %342, %cst_365 {dimension_numbers = #tpu.dot_dimension_numbers<[1], [0], [0], [1], [0, 0, 1, 1], [], []>} : vector<2x128xbf16>, vector<128x256xbf16>, vector<2x256xf32> -> vector<2x256xf32>
    %344 = arith.addf %339, %343 : vector<2x256xf32>
    %c0_366 = arith.constant 0 : index
    %c0_367 = arith.constant 0 : index
    %345 = vector.load %arg8[%c0_366, %c0_367] : memref<1x256xf32, #tpu.memory_space<vmem>>, vector<1x256xf32>
    %346 = vector.broadcast %345 : vector<1x256xf32> to vector<2x256xf32>
    %347 = arith.addf %344, %346 : vector<2x256xf32>
    %cst_368 = arith.constant 0.000000e+00 : f32
    %348 = vector.broadcast %cst_368 : f32 to vector<2x256xf32>
    %349 = arith.maximumf %347, %348 : vector<2x256xf32>
    %c0_369 = arith.constant 0 : index
    %c0_370 = arith.constant 0 : index
    %350 = vector.load %arg9[%c0_369, %c0_370] : memref<256x4xf32, #tpu.memory_space<vmem>>, vector<256x4xf32>
    %cst_371 = arith.constant dense<0.000000e+00> : vector<2x4xf32>
    %351 = tpu.matmul %349, %350, %cst_371 {dimension_numbers = #tpu.dot_dimension_numbers<[1], [0], [0], [1], [0, 0, 1, 1], [], []>} : vector<2x256xf32>, vector<256x4xf32>, vector<2x4xf32> -> vector<2x4xf32>
    %c0_372 = arith.constant 0 : index
    %c0_373 = arith.constant 0 : index
    %352 = vector.load %arg10[%c0_372, %c0_373] : memref<1x4xf32, #tpu.memory_space<vmem>>, vector<1x4xf32>
    %353 = vector.broadcast %352 : vector<1x4xf32> to vector<2x4xf32>
    %354 = arith.addf %351, %353 : vector<2x4xf32>
    %c0_374 = arith.constant 0 : index
    %c0_375 = arith.constant 0 : index
    %355 = vector.load %arg11[%c0_374, %c0_375] : memref<2x4xf32, #tpu.memory_space<vmem>>, vector<2x4xf32>
    tpu.vector_store %arg11[%c0_374, %c0_375], %354 {strides = array<i32>} : memref<2x4xf32, #tpu.memory_space<vmem>>, vector<2x4xf32>,
    return
  }
}

</mosaic_0001>

<llo_original>
// kernel: cnn_policy_forward.1
$region0: #{cnn_policy_forward.1}
  #allocation0 [shape = 'u32[]', space=smem, size = 0x4, offset = 0x4, fixed_abs, tag = 'smem constant byte address 0x4 - core index']
  #allocation1 [shape = 'u32[144,128]{1,0:T(1,128)}', space=vmem, size = 0x12000, scoped, tag = 'internal scratch']
  #allocation2 [shape = 'f32[2,10,10,32]{3,2,1,0:T(8,128)}', space=vmem, size = 0x28000, scoped, tag = 'scratch operand']
  #allocation3 [shape = 'f32[2,64,64]{2,1,0:T(8,128)}', space=vmem, size = 0x10000, scoped, tag = 'scratch operand']
  #allocation4 [shape = 'f32[2,4096]{1,0:T(2,128)}', space=vmem, size = 0x8000, scoped, tag = 'scratch operand']
  %s0 = inlined_call_operand.vmem [shape: f32[2,10,10,4], index: 0, kind: input, shape index: {}]
  %s1 = inlined_call_operand.vmem [shape: f32[2,128], index: 1, kind: input, shape index: {}]
  %s2 = inlined_call_operand.hbm [shape: bf16[9,4,32], index: 2, kind: input, shape index: {}]
  %s3 = inlined_call_operand.hbm [shape: f32[1,32], index: 3, kind: input, shape index: {}]
  %s4 = inlined_call_operand.hbm [shape: bf16[9,32,64], index: 4, kind: input, shape index: {}]
  %s5 = inlined_call_operand.hbm [shape: f32[1,64], index: 5, kind: input, shape index: {}]
  %s6 = inlined_call_operand.hbm [shape: bf16[4096,256], index: 6, kind: input, shape index: {}]
  %s7 = inlined_call_operand.hbm [shape: bf16[128,256], index: 7, kind: input, shape index: {}]
  %s8 = inlined_call_operand.hbm [shape: f32[1,256], index: 8, kind: input, shape index: {}]
  %s9 = inlined_call_operand.vmem [shape: f32[256,4], index: 9, kind: input, shape index: {}]
  %s10 = inlined_call_operand.hbm [shape: f32[1,4], index: 10, kind: input, shape index: {}]
  %s11 = inlined_call_operand.vmem [shape: f32[2,4], index: 11, kind: output, shape index: {}]
  %s12 = sld [smem:[#allocation0]]
  $region86: #{cnn_policy_forward.1} parent=0
    _
  %s14 = ssub.s32 1, %s12
  %s15 = scalar_select 0, %s14, %s12
  $region1: #{cnn_policy_forward.1} parent=0
    #allocation5 [shape = 'u8[9216]{0}', space=vmem, size = 0x2400, scoped, tag = 'input window, operand 2, single buffered']
    #allocation6 [shape = 's32[1]{0}', space=sflag, size = 0x4, scoped, tag = 'scoped memory for cnn_policy_forward.1']
    #allocation7 [shape = 'u8[512]{0}', space=vmem, size = 0x400, scoped, tag = 'input window, operand 3, single buffered']
    #allocation8 [shape = 's32[1]{0}', space=sflag, size = 0x4, scoped, tag = 'scoped memory for cnn_policy_forward.1']
    #allocation9 [shape = 'u8[73728]{0}', space=vmem, size = 0x12000, scoped, tag = 'input window, operand 4, single buffered']
    #allocation10 [shape = 'u8[512]{0}', space=vmem, size = 0x400, scoped, tag = 'input window, operand 5, single buffered']
    #allocation11 [shape = 's32[1]{0}', space=sflag, size = 0x4, scoped, tag = 'scoped memory for cnn_policy_forward.1']
    #allocation12 [shape = 'u8[2097152]{0}', space=vmem, size = 0x200000, scoped, tag = 'input window, operand 6, single buffered']
    #allocation13 [shape = 'u8[65536]{0}', space=vmem, size = 0x10000, scoped, tag = 'input window, operand 7, single buffered']
    #allocation14 [shape = 's32[1]{0}', space=sflag, size = 0x4, scoped, tag = 'scoped memory for cnn_policy_forward.1']
    #allocation15 [shape = 'u8[1024]{0}', space=vmem, size = 0x400, scoped, tag = 'input window, operand 8, single buffered']
    #allocation16 [shape = 'u8[512]{0}', space=vmem, size = 0x400, scoped, tag = 'input window, operand 10, single buffered']
    #allocation17 [shape = 's32[1]{0}', space=sflag, size = 0x4, scoped, tag = 'scoped memory for cnn_policy_forward.1']
    %16 = vsyncpa [#allocation6], 0
    %17 = vsyncpa [#allocation8], 0
    %18 = vsyncpa [#allocation11], 0
    %19 = vsyncpa [#allocation14], 0
    %20 = vsyncpa [#allocation17], 0
    // Predicated region
    $region2: #{cnn_policy_forward.1} parent=1 // pred_check
      _
    $region3: #{cnn_policy_forward.1} parent=1 // pred_check_branch
      %22 = sbr.rel (0) target = $region5
    $region4: #{cnn_policy_forward.1} parent=1 // pred_region
      _
    $region5: #{cnn_policy_forward.1} parent=1 // pred_fallthru
      _
    // Predicated region
    $region6: #{cnn_policy_forward.1} parent=1 // pred_check
      _
    $region7: #{cnn_policy_forward.1} parent=1 // pred_check_branch
      %24 = sbr.rel (0) target = $region9
    $region8: #{cnn_policy_forward.1} parent=1 // pred_region
      _
    $region9: #{cnn_policy_forward.1} parent=1 // pred_fallthru
      _
    // Predicated region
    $region10: #{cnn_policy_forward.1} parent=1 // pred_check
      _
    $region11: #{cnn_policy_forward.1} parent=1 // pred_check_branch
      %26 = sbr.rel (0) target = $region13
    $region12: #{cnn_policy_forward.1} parent=1 // pred_region
      %s28 = ssub.s32 288, 288
      %29 = vsyncadd [#allocation6], %s28
      %s30 = sshll.u32 [#allocation5], 4
      %s31 = int_to_ptr.vmem [resolvable:$true] %s30
      %36 = dma.hbm_to_vmem [thread:$0]  %s2, 288, %s31, [#allocation6], 32, 32, 2
    $region13: #{cnn_policy_forward.1} parent=1 // pred_fallthru
      _
    // Predicated region
    $region14: #{cnn_policy_forward.1} parent=1 // pred_check
      _
    $region15: #{cnn_policy_forward.1} parent=1 // pred_check_branch
      %38 = sbr.rel (0) target = $region17
    $region16: #{cnn_policy_forward.1} parent=1 // pred_region
      %s40 = ssub.s32 16, 16
      %41 = vsyncadd [#allocation8], %s40
      %s43 = sshll.u32 [#allocation7], 4
      %s44 = int_to_ptr.vmem [resolvable:$true] %s43
      %46 = dma.hbm_to_vmem [thread:$0]  %s3, 16, %s44, [#allocation8]
    $region17: #{cnn_policy_forward.1} parent=1 // pred_fallthru
      _
    // Predicated region
    $region18: #{cnn_policy_forward.1} parent=1 // pred_check
      _
    $region19: #{cnn_policy_forward.1} parent=1 // pred_check_branch
      %48 = sbr.rel (0) target = $region21
    $region20: #{cnn_policy_forward.1} parent=1 // pred_region
      %s50 = ssub.s32 2304, 2304
      %51 = vsyncadd [#allocation8], %s50
      %s52 = sshll.u32 [#allocation9], 4
      %s53 = int_to_ptr.vmem [resolvable:$true] %s52
      %58 = dma.hbm_to_vmem [thread:$0]  %s4, 2304, %s53, [#allocation8], 64, 64, 4
    $region21: #{cnn_policy_forward.1} parent=1 // pred_fallthru
      _
    // Predicated region
    $region22: #{cnn_policy_forward.1} parent=1 // pred_check
      _
    $region23: #{cnn_policy_forward.1} parent=1 // pred_check_branch
      %60 = sbr.rel (0) target = $region25
    $region24: #{cnn_policy_forward.1} parent=1 // pred_region
      %s62 = ssub.s32 16, 16
      %63 = vsyncadd [#allocation11], %s62
      %s65 = sshll.u32 [#allocation10], 4
      %s66 = int_to_ptr.vmem [resolvable:$true] %s65
      %68 = dma.hbm_to_vmem [thread:$0]  %s5, 16, %s66, [#allocation11]
    $region25: #{cnn_policy_forward.1} parent=1 // pred_fallthru
      _
    // Predicated region
    $region26: #{cnn_policy_forward.1} parent=1 // pred_check
      _
    $region27: #{cnn_policy_forward.1} parent=1 // pred_check_branch
      %70 = sbr.rel (0) target = $region29
    $region28: #{cnn_policy_forward.1} parent=1 // pred_region
      %s72 = ssub.s32 65536, 65536
      %73 = vsyncadd [#allocation11], %s72
      %s74 = sshll.u32 [#allocation12], 4
      %s75 = int_to_ptr.vmem [resolvable:$true] %s74
      %80 = dma.hbm_to_vmem [thread:$0]  %s6, 65536, %s75, [#allocation11], 128, 128, 8
    $region29: #{cnn_policy_forward.1} parent=1 // pred_fallthru
      _
    // Predicated region
    $region30: #{cnn_policy_forward.1} parent=1 // pred_check
      _
    $region31: #{cnn_policy_forward.1} parent=1 // pred_check_branch
      %82 = sbr.rel (0) target = $region33
    $region32: #{cnn_policy_forward.1} parent=1 // pred_region
      %s84 = ssub.s32 2048, 2048
      %85 = vsyncadd [#allocation14], %s84
      %s86 = sshll.u32 [#allocation13], 4
      %s87 = int_to_ptr.vmem [resolvable:$true] %s86
      %92 = dma.hbm_to_vmem [thread:$0]  %s7, 2048, %s87, [#allocation14], 128, 128, 8
    $region33: #{cnn_policy_forward.1} parent=1 // pred_fallthru
      _
    // Predicated region
    $region34: #{cnn_policy_forward.1} parent=1 // pred_check
      _
    $region35: #{cnn_policy_forward.1} parent=1 // pred_check_branch
      %94 = sbr.rel (0) target = $region37
    $region36: #{cnn_policy_forward.1} parent=1 // pred_region
      %s96 = ssub.s32 32, 32
      %97 = vsyncadd [#allocation14], %s96
      %s99 = sshll.u32 [#allocation15], 4
      %s100 = int_to_ptr.vmem [resolvable:$true] %s99
      %102 = dma.hbm_to_vmem [thread:$0]  %s8, 32, %s100, [#allocation14]
    $region37: #{cnn_policy_forward.1} parent=1 // pred_fallthru
      _
    // Predicated region
    $region38: #{cnn_policy_forward.1} parent=1 // pred_check
      _
    $region39: #{cnn_policy_forward.1} parent=1 // pred_check_branch
      %104 = sbr.rel (0) target = $region41
    $region40: #{cnn_policy_forward.1} parent=1 // pred_region
      _
    $region41: #{cnn_policy_forward.1} parent=1 // pred_fallthru
      _
    // Predicated region
    $region42: #{cnn_policy_forward.1} parent=1 // pred_check
      _
    $region43: #{cnn_policy_forward.1} parent=1 // pred_check_branch
      %106 = sbr.rel (0) target = $region45
    $region44: #{cnn_policy_forward.1} parent=1 // pred_region
      %s108 = ssub.s32 16, 16
      %109 = vsyncadd [#allocation17], %s108
      %s111 = sshll.u32 [#allocation16], 4
      %s112 = int_to_ptr.vmem [resolvable:$true] %s111
      %114 = dma.hbm_to_vmem [thread:$0]  %s10, 16, %s112, [#allocation17]
    $region45: #{cnn_policy_forward.1} parent=1 // pred_fallthru
      _
    // Predicated region
    $region46: #{cnn_policy_forward.1} parent=1 // pred_check
      _
    $region47: #{cnn_policy_forward.1} parent=1 // pred_check_branch
      %116 = sbr.rel (0) target = $region49
    $region48: #{cnn_policy_forward.1} parent=1 // pred_region
      %117 = dma.done [#allocation6], 288
    $region49: #{cnn_policy_forward.1} parent=1 // pred_fallthru
      _
    // Predicated region
    $region50: #{cnn_policy_forward.1} parent=1 // pred_check
      _
    $region51: #{cnn_policy_forward.1} parent=1 // pred_check_branch
      %119 = sbr.rel (0) target = $region53
    $region52: #{cnn_policy_forward.1} parent=1 // pred_region
      %120 = dma.done [#allocation8], 16
    $region53: #{cnn_policy_forward.1} parent=1 // pred_fallthru
      _
    // Predicated region
    $region54: #{cnn_policy_forward.1} parent=1 // pred_check
      _
    $region55: #{cnn_policy_forward.1} parent=1 // pred_check_branch
      %122 = sbr.rel (0) target = $region57
    $region56: #{cnn_policy_forward.1} parent=1 // pred_region
      %123 = dma.done [#allocation8], 2304
    $region57: #{cnn_policy_forward.1} parent=1 // pred_fallthru
      _
    // Predicated region
    $region58: #{cnn_policy_forward.1} parent=1 // pred_check
      _
    $region59: #{cnn_policy_forward.1} parent=1 // pred_check_branch
      %125 = sbr.rel (0) target = $region61
    $region60: #{cnn_policy_forward.1} parent=1 // pred_region
      %126 = dma.done [#allocation11], 16
    $region61: #{cnn_policy_forward.1} parent=1 // pred_fallthru
      _
    // Predicated region
    $region62: #{cnn_policy_forward.1} parent=1 // pred_check
      _
    $region63: #{cnn_policy_forward.1} parent=1 // pred_check_branch
      %128 = sbr.rel (0) target = $region65
    $region64: #{cnn_policy_forward.1} parent=1 // pred_region
      %129 = dma.done [#allocation11], 65536
    $region65: #{cnn_policy_forward.1} parent=1 // pred_fallthru
      _
    // Predicated region
    $region66: #{cnn_policy_forward.1} parent=1 // pred_check
      _
    $region67: #{cnn_policy_forward.1} parent=1 // pred_check_branch
      %131 = sbr.rel (0) target = $region69
    $region68: #{cnn_policy_forward.1} parent=1 // pred_region
      %132 = dma.done [#allocation14], 2048
    $region69: #{cnn_policy_forward.1} parent=1 // pred_fallthru
      _
    // Predicated region
    $region70: #{cnn_policy_forward.1} parent=1 // pred_check
      _
    $region71: #{cnn_policy_forward.1} parent=1 // pred_check_branch
      %134 = sbr.rel (0) target = $region73
    $region72: #{cnn_policy_forward.1} parent=1 // pred_region
      %135 = dma.done [#allocation14], 32
    $region73: #{cnn_policy_forward.1} parent=1 // pred_fallthru
      _
    // Predicated region
    $region74: #{cnn_policy_forward.1} parent=1 // pred_check
      _
    $region75: #{cnn_policy_forward.1} parent=1 // pred_check_branch
      %137 = sbr.rel (0) target = $region77
    $region76: #{cnn_policy_forward.1} parent=1 // pred_region
      %138 = dma.done [#allocation17], 16
    $region77: #{cnn_policy_forward.1} parent=1 // pred_fallthru
      _
    %v140 = vld [vmem:[%s0] sm:$0xff]
    %v141 = vld [vmem:[%s0 + $0x10] sm:$0xff]
    %v142 = vld [vmem:[%s0 + $0x20] sm:$0xff]
    %v143 = vld [vmem:[%s0 + $0x30] sm:$0xff]
    %v144 = vld [vmem:[%s0 + $0x40] sm:$0xff]
    %v145 = vld [vmem:[%s0 + $0x50] sm:$0xff]
    %v146 = vld [vmem:[%s0 + $0x60] sm:$0xff]
    %v147 = vld [vmem:[%s0 + $0x70] sm:$0xff]
    %v148 = vld [vmem:[%s0 + $0xa0] sm:$0xff]
    %v149 = vld [vmem:[%s0 + $0xb0] sm:$0xff]
    %v150 = vld [vmem:[%s0 + $0xc0] sm:$0xff]
    %v151 = vld [vmem:[%s0 + $0xd0] sm:$0xff]
    %v152 = vld [vmem:[%s0 + $0xe0] sm:$0xff]
    %v153 = vld [vmem:[%s0 + $0xf0] sm:$0xff]
    %v154 = vld [vmem:[%s0 + $0x100] sm:$0xff]
    %v155 = vld [vmem:[%s0 + $0x110] sm:$0xff]
    %v156 = vpack.c.bf16 %v141, %v140
    %v157 = vpack.c.bf16 %v143, %v142
    %v158 = vpack.c.bf16 %v145, %v144
    %v159 = vpack.c.bf16 %v147, %v146
    %v160 = vpack.c.bf16 %v149, %v148
    %v161 = vpack.c.bf16 %v151, %v150
    %v162 = vpack.c.bf16 %v153, %v152
    %v163 = vpack.c.bf16 %v155, %v154
    %v164 = vld [vmem:[#allocation5] sm:$0x3]
    %v165 = vld [vmem:[%s0 + $0x1] sm:$0xff]
    %v166 = vld [vmem:[%s0 + $0x11] sm:$0xff]
    %v167 = vld [vmem:[%s0 + $0x21] sm:$0xff]
    %v168 = vld [vmem:[%s0 + $0x31] sm:$0xff]
    %v169 = vld [vmem:[%s0 + $0x41] sm:$0xff]
    %v170 = vld [vmem:[%s0 + $0x51] sm:$0xff]
    %v171 = vld [vmem:[%s0 + $0x61] sm:$0xff]
    %v172 = vld [vmem:[%s0 + $0x71] sm:$0xff]
    %v173 = vld [vmem:[%s0 + $0xa1] sm:$0xff]
    %v174 = vld [vmem:[%s0 + $0xb1] sm:$0xff]
    %v175 = vld [vmem:[%s0 + $0xc1] sm:$0xff]
    %v176 = vld [vmem:[%s0 + $0xd1] sm:$0xff]
    %v177 = vld [vmem:[%s0 + $0xe1] sm:$0xff]
    %v178 = vld [vmem:[%s0 + $0xf1] sm:$0xff]
    %v179 = vld [vmem:[%s0 + $0x101] sm:$0xff]
    %v180 = vld [vmem:[%s0 + $0x111] sm:$0xff]
    %v181 = vpack.c.bf16 %v166, %v165
    %v182 = vpack.c.bf16 %v168, %v167
    %v183 = vpack.c.bf16 %v170, %v169
    %v184 = vpack.c.bf16 %v172, %v171
    %v185 = vpack.c.bf16 %v174, %v173
    %v186 = vpack.c.bf16 %v176, %v175
    %v187 = vpack.c.bf16 %v178, %v177
    %v188 = vpack.c.bf16 %v180, %v179
    %s189 = scalar_lea.vmem [#allocation5], 2
    %v190 = vld [vmem:[%s189] sm:$0x3]
    %vm191 = vcmask 31744
    %v193 = vsel %vm191, %v181, 0
    %v196 = vsel %vm191, %v182, 0
    %v199 = vsel %vm191, %v183, 0
    %v202 = vsel %vm191, %v184, 0
    %v205 = vsel %vm191, %v185, 0
    %v208 = vsel %vm191, %v186, 0
    %v211 = vsel %vm191, %v187, 0
    %v214 = vsel %vm191, %v188, 0
    %vm216 = vcmask 1041408
    %v218 = vsel %vm216, %v190, 0
    %220 = vmatprep.subr.bf16.mxu0 0
    %221 = vmatpush1.bf16.msra.mxu0 0
    %222 = vmatprep.subr.bf16.mxu0 0
    %223 = vmatpush1.bf16.msra.mxu0 0
    %224 = vmatprep.subr.bf16.mxu0 0
    %225 = vmatpush1.bf16.msra.mxu0 0
    %226 = vmatprep.subr.bf16.mxu0 0
    %227 = vmatpush1.bf16.msra.mxu0 0
    %228 = vmatprep.subr.bf16.mxu0 0
    %229 = vmatpush1.bf16.msra.mxu0 0
    %230 = vmatprep.subr.bf16.mxu0 0
    %231 = vmatpush1.bf16.msra.mxu0 0
    %232 = vmatprep.subr.bf16.mxu0 0
    %233 = vmatpush1.bf16.msra.mxu0 0
    %234 = vmatprep.subr.bf16.mxu0 0
    %235 = vmatpush1.bf16.msra.mxu0 %v218
    %236 = vmatprep.subr.bf16.mxu0 0
    %237 = vmatpush2.bf16.msra.mxu0 0
    %238 = vmatprep.subr.bf16.mxu0 0
    %239 = vmatpush2.bf16.msra.mxu0 0
    %240 = vmatprep.subr.bf16.mxu0 0
    %241 = vmatpush2.bf16.msra.mxu0 0
    %242 = vmatprep.subr.bf16.mxu0 0
    %243 = vmatpush2.bf16.msra.mxu0 0
    %244 = vmatprep.subr.bf16.mxu0 0
    %245 = vmatpush2.bf16.msra.mxu0 0
    %246 = vmatprep.subr.bf16.mxu0 0
    %247 = vmatpush2.bf16.msra.mxu0 0
    %248 = vmatprep.subr.bf16.mxu0 0
    %249 = vmatpush2.bf16.msra.mxu0 0
    %250 = vmatprep.subr.bf16.mxu0 0
    %251 = vmatpush2.bf16.msra.mxu0 0
    %252 = vmatprep.mubr.bf16.mxu0 0
    %253 = vmatmul.mubr.bf16.gmra.mxu0 %v193
    %v254 = vpop.f32.mrf.mxu0
    %v255 = vadd.f32 0.0, %v254
    %v256 = vpop.f32.mrf.mxu0
    %v257 = vpop.f32.mrf.mxu0
    %v258 = vadd.f32 0.0, %v257
    %v259 = vpop.f32.mrf.mxu0
    %260 = vmatprep.mubr.bf16.mxu0 0
    %261 = vmatmul.mubr.bf16.gmra.mxu0 %v196
    %v262 = vpop.f32.mrf.mxu0
    %v263 = vadd.f32 0.0, %v262
    %v264 = vpop.f32.mrf.mxu0
    %v265 = vpop.f32.mrf.mxu0
    %v266 = vadd.f32 0.0, %v265
    %v267 = vpop.f32.mrf.mxu0
    %268 = vmatprep.mubr.bf16.mxu0 0
    %269 = vmatmul.mubr.bf16.gmra.mxu0 %v199
    %v270 = vpop.f32.mrf.mxu0
    %v271 = vadd.f32 0.0, %v270
    %v272 = vpop.f32.mrf.mxu0
    %v273 = vpop.f32.mrf.mxu0
    %v274 = vadd.f32 0.0, %v273
    %v275 = vpop.f32.mrf.mxu0
    %276 = vmatprep.mubr.bf16.mxu0 0
    %277 = vmatmul.mubr.bf16.gmra.mxu0 %v202
    %v278 = vpop.f32.mrf.mxu0
    %v279 = vadd.f32 0.0, %v278
    %v280 = vpop.f32.mrf.mxu0
    %v281 = vpop.f32.mrf.mxu0
    %v282 = vadd.f32 0.0, %v281
    %v283 = vpop.f32.mrf.mxu0
    %284 = vmatprep.mubr.bf16.mxu0 0
    %285 = vmatmul.mubr.bf16.gmra.mxu0 %v205
    %v286 = vpop.f32.mrf.mxu0
    %v287 = vadd.f32 0.0, %v286
    %v288 = vpop.f32.mrf.mxu0
    %v289 = vpop.f32.mrf.mxu0
    %v290 = vadd.f32 0.0, %v289
    %v291 = vpop.f32.mrf.mxu0
    %292 = vmatprep.mubr.bf16.mxu0 0
    %293 = vmatmul.mubr.bf16.gmra.mxu0 %v208
    %v294 = vpop.f32.mrf.mxu0
    %v295 = vadd.f32 0.0, %v294
    %v296 = vpop.f32.mrf.mxu0
    %v297 = vpop.f32.mrf.mxu0
    %v298 = vadd.f32 0.0, %v297
    %v299 = vpop.f32.mrf.mxu0
    %300 = vmatprep.mubr.bf16.mxu0 0
    %301 = vmatmul.mubr.bf16.gmra.mxu0 %v211
    %v302 = vpop.f32.mrf.mxu0
    %v303 = vadd.f32 0.0, %v302
    %v304 = vpop.f32.mrf.mxu0
    %v305 = vpop.f32.mrf.mxu0
    %v306 = vadd.f32 0.0, %v305
    %v307 = vpop.f32.mrf.mxu0
    %308 = vmatprep.mubr.bf16.mxu0 0
    %309 = vmatmul.mubr.bf16.gmra.mxu0 %v214
    %v310 = vpop.f32.mrf.mxu0
    %v311 = vadd.f32 0.0, %v310
    %v312 = vpop.f32.mrf.mxu0
    %v313 = vpop.f32.mrf.mxu0
    %v314 = vadd.f32 0.0, %v313
    %v315 = vpop.f32.mrf.mxu0
    %316 = vdwg.mxu0
    %v318 = vsel %vm191, %v156, 0
    %v321 = vsel %vm191, %v157, 0
    %v324 = vsel %vm191, %v158, 0
    %v327 = vsel %vm191, %v159, 0
    %v330 = vsel %vm191, %v160, 0
    %v333 = vsel %vm191, %v161, 0
    %v336 = vsel %vm191, %v162, 0
    %v339 = vsel %vm191, %v163, 0
    %v342 = vsel %vm216, %v164, 0
    %344 = vmatprep.subr.bf16.mxu0 0
    %345 = vmatpush1.bf16.msra.mxu0 0
    %346 = vmatprep.subr.bf16.mxu0 0
    %347 = vmatpush1.bf16.msra.mxu0 0
    %348 = vmatprep.subr.bf16.mxu0 0
    %349 = vmatpush1.bf16.msra.mxu0 0
    %350 = vmatprep.subr.bf16.mxu0 0
    %351 = vmatpush1.bf16.msra.mxu0 0
    %352 = vmatprep.subr.bf16.mxu0 0
    %353 = vmatpush1.bf16.msra.mxu0 0
    %354 = vmatprep.subr.bf16.mxu0 0
    %355 = vmatpush1.bf16.msra.mxu0 0
    %356 = vmatprep.subr.bf16.mxu0 0
    %357 = vmatpush1.bf16.msra.mxu0 0
    %358 = vmatprep.subr.bf16.mxu0 0
    %359 = vmatpush1.bf16.msra.mxu0 %v342
    %360 = vmatprep.subr.bf16.mxu0 0
    %361 = vmatpush2.bf16.msra.mxu0 0
    %362 = vmatprep.subr.bf16.mxu0 0
    %363 = vmatpush2.bf16.msra.mxu0 0
    %364 = vmatprep.subr.bf16.mxu0 0
    %365 = vmatpush2.bf16.msra.mxu0 0
    %366 = vmatprep.subr.bf16.mxu0 0
    %367 = vmatpush2.bf16.msra.mxu0 0
    %368 = vmatprep.subr.bf16.mxu0 0
    %369 = vmatpush2.bf16.msra.mxu0 0
    %370 = vmatprep.subr.bf16.mxu0 0
    %371 = vmatpush2.bf16.msra.mxu0 0
    %372 = vmatprep.subr.bf16.mxu0 0
    %373 = vmatpush2.bf16.msra.mxu0 0
    %374 = vmatprep.subr.bf16.mxu0 0
    %375 = vmatpush2.bf16.msra.mxu0 0
    %376 = vmatprep.mubr.bf16.mxu0 0
    %377 = vmatmul.mubr.bf16.gmra.mxu0 %v318
    %v378 = vpop.f32.mrf.mxu0
    %v379 = vadd.f32 %v255, %v378
    %v380 = vpop.f32.mrf.mxu0
    %v381 = vpop.f32.mrf.mxu0
    %v382 = vadd.f32 %v258, %v381
    %v383 = vpop.f32.mrf.mxu0
    %384 = vmatprep.mubr.bf16.mxu0 0
    %385 = vmatmul.mubr.bf16.gmra.mxu0 %v321
    %v386 = vpop.f32.mrf.mxu0
    %v387 = vadd.f32 %v263, %v386
    %v388 = vpop.f32.mrf.mxu0
    %v389 = vpop.f32.mrf.mxu0
    %v390 = vadd.f32 %v266, %v389
    %v391 = vpop.f32.mrf.mxu0
    %392 = vmatprep.mubr.bf16.mxu0 0
    %393 = vmatmul.mubr.bf16.gmra.mxu0 %v324
    %v394 = vpop.f32.mrf.mxu0
    %v395 = vadd.f32 %v271, %v394
    %v396 = vpop.f32.mrf.mxu0
    %v397 = vpop.f32.mrf.mxu0
    %v398 = vadd.f32 %v274, %v397
    %v399 = vpop.f32.mrf.mxu0
    %400 = vmatprep.mubr.bf16.mxu0 0
    %401 = vmatmul.mubr.bf16.gmra.mxu0 %v327
    %v402 = vpop.f32.mrf.mxu0
    %v403 = vadd.f32 %v279, %v402
    %v404 = vpop.f32.mrf.mxu0
    %v405 = vpop.f32.mrf.mxu0
    %v406 = vadd.f32 %v282, %v405
    %v407 = vpop.f32.mrf.mxu0
    %408 = vmatprep.mubr.bf16.mxu0 0
    %409 = vmatmul.mubr.bf16.gmra.mxu0 %v330
    %v410 = vpop.f32.mrf.mxu0
    %v411 = vadd.f32 %v287, %v410
    %v412 = vpop.f32.mrf.mxu0
    %v413 = vpop.f32.mrf.mxu0
    %v414 = vadd.f32 %v290, %v413
    %v415 = vpop.f32.mrf.mxu0
    %416 = vmatprep.mubr.bf16.mxu0 0
    %417 = vmatmul.mubr.bf16.gmra.mxu0 %v333
    %v418 = vpop.f32.mrf.mxu0
    %v419 = vadd.f32 %v295, %v418
    %v420 = vpop.f32.mrf.mxu0
    %v421 = vpop.f32.mrf.mxu0
    %v422 = vadd.f32 %v298, %v421
    %v423 = vpop.f32.mrf.mxu0
    %424 = vmatprep.mubr.bf16.mxu0 0
    %425 = vmatmul.mubr.bf16.gmra.mxu0 %v336
    %v426 = vpop.f32.mrf.mxu0
    %v427 = vadd.f32 %v303, %v426
    %v428 = vpop.f32.mrf.mxu0
    %v429 = vpop.f32.mrf.mxu0
    %v430 = vadd.f32 %v306, %v429
    %v431 = vpop.f32.mrf.mxu0
    %432 = vmatprep.mubr.bf16.mxu0 0
    %433 = vmatmul.mubr.bf16.gmra.mxu0 %v339
    %v434 = vpop.f32.mrf.mxu0
    %v435 = vadd.f32 %v311, %v434
    %v436 = vpop.f32.mrf.mxu0
    %v437 = vpop.f32.mrf.mxu0
    %v438 = vadd.f32 %v314, %v437
    %v439 = vpop.f32.mrf.mxu0
    %440 = vdwg.mxu0
    %v441 = vld [vmem:[%s0 + $0x2] sm:$0xff]
    %v442 = vld [vmem:[%s0 + $0x12] sm:$0xff]
    %v443 = vld [vmem:[%s0 + $0x22] sm:$0xff]
    %v444 = vld [vmem:[%s0 + $0x32] sm:$0xff]
    %v445 = vld [vmem:[%s0 + $0x42] sm:$0xff]
    %v446 = vld [vmem:[%s0 + $0x52] sm:$0xff]
    %v447 = vld [vmem:[%s0 + $0x62] sm:$0xff]
    %v448 = vld [vmem:[%s0 + $0x72] sm:$0xff]
    %v449 = vld [vmem:[%s0 + $0xa2] sm:$0xff]
    %v450 = vld [vmem:[%s0 + $0xb2] sm:$0xff]
    %v451 = vld [vmem:[%s0 + $0xc2] sm:$0xff]
    %v452 = vld [vmem:[%s0 + $0xd2] sm:$0xff]
    %v453 = vld [vmem:[%s0 + $0xe2] sm:$0xff]
    %v454 = vld [vmem:[%s0 + $0xf2] sm:$0xff]
    %v455 = vld [vmem:[%s0 + $0x102] sm:$0xff]
    %v456 = vld [vmem:[%s0 + $0x112] sm:$0xff]
    %v457 = vpack.c.bf16 %v442, %v441
    %v458 = vpack.c.bf16 %v444, %v443
    %v459 = vpack.c.bf16 %v446, %v445
    %v460 = vpack.c.bf16 %v448, %v447
    %v461 = vpack.c.bf16 %v450, %v449
    %v462 = vpack.c.bf16 %v452, %v451
    %v463 = vpack.c.bf16 %v454, %v453
    %v464 = vpack.c.bf16 %v456, %v455
    %s465 = scalar_lea.vmem [#allocation5], 4
    %v466 = vld [vmem:[%s465] sm:$0x3]
    %v468 = vsel %vm191, %v457, 0
    %v471 = vsel %vm191, %v458, 0
    %v474 = vsel %vm191, %v459, 0
    %v477 = vsel %vm191, %v460, 0
    %v480 = vsel %vm191, %v461, 0
    %v483 = vsel %vm191, %v462, 0
    %v486 = vsel %vm191, %v463, 0
    %v489 = vsel %vm191, %v464, 0
    %v492 = vsel %vm216, %v466, 0
    %494 = vmatprep.subr.bf16.mxu0 0
    %495 = vmatpush1.bf16.msra.mxu0 0
    %496 = vmatprep.subr.bf16.mxu0 0
    %497 = vmatpush1.bf16.msra.mxu0 0
    %498 = vmatprep.subr.bf16.mxu0 0
    %499 = vmatpush1.bf16.msra.mxu0 0
    %500 = vmatprep.subr.bf16.mxu0 0
    %501 = vmatpush1.bf16.msra.mxu0 0
    %502 = vmatprep.subr.bf16.mxu0 0
    %503 = vmatpush1.bf16.msra.mxu0 0
    %504 = vmatprep.subr.bf16.mxu0 0
    %505 = vmatpush1.bf16.msra.mxu0 0
    %506 = vmatprep.subr.bf16.mxu0 0
    %507 = vmatpush1.bf16.msra.mxu0 0
    %508 = vmatprep.subr.bf16.mxu0 0
    %509 = vmatpush1.bf16.msra.mxu0 %v492
    %510 = vmatprep.subr.bf16.mxu0 0
    %511 = vmatpush2.bf16.msra.mxu0 0
    %512 = vmatprep.subr.bf16.mxu0 0
    %513 = vmatpush2.bf16.msra.mxu0 0
    %514 = vmatprep.subr.bf16.mxu0 0
    %515 = vmatpush2.bf16.msra.mxu0 0
    %516 = vmatprep.subr.bf16.mxu0 0
    %517 = vmatpush2.bf16.msra.mxu0 0
    %518 = vmatprep.subr.bf16.mxu0 0
    %519 = vmatpush2.bf16.msra.mxu0 0
    %520 = vmatprep.subr.bf16.mxu0 0
    %521 = vmatpush2.bf16.msra.mxu0 0
    %522 = vmatprep.subr.bf16.mxu0 0
    %523 = vmatpush2.bf16.msra.mxu0 0
    %524 = vmatprep.subr.bf16.mxu0 0
    %525 = vmatpush2.bf16.msra.mxu0 0
    %526 = vmatprep.mubr.bf16.mxu0 0
    %527 = vmatmul.mubr.bf16.gmra.mxu0 %v468
    %v528 = vpop.f32.mrf.mxu0
    %v529 = vadd.f32 0.0, %v528
    %v530 = vpop.f32.mrf.mxu0
    %v531 = vpop.f32.mrf.mxu0
    %v532 = vadd.f32 0.0, %v531
    %v533 = vpop.f32.mrf.mxu0
    %534 = vmatprep.mubr.bf16.mxu0 0
    %535 = vmatmul.mubr.bf16.gmra.mxu0 %v471
    %v536 = vpop.f32.mrf.mxu0
    %v537 = vadd.f32 0.0, %v536
    %v538 = vpop.f32.mrf.mxu0
    %v539 = vpop.f32.mrf.mxu0
    %v540 = vadd.f32 0.0, %v539
    %v541 = vpop.f32.mrf.mxu0
    %542 = vmatprep.mubr.bf16.mxu0 0
    %543 = vmatmul.mubr.bf16.gmra.mxu0 %v474
    %v544 = vpop.f32.mrf.mxu0
    %v545 = vadd.f32 0.0, %v544
    %v546 = vpop.f32.mrf.mxu0
    %v547 = vpop.f32.mrf.mxu0
    %v548 = vadd.f32 0.0, %v547
    %v549 = vpop.f32.mrf.mxu0
    %550 = vmatprep.mubr.bf16.mxu0 0
    %551 = vmatmul.mubr.bf16.gmra.mxu0 %v477
    %v552 = vpop.f32.mrf.mxu0
    %v553 = vadd.f32 0.0, %v552
    %v554 = vpop.f32.mrf.mxu0
    %v555 = vpop.f32.mrf.mxu0
    %v556 = vadd.f32 0.0, %v555
    %v557 = vpop.f32.mrf.mxu0
    %558 = vmatprep.mubr.bf16.mxu0 0
    %559 = vmatmul.mubr.bf16.gmra.mxu0 %v480
    %v560 = vpop.f32.mrf.mxu0
    %v561 = vadd.f32 0.0, %v560
    %v562 = vpop.f32.mrf.mxu0
    %v563 = vpop.f32.mrf.mxu0
    %v564 = vadd.f32 0.0, %v563
    %v565 = vpop.f32.mrf.mxu0
    %566 = vmatprep.mubr.bf16.mxu0 0
    %567 = vmatmul.mubr.bf16.gmra.mxu0 %v483
    %v568 = vpop.f32.mrf.mxu0
    %v569 = vadd.f32 0.0, %v568
    %v570 = vpop.f32.mrf.mxu0
    %v571 = vpop.f32.mrf.mxu0
    %v572 = vadd.f32 0.0, %v571
    %v573 = vpop.f32.mrf.mxu0
    %574 = vmatprep.mubr.bf16.mxu0 0
    %575 = vmatmul.mubr.bf16.gmra.mxu0 %v486
    %v576 = vpop.f32.mrf.mxu0
    %v577 = vadd.f32 0.0, %v576
    %v578 = vpop.f32.mrf.mxu0
    %v579 = vpop.f32.mrf.mxu0
    %v580 = vadd.f32 0.0, %v579
    %v581 = vpop.f32.mrf.mxu0
    %582 = vmatprep.mubr.bf16.mxu0 0
    %583 = vmatmul.mubr.bf16.gmra.mxu0 %v489
    %v584 = vpop.f32.mrf.mxu0
    %v585 = vadd.f32 0.0, %v584
    %v586 = vpop.f32.mrf.mxu0
    %v587 = vpop.f32.mrf.mxu0
    %v588 = vadd.f32 0.0, %v587
    %v589 = vpop.f32.mrf.mxu0
    %590 = vdwg.mxu0
    %v591 = vadd.f32 %v379, %v529
    %v592 = vadd.f32 %v382, %v532
    %v593 = vadd.f32 %v387, %v537
    %v594 = vadd.f32 %v390, %v540
    %v595 = vadd.f32 %v395, %v545
    %v596 = vadd.f32 %v398, %v548
    %v597 = vadd.f32 %v403, %v553
    %v598 = vadd.f32 %v406, %v556
    %v599 = vadd.f32 %v411, %v561
    %v600 = vadd.f32 %v414, %v564
    %v601 = vadd.f32 %v419, %v569
    %v602 = vadd.f32 %v422, %v572
    %v603 = vadd.f32 %v427, %v577
    %v604 = vadd.f32 %v430, %v580
    %v605 = vadd.f32 %v435, %v585
    %v606 = vadd.f32 %v438, %v588
    %s607 = scalar_lea.vmem %s0, 16
    %v608 = vld [vmem:[%s607] sm:$0xff]
    %v609 = vld [vmem:[%s607 + $0x10] sm:$0xff]
    %v610 = vld [vmem:[%s607 + $0x20] sm:$0xff]
    %v611 = vld [vmem:[%s607 + $0x30] sm:$0xff]
    %v612 = vld [vmem:[%s607 + $0x40] sm:$0xff]
    %v613 = vld [vmem:[%s607 + $0x50] sm:$0xff]
    %v614 = vld [vmem:[%s607 + $0x60] sm:$0xff]
    %v615 = vld [vmem:[%s607 + $0x70] sm:$0xff]
    %v616 = vld [vmem:[%s607 + $0xa0] sm:$0xff]
    %v617 = vld [vmem:[%s607 + $0xb0] sm:$0xff]
    %v618 = vld [vmem:[%s607 + $0xc0] sm:$0xff]
    %v619 = vld [vmem:[%s607 + $0xd0] sm:$0xff]
    %v620 = vld [vmem:[%s607 + $0xe0] sm:$0xff]
    %v621 = vld [vmem:[%s607 + $0xf0] sm:$0xff]
    %v622 = vld [vmem:[%s607 + $0x100] sm:$0xff]
    %v623 = vld [vmem:[%s607 + $0x110] sm:$0xff]
    %v624 = vpack.c.bf16 %v609, %v608
    %v625 = vpack.c.bf16 %v611, %v610
    %v626 = vpack.c.bf16 %v613, %v612
    %v627 = vpack.c.bf16 %v615, %v614
    %v628 = vpack.c.bf16 %v617, %v616
    %v629 = vpack.c.bf16 %v619, %v618
    %v630 = vpack.c.bf16 %v621, %v620
    %v631 = vpack.c.bf16 %v623, %v622
    %s632 = scalar_lea.vmem [#allocation5], 6
    %v633 = vld [vmem:[%s632] sm:$0x3]
    %v635 = vsel %vm191, %v624, 0
    %v638 = vsel %vm191, %v625, 0
    %v641 = vsel %vm191, %v626, 0
    %v644 = vsel %vm191, %v627, 0
    %v647 = vsel %vm191, %v628, 0
    %v650 = vsel %vm191, %v629, 0
    %v653 = vsel %vm191, %v630, 0
    %v656 = vsel %vm191, %v631, 0
    %v659 = vsel %vm216, %v633, 0
    %661 = vmatprep.subr.bf16.mxu0 0
    %662 = vmatpush1.bf16.msra.mxu0 0
    %663 = vmatprep.subr.bf16.mxu0 0
    %664 = vmatpush1.bf16.msra.mxu0 0
    %665 = vmatprep.subr.bf16.mxu0 0
    %666 = vmatpush1.bf16.msra.mxu0 0
    %667 = vmatprep.subr.bf16.mxu0 0
    %668 = vmatpush1.bf16.msra.mxu0 0
    %669 = vmatprep.subr.bf16.mxu0 0
    %670 = vmatpush1.bf16.msra.mxu0 0
    %671 = vmatprep.subr.bf16.mxu0 0
    %672 = vmatpush1.bf16.msra.mxu0 0
    %673 = vmatprep.subr.bf16.mxu0 0
    %674 = vmatpush1.bf16.msra.mxu0 0
    %675 = vmatprep.subr.bf16.mxu0 0
    %676 = vmatpush1.bf16.msra.mxu0 %v659
    %677 = vmatprep.subr.bf16.mxu0 0
    %678 = vmatpush2.bf16.msra.mxu0 0
    %679 = vmatprep.subr.bf16.mxu0 0
    %680 = vmatpush2.bf16.msra.mxu0 0
    %681 = vmatprep.subr.bf16.mxu0 0
    %682 = vmatpush2.bf16.msra.mxu0 0
    %683 = vmatprep.subr.bf16.mxu0 0
    %684 = vmatpush2.bf16.msra.mxu0 0
    %685 = vmatprep.subr.bf16.mxu0 0
    %686 = vmatpush2.bf16.msra.mxu0 0
    %687 = vmatprep.subr.bf16.mxu0 0
    %688 = vmatpush2.bf16.msra.mxu0 0
    %689 = vmatprep.subr.bf16.mxu0 0
    %690 = vmatpush2.bf16.msra.mxu0 0
    %691 = vmatprep.subr.bf16.mxu0 0
    %692 = vmatpush2.bf16.msra.mxu0 0
    %693 = vmatprep.mubr.bf16.mxu0 0
    %694 = vmatmul.mubr.bf16.gmra.mxu0 %v635
    %v695 = vpop.f32.mrf.mxu0
    %v696 = vadd.f32 0.0, %v695
    %v697 = vpop.f32.mrf.mxu0
    %v698 = vpop.f32.mrf.mxu0
    %v699 = vadd.f32 0.0, %v698
    %v700 = vpop.f32.mrf.mxu0
    %701 = vmatprep.mubr.bf16.mxu0 0
    %702 = vmatmul.mubr.bf16.gmra.mxu0 %v638
    %v703 = vpop.f32.mrf.mxu0
    %v704 = vadd.f32 0.0, %v703
    %v705 = vpop.f32.mrf.mxu0
    %v706 = vpop.f32.mrf.mxu0
    %v707 = vadd.f32 0.0, %v706
    %v708 = vpop.f32.mrf.mxu0
    %709 = vmatprep.mubr.bf16.mxu0 0
    %710 = vmatmul.mubr.bf16.gmra.mxu0 %v641
    %v711 = vpop.f32.mrf.mxu0
    %v712 = vadd.f32 0.0, %v711
    %v713 = vpop.f32.mrf.mxu0
    %v714 = vpop.f32.mrf.mxu0
    %v715 = vadd.f32 0.0, %v714
    %v716 = vpop.f32.mrf.mxu0
    %717 = vmatprep.mubr.bf16.mxu0 0
    %718 = vmatmul.mubr.bf16.gmra.mxu0 %v644
    %v719 = vpop.f32.mrf.mxu0
    %v720 = vadd.f32 0.0, %v719
    %v721 = vpop.f32.mrf.mxu0
    %v722 = vpop.f32.mrf.mxu0
    %v723 = vadd.f32 0.0, %v722
    %v724 = vpop.f32.mrf.mxu0
    %725 = vmatprep.mubr.bf16.mxu0 0
    %726 = vmatmul.mubr.bf16.gmra.mxu0 %v647
    %v727 = vpop.f32.mrf.mxu0
    %v728 = vadd.f32 0.0, %v727
    %v729 = vpop.f32.mrf.mxu0
    %v730 = vpop.f32.mrf.mxu0
    %v731 = vadd.f32 0.0, %v730
    %v732 = vpop.f32.mrf.mxu0
    %733 = vmatprep.mubr.bf16.mxu0 0
    %734 = vmatmul.mubr.bf16.gmra.mxu0 %v650
    %v735 = vpop.f32.mrf.mxu0
    %v736 = vadd.f32 0.0, %v735
    %v737 = vpop.f32.mrf.mxu0
    %v738 = vpop.f32.mrf.mxu0
    %v739 = vadd.f32 0.0, %v738
    %v740 = vpop.f32.mrf.mxu0
    %741 = vmatprep.mubr.bf16.mxu0 0
    %742 = vmatmul.mubr.bf16.gmra.mxu0 %v653
    %v743 = vpop.f32.mrf.mxu0
    %v744 = vadd.f32 0.0, %v743
    %v745 = vpop.f32.mrf.mxu0
    %v746 = vpop.f32.mrf.mxu0
    %v747 = vadd.f32 0.0, %v746
    %v748 = vpop.f32.mrf.mxu0
    %749 = vmatprep.mubr.bf16.mxu0 0
    %750 = vmatmul.mubr.bf16.gmra.mxu0 %v656
    %v751 = vpop.f32.mrf.mxu0
    %v752 = vadd.f32 0.0, %v751
    %v753 = vpop.f32.mrf.mxu0
    %v754 = vpop.f32.mrf.mxu0
    %v755 = vadd.f32 0.0, %v754
    %v756 = vpop.f32.mrf.mxu0
    %757 = vdwg.mxu0
    %v758 = vadd.f32 %v591, %v696
    %v759 = vadd.f32 %v592, %v699
    %v760 = vadd.f32 %v593, %v704
    %v761 = vadd.f32 %v594, %v707
    %v762 = vadd.f32 %v595, %v712
    %v763 = vadd.f32 %v596, %v715
    %v764 = vadd.f32 %v597, %v720
    %v765 = vadd.f32 %v598, %v723
    %v766 = vadd.f32 %v599, %v728
    %v767 = vadd.f32 %v600, %v731
    %v768 = vadd.f32 %v601, %v736
    %v769 = vadd.f32 %v602, %v739
    %v770 = vadd.f32 %v603, %v744
    %v771 = vadd.f32 %v604, %v747
    %v772 = vadd.f32 %v605, %v752
    %v773 = vadd.f32 %v606, %v755
    %v774 = vld [vmem:[%s607 + $0x1] sm:$0xff]
    %v775 = vld [vmem:[%s607 + $0x11] sm:$0xff]
    %v776 = vld [vmem:[%s607 + $0x21] sm:$0xff]
    %v777 = vld [vmem:[%s607 + $0x31] sm:$0xff]
    %v778 = vld [vmem:[%s607 + $0x41] sm:$0xff]
    %v779 = vld [vmem:[%s607 + $0x51] sm:$0xff]
    %v780 = vld [vmem:[%s607 + $0x61] sm:$0xff]
    %v781 = vld [vmem:[%s607 + $0x71] sm:$0xff]
    %v782 = vld [vmem:[%s607 + $0xa1] sm:$0xff]
    %v783 = vld [vmem:[%s607 + $0xb1] sm:$0xff]
    %v784 = vld [vmem:[%s607 + $0xc1] sm:$0xff]
    %v785 = vld [vmem:[%s607 + $0xd1] sm:$0xff]
    %v786 = vld [vmem:[%s607 + $0xe1] sm:$0xff]
    %v787 = vld [vmem:[%s607 + $0xf1] sm:$0xff]
    %v788 = vld [vmem:[%s607 + $0x101] sm:$0xff]
    %v789 = vld [vmem:[%s607 + $0x111] sm:$0xff]
    %v790 = vpack.c.bf16 %v775, %v774
    %v791 = vpack.c.bf16 %v777, %v776
    %v792 = vpack.c.bf16 %v779, %v778
    %v793 = vpack.c.bf16 %v781, %v780
    %v794 = vpack.c.bf16 %v783, %v782
    %v795 = vpack.c.bf16 %v785, %v784
    %v796 = vpack.c.bf16 %v787, %v786
    %v797 = vpack.c.bf16 %v789, %v788
    %s798 = scalar_lea.vmem [#allocation5], 8
    %v799 = vld [vmem:[%s798] sm:$0x3]
    %v801 = vsel %vm191, %v790, 0
    %v804 = vsel %vm191, %v791, 0
    %v807 = vsel %vm191, %v792, 0
    %v810 = vsel %vm191, %v793, 0
    %v813 = vsel %vm191, %v794, 0
    %v816 = vsel %vm191, %v795, 0
    %v819 = vsel %vm191, %v796, 0
    %v822 = vsel %vm191, %v797, 0
    %v825 = vsel %vm216, %v799, 0
    %827 = vmatprep.subr.bf16.mxu0 0
    %828 = vmatpush1.bf16.msra.mxu0 0
    %829 = vmatprep.subr.bf16.mxu0 0
    %830 = vmatpush1.bf16.msra.mxu0 0
    %831 = vmatprep.subr.bf16.mxu0 0
    %832 = vmatpush1.bf16.msra.mxu0 0
    %833 = vmatprep.subr.bf16.mxu0 0
    %834 = vmatpush1.bf16.msra.mxu0 0
    %835 = vmatprep.subr.bf16.mxu0 0
    %836 = vmatpush1.bf16.msra.mxu0 0
    %837 = vmatprep.subr.bf16.mxu0 0
    %838 = vmatpush1.bf16.msra.mxu0 0
    %839 = vmatprep.subr.bf16.mxu0 0
    %840 = vmatpush1.bf16.msra.mxu0 0
    %841 = vmatprep.subr.bf16.mxu0 0
    %842 = vmatpush1.bf16.msra.mxu0 %v825
    %843 = vmatprep.subr.bf16.mxu0 0
    %844 = vmatpush2.bf16.msra.mxu0 0
    %845 = vmatprep.subr.bf16.mxu0 0
    %846 = vmatpush2.bf16.msra.mxu0 0
    %847 = vmatprep.subr.bf16.mxu0 0
    %848 = vmatpush2.bf16.msra.mxu0 0
    %849 = vmatprep.subr.bf16.mxu0 0
    %850 = vmatpush2.bf16.msra.mxu0 0
    %851 = vmatprep.subr.bf16.mxu0 0
    %852 = vmatpush2.bf16.msra.mxu0 0
    %853 = vmatprep.subr.bf16.mxu0 0
    %854 = vmatpush2.bf16.msra.mxu0 0
    %855 = vmatprep.subr.bf16.mxu0 0
    %856 = vmatpush2.bf16.msra.mxu0 0
    %857 = vmatprep.subr.bf16.mxu0 0
    %858 = vmatpush2.bf16.msra.mxu0 0
    %859 = vmatprep.mubr.bf16.mxu0 0
    %860 = vmatmul.mubr.bf16.gmra.mxu0 %v801
    %v861 = vpop.f32.mrf.mxu0
    %v862 = vadd.f32 0.0, %v861
    %v863 = vpop.f32.mrf.mxu0
    %v864 = vpop.f32.mrf.mxu0
    %v865 = vadd.f32 0.0, %v864
    %v866 = vpop.f32.mrf.mxu0
    %867 = vmatprep.mubr.bf16.mxu0 0
    %868 = vmatmul.mubr.bf16.gmra.mxu0 %v804
    %v869 = vpop.f32.mrf.mxu0
    %v870 = vadd.f32 0.0, %v869
    %v871 = vpop.f32.mrf.mxu0
    %v872 = vpop.f32.mrf.mxu0
    %v873 = vadd.f32 0.0, %v872
    %v874 = vpop.f32.mrf.mxu0
    %875 = vmatprep.mubr.bf16.mxu0 0
    %876 = vmatmul.mubr.bf16.gmra.mxu0 %v807
    %v877 = vpop.f32.mrf.mxu0
    %v878 = vadd.f32 0.0, %v877
    %v879 = vpop.f32.mrf.mxu0
    %v880 = vpop.f32.mrf.mxu0
    %v881 = vadd.f32 0.0, %v880
    %v882 = vpop.f32.mrf.mxu0
    %883 = vmatprep.mubr.bf16.mxu0 0
    %884 = vmatmul.mubr.bf16.gmra.mxu0 %v810
    %v885 = vpop.f32.mrf.mxu0
    %v886 = vadd.f32 0.0, %v885
    %v887 = vpop.f32.mrf.mxu0
    %v888 = vpop.f32.mrf.mxu0
    %v889 = vadd.f32 0.0, %v888
    %v890 = vpop.f32.mrf.mxu0
    %891 = vmatprep.mubr.bf16.mxu0 0
    %892 = vmatmul.mubr.bf16.gmra.mxu0 %v813
    %v893 = vpop.f32.mrf.mxu0
    %v894 = vadd.f32 0.0, %v893
    %v895 = vpop.f32.mrf.mxu0
    %v896 = vpop.f32.mrf.mxu0
    %v897 = vadd.f32 0.0, %v896
    %v898 = vpop.f32.mrf.mxu0
    %899 = vmatprep.mubr.bf16.mxu0 0
    %900 = vmatmul.mubr.bf16.gmra.mxu0 %v816
    %v901 = vpop.f32.mrf.mxu0
    %v902 = vadd.f32 0.0, %v901
    %v903 = vpop.f32.mrf.mxu0
    %v904 = vpop.f32.mrf.mxu0
    %v905 = vadd.f32 0.0, %v904
    %v906 = vpop.f32.mrf.mxu0
    %907 = vmatprep.mubr.bf16.mxu0 0
    %908 = vmatmul.mubr.bf16.gmra.mxu0 %v819
    %v909 = vpop.f32.mrf.mxu0
    %v910 = vadd.f32 0.0, %v909
    %v911 = vpop.f32.mrf.mxu0
    %v912 = vpop.f32.mrf.mxu0
    %v913 = vadd.f32 0.0, %v912
    %v914 = vpop.f32.mrf.mxu0
    %915 = vmatprep.mubr.bf16.mxu0 0
    %916 = vmatmul.mubr.bf16.gmra.mxu0 %v822
    %v917 = vpop.f32.mrf.mxu0
    %v918 = vadd.f32 0.0, %v917
    %v919 = vpop.f32.mrf.mxu0
    %v920 = vpop.f32.mrf.mxu0
    %v921 = vadd.f32 0.0, %v920
    %v922 = vpop.f32.mrf.mxu0
    %923 = vdwg.mxu0
    %v924 = vadd.f32 %v758, %v862
    %v925 = vadd.f32 %v759, %v865
    %v926 = vadd.f32 %v760, %v870
    %v927 = vadd.f32 %v761, %v873
    %v928 = vadd.f32 %v762, %v878
    %v929 = vadd.f32 %v763, %v881
    %v930 = vadd.f32 %v764, %v886
    %v931 = vadd.f32 %v765, %v889
    %v932 = vadd.f32 %v766, %v894
    %v933 = vadd.f32 %v767, %v897
    %v934 = vadd.f32 %v768, %v902
    %v935 = vadd.f32 %v769, %v905
    %v936 = vadd.f32 %v770, %v910
    %v937 = vadd.f32 %v771, %v913
    %v938 = vadd.f32 %v772, %v918
    %v939 = vadd.f32 %v773, %v921
    %v940 = vld [vmem:[%s607 + $0x2] sm:$0xff]
    %v941 = vld [vmem:[%s607 + $0x12] sm:$0xff]
    %v942 = vld [vmem:[%s607 + $0x22] sm:$0xff]
    %v943 = vld [vmem:[%s607 + $0x32] sm:$0xff]
    %v944 = vld [vmem:[%s607 + $0x42] sm:$0xff]
    %v945 = vld [vmem:[%s607 + $0x52] sm:$0xff]
    %v946 = vld [vmem:[%s607 + $0x62] sm:$0xff]
    %v947 = vld [vmem:[%s607 + $0x72] sm:$0xff]
    %v948 = vld [vmem:[%s607 + $0xa2] sm:$0xff]
    %v949 = vld [vmem:[%s607 + $0xb2] sm:$0xff]
    %v950 = vld [vmem:[%s607 + $0xc2] sm:$0xff]
    %v951 = vld [vmem:[%s607 + $0xd2] sm:$0xff]
    %v952 = vld [vmem:[%s607 + $0xe2] sm:$0xff]
    %v953 = vld [vmem:[%s607 + $0xf2] sm:$0xff]
    %v954 = vld [vmem:[%s607 + $0x102] sm:$0xff]
    %v955 = vld [vmem:[%s607 + $0x112] sm:$0xff]
    %v956 = vpack.c.bf16 %v941, %v940
    %v957 = vpack.c.bf16 %v943, %v942
    %v958 = vpack.c.bf16 %v945, %v944
    %v959 = vpack.c.bf16 %v947, %v946
    %v960 = vpack.c.bf16 %v949, %v948
    %v961 = vpack.c.bf16 %v951, %v950
    %v962 = vpack.c.bf16 %v953, %v952
    %v963 = vpack.c.bf16 %v955, %v954
    %s964 = scalar_lea.vmem [#allocation5], 10
    %v965 = vld [vmem:[%s964] sm:$0x3]
    %v967 = vsel %vm191, %v956, 0
    %v970 = vsel %vm191, %v957, 0
    %v973 = vsel %vm191, %v958, 0
    %v976 = vsel %vm191, %v959, 0
    %v979 = vsel %vm191, %v960, 0
    %v982 = vsel %vm191, %v961, 0
    %v985 = vsel %vm191, %v962, 0
    %v988 = vsel %vm191, %v963, 0
    %v991 = vsel %vm216, %v965, 0
    %993 = vmatprep.subr.bf16.mxu0 0
    %994 = vmatpush1.bf16.msra.mxu0 0
    %995 = vmatprep.subr.bf16.mxu0 0
    %996 = vmatpush1.bf16.msra.mxu0 0
    %997 = vmatprep.subr.bf16.mxu0 0
    %998 = vmatpush1.bf16.msra.mxu0 0
    %999 = vmatprep.subr.bf16.mxu0 0
    %1000 = vmatpush1.bf16.msra.mxu0 0
    %1001 = vmatprep.subr.bf16.mxu0 0
    %1002 = vmatpush1.bf16.msra.mxu0 0
    %1003 = vmatprep.subr.bf16.mxu0 0
    %1004 = vmatpush1.bf16.msra.mxu0 0
    %1005 = vmatprep.subr.bf16.mxu0 0
    %1006 = vmatpush1.bf16.msra.mxu0 0
    %1007 = vmatprep.subr.bf16.mxu0 0
    %1008 = vmatpush1.bf16.msra.mxu0 %v991
    %1009 = vmatprep.subr.bf16.mxu0 0
    %1010 = vmatpush2.bf16.msra.mxu0 0
    %1011 = vmatprep.subr.bf16.mxu0 0
    %1012 = vmatpush2.bf16.msra.mxu0 0
    %1013 = vmatprep.subr.bf16.mxu0 0
    %1014 = vmatpush2.bf16.msra.mxu0 0
    %1015 = vmatprep.subr.bf16.mxu0 0
    %1016 = vmatpush2.bf16.msra.mxu0 0
    %1017 = vmatprep.subr.bf16.mxu0 0
    %1018 = vmatpush2.bf16.msra.mxu0 0
    %1019 = vmatprep.subr.bf16.mxu0 0
    %1020 = vmatpush2.bf16.msra.mxu0 0
    %1021 = vmatprep.subr.bf16.mxu0 0
    %1022 = vmatpush2.bf16.msra.mxu0 0
    %1023 = vmatprep.subr.bf16.mxu0 0
    %1024 = vmatpush2.bf16.msra.mxu0 0
    %1025 = vmatprep.mubr.bf16.mxu0 0
    %1026 = vmatmul.mubr.bf16.gmra.mxu0 %v967
    %v1027 = vpop.f32.mrf.mxu0
    %v1028 = vadd.f32 0.0, %v1027
    %v1029 = vpop.f32.mrf.mxu0
    %v1030 = vpop.f32.mrf.mxu0
    %v1031 = vadd.f32 0.0, %v1030
    %v1032 = vpop.f32.mrf.mxu0
    %1033 = vmatprep.mubr.bf16.mxu0 0
    %1034 = vmatmul.mubr.bf16.gmra.mxu0 %v970
    %v1035 = vpop.f32.mrf.mxu0
    %v1036 = vadd.f32 0.0, %v1035
    %v1037 = vpop.f32.mrf.mxu0
    %v1038 = vpop.f32.mrf.mxu0
    %v1039 = vadd.f32 0.0, %v1038
    %v1040 = vpop.f32.mrf.mxu0
    %1041 = vmatprep.mubr.bf16.mxu0 0
    %1042 = vmatmul.mubr.bf16.gmra.mxu0 %v973
    %v1043 = vpop.f32.mrf.mxu0
    %v1044 = vadd.f32 0.0, %v1043
    %v1045 = vpop.f32.mrf.mxu0
    %v1046 = vpop.f32.mrf.mxu0
    %v1047 = vadd.f32 0.0, %v1046
    %v1048 = vpop.f32.mrf.mxu0
    %1049 = vmatprep.mubr.bf16.mxu0 0
    %1050 = vmatmul.mubr.bf16.gmra.mxu0 %v976
    %v1051 = vpop.f32.mrf.mxu0
    %v1052 = vadd.f32 0.0, %v1051
    %v1053 = vpop.f32.mrf.mxu0
    %v1054 = vpop.f32.mrf.mxu0
    %v1055 = vadd.f32 0.0, %v1054
    %v1056 = vpop.f32.mrf.mxu0
    %1057 = vmatprep.mubr.bf16.mxu0 0
    %1058 = vmatmul.mubr.bf16.gmra.mxu0 %v979
    %v1059 = vpop.f32.mrf.mxu0
    %v1060 = vadd.f32 0.0, %v1059
    %v1061 = vpop.f32.mrf.mxu0
    %v1062 = vpop.f32.mrf.mxu0
    %v1063 = vadd.f32 0.0, %v1062
    %v1064 = vpop.f32.mrf.mxu0
    %1065 = vmatprep.mubr.bf16.mxu0 0
    %1066 = vmatmul.mubr.bf16.gmra.mxu0 %v982
    %v1067 = vpop.f32.mrf.mxu0
    %v1068 = vadd.f32 0.0, %v1067
    %v1069 = vpop.f32.mrf.mxu0
    %v1070 = vpop.f32.mrf.mxu0
    %v1071 = vadd.f32 0.0, %v1070
    %v1072 = vpop.f32.mrf.mxu0
    %1073 = vmatprep.mubr.bf16.mxu0 0
    %1074 = vmatmul.mubr.bf16.gmra.mxu0 %v985
    %v1075 = vpop.f32.mrf.mxu0
    %v1076 = vadd.f32 0.0, %v1075
    %v1077 = vpop.f32.mrf.mxu0
    %v1078 = vpop.f32.mrf.mxu0
    %v1079 = vadd.f32 0.0, %v1078
    %v1080 = vpop.f32.mrf.mxu0
    %1081 = vmatprep.mubr.bf16.mxu0 0
    %1082 = vmatmul.mubr.bf16.gmra.mxu0 %v988
    %v1083 = vpop.f32.mrf.mxu0
    %v1084 = vadd.f32 0.0, %v1083
    %v1085 = vpop.f32.mrf.mxu0
    %v1086 = vpop.f32.mrf.mxu0
    %v1087 = vadd.f32 0.0, %v1086
    %v1088 = vpop.f32.mrf.mxu0
    %1089 = vdwg.mxu0
    %v1090 = vadd.f32 %v924, %v1028
    %v1091 = vadd.f32 %v925, %v1031
    %v1092 = vadd.f32 %v926, %v1036
    %v1093 = vadd.f32 %v927, %v1039
    %v1094 = vadd.f32 %v928, %v1044
    %v1095 = vadd.f32 %v929, %v1047
    %v1096 = vadd.f32 %v930, %v1052
    %v1097 = vadd.f32 %v931, %v1055
    %v1098 = vadd.f32 %v932, %v1060
    %v1099 = vadd.f32 %v933, %v1063
    %v1100 = vadd.f32 %v934, %v1068
    %v1101 = vadd.f32 %v935, %v1071
    %v1102 = vadd.f32 %v936, %v1076
    %v1103 = vadd.f32 %v937, %v1079
    %v1104 = vadd.f32 %v938, %v1084
    %v1105 = vadd.f32 %v939, %v1087
    %s1106 = scalar_lea.vmem %s0, 32
    %v1107 = vld [vmem:[%s1106] sm:$0xff]
    %v1108 = vld [vmem:[%s1106 + $0x10] sm:$0xff]
    %v1109 = vld [vmem:[%s1106 + $0x20] sm:$0xff]
    %v1110 = vld [vmem:[%s1106 + $0x30] sm:$0xff]
    %v1111 = vld [vmem:[%s1106 + $0x40] sm:$0xff]
    %v1112 = vld [vmem:[%s1106 + $0x50] sm:$0xff]
    %v1113 = vld [vmem:[%s1106 + $0x60] sm:$0xff]
    %v1114 = vld [vmem:[%s1106 + $0x70] sm:$0xff]
    %v1115 = vld [vmem:[%s1106 + $0xa0] sm:$0xff]
    %v1116 = vld [vmem:[%s1106 + $0xb0] sm:$0xff]
    %v1117 = vld [vmem:[%s1106 + $0xc0] sm:$0xff]
    %v1118 = vld [vmem:[%s1106 + $0xd0] sm:$0xff]
    %v1119 = vld [vmem:[%s1106 + $0xe0] sm:$0xff]
    %v1120 = vld [vmem:[%s1106 + $0xf0] sm:$0xff]
    %v1121 = vld [vmem:[%s1106 + $0x100] sm:$0xff]
    %v1122 = vld [vmem:[%s1106 + $0x110] sm:$0xff]
    %v1123 = vpack.c.bf16 %v1108, %v1107
    %v1124 = vpack.c.bf16 %v1110, %v1109
    %v1125 = vpack.c.bf16 %v1112, %v1111
    %v1126 = vpack.c.bf16 %v1114, %v1113
    %v1127 = vpack.c.bf16 %v1116, %v1115
    %v1128 = vpack.c.bf16 %v1118, %v1117
    %v1129 = vpack.c.bf16 %v1120, %v1119
    %v1130 = vpack.c.bf16 %v1122, %v1121
    %s1131 = scalar_lea.vmem [#allocation5], 12
    %v1132 = vld [vmem:[%s1131] sm:$0x3]
    %v1134 = vsel %vm191, %v1123, 0
    %v1137 = vsel %vm191, %v1124, 0
    %v1140 = vsel %vm191, %v1125, 0
    %v1143 = vsel %vm191, %v1126, 0
    %v1146 = vsel %vm191, %v1127, 0
    %v1149 = vsel %vm191, %v1128, 0
    %v1152 = vsel %vm191, %v1129, 0
    %v1155 = vsel %vm191, %v1130, 0
    %v1158 = vsel %vm216, %v1132, 0
    %1160 = vmatprep.subr.bf16.mxu0 0
    %1161 = vmatpush1.bf16.msra.mxu0 0
    %1162 = vmatprep.subr.bf16.mxu0 0
    %1163 = vmatpush1.bf16.msra.mxu0 0
    %1164 = vmatprep.subr.bf16.mxu0 0
    %1165 = vmatpush1.bf16.msra.mxu0 0
    %1166 = vmatprep.subr.bf16.mxu0 0
    %1167 = vmatpush1.bf16.msra.mxu0 0
    %1168 = vmatprep.subr.bf16.mxu0 0
    %1169 = vmatpush1.bf16.msra.mxu0 0
    %1170 = vmatprep.subr.bf16.mxu0 0
    %1171 = vmatpush1.bf16.msra.mxu0 0
    %1172 = vmatprep.subr.bf16.mxu0 0
    %1173 = vmatpush1.bf16.msra.mxu0 0
    %1174 = vmatprep.subr.bf16.mxu0 0
    %1175 = vmatpush1.bf16.msra.mxu0 %v1158
    %1176 = vmatprep.subr.bf16.mxu0 0
    %1177 = vmatpush2.bf16.msra.mxu0 0
    %1178 = vmatprep.subr.bf16.mxu0 0
    %1179 = vmatpush2.bf16.msra.mxu0 0
    %1180 = vmatprep.subr.bf16.mxu0 0
    %1181 = vmatpush2.bf16.msra.mxu0 0
    %1182 = vmatprep.subr.bf16.mxu0 0
    %1183 = vmatpush2.bf16.msra.mxu0 0
    %1184 = vmatprep.subr.bf16.mxu0 0
    %1185 = vmatpush2.bf16.msra.mxu0 0
    %1186 = vmatprep.subr.bf16.mxu0 0
    %1187 = vmatpush2.bf16.msra.mxu0 0
    %1188 = vmatprep.subr.bf16.mxu0 0
    %1189 = vmatpush2.bf16.msra.mxu0 0
    %1190 = vmatprep.subr.bf16.mxu0 0
    %1191 = vmatpush2.bf16.msra.mxu0 0
    %1192 = vmatprep.mubr.bf16.mxu0 0
    %1193 = vmatmul.mubr.bf16.gmra.mxu0 %v1134
    %v1194 = vpop.f32.mrf.mxu0
    %v1195 = vadd.f32 0.0, %v1194
    %v1196 = vpop.f32.mrf.mxu0
    %v1197 = vpop.f32.mrf.mxu0
    %v1198 = vadd.f32 0.0, %v1197
    %v1199 = vpop.f32.mrf.mxu0
    %1200 = vmatprep.mubr.bf16.mxu0 0
    %1201 = vmatmul.mubr.bf16.gmra.mxu0 %v1137
    %v1202 = vpop.f32.mrf.mxu0
    %v1203 = vadd.f32 0.0, %v1202
    %v1204 = vpop.f32.mrf.mxu0
    %v1205 = vpop.f32.mrf.mxu0
    %v1206 = vadd.f32 0.0, %v1205
    %v1207 = vpop.f32.mrf.mxu0
    %1208 = vmatprep.mubr.bf16.mxu0 0
    %1209 = vmatmul.mubr.bf16.gmra.mxu0 %v1140
    %v1210 = vpop.f32.mrf.mxu0
    %v1211 = vadd.f32 0.0, %v1210
    %v1212 = vpop.f32.mrf.mxu0
    %v1213 = vpop.f32.mrf.mxu0
    %v1214 = vadd.f32 0.0, %v1213
    %v1215 = vpop.f32.mrf.mxu0
    %1216 = vmatprep.mubr.bf16.mxu0 0
    %1217 = vmatmul.mubr.bf16.gmra.mxu0 %v1143
    %v1218 = vpop.f32.mrf.mxu0
    %v1219 = vadd.f32 0.0, %v1218
    %v1220 = vpop.f32.mrf.mxu0
    %v1221 = vpop.f32.mrf.mxu0
    %v1222 = vadd.f32 0.0, %v1221
    %v1223 = vpop.f32.mrf.mxu0
    %1224 = vmatprep.mubr.bf16.mxu0 0
    %1225 = vmatmul.mubr.bf16.gmra.mxu0 %v1146
    %v1226 = vpop.f32.mrf.mxu0
    %v1227 = vadd.f32 0.0, %v1226
    %v1228 = vpop.f32.mrf.mxu0
    %v1229 = vpop.f32.mrf.mxu0
    %v1230 = vadd.f32 0.0, %v1229
    %v1231 = vpop.f32.mrf.mxu0
    %1232 = vmatprep.mubr.bf16.mxu0 0
    %1233 = vmatmul.mubr.bf16.gmra.mxu0 %v1149
    %v1234 = vpop.f32.mrf.mxu0
    %v1235 = vadd.f32 0.0, %v1234
    %v1236 = vpop.f32.mrf.mxu0
    %v1237 = vpop.f32.mrf.mxu0
    %v1238 = vadd.f32 0.0, %v1237
    %v1239 = vpop.f32.mrf.mxu0
    %1240 = vmatprep.mubr.bf16.mxu0 0
    %1241 = vmatmul.mubr.bf16.gmra.mxu0 %v1152
    %v1242 = vpop.f32.mrf.mxu0
    %v1243 = vadd.f32 0.0, %v1242
    %v1244 = vpop.f32.mrf.mxu0
    %v1245 = vpop.f32.mrf.mxu0
    %v1246 = vadd.f32 0.0, %v1245
    %v1247 = vpop.f32.mrf.mxu0
    %1248 = vmatprep.mubr.bf16.mxu0 0
    %1249 = vmatmul.mubr.bf16.gmra.mxu0 %v1155
    %v1250 = vpop.f32.mrf.mxu0
    %v1251 = vadd.f32 0.0, %v1250
    %v1252 = vpop.f32.mrf.mxu0
    %v1253 = vpop.f32.mrf.mxu0
    %v1254 = vadd.f32 0.0, %v1253
    %v1255 = vpop.f32.mrf.mxu0
    %1256 = vdwg.mxu0
    %v1257 = vadd.f32 %v1090, %v1195
    %v1258 = vadd.f32 %v1091, %v1198
    %v1259 = vadd.f32 %v1092, %v1203
    %v1260 = vadd.f32 %v1093, %v1206
    %v1261 = vadd.f32 %v1094, %v1211
    %v1262 = vadd.f32 %v1095, %v1214
    %v1263 = vadd.f32 %v1096, %v1219
    %v1264 = vadd.f32 %v1097, %v1222
    %v1265 = vadd.f32 %v1098, %v1227
    %v1266 = vadd.f32 %v1099, %v1230
    %v1267 = vadd.f32 %v1100, %v1235
    %v1268 = vadd.f32 %v1101, %v1238
    %v1269 = vadd.f32 %v1102, %v1243
    %v1270 = vadd.f32 %v1103, %v1246
    %v1271 = vadd.f32 %v1104, %v1251
    %v1272 = vadd.f32 %v1105, %v1254
    %v1273 = vld [vmem:[%s1106 + $0x1] sm:$0xff]
    %v1274 = vld [vmem:[%s1106 + $0x11] sm:$0xff]
    %v1275 = vld [vmem:[%s1106 + $0x21] sm:$0xff]
    %v1276 = vld [vmem:[%s1106 + $0x31] sm:$0xff]
    %v1277 = vld [vmem:[%s1106 + $0x41] sm:$0xff]
    %v1278 = vld [vmem:[%s1106 + $0x51] sm:$0xff]
    %v1279 = vld [vmem:[%s1106 + $0x61] sm:$0xff]
    %v1280 = vld [vmem:[%s1106 + $0x71] sm:$0xff]
    %v1281 = vld [vmem:[%s1106 + $0xa1] sm:$0xff]
    %v1282 = vld [vmem:[%s1106 + $0xb1] sm:$0xff]
    %v1283 = vld [vmem:[%s1106 + $0xc1] sm:$0xff]
    %v1284 = vld [vmem:[%s1106 + $0xd1] sm:$0xff]
    %v1285 = vld [vmem:[%s1106 + $0xe1] sm:$0xff]
    %v1286 = vld [vmem:[%s1106 + $0xf1] sm:$0xff]
    %v1287 = vld [vmem:[%s1106 + $0x101] sm:$0xff]
    %v1288 = vld [vmem:[%s1106 + $0x111] sm:$0xff]
    %v1289 = vpack.c.bf16 %v1274, %v1273
    %v1290 = vpack.c.bf16 %v1276, %v1275
    %v1291 = vpack.c.bf16 %v1278, %v1277
    %v1292 = vpack.c.bf16 %v1280, %v1279
    %v1293 = vpack.c.bf16 %v1282, %v1281
    %v1294 = vpack.c.bf16 %v1284, %v1283
    %v1295 = vpack.c.bf16 %v1286, %v1285
    %v1296 = vpack.c.bf16 %v1288, %v1287
    %s1297 = scalar_lea.vmem [#allocation5], 14
    %v1298 = vld [vmem:[%s1297] sm:$0x3]
    %v1300 = vsel %vm191, %v1289, 0
    %v1303 = vsel %vm191, %v1290, 0
    %v1306 = vsel %vm191, %v1291, 0
    %v1309 = vsel %vm191, %v1292, 0
    %v1312 = vsel %vm191, %v1293, 0
    %v1315 = vsel %vm191, %v1294, 0
    %v1318 = vsel %vm191, %v1295, 0
    %v1321 = vsel %vm191, %v1296, 0
    %v1324 = vsel %vm216, %v1298, 0
    %1326 = vmatprep.subr.bf16.mxu0 0
    %1327 = vmatpush1.bf16.msra.mxu0 0
    %1328 = vmatprep.subr.bf16.mxu0 0
    %1329 = vmatpush1.bf16.msra.mxu0 0
    %1330 = vmatprep.subr.bf16.mxu0 0
    %1331 = vmatpush1.bf16.msra.mxu0 0
    %1332 = vmatprep.subr.bf16.mxu0 0
    %1333 = vmatpush1.bf16.msra.mxu0 0
    %1334 = vmatprep.subr.bf16.mxu0 0
    %1335 = vmatpush1.bf16.msra.mxu0 0
    %1336 = vmatprep.subr.bf16.mxu0 0
    %1337 = vmatpush1.bf16.msra.mxu0 0
    %1338 = vmatprep.subr.bf16.mxu0 0
    %1339 = vmatpush1.bf16.msra.mxu0 0
    %1340 = vmatprep.subr.bf16.mxu0 0
    %1341 = vmatpush1.bf16.msra.mxu0 %v1324
    %1342 = vmatprep.subr.bf16.mxu0 0
    %1343 = vmatpush2.bf16.msra.mxu0 0
    %1344 = vmatprep.subr.bf16.mxu0 0
    %1345 = vmatpush2.bf16.msra.mxu0 0
    %1346 = vmatprep.subr.bf16.mxu0 0
    %1347 = vmatpush2.bf16.msra.mxu0 0
    %1348 = vmatprep.subr.bf16.mxu0 0
    %1349 = vmatpush2.bf16.msra.mxu0 0
    %1350 = vmatprep.subr.bf16.mxu0 0
    %1351 = vmatpush2.bf16.msra.mxu0 0
    %1352 = vmatprep.subr.bf16.mxu0 0
    %1353 = vmatpush2.bf16.msra.mxu0 0
    %1354 = vmatprep.subr.bf16.mxu0 0
    %1355 = vmatpush2.bf16.msra.mxu0 0
    %1356 = vmatprep.subr.bf16.mxu0 0
    %1357 = vmatpush2.bf16.msra.mxu0 0
    %1358 = vmatprep.mubr.bf16.mxu0 0
    %1359 = vmatmul.mubr.bf16.gmra.mxu0 %v1300
    %v1360 = vpop.f32.mrf.mxu0
    %v1361 = vadd.f32 0.0, %v1360
    %v1362 = vpop.f32.mrf.mxu0
    %v1363 = vpop.f32.mrf.mxu0
    %v1364 = vadd.f32 0.0, %v1363
    %v1365 = vpop.f32.mrf.mxu0
    %1366 = vmatprep.mubr.bf16.mxu0 0
    %1367 = vmatmul.mubr.bf16.gmra.mxu0 %v1303
    %v1368 = vpop.f32.mrf.mxu0
    %v1369 = vadd.f32 0.0, %v1368
    %v1370 = vpop.f32.mrf.mxu0
    %v1371 = vpop.f32.mrf.mxu0
    %v1372 = vadd.f32 0.0, %v1371
    %v1373 = vpop.f32.mrf.mxu0
    %1374 = vmatprep.mubr.bf16.mxu0 0
    %1375 = vmatmul.mubr.bf16.gmra.mxu0 %v1306
    %v1376 = vpop.f32.mrf.mxu0
    %v1377 = vadd.f32 0.0, %v1376
    %v1378 = vpop.f32.mrf.mxu0
    %v1379 = vpop.f32.mrf.mxu0
    %v1380 = vadd.f32 0.0, %v1379
    %v1381 = vpop.f32.mrf.mxu0
    %1382 = vmatprep.mubr.bf16.mxu0 0
    %1383 = vmatmul.mubr.bf16.gmra.mxu0 %v1309
    %v1384 = vpop.f32.mrf.mxu0
    %v1385 = vadd.f32 0.0, %v1384
    %v1386 = vpop.f32.mrf.mxu0
    %v1387 = vpop.f32.mrf.mxu0
    %v1388 = vadd.f32 0.0, %v1387
    %v1389 = vpop.f32.mrf.mxu0
    %1390 = vmatprep.mubr.bf16.mxu0 0
    %1391 = vmatmul.mubr.bf16.gmra.mxu0 %v1312
    %v1392 = vpop.f32.mrf.mxu0
    %v1393 = vadd.f32 0.0, %v1392
    %v1394 = vpop.f32.mrf.mxu0
    %v1395 = vpop.f32.mrf.mxu0
    %v1396 = vadd.f32 0.0, %v1395
    %v1397 = vpop.f32.mrf.mxu0
    %1398 = vmatprep.mubr.bf16.mxu0 0
    %1399 = vmatmul.mubr.bf16.gmra.mxu0 %v1315
    %v1400 = vpop.f32.mrf.mxu0
    %v1401 = vadd.f32 0.0, %v1400
    %v1402 = vpop.f32.mrf.mxu0
    %v1403 = vpop.f32.mrf.mxu0
    %v1404 = vadd.f32 0.0, %v1403
    %v1405 = vpop.f32.mrf.mxu0
    %1406 = vmatprep.mubr.bf16.mxu0 0
    %1407 = vmatmul.mubr.bf16.gmra.mxu0 %v1318
    %v1408 = vpop.f32.mrf.mxu0
    %v1409 = vadd.f32 0.0, %v1408
    %v1410 = vpop.f32.mrf.mxu0
    %v1411 = vpop.f32.mrf.mxu0
    %v1412 = vadd.f32 0.0, %v1411
    %v1413 = vpop.f32.mrf.mxu0
    %1414 = vmatprep.mubr.bf16.mxu0 0
    %1415 = vmatmul.mubr.bf16.gmra.mxu0 %v1321
    %v1416 = vpop.f32.mrf.mxu0
    %v1417 = vadd.f32 0.0, %v1416
    %v1418 = vpop.f32.mrf.mxu0
    %v1419 = vpop.f32.mrf.mxu0
    %v1420 = vadd.f32 0.0, %v1419
    %v1421 = vpop.f32.mrf.mxu0
    %1422 = vdwg.mxu0
    %v1423 = vadd.f32 %v1257, %v1361
    %v1424 = vadd.f32 %v1258, %v1364
    %v1425 = vadd.f32 %v1259, %v1369
    %v1426 = vadd.f32 %v1260, %v1372
    %v1427 = vadd.f32 %v1261, %v1377
    %v1428 = vadd.f32 %v1262, %v1380
    %v1429 = vadd.f32 %v1263, %v1385
    %v1430 = vadd.f32 %v1264, %v1388
    %v1431 = vadd.f32 %v1265, %v1393
    %v1432 = vadd.f32 %v1266, %v1396
    %v1433 = vadd.f32 %v1267, %v1401
    %v1434 = vadd.f32 %v1268, %v1404
    %v1435 = vadd.f32 %v1269, %v1409
    %v1436 = vadd.f32 %v1270, %v1412
    %v1437 = vadd.f32 %v1271, %v1417
    %v1438 = vadd.f32 %v1272, %v1420
    %v1439 = vld [vmem:[%s1106 + $0x2] sm:$0xff]
    %v1440 = vld [vmem:[%s1106 + $0x12] sm:$0xff]
    %v1441 = vld [vmem:[%s1106 + $0x22] sm:$0xff]
    %v1442 = vld [vmem:[%s1106 + $0x32] sm:$0xff]
    %v1443 = vld [vmem:[%s1106 + $0x42] sm:$0xff]
    %v1444 = vld [vmem:[%s1106 + $0x52] sm:$0xff]
    %v1445 = vld [vmem:[%s1106 + $0x62] sm:$0xff]
    %v1446 = vld [vmem:[%s1106 + $0x72] sm:$0xff]
    %v1447 = vld [vmem:[%s1106 + $0xa2] sm:$0xff]
    %v1448 = vld [vmem:[%s1106 + $0xb2] sm:$0xff]
    %v1449 = vld [vmem:[%s1106 + $0xc2] sm:$0xff]
    %v1450 = vld [vmem:[%s1106 + $0xd2] sm:$0xff]
    %v1451 = vld [vmem:[%s1106 + $0xe2] sm:$0xff]
    %v1452 = vld [vmem:[%s1106 + $0xf2] sm:$0xff]
    %v1453 = vld [vmem:[%s1106 + $0x102] sm:$0xff]
    %v1454 = vld [vmem:[%s1106 + $0x112] sm:$0xff]
    %v1455 = vpack.c.bf16 %v1440, %v1439
    %v1456 = vpack.c.bf16 %v1442, %v1441
    %v1457 = vpack.c.bf16 %v1444, %v1443
    %v1458 = vpack.c.bf16 %v1446, %v1445
    %v1459 = vpack.c.bf16 %v1448, %v1447
    %v1460 = vpack.c.bf16 %v1450, %v1449
    %v1461 = vpack.c.bf16 %v1452, %v1451
    %v1462 = vpack.c.bf16 %v1454, %v1453
    %s1463 = scalar_lea.vmem [#allocation5], 16
    %v1464 = vld [vmem:[%s1463] sm:$0x3]
    %v1466 = vsel %vm191, %v1455, 0
    %v1469 = vsel %vm191, %v1456, 0
    %v1472 = vsel %vm191, %v1457, 0
    %v1475 = vsel %vm191, %v1458, 0
    %v1478 = vsel %vm191, %v1459, 0
    %v1481 = vsel %vm191, %v1460, 0
    %v1484 = vsel %vm191, %v1461, 0
    %v1487 = vsel %vm191, %v1462, 0
    %v1490 = vsel %vm216, %v1464, 0
    %1492 = vmatprep.subr.bf16.mxu0 0
    %1493 = vmatpush1.bf16.msra.mxu0 0
    %1494 = vmatprep.subr.bf16.mxu0 0
    %1495 = vmatpush1.bf16.msra.mxu0 0
    %1496 = vmatprep.subr.bf16.mxu0 0
    %1497 = vmatpush1.bf16.msra.mxu0 0
    %1498 = vmatprep.subr.bf16.mxu0 0
    %1499 = vmatpush1.bf16.msra.mxu0 0
    %1500 = vmatprep.subr.bf16.mxu0 0
    %1501 = vmatpush1.bf16.msra.mxu0 0
    %1502 = vmatprep.subr.bf16.mxu0 0
    %1503 = vmatpush1.bf16.msra.mxu0 0
    %1504 = vmatprep.subr.bf16.mxu0 0
    %1505 = vmatpush1.bf16.msra.mxu0 0
    %1506 = vmatprep.subr.bf16.mxu0 0
    %1507 = vmatpush1.bf16.msra.mxu0 %v1490
    %1508 = vmatprep.subr.bf16.mxu0 0
    %1509 = vmatpush2.bf16.msra.mxu0 0
    %1510 = vmatprep.subr.bf16.mxu0 0
    %1511 = vmatpush2.bf16.msra.mxu0 0
    %1512 = vmatprep.subr.bf16.mxu0 0
    %1513 = vmatpush2.bf16.msra.mxu0 0
    %1514 = vmatprep.subr.bf16.mxu0 0
    %1515 = vmatpush2.bf16.msra.mxu0 0
    %1516 = vmatprep.subr.bf16.mxu0 0
    %1517 = vmatpush2.bf16.msra.mxu0 0
    %1518 = vmatprep.subr.bf16.mxu0 0
    %1519 = vmatpush2.bf16.msra.mxu0 0
    %1520 = vmatprep.subr.bf16.mxu0 0
    %1521 = vmatpush2.bf16.msra.mxu0 0
    %1522 = vmatprep.subr.bf16.mxu0 0
    %1523 = vmatpush2.bf16.msra.mxu0 0
    %1524 = vmatprep.mubr.bf16.mxu0 0
    %1525 = vmatmul.mubr.bf16.gmra.mxu0 %v1466
    %v1526 = vpop.f32.mrf.mxu0
    %v1527 = vadd.f32 0.0, %v1526
    %v1528 = vpop.f32.mrf.mxu0
    %v1529 = vpop.f32.mrf.mxu0
    %v1530 = vadd.f32 0.0, %v1529
    %v1531 = vpop.f32.mrf.mxu0
    %1532 = vmatprep.mubr.bf16.mxu0 0
    %1533 = vmatmul.mubr.bf16.gmra.mxu0 %v1469
    %v1534 = vpop.f32.mrf.mxu0
    %v1535 = vadd.f32 0.0, %v1534
    %v1536 = vpop.f32.mrf.mxu0
    %v1537 = vpop.f32.mrf.mxu0
    %v1538 = vadd.f32 0.0, %v1537
    %v1539 = vpop.f32.mrf.mxu0
    %1540 = vmatprep.mubr.bf16.mxu0 0
    %1541 = vmatmul.mubr.bf16.gmra.mxu0 %v1472
    %v1542 = vpop.f32.mrf.mxu0
    %v1543 = vadd.f32 0.0, %v1542
    %v1544 = vpop.f32.mrf.mxu0
    %v1545 = vpop.f32.mrf.mxu0
    %v1546 = vadd.f32 0.0, %v1545
    %v1547 = vpop.f32.mrf.mxu0
    %1548 = vmatprep.mubr.bf16.mxu0 0
    %1549 = vmatmul.mubr.bf16.gmra.mxu0 %v1475
    %v1550 = vpop.f32.mrf.mxu0
    %v1551 = vadd.f32 0.0, %v1550
    %v1552 = vpop.f32.mrf.mxu0
    %v1553 = vpop.f32.mrf.mxu0
    %v1554 = vadd.f32 0.0, %v1553
    %v1555 = vpop.f32.mrf.mxu0
    %1556 = vmatprep.mubr.bf16.mxu0 0
    %1557 = vmatmul.mubr.bf16.gmra.mxu0 %v1478
    %v1558 = vpop.f32.mrf.mxu0
    %v1559 = vadd.f32 0.0, %v1558
    %v1560 = vpop.f32.mrf.mxu0
    %v1561 = vpop.f32.mrf.mxu0
    %v1562 = vadd.f32 0.0, %v1561
    %v1563 = vpop.f32.mrf.mxu0
    %1564 = vmatprep.mubr.bf16.mxu0 0
    %1565 = vmatmul.mubr.bf16.gmra.mxu0 %v1481
    %v1566 = vpop.f32.mrf.mxu0
    %v1567 = vadd.f32 0.0, %v1566
    %v1568 = vpop.f32.mrf.mxu0
    %v1569 = vpop.f32.mrf.mxu0
    %v1570 = vadd.f32 0.0, %v1569
    %v1571 = vpop.f32.mrf.mxu0
    %1572 = vmatprep.mubr.bf16.mxu0 0
    %1573 = vmatmul.mubr.bf16.gmra.mxu0 %v1484
    %v1574 = vpop.f32.mrf.mxu0
    %v1575 = vadd.f32 0.0, %v1574
    %v1576 = vpop.f32.mrf.mxu0
    %v1577 = vpop.f32.mrf.mxu0
    %v1578 = vadd.f32 0.0, %v1577
    %v1579 = vpop.f32.mrf.mxu0
    %1580 = vmatprep.mubr.bf16.mxu0 0
    %1581 = vmatmul.mubr.bf16.gmra.mxu0 %v1487
    %v1582 = vpop.f32.mrf.mxu0
    %v1583 = vadd.f32 0.0, %v1582
    %v1584 = vpop.f32.mrf.mxu0
    %v1585 = vpop.f32.mrf.mxu0
    %v1586 = vadd.f32 0.0, %v1585
    %v1587 = vpop.f32.mrf.mxu0
    %1588 = vdwg.mxu0
    %v1589 = vadd.f32 %v1423, %v1527
    %v1590 = vadd.f32 %v1424, %v1530
    %v1591 = vadd.f32 %v1425, %v1535
    %v1592 = vadd.f32 %v1426, %v1538
    %v1593 = vadd.f32 %v1427, %v1543
    %v1594 = vadd.f32 %v1428, %v1546
    %v1595 = vadd.f32 %v1429, %v1551
    %v1596 = vadd.f32 %v1430, %v1554
    %v1597 = vadd.f32 %v1431, %v1559
    %v1598 = vadd.f32 %v1432, %v1562
    %v1599 = vadd.f32 %v1433, %v1567
    %v1600 = vadd.f32 %v1434, %v1570
    %v1601 = vadd.f32 %v1435, %v1575
    %v1602 = vadd.f32 %v1436, %v1578
    %v1603 = vadd.f32 %v1437, %v1583
    %v1604 = vadd.f32 %v1438, %v1586
    %v1605 = vld [vmem:[#allocation7] sm:$0x1]
    %v1607 = vlaneseq
    %v1608 = vshrl.u32 %v1607, 7
    %v1609 = vsub.s32 0, %v1608
    %v1610 = vrot.slane %v1605, %v1609
    %v1612 = vadd.f32 %v1589, %v1610
    %v1613 = vadd.f32 %v1590, %v1610
    %v1614 = vadd.f32 %v1591, %v1610
    %v1615 = vadd.f32 %v1592, %v1610
    %v1616 = vadd.f32 %v1593, %v1610
    %v1617 = vadd.f32 %v1594, %v1610
    %v1618 = vadd.f32 %v1595, %v1610
    %v1619 = vadd.f32 %v1596, %v1610
    %v1620 = vadd.f32 %v1597, %v1610
    %v1621 = vadd.f32 %v1598, %v1610
    %v1622 = vadd.f32 %v1599, %v1610
    %v1623 = vadd.f32 %v1600, %v1610
    %v1624 = vadd.f32 %v1601, %v1610
    %v1625 = vadd.f32 %v1602, %v1610
    %v1626 = vadd.f32 %v1603, %v1610
    %v1627 = vadd.f32 %v1604, %v1610
    %v1628 = vmax.f32 %v1612, 0.0
    %v1629 = vmax.f32 %v1613, 0.0
    %v1630 = vmax.f32 %v1614, 0.0
    %v1631 = vmax.f32 %v1615, 0.0
    %v1632 = vmax.f32 %v1616, 0.0
    %v1633 = vmax.f32 %v1617, 0.0
    %v1634 = vmax.f32 %v1618, 0.0
    %v1635 = vmax.f32 %v1619, 0.0
    %v1636 = vmax.f32 %v1620, 0.0
    %v1637 = vmax.f32 %v1621, 0.0
    %v1638 = vmax.f32 %v1622, 0.0
    %v1639 = vmax.f32 %v1623, 0.0
    %v1640 = vmax.f32 %v1624, 0.0
    %v1641 = vmax.f32 %v1625, 0.0
    %v1642 = vmax.f32 %v1626, 0.0
    %v1643 = vmax.f32 %v1627, 0.0
    %vm1644 = vcmask 261120
    %1645 = vst.msk [vmem:[#allocation2] sm:$0xff] %vm1644, 0.0
    %vm1646 = vcmask 254976
    %1647 = vst.msk [vmem:[#allocation2 + $0x8] sm:$0x3] %vm1646, 0.0
    %1648 = vst.msk [vmem:[#allocation2 + $0x10] sm:$0xff] %vm1644, 0.0
    %1649 = vst.msk [vmem:[#allocation2 + $0x18] sm:$0x3] %vm1646, 0.0
    %1650 = vst.msk [vmem:[#allocation2 + $0x20] sm:$0xff] %vm1644, 0.0
    %1651 = vst.msk [vmem:[#allocation2 + $0x28] sm:$0x3] %vm1646, 0.0
    %1652 = vst.msk [vmem:[#allocation2 + $0x30] sm:$0xff] %vm1644, 0.0
    %1653 = vst.msk [vmem:[#allocation2 + $0x38] sm:$0x3] %vm1646, 0.0
    %1654 = vst.msk [vmem:[#allocation2 + $0x40] sm:$0xff] %vm1644, 0.0
    %1655 = vst.msk [vmem:[#allocation2 + $0x48] sm:$0x3] %vm1646, 0.0
    %1656 = vst.msk [vmem:[#allocation2 + $0x50] sm:$0xff] %vm1644, 0.0
    %1657 = vst.msk [vmem:[#allocation2 + $0x58] sm:$0x3] %vm1646, 0.0
    %1658 = vst.msk [vmem:[#allocation2 + $0x60] sm:$0xff] %vm1644, 0.0
    %1659 = vst.msk [vmem:[#allocation2 + $0x68] sm:$0x3] %vm1646, 0.0
    %1660 = vst.msk [vmem:[#allocation2 + $0x70] sm:$0xff] %vm1644, 0.0
    %1661 = vst.msk [vmem:[#allocation2 + $0x78] sm:$0x3] %vm1646, 0.0
    %1662 = vst.msk [vmem:[#allocation2 + $0x80] sm:$0xff] %vm1644, 0.0
    %1663 = vst.msk [vmem:[#allocation2 + $0x88] sm:$0x3] %vm1646, 0.0
    %1664 = vst.msk [vmem:[#allocation2 + $0x90] sm:$0xff] %vm1644, 0.0
    %1665 = vst.msk [vmem:[#allocation2 + $0x98] sm:$0x3] %vm1646, 0.0
    %1666 = vst.msk [vmem:[#allocation2 + $0xa0] sm:$0xff] %vm1644, 0.0
    %1667 = vst.msk [vmem:[#allocation2 + $0xa8] sm:$0x3] %vm1646, 0.0
    %1668 = vst.msk [vmem:[#allocation2 + $0xb0] sm:$0xff] %vm1644, 0.0
    %1669 = vst.msk [vmem:[#allocation2 + $0xb8] sm:$0x3] %vm1646, 0.0
    %1670 = vst.msk [vmem:[#allocation2 + $0xc0] sm:$0xff] %vm1644, 0.0
    %1671 = vst.msk [vmem:[#allocation2 + $0xc8] sm:$0x3] %vm1646, 0.0
    %1672 = vst.msk [vmem:[#allocation2 + $0xd0] sm:$0xff] %vm1644, 0.0
    %1673 = vst.msk [vmem:[#allocation2 + $0xd8] sm:$0x3] %vm1646, 0.0
    %1674 = vst.msk [vmem:[#allocation2 + $0xe0] sm:$0xff] %vm1644, 0.0
    %1675 = vst.msk [vmem:[#allocation2 + $0xe8] sm:$0x3] %vm1646, 0.0
    %1676 = vst.msk [vmem:[#allocation2 + $0xf0] sm:$0xff] %vm1644, 0.0
    %1677 = vst.msk [vmem:[#allocation2 + $0xf8] sm:$0x3] %vm1646, 0.0
    %1678 = vst.msk [vmem:[#allocation2 + $0x100] sm:$0xff] %vm1644, 0.0
    %1679 = vst.msk [vmem:[#allocation2 + $0x108] sm:$0x3] %vm1646, 0.0
    %1680 = vst.msk [vmem:[#allocation2 + $0x110] sm:$0xff] %vm1644, 0.0
    %1681 = vst.msk [vmem:[#allocation2 + $0x118] sm:$0x3] %vm1646, 0.0
    %1682 = vst.msk [vmem:[#allocation2 + $0x120] sm:$0xff] %vm1644, 0.0
    %1683 = vst.msk [vmem:[#allocation2 + $0x128] sm:$0x3] %vm1646, 0.0
    %1684 = vst.msk [vmem:[#allocation2 + $0x130] sm:$0xff] %vm1644, 0.0
    %1685 = vst.msk [vmem:[#allocation2 + $0x138] sm:$0x3] %vm1646, 0.0
    %s1686 = scalar_lea.vmem [#allocation2], 16
    %1687 = vst.msk [vmem:[%s1686 + $0x1] sm:$0xff] %vm1644, %v1628
    %1688 = vst.msk [vmem:[%s1686 + $0x11] sm:$0xff] %vm1644, %v1629
    %1689 = vst.msk [vmem:[%s1686 + $0x21] sm:$0xff] %vm1644, %v1630
    %1690 = vst.msk [vmem:[%s1686 + $0x31] sm:$0xff] %vm1644, %v1631
    %1691 = vst.msk [vmem:[%s1686 + $0x41] sm:$0xff] %vm1644, %v1632
    %1692 = vst.msk [vmem:[%s1686 + $0x51] sm:$0xff] %vm1644, %v1633
    %1693 = vst.msk [vmem:[%s1686 + $0x61] sm:$0xff] %vm1644, %v1634
    %1694 = vst.msk [vmem:[%s1686 + $0x71] sm:$0xff] %vm1644, %v1635
    %1695 = vst.msk [vmem:[%s1686 + $0xa1] sm:$0xff] %vm1644, %v1636
    %1696 = vst.msk [vmem:[%s1686 + $0xb1] sm:$0xff] %vm1644, %v1637
    %1697 = vst.msk [vmem:[%s1686 + $0xc1] sm:$0xff] %vm1644, %v1638
    %1698 = vst.msk [vmem:[%s1686 + $0xd1] sm:$0xff] %vm1644, %v1639
    %1699 = vst.msk [vmem:[%s1686 + $0xe1] sm:$0xff] %vm1644, %v1640
    %1700 = vst.msk [vmem:[%s1686 + $0xf1] sm:$0xff] %vm1644, %v1641
    %1701 = vst.msk [vmem:[%s1686 + $0x101] sm:$0xff] %vm1644, %v1642
    %1702 = vst.msk [vmem:[%s1686 + $0x111] sm:$0xff] %vm1644, %v1643
    %v1703 = vld [vmem:[#allocation2] sm:$0xff]
    %v1704 = vld [vmem:[#allocation2 + $0x10] sm:$0xff]
    %v1705 = vld [vmem:[#allocation2 + $0x20] sm:$0xff]
    %v1706 = vld [vmem:[#allocation2 + $0x30] sm:$0xff]
    %v1707 = vld [vmem:[#allocation2 + $0x40] sm:$0xff]
    %v1708 = vld [vmem:[#allocation2 + $0x50] sm:$0xff]
    %v1709 = vld [vmem:[#allocation2 + $0x60] sm:$0xff]
    %v1710 = vld [vmem:[#allocation2 + $0x70] sm:$0xff]
    %v1711 = vld [vmem:[#allocation2 + $0xa0] sm:$0xff]
    %v1712 = vld [vmem:[#allocation2 + $0xb0] sm:$0xff]
    %v1713 = vld [vmem:[#allocation2 + $0xc0] sm:$0xff]
    %v1714 = vld [vmem:[#allocation2 + $0xd0] sm:$0xff]
    %v1715 = vld [vmem:[#allocation2 + $0xe0] sm:$0xff]
    %v1716 = vld [vmem:[#allocation2 + $0xf0] sm:$0xff]
    %v1717 = vld [vmem:[#allocation2 + $0x100] sm:$0xff]
    %v1718 = vld [vmem:[#allocation2 + $0x110] sm:$0xff]
    %v1719 = vpack.c.bf16 %v1704, %v1703
    %v1720 = vpack.c.bf16 %v1706, %v1705
    %v1721 = vpack.c.bf16 %v1708, %v1707
    %v1722 = vpack.c.bf16 %v1710, %v1709
    %v1723 = vpack.c.bf16 %v1712, %v1711
    %v1724 = vpack.c.bf16 %v1714, %v1713
    %v1725 = vpack.c.bf16 %v1716, %v1715
    %v1726 = vpack.c.bf16 %v1718, %v1717
    %v1727 = vld [vmem:[#allocation9] sm:$0xf]
    %v1728 = vld [vmem:[#allocation9 + $0x4] sm:$0xf]
    %v1729 = vld [vmem:[#allocation9 + $0x8] sm:$0xf]
    %v1730 = vld [vmem:[#allocation9 + $0xc] sm:$0xf]
    %v1731 = vld [vmem:[#allocation2 + $0x1] sm:$0xff]
    %v1732 = vld [vmem:[#allocation2 + $0x11] sm:$0xff]
    %v1733 = vld [vmem:[#allocation2 + $0x21] sm:$0xff]
    %v1734 = vld [vmem:[#allocation2 + $0x31] sm:$0xff]
    %v1735 = vld [vmem:[#allocation2 + $0x41] sm:$0xff]
    %v1736 = vld [vmem:[#allocation2 + $0x51] sm:$0xff]
    %v1737 = vld [vmem:[#allocation2 + $0x61] sm:$0xff]
    %v1738 = vld [vmem:[#allocation2 + $0x71] sm:$0xff]
    %v1739 = vld [vmem:[#allocation2 + $0xa1] sm:$0xff]
    %v1740 = vld [vmem:[#allocation2 + $0xb1] sm:$0xff]
    %v1741 = vld [vmem:[#allocation2 + $0xc1] sm:$0xff]
    %v1742 = vld [vmem:[#allocation2 + $0xd1] sm:$0xff]
    %v1743 = vld [vmem:[#allocation2 + $0xe1] sm:$0xff]
    %v1744 = vld [vmem:[#allocation2 + $0xf1] sm:$0xff]
    %v1745 = vld [vmem:[#allocation2 + $0x101] sm:$0xff]
    %v1746 = vld [vmem:[#allocation2 + $0x111] sm:$0xff]
    %v1747 = vpack.c.bf16 %v1732, %v1731
    %v1748 = vpack.c.bf16 %v1734, %v1733
    %v1749 = vpack.c.bf16 %v1736, %v1735
    %v1750 = vpack.c.bf16 %v1738, %v1737
    %v1751 = vpack.c.bf16 %v1740, %v1739
    %v1752 = vpack.c.bf16 %v1742, %v1741
    %v1753 = vpack.c.bf16 %v1744, %v1743
    %v1754 = vpack.c.bf16 %v1746, %v1745
    %s1755 = scalar_lea.vmem [#allocation9], 16
    %v1756 = vld [vmem:[%s1755] sm:$0xf]
    %v1757 = vld [vmem:[%s1755 + $0x4] sm:$0xf]
    %v1758 = vld [vmem:[%s1755 + $0x8] sm:$0xf]
    %v1759 = vld [vmem:[%s1755 + $0xc] sm:$0xf]
    %v1764 = vunpack.c.l.b16 %v1756
    %v1765 = vunpack.c.l.b16 %v1757
    %v1766 = vunpack.c.l.b16 %v1758
    %v1767 = vunpack.c.l.b16 %v1759
    %v1768 = vpack.c.b16 %v1765, %v1764
    %v1769 = vpack.c.b16 %v1767, %v1766
    %v1773 = vsel %vm1644, %v1747, 0
    %v1776 = vsel %vm1644, %v1748, 0
    %v1779 = vsel %vm1644, %v1749, 0
    %v1782 = vsel %vm1644, %v1750, 0
    %v1785 = vsel %vm1644, %v1751, 0
    %v1788 = vsel %vm1644, %v1752, 0
    %v1791 = vsel %vm1644, %v1753, 0
    %v1794 = vsel %vm1644, %v1754, 0
    %1796 = vmatprep.subr.bf16.mxu0 0
    %1797 = vmatpush1.bf16.msra.mxu0 0
    %1798 = vmatprep.subr.bf16.mxu0 0
    %1799 = vmatpush1.bf16.msra.mxu0 0
    %1800 = vmatprep.subr.bf16.mxu0 0
    %1801 = vmatpush1.bf16.msra.mxu0 0
    %1802 = vmatprep.subr.bf16.mxu0 0
    %1803 = vmatpush1.bf16.msra.mxu0 0
    %1804 = vmatprep.subr.bf16.mxu0 0
    %1805 = vmatpush1.bf16.msra.mxu0 0
    %1806 = vmatprep.subr.bf16.mxu0 0
    %1807 = vmatpush1.bf16.msra.mxu0 0
    %1808 = vmatprep.subr.bf16.mxu0 0
    %1809 = vmatpush1.bf16.msra.mxu0 %v1769
    %1810 = vmatprep.subr.bf16.mxu0 0
    %1811 = vmatpush1.bf16.msra.mxu0 %v1768
    %1812 = vmatprep.subr.bf16.mxu0 0
    %1813 = vmatpush2.bf16.msra.mxu0 0
    %1814 = vmatprep.subr.bf16.mxu0 0
    %1815 = vmatpush2.bf16.msra.mxu0 0
    %1816 = vmatprep.subr.bf16.mxu0 0
    %1817 = vmatpush2.bf16.msra.mxu0 0
    %1818 = vmatprep.subr.bf16.mxu0 0
    %1819 = vmatpush2.bf16.msra.mxu0 0
    %1820 = vmatprep.subr.bf16.mxu0 0
    %1821 = vmatpush2.bf16.msra.mxu0 0
    %1822 = vmatprep.subr.bf16.mxu0 0
    %1823 = vmatpush2.bf16.msra.mxu0 0
    %1824 = vmatprep.subr.bf16.mxu0 0
    %1825 = vmatpush2.bf16.msra.mxu0 0
    %1826 = vmatprep.subr.bf16.mxu0 0
    %1827 = vmatpush2.bf16.msra.mxu0 0
    %1828 = vmatprep.mubr.bf16.mxu0 0
    %1829 = vmatmul.mubr.bf16.gmra.mxu0 %v1773
    %v1830 = vpop.f32.mrf.mxu0
    %v1831 = vadd.f32 0.0, %v1830
    %v1832 = vpop.f32.mrf.mxu0
    %v1833 = vpop.f32.mrf.mxu0
    %v1834 = vadd.f32 0.0, %v1833
    %v1835 = vpop.f32.mrf.mxu0
    %1836 = vmatprep.mubr.bf16.mxu0 0
    %1837 = vmatmul.mubr.bf16.gmra.mxu0 %v1776
    %v1838 = vpop.f32.mrf.mxu0
    %v1839 = vadd.f32 0.0, %v1838
    %v1840 = vpop.f32.mrf.mxu0
    %v1841 = vpop.f32.mrf.mxu0
    %v1842 = vadd.f32 0.0, %v1841
    %v1843 = vpop.f32.mrf.mxu0
    %1844 = vmatprep.mubr.bf16.mxu0 0
    %1845 = vmatmul.mubr.bf16.gmra.mxu0 %v1779
    %v1846 = vpop.f32.mrf.mxu0
    %v1847 = vadd.f32 0.0, %v1846
    %v1848 = vpop.f32.mrf.mxu0
    %v1849 = vpop.f32.mrf.mxu0
    %v1850 = vadd.f32 0.0, %v1849
    %v1851 = vpop.f32.mrf.mxu0
    %1852 = vmatprep.mubr.bf16.mxu0 0
    %1853 = vmatmul.mubr.bf16.gmra.mxu0 %v1782
    %v1854 = vpop.f32.mrf.mxu0
    %v1855 = vadd.f32 0.0, %v1854
    %v1856 = vpop.f32.mrf.mxu0
    %v1857 = vpop.f32.mrf.mxu0
    %v1858 = vadd.f32 0.0, %v1857
    %v1859 = vpop.f32.mrf.mxu0
    %1860 = vmatprep.mubr.bf16.mxu0 0
    %1861 = vmatmul.mubr.bf16.gmra.mxu0 %v1785
    %v1862 = vpop.f32.mrf.mxu0
    %v1863 = vadd.f32 0.0, %v1862
    %v1864 = vpop.f32.mrf.mxu0
    %v1865 = vpop.f32.mrf.mxu0
    %v1866 = vadd.f32 0.0, %v1865
    %v1867 = vpop.f32.mrf.mxu0
    %1868 = vmatprep.mubr.bf16.mxu0 0
    %1869 = vmatmul.mubr.bf16.gmra.mxu0 %v1788
    %v1870 = vpop.f32.mrf.mxu0
    %v1871 = vadd.f32 0.0, %v1870
    %v1872 = vpop.f32.mrf.mxu0
    %v1873 = vpop.f32.mrf.mxu0
    %v1874 = vadd.f32 0.0, %v1873
    %v1875 = vpop.f32.mrf.mxu0
    %1876 = vmatprep.mubr.bf16.mxu0 0
    %1877 = vmatmul.mubr.bf16.gmra.mxu0 %v1791
    %v1878 = vpop.f32.mrf.mxu0
    %v1879 = vadd.f32 0.0, %v1878
    %v1880 = vpop.f32.mrf.mxu0
    %v1881 = vpop.f32.mrf.mxu0
    %v1882 = vadd.f32 0.0, %v1881
    %v1883 = vpop.f32.mrf.mxu0
    %1884 = vmatprep.mubr.bf16.mxu0 0
    %1885 = vmatmul.mubr.bf16.gmra.mxu0 %v1794
    %v1886 = vpop.f32.mrf.mxu0
    %v1887 = vadd.f32 0.0, %v1886
    %v1888 = vpop.f32.mrf.mxu0
    %v1889 = vpop.f32.mrf.mxu0
    %v1890 = vadd.f32 0.0, %v1889
    %v1891 = vpop.f32.mrf.mxu0
    %1892 = vdwg.mxu0
    %v1897 = vunpack.c.l.b16 %v1727
    %v1898 = vunpack.c.l.b16 %v1728
    %v1899 = vunpack.c.l.b16 %v1729
    %v1900 = vunpack.c.l.b16 %v1730
    %v1901 = vpack.c.b16 %v1898, %v1897
    %v1902 = vpack.c.b16 %v1900, %v1899
    %v1906 = vsel %vm1644, %v1719, 0
    %v1909 = vsel %vm1644, %v1720, 0
    %v1912 = vsel %vm1644, %v1721, 0
    %v1915 = vsel %vm1644, %v1722, 0
    %v1918 = vsel %vm1644, %v1723, 0
    %v1921 = vsel %vm1644, %v1724, 0
    %v1924 = vsel %vm1644, %v1725, 0
    %v1927 = vsel %vm1644, %v1726, 0
    %1929 = vmatprep.subr.bf16.mxu0 0
    %1930 = vmatpush1.bf16.msra.mxu0 0
    %1931 = vmatprep.subr.bf16.mxu0 0
    %1932 = vmatpush1.bf16.msra.mxu0 0
    %1933 = vmatprep.subr.bf16.mxu0 0
    %1934 = vmatpush1.bf16.msra.mxu0 0
    %1935 = vmatprep.subr.bf16.mxu0 0
    %1936 = vmatpush1.bf16.msra.mxu0 0
    %1937 = vmatprep.subr.bf16.mxu0 0
    %1938 = vmatpush1.bf16.msra.mxu0 0
    %1939 = vmatprep.subr.bf16.mxu0 0
    %1940 = vmatpush1.bf16.msra.mxu0 0
    %1941 = vmatprep.subr.bf16.mxu0 0
    %1942 = vmatpush1.bf16.msra.mxu0 %v1902
    %1943 = vmatprep.subr.bf16.mxu0 0
    %1944 = vmatpush1.bf16.msra.mxu0 %v1901
    %1945 = vmatprep.subr.bf16.mxu0 0
    %1946 = vmatpush2.bf16.msra.mxu0 0
    %1947 = vmatprep.subr.bf16.mxu0 0
    %1948 = vmatpush2.bf16.msra.mxu0 0
    %1949 = vmatprep.subr.bf16.mxu0 0
    %1950 = vmatpush2.bf16.msra.mxu0 0
    %1951 = vmatprep.subr.bf16.mxu0 0
    %1952 = vmatpush2.bf16.msra.mxu0 0
    %1953 = vmatprep.subr.bf16.mxu0 0
    %1954 = vmatpush2.bf16.msra.mxu0 0
    %1955 = vmatprep.subr.bf16.mxu0 0
    %1956 = vmatpush2.bf16.msra.mxu0 0
    %1957 = vmatprep.subr.bf16.mxu0 0
    %1958 = vmatpush2.bf16.msra.mxu0 0
    %1959 = vmatprep.subr.bf16.mxu0 0
    %1960 = vmatpush2.bf16.msra.mxu0 0
    %1961 = vmatprep.mubr.bf16.mxu0 0
    %1962 = vmatmul.mubr.bf16.gmra.mxu0 %v1906
    %v1963 = vpop.f32.mrf.mxu0
    %v1964 = vadd.f32 %v1831, %v1963
    %v1965 = vpop.f32.mrf.mxu0
    %v1966 = vpop.f32.mrf.mxu0
    %v1967 = vadd.f32 %v1834, %v1966
    %v1968 = vpop.f32.mrf.mxu0
    %1969 = vmatprep.mubr.bf16.mxu0 0
    %1970 = vmatmul.mubr.bf16.gmra.mxu0 %v1909
    %v1971 = vpop.f32.mrf.mxu0
    %v1972 = vadd.f32 %v1839, %v1971
    %v1973 = vpop.f32.mrf.mxu0
    %v1974 = vpop.f32.mrf.mxu0
    %v1975 = vadd.f32 %v1842, %v1974
    %v1976 = vpop.f32.mrf.mxu0
    %1977 = vmatprep.mubr.bf16.mxu0 0
    %1978 = vmatmul.mubr.bf16.gmra.mxu0 %v1912
    %v1979 = vpop.f32.mrf.mxu0
    %v1980 = vadd.f32 %v1847, %v1979
    %v1981 = vpop.f32.mrf.mxu0
    %v1982 = vpop.f32.mrf.mxu0
    %v1983 = vadd.f32 %v1850, %v1982
    %v1984 = vpop.f32.mrf.mxu0
    %1985 = vmatprep.mubr.bf16.mxu0 0
    %1986 = vmatmul.mubr.bf16.gmra.mxu0 %v1915
    %v1987 = vpop.f32.mrf.mxu0
    %v1988 = vadd.f32 %v1855, %v1987
    %v1989 = vpop.f32.mrf.mxu0
    %v1990 = vpop.f32.mrf.mxu0
    %v1991 = vadd.f32 %v1858, %v1990
    %v1992 = vpop.f32.mrf.mxu0
    %1993 = vmatprep.mubr.bf16.mxu0 0
    %1994 = vmatmul.mubr.bf16.gmra.mxu0 %v1918
    %v1995 = vpop.f32.mrf.mxu0
    %v1996 = vadd.f32 %v1863, %v1995
    %v1997 = vpop.f32.mrf.mxu0
    %v1998 = vpop.f32.mrf.mxu0
    %v1999 = vadd.f32 %v1866, %v1998
    %v2000 = vpop.f32.mrf.mxu0
    %2001 = vmatprep.mubr.bf16.mxu0 0
    %2002 = vmatmul.mubr.bf16.gmra.mxu0 %v1921
    %v2003 = vpop.f32.mrf.mxu0
    %v2004 = vadd.f32 %v1871, %v2003
    %v2005 = vpop.f32.mrf.mxu0
    %v2006 = vpop.f32.mrf.mxu0
    %v2007 = vadd.f32 %v1874, %v2006
    %v2008 = vpop.f32.mrf.mxu0
    %2009 = vmatprep.mubr.bf16.mxu0 0
    %2010 = vmatmul.mubr.bf16.gmra.mxu0 %v1924
    %v2011 = vpop.f32.mrf.mxu0
    %v2012 = vadd.f32 %v1879, %v2011
    %v2013 = vpop.f32.mrf.mxu0
    %v2014 = vpop.f32.mrf.mxu0
    %v2015 = vadd.f32 %v1882, %v2014
    %v2016 = vpop.f32.mrf.mxu0
    %2017 = vmatprep.mubr.bf16.mxu0 0
    %2018 = vmatmul.mubr.bf16.gmra.mxu0 %v1927
    %v2019 = vpop.f32.mrf.mxu0
    %v2020 = vadd.f32 %v1887, %v2019
    %v2021 = vpop.f32.mrf.mxu0
    %v2022 = vpop.f32.mrf.mxu0
    %v2023 = vadd.f32 %v1890, %v2022
    %v2024 = vpop.f32.mrf.mxu0
    %2025 = vdwg.mxu0
    %v2026 = vld [vmem:[#allocation2 + $0x2] sm:$0xff]
    %v2027 = vld [vmem:[#allocation2 + $0x12] sm:$0xff]
    %v2028 = vld [vmem:[#allocation2 + $0x22] sm:$0xff]
    %v2029 = vld [vmem:[#allocation2 + $0x32] sm:$0xff]
    %v2030 = vld [vmem:[#allocation2 + $0x42] sm:$0xff]
    %v2031 = vld [vmem:[#allocation2 + $0x52] sm:$0xff]
    %v2032 = vld [vmem:[#allocation2 + $0x62] sm:$0xff]
    %v2033 = vld [vmem:[#allocation2 + $0x72] sm:$0xff]
    %v2034 = vld [vmem:[#allocation2 + $0xa2] sm:$0xff]
    %v2035 = vld [vmem:[#allocation2 + $0xb2] sm:$0xff]
    %v2036 = vld [vmem:[#allocation2 + $0xc2] sm:$0xff]
    %v2037 = vld [vmem:[#allocation2 + $0xd2] sm:$0xff]
    %v2038 = vld [vmem:[#allocation2 + $0xe2] sm:$0xff]
    %v2039 = vld [vmem:[#allocation2 + $0xf2] sm:$0xff]
    %v2040 = vld [vmem:[#allocation2 + $0x102] sm:$0xff]
    %v2041 = vld [vmem:[#allocation2 + $0x112] sm:$0xff]
    %v2042 = vpack.c.bf16 %v2027, %v2026
    %v2043 = vpack.c.bf16 %v2029, %v2028
    %v2044 = vpack.c.bf16 %v2031, %v2030
    %v2045 = vpack.c.bf16 %v2033, %v2032
    %v2046 = vpack.c.bf16 %v2035, %v2034
    %v2047 = vpack.c.bf16 %v2037, %v2036
    %v2048 = vpack.c.bf16 %v2039, %v2038
    %v2049 = vpack.c.bf16 %v2041, %v2040
    %s2050 = scalar_lea.vmem [#allocation9], 32
    %v2051 = vld [vmem:[%s2050] sm:$0xf]
    %v2052 = vld [vmem:[%s2050 + $0x4] sm:$0xf]
    %v2053 = vld [vmem:[%s2050 + $0x8] sm:$0xf]
    %v2054 = vld [vmem:[%s2050 + $0xc] sm:$0xf]
    %v2059 = vunpack.c.l.b16 %v2051
    %v2060 = vunpack.c.l.b16 %v2052
    %v2061 = vunpack.c.l.b16 %v2053
    %v2062 = vunpack.c.l.b16 %v2054
    %v2063 = vpack.c.b16 %v2060, %v2059
    %v2064 = vpack.c.b16 %v2062, %v2061
    %v2068 = vsel %vm1644, %v2042, 0
    %v2071 = vsel %vm1644, %v2043, 0
    %v2074 = vsel %vm1644, %v2044, 0
    %v2077 = vsel %vm1644, %v2045, 0
    %v2080 = vsel %vm1644, %v2046, 0
    %v2083 = vsel %vm1644, %v2047, 0
    %v2086 = vsel %vm1644, %v2048, 0
    %v2089 = vsel %vm1644, %v2049, 0
    %2091 = vmatprep.subr.bf16.mxu0 0
    %2092 = vmatpush1.bf16.msra.mxu0 0
    %2093 = vmatprep.subr.bf16.mxu0 0
    %2094 = vmatpush1.bf16.msra.mxu0 0
    %2095 = vmatprep.subr.bf16.mxu0 0
    %2096 = vmatpush1.bf16.msra.mxu0 0
    %2097 = vmatprep.subr.bf16.mxu0 0
    %2098 = vmatpush1.bf16.msra.mxu0 0
    %2099 = vmatprep.subr.bf16.mxu0 0
    %2100 = vmatpush1.bf16.msra.mxu0 0
    %2101 = vmatprep.subr.bf16.mxu0 0
    %2102 = vmatpush1.bf16.msra.mxu0 0
    %2103 = vmatprep.subr.bf16.mxu0 0
    %2104 = vmatpush1.bf16.msra.mxu0 %v2064
    %2105 = vmatprep.subr.bf16.mxu0 0
    %2106 = vmatpush1.bf16.msra.mxu0 %v2063
    %2107 = vmatprep.subr.bf16.mxu0 0
    %2108 = vmatpush2.bf16.msra.mxu0 0
    %2109 = vmatprep.subr.bf16.mxu0 0
    %2110 = vmatpush2.bf16.msra.mxu0 0
    %2111 = vmatprep.subr.bf16.mxu0 0
    %2112 = vmatpush2.bf16.msra.mxu0 0
    %2113 = vmatprep.subr.bf16.mxu0 0
    %2114 = vmatpush2.bf16.msra.mxu0 0
    %2115 = vmatprep.subr.bf16.mxu0 0
    %2116 = vmatpush2.bf16.msra.mxu0 0
    %2117 = vmatprep.subr.bf16.mxu0 0
    %2118 = vmatpush2.bf16.msra.mxu0 0
    %2119 = vmatprep.subr.bf16.mxu0 0
    %2120 = vmatpush2.bf16.msra.mxu0 0
    %2121 = vmatprep.subr.bf16.mxu0 0
    %2122 = vmatpush2.bf16.msra.mxu0 0
    %2123 = vmatprep.mubr.bf16.mxu0 0
    %2124 = vmatmul.mubr.bf16.gmra.mxu0 %v2068
    %v2125 = vpop.f32.mrf.mxu0
    %v2126 = vadd.f32 0.0, %v2125
    %v2127 = vpop.f32.mrf.mxu0
    %v2128 = vpop.f32.mrf.mxu0
    %v2129 = vadd.f32 0.0, %v2128
    %v2130 = vpop.f32.mrf.mxu0
    %2131 = vmatprep.mubr.bf16.mxu0 0
    %2132 = vmatmul.mubr.bf16.gmra.mxu0 %v2071
    %v2133 = vpop.f32.mrf.mxu0
    %v2134 = vadd.f32 0.0, %v2133
    %v2135 = vpop.f32.mrf.mxu0
    %v2136 = vpop.f32.mrf.mxu0
    %v2137 = vadd.f32 0.0, %v2136
    %v2138 = vpop.f32.mrf.mxu0
    %2139 = vmatprep.mubr.bf16.mxu0 0
    %2140 = vmatmul.mubr.bf16.gmra.mxu0 %v2074
    %v2141 = vpop.f32.mrf.mxu0
    %v2142 = vadd.f32 0.0, %v2141
    %v2143 = vpop.f32.mrf.mxu0
    %v2144 = vpop.f32.mrf.mxu0
    %v2145 = vadd.f32 0.0, %v2144
    %v2146 = vpop.f32.mrf.mxu0
    %2147 = vmatprep.mubr.bf16.mxu0 0
    %2148 = vmatmul.mubr.bf16.gmra.mxu0 %v2077
    %v2149 = vpop.f32.mrf.mxu0
    %v2150 = vadd.f32 0.0, %v2149
    %v2151 = vpop.f32.mrf.mxu0
    %v2152 = vpop.f32.mrf.mxu0
    %v2153 = vadd.f32 0.0, %v2152
    %v2154 = vpop.f32.mrf.mxu0
    %2155 = vmatprep.mubr.bf16.mxu0 0
    %2156 = vmatmul.mubr.bf16.gmra.mxu0 %v2080
    %v2157 = vpop.f32.mrf.mxu0
    %v2158 = vadd.f32 0.0, %v2157
    %v2159 = vpop.f32.mrf.mxu0
    %v2160 = vpop.f32.mrf.mxu0
    %v2161 = vadd.f32 0.0, %v2160
    %v2162 = vpop.f32.mrf.mxu0
    %2163 = vmatprep.mubr.bf16.mxu0 0
    %2164 = vmatmul.mubr.bf16.gmra.mxu0 %v2083
    %v2165 = vpop.f32.mrf.mxu0
    %v2166 = vadd.f32 0.0, %v2165
    %v2167 = vpop.f32.mrf.mxu0
    %v2168 = vpop.f32.mrf.mxu0
    %v2169 = vadd.f32 0.0, %v2168
    %v2170 = vpop.f32.mrf.mxu0
    %2171 = vmatprep.mubr.bf16.mxu0 0
    %2172 = vmatmul.mubr.bf16.gmra.mxu0 %v2086
    %v2173 = vpop.f32.mrf.mxu0
    %v2174 = vadd.f32 0.0, %v2173
    %v2175 = vpop.f32.mrf.mxu0
    %v2176 = vpop.f32.mrf.mxu0
    %v2177 = vadd.f32 0.0, %v2176
    %v2178 = vpop.f32.mrf.mxu0
    %2179 = vmatprep.mubr.bf16.mxu0 0
    %2180 = vmatmul.mubr.bf16.gmra.mxu0 %v2089
    %v2181 = vpop.f32.mrf.mxu0
    %v2182 = vadd.f32 0.0, %v2181
    %v2183 = vpop.f32.mrf.mxu0
    %v2184 = vpop.f32.mrf.mxu0
    %v2185 = vadd.f32 0.0, %v2184
    %v2186 = vpop.f32.mrf.mxu0
    %2187 = vdwg.mxu0
    %v2188 = vadd.f32 %v1964, %v2126
    %v2189 = vadd.f32 %v1967, %v2129
    %v2190 = vadd.f32 %v1972, %v2134
    %v2191 = vadd.f32 %v1975, %v2137
    %v2192 = vadd.f32 %v1980, %v2142
    %v2193 = vadd.f32 %v1983, %v2145
    %v2194 = vadd.f32 %v1988, %v2150
    %v2195 = vadd.f32 %v1991, %v2153
    %v2196 = vadd.f32 %v1996, %v2158
    %v2197 = vadd.f32 %v1999, %v2161
    %v2198 = vadd.f32 %v2004, %v2166
    %v2199 = vadd.f32 %v2007, %v2169
    %v2200 = vadd.f32 %v2012, %v2174
    %v2201 = vadd.f32 %v2015, %v2177
    %v2202 = vadd.f32 %v2020, %v2182
    %v2203 = vadd.f32 %v2023, %v2185
    %v2204 = vld [vmem:[%s1686] sm:$0xff]
    %v2205 = vld [vmem:[%s1686 + $0x10] sm:$0xff]
    %v2206 = vld [vmem:[%s1686 + $0x20] sm:$0xff]
    %v2207 = vld [vmem:[%s1686 + $0x30] sm:$0xff]
    %v2208 = vld [vmem:[%s1686 + $0x40] sm:$0xff]
    %v2209 = vld [vmem:[%s1686 + $0x50] sm:$0xff]
    %v2210 = vld [vmem:[%s1686 + $0x60] sm:$0xff]
    %v2211 = vld [vmem:[%s1686 + $0x70] sm:$0xff]
    %v2212 = vld [vmem:[%s1686 + $0xa0] sm:$0xff]
    %v2213 = vld [vmem:[%s1686 + $0xb0] sm:$0xff]
    %v2214 = vld [vmem:[%s1686 + $0xc0] sm:$0xff]
    %v2215 = vld [vmem:[%s1686 + $0xd0] sm:$0xff]
    %v2216 = vld [vmem:[%s1686 + $0xe0] sm:$0xff]
    %v2217 = vld [vmem:[%s1686 + $0xf0] sm:$0xff]
    %v2218 = vld [vmem:[%s1686 + $0x100] sm:$0xff]
    %v2219 = vld [vmem:[%s1686 + $0x110] sm:$0xff]
    %v2220 = vpack.c.bf16 %v2205, %v2204
    %v2221 = vpack.c.bf16 %v2207, %v2206
    %v2222 = vpack.c.bf16 %v2209, %v2208
    %v2223 = vpack.c.bf16 %v2211, %v2210
    %v2224 = vpack.c.bf16 %v2213, %v2212
    %v2225 = vpack.c.bf16 %v2215, %v2214
    %v2226 = vpack.c.bf16 %v2217, %v2216
    %v2227 = vpack.c.bf16 %v2219, %v2218
    %s2228 = scalar_lea.vmem [#allocation9], 48
    %v2229 = vld [vmem:[%s2228] sm:$0xf]
    %v2230 = vld [vmem:[%s2228 + $0x4] sm:$0xf]
    %v2231 = vld [vmem:[%s2228 + $0x8] sm:$0xf]
    %v2232 = vld [vmem:[%s2228 + $0xc] sm:$0xf]
    %v2237 = vunpack.c.l.b16 %v2229
    %v2238 = vunpack.c.l.b16 %v2230
    %v2239 = vunpack.c.l.b16 %v2231
    %v2240 = vunpack.c.l.b16 %v2232
    %v2241 = vpack.c.b16 %v2238, %v2237
    %v2242 = vpack.c.b16 %v2240, %v2239
    %v2246 = vsel %vm1644, %v2220, 0
    %v2249 = vsel %vm1644, %v2221, 0
    %v2252 = vsel %vm1644, %v2222, 0
    %v2255 = vsel %vm1644, %v2223, 0
    %v2258 = vsel %vm1644, %v2224, 0
    %v2261 = vsel %vm1644, %v2225, 0
    %v2264 = vsel %vm1644, %v2226, 0
    %v2267 = vsel %vm1644, %v2227, 0
    %2269 = vmatprep.subr.bf16.mxu0 0
    %2270 = vmatpush1.bf16.msra.mxu0 0
    %2271 = vmatprep.subr.bf16.mxu0 0
    %2272 = vmatpush1.bf16.msra.mxu0 0
    %2273 = vmatprep.subr.bf16.mxu0 0
    %2274 = vmatpush1.bf16.msra.mxu0 0
    %2275 = vmatprep.subr.bf16.mxu0 0
    %2276 = vmatpush1.bf16.msra.mxu0 0
    %2277 = vmatprep.subr.bf16.mxu0 0
    %2278 = vmatpush1.bf16.msra.mxu0 0
    %2279 = vmatprep.subr.bf16.mxu0 0
    %2280 = vmatpush1.bf16.msra.mxu0 0
    %2281 = vmatprep.subr.bf16.mxu0 0
    %2282 = vmatpush1.bf16.msra.mxu0 %v2242
    %2283 = vmatprep.subr.bf16.mxu0 0
    %2284 = vmatpush1.bf16.msra.mxu0 %v2241
    %2285 = vmatprep.subr.bf16.mxu0 0
    %2286 = vmatpush2.bf16.msra.mxu0 0
    %2287 = vmatprep.subr.bf16.mxu0 0
    %2288 = vmatpush2.bf16.msra.mxu0 0
    %2289 = vmatprep.subr.bf16.mxu0 0
    %2290 = vmatpush2.bf16.msra.mxu0 0
    %2291 = vmatprep.subr.bf16.mxu0 0
    %2292 = vmatpush2.bf16.msra.mxu0 0
    %2293 = vmatprep.subr.bf16.mxu0 0
    %2294 = vmatpush2.bf16.msra.mxu0 0
    %2295 = vmatprep.subr.bf16.mxu0 0
    %2296 = vmatpush2.bf16.msra.mxu0 0
    %2297 = vmatprep.subr.bf16.mxu0 0
    %2298 = vmatpush2.bf16.msra.mxu0 0
    %2299 = vmatprep.subr.bf16.mxu0 0
    %2300 = vmatpush2.bf16.msra.mxu0 0
    %2301 = vmatprep.mubr.bf16.mxu0 0
    %2302 = vmatmul.mubr.bf16.gmra.mxu0 %v2246
    %v2303 = vpop.f32.mrf.mxu0
    %v2304 = vadd.f32 0.0, %v2303
    %v2305 = vpop.f32.mrf.mxu0
    %v2306 = vpop.f32.mrf.mxu0
    %v2307 = vadd.f32 0.0, %v2306
    %v2308 = vpop.f32.mrf.mxu0
    %2309 = vmatprep.mubr.bf16.mxu0 0
    %2310 = vmatmul.mubr.bf16.gmra.mxu0 %v2249
    %v2311 = vpop.f32.mrf.mxu0
    %v2312 = vadd.f32 0.0, %v2311
    %v2313 = vpop.f32.mrf.mxu0
    %v2314 = vpop.f32.mrf.mxu0
    %v2315 = vadd.f32 0.0, %v2314
    %v2316 = vpop.f32.mrf.mxu0
    %2317 = vmatprep.mubr.bf16.mxu0 0
    %2318 = vmatmul.mubr.bf16.gmra.mxu0 %v2252
    %v2319 = vpop.f32.mrf.mxu0
    %v2320 = vadd.f32 0.0, %v2319
    %v2321 = vpop.f32.mrf.mxu0
    %v2322 = vpop.f32.mrf.mxu0
    %v2323 = vadd.f32 0.0, %v2322
    %v2324 = vpop.f32.mrf.mxu0
    %2325 = vmatprep.mubr.bf16.mxu0 0
    %2326 = vmatmul.mubr.bf16.gmra.mxu0 %v2255
    %v2327 = vpop.f32.mrf.mxu0
    %v2328 = vadd.f32 0.0, %v2327
    %v2329 = vpop.f32.mrf.mxu0
    %v2330 = vpop.f32.mrf.mxu0
    %v2331 = vadd.f32 0.0, %v2330
    %v2332 = vpop.f32.mrf.mxu0
    %2333 = vmatprep.mubr.bf16.mxu0 0
    %2334 = vmatmul.mubr.bf16.gmra.mxu0 %v2258
    %v2335 = vpop.f32.mrf.mxu0
    %v2336 = vadd.f32 0.0, %v2335
    %v2337 = vpop.f32.mrf.mxu0
    %v2338 = vpop.f32.mrf.mxu0
    %v2339 = vadd.f32 0.0, %v2338
    %v2340 = vpop.f32.mrf.mxu0
    %2341 = vmatprep.mubr.bf16.mxu0 0
    %2342 = vmatmul.mubr.bf16.gmra.mxu0 %v2261
    %v2343 = vpop.f32.mrf.mxu0
    %v2344 = vadd.f32 0.0, %v2343
    %v2345 = vpop.f32.mrf.mxu0
    %v2346 = vpop.f32.mrf.mxu0
    %v2347 = vadd.f32 0.0, %v2346
    %v2348 = vpop.f32.mrf.mxu0
    %2349 = vmatprep.mubr.bf16.mxu0 0
    %2350 = vmatmul.mubr.bf16.gmra.mxu0 %v2264
    %v2351 = vpop.f32.mrf.mxu0
    %v2352 = vadd.f32 0.0, %v2351
    %v2353 = vpop.f32.mrf.mxu0
    %v2354 = vpop.f32.mrf.mxu0
    %v2355 = vadd.f32 0.0, %v2354
    %v2356 = vpop.f32.mrf.mxu0
    %2357 = vmatprep.mubr.bf16.mxu0 0
    %2358 = vmatmul.mubr.bf16.gmra.mxu0 %v2267
    %v2359 = vpop.f32.mrf.mxu0
    %v2360 = vadd.f32 0.0, %v2359
    %v2361 = vpop.f32.mrf.mxu0
    %v2362 = vpop.f32.mrf.mxu0
    %v2363 = vadd.f32 0.0, %v2362
    %v2364 = vpop.f32.mrf.mxu0
    %2365 = vdwg.mxu0
    %v2366 = vadd.f32 %v2188, %v2304
    %v2367 = vadd.f32 %v2189, %v2307
    %v2368 = vadd.f32 %v2190, %v2312
    %v2369 = vadd.f32 %v2191, %v2315
    %v2370 = vadd.f32 %v2192, %v2320
    %v2371 = vadd.f32 %v2193, %v2323
    %v2372 = vadd.f32 %v2194, %v2328
    %v2373 = vadd.f32 %v2195, %v2331
    %v2374 = vadd.f32 %v2196, %v2336
    %v2375 = vadd.f32 %v2197, %v2339
    %v2376 = vadd.f32 %v2198, %v2344
    %v2377 = vadd.f32 %v2199, %v2347
    %v2378 = vadd.f32 %v2200, %v2352
    %v2379 = vadd.f32 %v2201, %v2355
    %v2380 = vadd.f32 %v2202, %v2360
    %v2381 = vadd.f32 %v2203, %v2363
    %v2382 = vld [vmem:[%s1686 + $0x1] sm:$0xff]
    %v2383 = vld [vmem:[%s1686 + $0x11] sm:$0xff]
    %v2384 = vld [vmem:[%s1686 + $0x21] sm:$0xff]
    %v2385 = vld [vmem:[%s1686 + $0x31] sm:$0xff]
    %v2386 = vld [vmem:[%s1686 + $0x41] sm:$0xff]
    %v2387 = vld [vmem:[%s1686 + $0x51] sm:$0xff]
    %v2388 = vld [vmem:[%s1686 + $0x61] sm:$0xff]
    %v2389 = vld [vmem:[%s1686 + $0x71] sm:$0xff]
    %v2390 = vld [vmem:[%s1686 + $0xa1] sm:$0xff]
    %v2391 = vld [vmem:[%s1686 + $0xb1] sm:$0xff]
    %v2392 = vld [vmem:[%s1686 + $0xc1] sm:$0xff]
    %v2393 = vld [vmem:[%s1686 + $0xd1] sm:$0xff]
    %v2394 = vld [vmem:[%s1686 + $0xe1] sm:$0xff]
    %v2395 = vld [vmem:[%s1686 + $0xf1] sm:$0xff]
    %v2396 = vld [vmem:[%s1686 + $0x101] sm:$0xff]
    %v2397 = vld [vmem:[%s1686 + $0x111] sm:$0xff]
    %v2398 = vpack.c.bf16 %v2383, %v2382
    %v2399 = vpack.c.bf16 %v2385, %v2384
    %v2400 = vpack.c.bf16 %v2387, %v2386
    %v2401 = vpack.c.bf16 %v2389, %v2388
    %v2402 = vpack.c.bf16 %v2391, %v2390
    %v2403 = vpack.c.bf16 %v2393, %v2392
    %v2404 = vpack.c.bf16 %v2395, %v2394
    %v2405 = vpack.c.bf16 %v2397, %v2396
    %s2406 = scalar_lea.vmem [#allocation9], 64
    %v2407 = vld [vmem:[%s2406] sm:$0xf]
    %v2408 = vld [vmem:[%s2406 + $0x4] sm:$0xf]
    %v2409 = vld [vmem:[%s2406 + $0x8] sm:$0xf]
    %v2410 = vld [vmem:[%s2406 + $0xc] sm:$0xf]
    %v2415 = vunpack.c.l.b16 %v2407
    %v2416 = vunpack.c.l.b16 %v2408
    %v2417 = vunpack.c.l.b16 %v2409
    %v2418 = vunpack.c.l.b16 %v2410
    %v2419 = vpack.c.b16 %v2416, %v2415
    %v2420 = vpack.c.b16 %v2418, %v2417
    %v2424 = vsel %vm1644, %v2398, 0
    %v2427 = vsel %vm1644, %v2399, 0
    %v2430 = vsel %vm1644, %v2400, 0
    %v2433 = vsel %vm1644, %v2401, 0
    %v2436 = vsel %vm1644, %v2402, 0
    %v2439 = vsel %vm1644, %v2403, 0
    %v2442 = vsel %vm1644, %v2404, 0
    %v2445 = vsel %vm1644, %v2405, 0
    %2447 = vmatprep.subr.bf16.mxu0 0
    %2448 = vmatpush1.bf16.msra.mxu0 0
    %2449 = vmatprep.subr.bf16.mxu0 0
    %2450 = vmatpush1.bf16.msra.mxu0 0
    %2451 = vmatprep.subr.bf16.mxu0 0
    %2452 = vmatpush1.bf16.msra.mxu0 0
    %2453 = vmatprep.subr.bf16.mxu0 0
    %2454 = vmatpush1.bf16.msra.mxu0 0
    %2455 = vmatprep.subr.bf16.mxu0 0
    %2456 = vmatpush1.bf16.msra.mxu0 0
    %2457 = vmatprep.subr.bf16.mxu0 0
    %2458 = vmatpush1.bf16.msra.mxu0 0
    %2459 = vmatprep.subr.bf16.mxu0 0
    %2460 = vmatpush1.bf16.msra.mxu0 %v2420
    %2461 = vmatprep.subr.bf16.mxu0 0
    %2462 = vmatpush1.bf16.msra.mxu0 %v2419
    %2463 = vmatprep.subr.bf16.mxu0 0
    %2464 = vmatpush2.bf16.msra.mxu0 0
    %2465 = vmatprep.subr.bf16.mxu0 0
    %2466 = vmatpush2.bf16.msra.mxu0 0
    %2467 = vmatprep.subr.bf16.mxu0 0
    %2468 = vmatpush2.bf16.msra.mxu0 0
    %2469 = vmatprep.subr.bf16.mxu0 0
    %2470 = vmatpush2.bf16.msra.mxu0 0
    %2471 = vmatprep.subr.bf16.mxu0 0
    %2472 = vmatpush2.bf16.msra.mxu0 0
    %2473 = vmatprep.subr.bf16.mxu0 0
    %2474 = vmatpush2.bf16.msra.mxu0 0
    %2475 = vmatprep.subr.bf16.mxu0 0
    %2476 = vmatpush2.bf16.msra.mxu0 0
    %2477 = vmatprep.subr.bf16.mxu0 0
    %2478 = vmatpush2.bf16.msra.mxu0 0
    %2479 = vmatprep.mubr.bf16.mxu0 0
    %2480 = vmatmul.mubr.bf16.gmra.mxu0 %v2424
    %v2481 = vpop.f32.mrf.mxu0
    %v2482 = vadd.f32 0.0, %v2481
    %v2483 = vpop.f32.mrf.mxu0
    %v2484 = vpop.f32.mrf.mxu0
    %v2485 = vadd.f32 0.0, %v2484
    %v2486 = vpop.f32.mrf.mxu0
    %2487 = vmatprep.mubr.bf16.mxu0 0
    %2488 = vmatmul.mubr.bf16.gmra.mxu0 %v2427
    %v2489 = vpop.f32.mrf.mxu0
    %v2490 = vadd.f32 0.0, %v2489
    %v2491 = vpop.f32.mrf.mxu0
    %v2492 = vpop.f32.mrf.mxu0
    %v2493 = vadd.f32 0.0, %v2492
    %v2494 = vpop.f32.mrf.mxu0
    %2495 = vmatprep.mubr.bf16.mxu0 0
    %2496 = vmatmul.mubr.bf16.gmra.mxu0 %v2430
    %v2497 = vpop.f32.mrf.mxu0
    %v2498 = vadd.f32 0.0, %v2497
    %v2499 = vpop.f32.mrf.mxu0
    %v2500 = vpop.f32.mrf.mxu0
    %v2501 = vadd.f32 0.0, %v2500
    %v2502 = vpop.f32.mrf.mxu0
    %2503 = vmatprep.mubr.bf16.mxu0 0
    %2504 = vmatmul.mubr.bf16.gmra.mxu0 %v2433
    %v2505 = vpop.f32.mrf.mxu0
    %v2506 = vadd.f32 0.0, %v2505
    %v2507 = vpop.f32.mrf.mxu0
    %v2508 = vpop.f32.mrf.mxu0
    %v2509 = vadd.f32 0.0, %v2508
    %v2510 = vpop.f32.mrf.mxu0
    %2511 = vmatprep.mubr.bf16.mxu0 0
    %2512 = vmatmul.mubr.bf16.gmra.mxu0 %v2436
    %v2513 = vpop.f32.mrf.mxu0
    %v2514 = vadd.f32 0.0, %v2513
    %v2515 = vpop.f32.mrf.mxu0
    %v2516 = vpop.f32.mrf.mxu0
    %v2517 = vadd.f32 0.0, %v2516
    %v2518 = vpop.f32.mrf.mxu0
    %2519 = vmatprep.mubr.bf16.mxu0 0
    %2520 = vmatmul.mubr.bf16.gmra.mxu0 %v2439
    %v2521 = vpop.f32.mrf.mxu0
    %v2522 = vadd.f32 0.0, %v2521
    %v2523 = vpop.f32.mrf.mxu0
    %v2524 = vpop.f32.mrf.mxu0
    %v2525 = vadd.f32 0.0, %v2524
    %v2526 = vpop.f32.mrf.mxu0
    %2527 = vmatprep.mubr.bf16.mxu0 0
    %2528 = vmatmul.mubr.bf16.gmra.mxu0 %v2442
    %v2529 = vpop.f32.mrf.mxu0
    %v2530 = vadd.f32 0.0, %v2529
    %v2531 = vpop.f32.mrf.mxu0
    %v2532 = vpop.f32.mrf.mxu0
    %v2533 = vadd.f32 0.0, %v2532
    %v2534 = vpop.f32.mrf.mxu0
    %2535 = vmatprep.mubr.bf16.mxu0 0
    %2536 = vmatmul.mubr.bf16.gmra.mxu0 %v2445
    %v2537 = vpop.f32.mrf.mxu0
    %v2538 = vadd.f32 0.0, %v2537
    %v2539 = vpop.f32.mrf.mxu0
    %v2540 = vpop.f32.mrf.mxu0
    %v2541 = vadd.f32 0.0, %v2540
    %v2542 = vpop.f32.mrf.mxu0
    %2543 = vdwg.mxu0
    %v2544 = vadd.f32 %v2366, %v2482
    %v2545 = vadd.f32 %v2367, %v2485
    %v2546 = vadd.f32 %v2368, %v2490
    %v2547 = vadd.f32 %v2369, %v2493
    %v2548 = vadd.f32 %v2370, %v2498
    %v2549 = vadd.f32 %v2371, %v2501
    %v2550 = vadd.f32 %v2372, %v2506
    %v2551 = vadd.f32 %v2373, %v2509
    %v2552 = vadd.f32 %v2374, %v2514
    %v2553 = vadd.f32 %v2375, %v2517
    %v2554 = vadd.f32 %v2376, %v2522
    %v2555 = vadd.f32 %v2377, %v2525
    %v2556 = vadd.f32 %v2378, %v2530
    %v2557 = vadd.f32 %v2379, %v2533
    %v2558 = vadd.f32 %v2380, %v2538
    %v2559 = vadd.f32 %v2381, %v2541
    %v2560 = vld [vmem:[%s1686 + $0x2] sm:$0xff]
    %v2561 = vld [vmem:[%s1686 + $0x12] sm:$0xff]
    %v2562 = vld [vmem:[%s1686 + $0x22] sm:$0xff]
    %v2563 = vld [vmem:[%s1686 + $0x32] sm:$0xff]
    %v2564 = vld [vmem:[%s1686 + $0x42] sm:$0xff]
    %v2565 = vld [vmem:[%s1686 + $0x52] sm:$0xff]
    %v2566 = vld [vmem:[%s1686 + $0x62] sm:$0xff]
    %v2567 = vld [vmem:[%s1686 + $0x72] sm:$0xff]
    %v2568 = vld [vmem:[%s1686 + $0xa2] sm:$0xff]
    %v2569 = vld [vmem:[%s1686 + $0xb2] sm:$0xff]
    %v2570 = vld [vmem:[%s1686 + $0xc2] sm:$0xff]
    %v2571 = vld [vmem:[%s1686 + $0xd2] sm:$0xff]
    %v2572 = vld [vmem:[%s1686 + $0xe2] sm:$0xff]
    %v2573 = vld [vmem:[%s1686 + $0xf2] sm:$0xff]
    %v2574 = vld [vmem:[%s1686 + $0x102] sm:$0xff]
    %v2575 = vld [vmem:[%s1686 + $0x112] sm:$0xff]
    %v2576 = vpack.c.bf16 %v2561, %v2560
    %v2577 = vpack.c.bf16 %v2563, %v2562
    %v2578 = vpack.c.bf16 %v2565, %v2564
    %v2579 = vpack.c.bf16 %v2567, %v2566
    %v2580 = vpack.c.bf16 %v2569, %v2568
    %v2581 = vpack.c.bf16 %v2571, %v2570
    %v2582 = vpack.c.bf16 %v2573, %v2572
    %v2583 = vpack.c.bf16 %v2575, %v2574
    %s2584 = scalar_lea.vmem [#allocation9], 80
    %v2585 = vld [vmem:[%s2584] sm:$0xf]
    %v2586 = vld [vmem:[%s2584 + $0x4] sm:$0xf]
    %v2587 = vld [vmem:[%s2584 + $0x8] sm:$0xf]
    %v2588 = vld [vmem:[%s2584 + $0xc] sm:$0xf]
    %v2593 = vunpack.c.l.b16 %v2585
    %v2594 = vunpack.c.l.b16 %v2586
    %v2595 = vunpack.c.l.b16 %v2587
    %v2596 = vunpack.c.l.b16 %v2588
    %v2597 = vpack.c.b16 %v2594, %v2593
    %v2598 = vpack.c.b16 %v2596, %v2595
    %v2602 = vsel %vm1644, %v2576, 0
    %v2605 = vsel %vm1644, %v2577, 0
    %v2608 = vsel %vm1644, %v2578, 0
    %v2611 = vsel %vm1644, %v2579, 0
    %v2614 = vsel %vm1644, %v2580, 0
    %v2617 = vsel %vm1644, %v2581, 0
    %v2620 = vsel %vm1644, %v2582, 0
    %v2623 = vsel %vm1644, %v2583, 0
    %2625 = vmatprep.subr.bf16.mxu0 0
    %2626 = vmatpush1.bf16.msra.mxu0 0
    %2627 = vmatprep.subr.bf16.mxu0 0
    %2628 = vmatpush1.bf16.msra.mxu0 0
    %2629 = vmatprep.subr.bf16.mxu0 0
    %2630 = vmatpush1.bf16.msra.mxu0 0
    %2631 = vmatprep.subr.bf16.mxu0 0
    %2632 = vmatpush1.bf16.msra.mxu0 0
    %2633 = vmatprep.subr.bf16.mxu0 0
    %2634 = vmatpush1.bf16.msra.mxu0 0
    %2635 = vmatprep.subr.bf16.mxu0 0
    %2636 = vmatpush1.bf16.msra.mxu0 0
    %2637 = vmatprep.subr.bf16.mxu0 0
    %2638 = vmatpush1.bf16.msra.mxu0 %v2598
    %2639 = vmatprep.subr.bf16.mxu0 0
    %2640 = vmatpush1.bf16.msra.mxu0 %v2597
    %2641 = vmatprep.subr.bf16.mxu0 0
    %2642 = vmatpush2.bf16.msra.mxu0 0
    %2643 = vmatprep.subr.bf16.mxu0 0
    %2644 = vmatpush2.bf16.msra.mxu0 0
    %2645 = vmatprep.subr.bf16.mxu0 0
    %2646 = vmatpush2.bf16.msra.mxu0 0
    %2647 = vmatprep.subr.bf16.mxu0 0
    %2648 = vmatpush2.bf16.msra.mxu0 0
    %2649 = vmatprep.subr.bf16.mxu0 0
    %2650 = vmatpush2.bf16.msra.mxu0 0
    %2651 = vmatprep.subr.bf16.mxu0 0
    %2652 = vmatpush2.bf16.msra.mxu0 0
    %2653 = vmatprep.subr.bf16.mxu0 0
    %2654 = vmatpush2.bf16.msra.mxu0 0
    %2655 = vmatprep.subr.bf16.mxu0 0
    %2656 = vmatpush2.bf16.msra.mxu0 0
    %2657 = vmatprep.mubr.bf16.mxu0 0
    %2658 = vmatmul.mubr.bf16.gmra.mxu0 %v2602
    %v2659 = vpop.f32.mrf.mxu0
    %v2660 = vadd.f32 0.0, %v2659
    %v2661 = vpop.f32.mrf.mxu0
    %v2662 = vpop.f32.mrf.mxu0
    %v2663 = vadd.f32 0.0, %v2662
    %v2664 = vpop.f32.mrf.mxu0
    %2665 = vmatprep.mubr.bf16.mxu0 0
    %2666 = vmatmul.mubr.bf16.gmra.mxu0 %v2605
    %v2667 = vpop.f32.mrf.mxu0
    %v2668 = vadd.f32 0.0, %v2667
    %v2669 = vpop.f32.mrf.mxu0
    %v2670 = vpop.f32.mrf.mxu0
    %v2671 = vadd.f32 0.0, %v2670
    %v2672 = vpop.f32.mrf.mxu0
    %2673 = vmatprep.mubr.bf16.mxu0 0
    %2674 = vmatmul.mubr.bf16.gmra.mxu0 %v2608
    %v2675 = vpop.f32.mrf.mxu0
    %v2676 = vadd.f32 0.0, %v2675
    %v2677 = vpop.f32.mrf.mxu0
    %v2678 = vpop.f32.mrf.mxu0
    %v2679 = vadd.f32 0.0, %v2678
    %v2680 = vpop.f32.mrf.mxu0
    %2681 = vmatprep.mubr.bf16.mxu0 0
    %2682 = vmatmul.mubr.bf16.gmra.mxu0 %v2611
    %v2683 = vpop.f32.mrf.mxu0
    %v2684 = vadd.f32 0.0, %v2683
    %v2685 = vpop.f32.mrf.mxu0
    %v2686 = vpop.f32.mrf.mxu0
    %v2687 = vadd.f32 0.0, %v2686
    %v2688 = vpop.f32.mrf.mxu0
    %2689 = vmatprep.mubr.bf16.mxu0 0
    %2690 = vmatmul.mubr.bf16.gmra.mxu0 %v2614
    %v2691 = vpop.f32.mrf.mxu0
    %v2692 = vadd.f32 0.0, %v2691
    %v2693 = vpop.f32.mrf.mxu0
    %v2694 = vpop.f32.mrf.mxu0
    %v2695 = vadd.f32 0.0, %v2694
    %v2696 = vpop.f32.mrf.mxu0
    %2697 = vmatprep.mubr.bf16.mxu0 0
    %2698 = vmatmul.mubr.bf16.gmra.mxu0 %v2617
    %v2699 = vpop.f32.mrf.mxu0
    %v2700 = vadd.f32 0.0, %v2699
    %v2701 = vpop.f32.mrf.mxu0
    %v2702 = vpop.f32.mrf.mxu0
    %v2703 = vadd.f32 0.0, %v2702
    %v2704 = vpop.f32.mrf.mxu0
    %2705 = vmatprep.mubr.bf16.mxu0 0
    %2706 = vmatmul.mubr.bf16.gmra.mxu0 %v2620
    %v2707 = vpop.f32.mrf.mxu0
    %v2708 = vadd.f32 0.0, %v2707
    %v2709 = vpop.f32.mrf.mxu0
    %v2710 = vpop.f32.mrf.mxu0
    %v2711 = vadd.f32 0.0, %v2710
    %v2712 = vpop.f32.mrf.mxu0
    %2713 = vmatprep.mubr.bf16.mxu0 0
    %2714 = vmatmul.mubr.bf16.gmra.mxu0 %v2623
    %v2715 = vpop.f32.mrf.mxu0
    %v2716 = vadd.f32 0.0, %v2715
    %v2717 = vpop.f32.mrf.mxu0
    %v2718 = vpop.f32.mrf.mxu0
    %v2719 = vadd.f32 0.0, %v2718
    %v2720 = vpop.f32.mrf.mxu0
    %2721 = vdwg.mxu0
    %v2722 = vadd.f32 %v2544, %v2660
    %v2723 = vadd.f32 %v2545, %v2663
    %v2724 = vadd.f32 %v2546, %v2668
    %v2725 = vadd.f32 %v2547, %v2671
    %v2726 = vadd.f32 %v2548, %v2676
    %v2727 = vadd.f32 %v2549, %v2679
    %v2728 = vadd.f32 %v2550, %v2684
    %v2729 = vadd.f32 %v2551, %v2687
    %v2730 = vadd.f32 %v2552, %v2692
    %v2731 = vadd.f32 %v2553, %v2695
    %v2732 = vadd.f32 %v2554, %v2700
    %v2733 = vadd.f32 %v2555, %v2703
    %v2734 = vadd.f32 %v2556, %v2708
    %v2735 = vadd.f32 %v2557, %v2711
    %v2736 = vadd.f32 %v2558, %v2716
    %v2737 = vadd.f32 %v2559, %v2719
    %s2738 = scalar_lea.vmem [#allocation2], 32
    %v2739 = vld [vmem:[%s2738] sm:$0xff]
    %v2740 = vld [vmem:[%s2738 + $0x10] sm:$0xff]
    %v2741 = vld [vmem:[%s2738 + $0x20] sm:$0xff]
    %v2742 = vld [vmem:[%s2738 + $0x30] sm:$0xff]
    %v2743 = vld [vmem:[%s2738 + $0x40] sm:$0xff]
    %v2744 = vld [vmem:[%s2738 + $0x50] sm:$0xff]
    %v2745 = vld [vmem:[%s2738 + $0x60] sm:$0xff]
    %v2746 = vld [vmem:[%s2738 + $0x70] sm:$0xff]
    %v2747 = vld [vmem:[%s2738 + $0xa0] sm:$0xff]
    %v2748 = vld [vmem:[%s2738 + $0xb0] sm:$0xff]
    %v2749 = vld [vmem:[%s2738 + $0xc0] sm:$0xff]
    %v2750 = vld [vmem:[%s2738 + $0xd0] sm:$0xff]
    %v2751 = vld [vmem:[%s2738 + $0xe0] sm:$0xff]
    %v2752 = vld [vmem:[%s2738 + $0xf0] sm:$0xff]
    %v2753 = vld [vmem:[%s2738 + $0x100] sm:$0xff]
    %v2754 = vld [vmem:[%s2738 + $0x110] sm:$0xff]
    %v2755 = vpack.c.bf16 %v2740, %v2739
    %v2756 = vpack.c.bf16 %v2742, %v2741
    %v2757 = vpack.c.bf16 %v2744, %v2743
    %v2758 = vpack.c.bf16 %v2746, %v2745
    %v2759 = vpack.c.bf16 %v2748, %v2747
    %v2760 = vpack.c.bf16 %v2750, %v2749
    %v2761 = vpack.c.bf16 %v2752, %v2751
    %v2762 = vpack.c.bf16 %v2754, %v2753
    %s2763 = scalar_lea.vmem [#allocation9], 96
    %v2764 = vld [vmem:[%s2763] sm:$0xf]
    %v2765 = vld [vmem:[%s2763 + $0x4] sm:$0xf]
    %v2766 = vld [vmem:[%s2763 + $0x8] sm:$0xf]
    %v2767 = vld [vmem:[%s2763 + $0xc] sm:$0xf]
    %v2772 = vunpack.c.l.b16 %v2764
    %v2773 = vunpack.c.l.b16 %v2765
    %v2774 = vunpack.c.l.b16 %v2766
    %v2775 = vunpack.c.l.b16 %v2767
    %v2776 = vpack.c.b16 %v2773, %v2772
    %v2777 = vpack.c.b16 %v2775, %v2774
    %v2781 = vsel %vm1644, %v2755, 0
    %v2784 = vsel %vm1644, %v2756, 0
    %v2787 = vsel %vm1644, %v2757, 0
    %v2790 = vsel %vm1644, %v2758, 0
    %v2793 = vsel %vm1644, %v2759, 0
    %v2796 = vsel %vm1644, %v2760, 0
    %v2799 = vsel %vm1644, %v2761, 0
    %v2802 = vsel %vm1644, %v2762, 0
    %2804 = vmatprep.subr.bf16.mxu0 0
    %2805 = vmatpush1.bf16.msra.mxu0 0
    %2806 = vmatprep.subr.bf16.mxu0 0
    %2807 = vmatpush1.bf16.msra.mxu0 0
    %2808 = vmatprep.subr.bf16.mxu0 0
    %2809 = vmatpush1.bf16.msra.mxu0 0
    %2810 = vmatprep.subr.bf16.mxu0 0
    %2811 = vmatpush1.bf16.msra.mxu0 0
    %2812 = vmatprep.subr.bf16.mxu0 0
    %2813 = vmatpush1.bf16.msra.mxu0 0
    %2814 = vmatprep.subr.bf16.mxu0 0
    %2815 = vmatpush1.bf16.msra.mxu0 0
    %2816 = vmatprep.subr.bf16.mxu0 0
    %2817 = vmatpush1.bf16.msra.mxu0 %v2777
    %2818 = vmatprep.subr.bf16.mxu0 0
    %2819 = vmatpush1.bf16.msra.mxu0 %v2776
    %2820 = vmatprep.subr.bf16.mxu0 0
    %2821 = vmatpush2.bf16.msra.mxu0 0
    %2822 = vmatprep.subr.bf16.mxu0 0
    %2823 = vmatpush2.bf16.msra.mxu0 0
    %2824 = vmatprep.subr.bf16.mxu0 0
    %2825 = vmatpush2.bf16.msra.mxu0 0
    %2826 = vmatprep.subr.bf16.mxu0 0
    %2827 = vmatpush2.bf16.msra.mxu0 0
    %2828 = vmatprep.subr.bf16.mxu0 0
    %2829 = vmatpush2.bf16.msra.mxu0 0
    %2830 = vmatprep.subr.bf16.mxu0 0
    %2831 = vmatpush2.bf16.msra.mxu0 0
    %2832 = vmatprep.subr.bf16.mxu0 0
    %2833 = vmatpush2.bf16.msra.mxu0 0
    %2834 = vmatprep.subr.bf16.mxu0 0
    %2835 = vmatpush2.bf16.msra.mxu0 0
    %2836 = vmatprep.mubr.bf16.mxu0 0
    %2837 = vmatmul.mubr.bf16.gmra.mxu0 %v2781
    %v2838 = vpop.f32.mrf.mxu0
    %v2839 = vadd.f32 0.0, %v2838
    %v2840 = vpop.f32.mrf.mxu0
    %v2841 = vpop.f32.mrf.mxu0
    %v2842 = vadd.f32 0.0, %v2841
    %v2843 = vpop.f32.mrf.mxu0
    %2844 = vmatprep.mubr.bf16.mxu0 0
    %2845 = vmatmul.mubr.bf16.gmra.mxu0 %v2784
    %v2846 = vpop.f32.mrf.mxu0
    %v2847 = vadd.f32 0.0, %v2846
    %v2848 = vpop.f32.mrf.mxu0
    %v2849 = vpop.f32.mrf.mxu0
    %v2850 = vadd.f32 0.0, %v2849
    %v2851 = vpop.f32.mrf.mxu0
    %2852 = vmatprep.mubr.bf16.mxu0 0
    %2853 = vmatmul.mubr.bf16.gmra.mxu0 %v2787
    %v2854 = vpop.f32.mrf.mxu0
    %v2855 = vadd.f32 0.0, %v2854
    %v2856 = vpop.f32.mrf.mxu0
    %v2857 = vpop.f32.mrf.mxu0
    %v2858 = vadd.f32 0.0, %v2857
    %v2859 = vpop.f32.mrf.mxu0
    %2860 = vmatprep.mubr.bf16.mxu0 0
    %2861 = vmatmul.mubr.bf16.gmra.mxu0 %v2790
    %v2862 = vpop.f32.mrf.mxu0
    %v2863 = vadd.f32 0.0, %v2862
    %v2864 = vpop.f32.mrf.mxu0
    %v2865 = vpop.f32.mrf.mxu0
    %v2866 = vadd.f32 0.0, %v2865
    %v2867 = vpop.f32.mrf.mxu0
    %2868 = vmatprep.mubr.bf16.mxu0 0
    %2869 = vmatmul.mubr.bf16.gmra.mxu0 %v2793
    %v2870 = vpop.f32.mrf.mxu0
    %v2871 = vadd.f32 0.0, %v2870
    %v2872 = vpop.f32.mrf.mxu0
    %v2873 = vpop.f32.mrf.mxu0
    %v2874 = vadd.f32 0.0, %v2873
    %v2875 = vpop.f32.mrf.mxu0
    %2876 = vmatprep.mubr.bf16.mxu0 0
    %2877 = vmatmul.mubr.bf16.gmra.mxu0 %v2796
    %v2878 = vpop.f32.mrf.mxu0
    %v2879 = vadd.f32 0.0, %v2878
    %v2880 = vpop.f32.mrf.mxu0
    %v2881 = vpop.f32.mrf.mxu0
    %v2882 = vadd.f32 0.0, %v2881
    %v2883 = vpop.f32.mrf.mxu0
    %2884 = vmatprep.mubr.bf16.mxu0 0
    %2885 = vmatmul.mubr.bf16.gmra.mxu0 %v2799
    %v2886 = vpop.f32.mrf.mxu0
    %v2887 = vadd.f32 0.0, %v2886
    %v2888 = vpop.f32.mrf.mxu0
    %v2889 = vpop.f32.mrf.mxu0
    %v2890 = vadd.f32 0.0, %v2889
    %v2891 = vpop.f32.mrf.mxu0
    %2892 = vmatprep.mubr.bf16.mxu0 0
    %2893 = vmatmul.mubr.bf16.gmra.mxu0 %v2802
    %v2894 = vpop.f32.mrf.mxu0
    %v2895 = vadd.f32 0.0, %v2894
    %v2896 = vpop.f32.mrf.mxu0
    %v2897 = vpop.f32.mrf.mxu0
    %v2898 = vadd.f32 0.0, %v2897
    %v2899 = vpop.f32.mrf.mxu0
    %2900 = vdwg.mxu0
    %v2901 = vadd.f32 %v2722, %v2839
    %v2902 = vadd.f32 %v2723, %v2842
    %v2903 = vadd.f32 %v2724, %v2847
    %v2904 = vadd.f32 %v2725, %v2850
    %v2905 = vadd.f32 %v2726, %v2855
    %v2906 = vadd.f32 %v2727, %v2858
    %v2907 = vadd.f32 %v2728, %v2863
    %v2908 = vadd.f32 %v2729, %v2866
    %v2909 = vadd.f32 %v2730, %v2871
    %v2910 = vadd.f32 %v2731, %v2874
    %v2911 = vadd.f32 %v2732, %v2879
    %v2912 = vadd.f32 %v2733, %v2882
    %v2913 = vadd.f32 %v2734, %v2887
    %v2914 = vadd.f32 %v2735, %v2890
    %v2915 = vadd.f32 %v2736, %v2895
    %v2916 = vadd.f32 %v2737, %v2898
    %v2917 = vld [vmem:[%s2738 + $0x1] sm:$0xff]
    %v2918 = vld [vmem:[%s2738 + $0x11] sm:$0xff]
    %v2919 = vld [vmem:[%s2738 + $0x21] sm:$0xff]
    %v2920 = vld [vmem:[%s2738 + $0x31] sm:$0xff]
    %v2921 = vld [vmem:[%s2738 + $0x41] sm:$0xff]
    %v2922 = vld [vmem:[%s2738 + $0x51] sm:$0xff]
    %v2923 = vld [vmem:[%s2738 + $0x61] sm:$0xff]
    %v2924 = vld [vmem:[%s2738 + $0x71] sm:$0xff]
    %v2925 = vld [vmem:[%s2738 + $0xa1] sm:$0xff]
    %v2926 = vld [vmem:[%s2738 + $0xb1] sm:$0xff]
    %v2927 = vld [vmem:[%s2738 + $0xc1] sm:$0xff]
    %v2928 = vld [vmem:[%s2738 + $0xd1] sm:$0xff]
    %v2929 = vld [vmem:[%s2738 + $0xe1] sm:$0xff]
    %v2930 = vld [vmem:[%s2738 + $0xf1] sm:$0xff]
    %v2931 = vld [vmem:[%s2738 + $0x101] sm:$0xff]
    %v2932 = vld [vmem:[%s2738 + $0x111] sm:$0xff]
    %v2933 = vpack.c.bf16 %v2918, %v2917
    %v2934 = vpack.c.bf16 %v2920, %v2919
    %v2935 = vpack.c.bf16 %v2922, %v2921
    %v2936 = vpack.c.bf16 %v2924, %v2923
    %v2937 = vpack.c.bf16 %v2926, %v2925
    %v2938 = vpack.c.bf16 %v2928, %v2927
    %v2939 = vpack.c.bf16 %v2930, %v2929
    %v2940 = vpack.c.bf16 %v2932, %v2931
    %s2941 = scalar_lea.vmem [#allocation9], 112
    %v2942 = vld [vmem:[%s2941] sm:$0xf]
    %v2943 = vld [vmem:[%s2941 + $0x4] sm:$0xf]
    %v2944 = vld [vmem:[%s2941 + $0x8] sm:$0xf]
    %v2945 = vld [vmem:[%s2941 + $0xc] sm:$0xf]
    %v2950 = vunpack.c.l.b16 %v2942
    %v2951 = vunpack.c.l.b16 %v2943
    %v2952 = vunpack.c.l.b16 %v2944
    %v2953 = vunpack.c.l.b16 %v2945
    %v2954 = vpack.c.b16 %v2951, %v2950
    %v2955 = vpack.c.b16 %v2953, %v2952
    %v2959 = vsel %vm1644, %v2933, 0
    %v2962 = vsel %vm1644, %v2934, 0
    %v2965 = vsel %vm1644, %v2935, 0
    %v2968 = vsel %vm1644, %v2936, 0
    %v2971 = vsel %vm1644, %v2937, 0
    %v2974 = vsel %vm1644, %v2938, 0
    %v2977 = vsel %vm1644, %v2939, 0
    %v2980 = vsel %vm1644, %v2940, 0
    %2982 = vmatprep.subr.bf16.mxu0 0
    %2983 = vmatpush1.bf16.msra.mxu0 0
    %2984 = vmatprep.subr.bf16.mxu0 0
    %2985 = vmatpush1.bf16.msra.mxu0 0
    %2986 = vmatprep.subr.bf16.mxu0 0
    %2987 = vmatpush1.bf16.msra.mxu0 0
    %2988 = vmatprep.subr.bf16.mxu0 0
    %2989 = vmatpush1.bf16.msra.mxu0 0
    %2990 = vmatprep.subr.bf16.mxu0 0
    %2991 = vmatpush1.bf16.msra.mxu0 0
    %2992 = vmatprep.subr.bf16.mxu0 0
    %2993 = vmatpush1.bf16.msra.mxu0 0
    %2994 = vmatprep.subr.bf16.mxu0 0
    %2995 = vmatpush1.bf16.msra.mxu0 %v2955
    %2996 = vmatprep.subr.bf16.mxu0 0
    %2997 = vmatpush1.bf16.msra.mxu0 %v2954
    %2998 = vmatprep.subr.bf16.mxu0 0
    %2999 = vmatpush2.bf16.msra.mxu0 0
    %3000 = vmatprep.subr.bf16.mxu0 0
    %3001 = vmatpush2.bf16.msra.mxu0 0
    %3002 = vmatprep.subr.bf16.mxu0 0
    %3003 = vmatpush2.bf16.msra.mxu0 0
    %3004 = vmatprep.subr.bf16.mxu0 0
    %3005 = vmatpush2.bf16.msra.mxu0 0
    %3006 = vmatprep.subr.bf16.mxu0 0
    %3007 = vmatpush2.bf16.msra.mxu0 0
    %3008 = vmatprep.subr.bf16.mxu0 0
    %3009 = vmatpush2.bf16.msra.mxu0 0
    %3010 = vmatprep.subr.bf16.mxu0 0
    %3011 = vmatpush2.bf16.msra.mxu0 0
    %3012 = vmatprep.subr.bf16.mxu0 0
    %3013 = vmatpush2.bf16.msra.mxu0 0
    %3014 = vmatprep.mubr.bf16.mxu0 0
    %3015 = vmatmul.mubr.bf16.gmra.mxu0 %v2959
    %v3016 = vpop.f32.mrf.mxu0
    %v3017 = vadd.f32 0.0, %v3016
    %v3018 = vpop.f32.mrf.mxu0
    %v3019 = vpop.f32.mrf.mxu0
    %v3020 = vadd.f32 0.0, %v3019
    %v3021 = vpop.f32.mrf.mxu0
    %3022 = vmatprep.mubr.bf16.mxu0 0
    %3023 = vmatmul.mubr.bf16.gmra.mxu0 %v2962
    %v3024 = vpop.f32.mrf.mxu0
    %v3025 = vadd.f32 0.0, %v3024
    %v3026 = vpop.f32.mrf.mxu0
    %v3027 = vpop.f32.mrf.mxu0
    %v3028 = vadd.f32 0.0, %v3027
    %v3029 = vpop.f32.mrf.mxu0
    %3030 = vmatprep.mubr.bf16.mxu0 0
    %3031 = vmatmul.mubr.bf16.gmra.mxu0 %v2965
    %v3032 = vpop.f32.mrf.mxu0
    %v3033 = vadd.f32 0.0, %v3032
    %v3034 = vpop.f32.mrf.mxu0
    %v3035 = vpop.f32.mrf.mxu0
    %v3036 = vadd.f32 0.0, %v3035
    %v3037 = vpop.f32.mrf.mxu0
    %3038 = vmatprep.mubr.bf16.mxu0 0
    %3039 = vmatmul.mubr.bf16.gmra.mxu0 %v2968
    %v3040 = vpop.f32.mrf.mxu0
    %v3041 = vadd.f32 0.0, %v3040
    %v3042 = vpop.f32.mrf.mxu0
    %v3043 = vpop.f32.mrf.mxu0
    %v3044 = vadd.f32 0.0, %v3043
    %v3045 = vpop.f32.mrf.mxu0
    %3046 = vmatprep.mubr.bf16.mxu0 0
    %3047 = vmatmul.mubr.bf16.gmra.mxu0 %v2971
    %v3048 = vpop.f32.mrf.mxu0
    %v3049 = vadd.f32 0.0, %v3048
    %v3050 = vpop.f32.mrf.mxu0
    %v3051 = vpop.f32.mrf.mxu0
    %v3052 = vadd.f32 0.0, %v3051
    %v3053 = vpop.f32.mrf.mxu0
    %3054 = vmatprep.mubr.bf16.mxu0 0
    %3055 = vmatmul.mubr.bf16.gmra.mxu0 %v2974
    %v3056 = vpop.f32.mrf.mxu0
    %v3057 = vadd.f32 0.0, %v3056
    %v3058 = vpop.f32.mrf.mxu0
    %v3059 = vpop.f32.mrf.mxu0
    %v3060 = vadd.f32 0.0, %v3059
    %v3061 = vpop.f32.mrf.mxu0
    %3062 = vmatprep.mubr.bf16.mxu0 0
    %3063 = vmatmul.mubr.bf16.gmra.mxu0 %v2977
    %v3064 = vpop.f32.mrf.mxu0
    %v3065 = vadd.f32 0.0, %v3064
    %v3066 = vpop.f32.mrf.mxu0
    %v3067 = vpop.f32.mrf.mxu0
    %v3068 = vadd.f32 0.0, %v3067
    %v3069 = vpop.f32.mrf.mxu0
    %3070 = vmatprep.mubr.bf16.mxu0 0
    %3071 = vmatmul.mubr.bf16.gmra.mxu0 %v2980
    %v3072 = vpop.f32.mrf.mxu0
    %v3073 = vadd.f32 0.0, %v3072
    %v3074 = vpop.f32.mrf.mxu0
    %v3075 = vpop.f32.mrf.mxu0
    %v3076 = vadd.f32 0.0, %v3075
    %v3077 = vpop.f32.mrf.mxu0
    %3078 = vdwg.mxu0
    %v3079 = vadd.f32 %v2901, %v3017
    %v3080 = vadd.f32 %v2902, %v3020
    %v3081 = vadd.f32 %v2903, %v3025
    %v3082 = vadd.f32 %v2904, %v3028
    %v3083 = vadd.f32 %v2905, %v3033
    %v3084 = vadd.f32 %v2906, %v3036
    %v3085 = vadd.f32 %v2907, %v3041
    %v3086 = vadd.f32 %v2908, %v3044
    %v3087 = vadd.f32 %v2909, %v3049
    %v3088 = vadd.f32 %v2910, %v3052
    %v3089 = vadd.f32 %v2911, %v3057
    %v3090 = vadd.f32 %v2912, %v3060
    %v3091 = vadd.f32 %v2913, %v3065
    %v3092 = vadd.f32 %v2914, %v3068
    %v3093 = vadd.f32 %v2915, %v3073
    %v3094 = vadd.f32 %v2916, %v3076
    %v3095 = vld [vmem:[%s2738 + $0x2] sm:$0xff]
    %v3096 = vld [vmem:[%s2738 + $0x12] sm:$0xff]
    %v3097 = vld [vmem:[%s2738 + $0x22] sm:$0xff]
    %v3098 = vld [vmem:[%s2738 + $0x32] sm:$0xff]
    %v3099 = vld [vmem:[%s2738 + $0x42] sm:$0xff]
    %v3100 = vld [vmem:[%s2738 + $0x52] sm:$0xff]
    %v3101 = vld [vmem:[%s2738 + $0x62] sm:$0xff]
    %v3102 = vld [vmem:[%s2738 + $0x72] sm:$0xff]
    %v3103 = vld [vmem:[%s2738 + $0xa2] sm:$0xff]
    %v3104 = vld [vmem:[%s2738 + $0xb2] sm:$0xff]
    %v3105 = vld [vmem:[%s2738 + $0xc2] sm:$0xff]
    %v3106 = vld [vmem:[%s2738 + $0xd2] sm:$0xff]
    %v3107 = vld [vmem:[%s2738 + $0xe2] sm:$0xff]
    %v3108 = vld [vmem:[%s2738 + $0xf2] sm:$0xff]
    %v3109 = vld [vmem:[%s2738 + $0x102] sm:$0xff]
    %v3110 = vld [vmem:[%s2738 + $0x112] sm:$0xff]
    %v3111 = vpack.c.bf16 %v3096, %v3095
    %v3112 = vpack.c.bf16 %v3098, %v3097
    %v3113 = vpack.c.bf16 %v3100, %v3099
    %v3114 = vpack.c.bf16 %v3102, %v3101
    %v3115 = vpack.c.bf16 %v3104, %v3103
    %v3116 = vpack.c.bf16 %v3106, %v3105
    %v3117 = vpack.c.bf16 %v3108, %v3107
    %v3118 = vpack.c.bf16 %v3110, %v3109
    %s3119 = scalar_lea.vmem [#allocation9], 128
    %v3120 = vld [vmem:[%s3119] sm:$0xf]
    %v3121 = vld [vmem:[%s3119 + $0x4] sm:$0xf]
    %v3122 = vld [vmem:[%s3119 + $0x8] sm:$0xf]
    %v3123 = vld [vmem:[%s3119 + $0xc] sm:$0xf]
    %v3128 = vunpack.c.l.b16 %v3120
    %v3129 = vunpack.c.l.b16 %v3121
    %v3130 = vunpack.c.l.b16 %v3122
    %v3131 = vunpack.c.l.b16 %v3123
    %v3132 = vpack.c.b16 %v3129, %v3128
    %v3133 = vpack.c.b16 %v3131, %v3130
    %v3137 = vsel %vm1644, %v3111, 0
    %v3140 = vsel %vm1644, %v3112, 0
    %v3143 = vsel %vm1644, %v3113, 0
    %v3146 = vsel %vm1644, %v3114, 0
    %v3149 = vsel %vm1644, %v3115, 0
    %v3152 = vsel %vm1644, %v3116, 0
    %v3155 = vsel %vm1644, %v3117, 0
    %v3158 = vsel %vm1644, %v3118, 0
    %3160 = vmatprep.subr.bf16.mxu0 0
    %3161 = vmatpush1.bf16.msra.mxu0 0
    %3162 = vmatprep.subr.bf16.mxu0 0
    %3163 = vmatpush1.bf16.msra.mxu0 0
    %3164 = vmatprep.subr.bf16.mxu0 0
    %3165 = vmatpush1.bf16.msra.mxu0 0
    %3166 = vmatprep.subr.bf16.mxu0 0
    %3167 = vmatpush1.bf16.msra.mxu0 0
    %3168 = vmatprep.subr.bf16.mxu0 0
    %3169 = vmatpush1.bf16.msra.mxu0 0
    %3170 = vmatprep.subr.bf16.mxu0 0
    %3171 = vmatpush1.bf16.msra.mxu0 0
    %3172 = vmatprep.subr.bf16.mxu0 0
    %3173 = vmatpush1.bf16.msra.mxu0 %v3133
    %3174 = vmatprep.subr.bf16.mxu0 0
    %3175 = vmatpush1.bf16.msra.mxu0 %v3132
    %3176 = vmatprep.subr.bf16.mxu0 0
    %3177 = vmatpush2.bf16.msra.mxu0 0
    %3178 = vmatprep.subr.bf16.mxu0 0
    %3179 = vmatpush2.bf16.msra.mxu0 0
    %3180 = vmatprep.subr.bf16.mxu0 0
    %3181 = vmatpush2.bf16.msra.mxu0 0
    %3182 = vmatprep.subr.bf16.mxu0 0
    %3183 = vmatpush2.bf16.msra.mxu0 0
    %3184 = vmatprep.subr.bf16.mxu0 0
    %3185 = vmatpush2.bf16.msra.mxu0 0
    %3186 = vmatprep.subr.bf16.mxu0 0
    %3187 = vmatpush2.bf16.msra.mxu0 0
    %3188 = vmatprep.subr.bf16.mxu0 0
    %3189 = vmatpush2.bf16.msra.mxu0 0
    %3190 = vmatprep.subr.bf16.mxu0 0
    %3191 = vmatpush2.bf16.msra.mxu0 0
    %3192 = vmatprep.mubr.bf16.mxu0 0
    %3193 = vmatmul.mubr.bf16.gmra.mxu0 %v3137
    %v3194 = vpop.f32.mrf.mxu0
    %v3195 = vadd.f32 0.0, %v3194
    %v3196 = vpop.f32.mrf.mxu0
    %v3197 = vpop.f32.mrf.mxu0
    %v3198 = vadd.f32 0.0, %v3197
    %v3199 = vpop.f32.mrf.mxu0
    %3200 = vmatprep.mubr.bf16.mxu0 0
    %3201 = vmatmul.mubr.bf16.gmra.mxu0 %v3140
    %v3202 = vpop.f32.mrf.mxu0
    %v3203 = vadd.f32 0.0, %v3202
    %v3204 = vpop.f32.mrf.mxu0
    %v3205 = vpop.f32.mrf.mxu0
    %v3206 = vadd.f32 0.0, %v3205
    %v3207 = vpop.f32.mrf.mxu0
    %3208 = vmatprep.mubr.bf16.mxu0 0
    %3209 = vmatmul.mubr.bf16.gmra.mxu0 %v3143
    %v3210 = vpop.f32.mrf.mxu0
    %v3211 = vadd.f32 0.0, %v3210
    %v3212 = vpop.f32.mrf.mxu0
    %v3213 = vpop.f32.mrf.mxu0
    %v3214 = vadd.f32 0.0, %v3213
    %v3215 = vpop.f32.mrf.mxu0
    %3216 = vmatprep.mubr.bf16.mxu0 0
    %3217 = vmatmul.mubr.bf16.gmra.mxu0 %v3146
    %v3218 = vpop.f32.mrf.mxu0
    %v3219 = vadd.f32 0.0, %v3218
    %v3220 = vpop.f32.mrf.mxu0
    %v3221 = vpop.f32.mrf.mxu0
    %v3222 = vadd.f32 0.0, %v3221
    %v3223 = vpop.f32.mrf.mxu0
    %3224 = vmatprep.mubr.bf16.mxu0 0
    %3225 = vmatmul.mubr.bf16.gmra.mxu0 %v3149
    %v3226 = vpop.f32.mrf.mxu0
    %v3227 = vadd.f32 0.0, %v3226
    %v3228 = vpop.f32.mrf.mxu0
    %v3229 = vpop.f32.mrf.mxu0
    %v3230 = vadd.f32 0.0, %v3229
    %v3231 = vpop.f32.mrf.mxu0
    %3232 = vmatprep.mubr.bf16.mxu0 0
    %3233 = vmatmul.mubr.bf16.gmra.mxu0 %v3152
    %v3234 = vpop.f32.mrf.mxu0
    %v3235 = vadd.f32 0.0, %v3234
    %v3236 = vpop.f32.mrf.mxu0
    %v3237 = vpop.f32.mrf.mxu0
    %v3238 = vadd.f32 0.0, %v3237
    %v3239 = vpop.f32.mrf.mxu0
    %3240 = vmatprep.mubr.bf16.mxu0 0
    %3241 = vmatmul.mubr.bf16.gmra.mxu0 %v3155
    %v3242 = vpop.f32.mrf.mxu0
    %v3243 = vadd.f32 0.0, %v3242
    %v3244 = vpop.f32.mrf.mxu0
    %v3245 = vpop.f32.mrf.mxu0
    %v3246 = vadd.f32 0.0, %v3245
    %v3247 = vpop.f32.mrf.mxu0
    %3248 = vmatprep.mubr.bf16.mxu0 0
    %3249 = vmatmul.mubr.bf16.gmra.mxu0 %v3158
    %v3250 = vpop.f32.mrf.mxu0
    %v3251 = vadd.f32 0.0, %v3250
    %v3252 = vpop.f32.mrf.mxu0
    %v3253 = vpop.f32.mrf.mxu0
    %v3254 = vadd.f32 0.0, %v3253
    %v3255 = vpop.f32.mrf.mxu0
    %3256 = vdwg.mxu0
    %v3257 = vadd.f32 %v3079, %v3195
    %v3258 = vadd.f32 %v3080, %v3198
    %v3259 = vadd.f32 %v3081, %v3203
    %v3260 = vadd.f32 %v3082, %v3206
    %v3261 = vadd.f32 %v3083, %v3211
    %v3262 = vadd.f32 %v3084, %v3214
    %v3263 = vadd.f32 %v3085, %v3219
    %v3264 = vadd.f32 %v3086, %v3222
    %v3265 = vadd.f32 %v3087, %v3227
    %v3266 = vadd.f32 %v3088, %v3230
    %v3267 = vadd.f32 %v3089, %v3235
    %v3268 = vadd.f32 %v3090, %v3238
    %v3269 = vadd.f32 %v3091, %v3243
    %v3270 = vadd.f32 %v3092, %v3246
    %v3271 = vadd.f32 %v3093, %v3251
    %v3272 = vadd.f32 %v3094, %v3254
    %v3273 = vld [vmem:[#allocation10] sm:$0x1]
    %v3275 = vlaneseq
    %v3276 = vshrl.u32 %v3275, 7
    %v3277 = vsub.s32 0, %v3276
    %v3278 = vrot.slane %v3273, %v3277
    %v3280 = vadd.f32 %v3257, %v3278
    %v3281 = vadd.f32 %v3258, %v3278
    %v3282 = vadd.f32 %v3259, %v3278
    %v3283 = vadd.f32 %v3260, %v3278
    %v3284 = vadd.f32 %v3261, %v3278
    %v3285 = vadd.f32 %v3262, %v3278
    %v3286 = vadd.f32 %v3263, %v3278
    %v3287 = vadd.f32 %v3264, %v3278
    %v3288 = vadd.f32 %v3265, %v3278
    %v3289 = vadd.f32 %v3266, %v3278
    %v3290 = vadd.f32 %v3267, %v3278
    %v3291 = vadd.f32 %v3268, %v3278
    %v3292 = vadd.f32 %v3269, %v3278
    %v3293 = vadd.f32 %v3270, %v3278
    %v3294 = vadd.f32 %v3271, %v3278
    %v3295 = vadd.f32 %v3272, %v3278
    %v3296 = vmax.f32 %v3280, 0.0
    %v3297 = vmax.f32 %v3281, 0.0
    %v3298 = vmax.f32 %v3282, 0.0
    %v3299 = vmax.f32 %v3283, 0.0
    %v3300 = vmax.f32 %v3284, 0.0
    %v3301 = vmax.f32 %v3285, 0.0
    %v3302 = vmax.f32 %v3286, 0.0
    %v3303 = vmax.f32 %v3287, 0.0
    %v3304 = vmax.f32 %v3288, 0.0
    %v3305 = vmax.f32 %v3289, 0.0
    %v3306 = vmax.f32 %v3290, 0.0
    %v3307 = vmax.f32 %v3291, 0.0
    %v3308 = vmax.f32 %v3292, 0.0
    %v3309 = vmax.f32 %v3293, 0.0
    %v3310 = vmax.f32 %v3294, 0.0
    %v3311 = vmax.f32 %v3295, 0.0
    %vm3312 = vcmask 523264
    %3313 = vst.msk [vmem:[#allocation3] sm:$0xff] %vm3312, %v3296
    %3314 = vst.msk [vmem:[#allocation3 + $0x8] sm:$0xff] %vm3312, %v3297
    %3315 = vst.msk [vmem:[#allocation3 + $0x10] sm:$0xff] %vm3312, %v3298
    %3316 = vst.msk [vmem:[#allocation3 + $0x18] sm:$0xff] %vm3312, %v3299
    %3317 = vst.msk [vmem:[#allocation3 + $0x20] sm:$0xff] %vm3312, %v3300
    %3318 = vst.msk [vmem:[#allocation3 + $0x28] sm:$0xff] %vm3312, %v3301
    %3319 = vst.msk [vmem:[#allocation3 + $0x30] sm:$0xff] %vm3312, %v3302
    %3320 = vst.msk [vmem:[#allocation3 + $0x38] sm:$0xff] %vm3312, %v3303
    %3321 = vst.msk [vmem:[#allocation3 + $0x40] sm:$0xff] %vm3312, %v3304
    %3322 = vst.msk [vmem:[#allocation3 + $0x48] sm:$0xff] %vm3312, %v3305
    %3323 = vst.msk [vmem:[#allocation3 + $0x50] sm:$0xff] %vm3312, %v3306
    %3324 = vst.msk [vmem:[#allocation3 + $0x58] sm:$0xff] %vm3312, %v3307
    %3325 = vst.msk [vmem:[#allocation3 + $0x60] sm:$0xff] %vm3312, %v3308
    %3326 = vst.msk [vmem:[#allocation3 + $0x68] sm:$0xff] %vm3312, %v3309
    %3327 = vst.msk [vmem:[#allocation3 + $0x70] sm:$0xff] %vm3312, %v3310
    %3328 = vst.msk [vmem:[#allocation3 + $0x78] sm:$0xff] %vm3312, %v3311
    %v3329 = vld [vmem:[#allocation3] sm:$0x1]
    %v3330 = vld [vmem:[#allocation3 + $0x40] sm:$0x1]
    %v3334 = vunpack.c.l.s4 1983009808
    %v3335 = vunpack.c.0.s8 %v3334
    %v3336 = vlaneseq
    %v3337 = vshrl.u32 %v3336, 7
    %v3338 = vsub.s32 %v3335, %v3337
    %v3339 = vrot.slane %v3329, %v3338
    %v3341 = vunpack.c.l.s4 1983009808
    %v3342 = vunpack.c.0.s8 %v3341
    %v3343 = vlaneseq
    %v3344 = vshrl.u32 %v3343, 7
    %v3345 = vsub.s32 %v3342, %v3344
    %v3346 = vrot.slane %v3330, %v3345
    %vm3347 = vcmask 1044484
    %v3348 = vsel %vm3347, %v3339, %v3339
    %vm3349 = vcmask 1046534
    %v3350 = vsel %vm3349, %v3339, %v3348
    %v3351 = vrot.slane %v3346, 7
    %vm3352 = vcmask 1041409
    %v3353 = vsel %vm3352, %v3351, %v3350
    %vm3354 = vcmask 1043459
    %v3355 = vsel %vm3354, %v3351, %v3353
    %vm3356 = vcmask 1045509
    %v3357 = vsel %vm3356, %v3351, %v3355
    %vm3358 = vcmask 1047559
    %v3359 = vsel %vm3358, %v3351, %v3357
    %vm3361 = vcmask 517120
    %3362 = vst.msk [vmem:[#allocation4] sm:$0x3] %vm3361, %v3359
    %v3363 = vld [vmem:[#allocation3 + $0x1] sm:$0x1]
    %v3364 = vld [vmem:[#allocation3 + $0x41] sm:$0x1]
    %v3368 = vunpack.c.l.s4 1983009808
    %v3369 = vunpack.c.0.s8 %v3368
    %v3370 = vlaneseq
    %v3371 = vshrl.u32 %v3370, 7
    %v3372 = vsub.s32 %v3369, %v3371
    %v3373 = vrot.slane %v3363, %v3372
    %v3375 = vunpack.c.l.s4 1983009808
    %v3376 = vunpack.c.0.s8 %v3375
    %v3377 = vlaneseq
    %v3378 = vshrl.u32 %v3377, 7
    %v3379 = vsub.s32 %v3376, %v3378
    %v3380 = vrot.slane %v3364, %v3379
    %v3381 = vsel %vm3347, %v3373, %v3373
    %v3382 = vsel %vm3349, %v3373, %v3381
    %v3383 = vrot.slane %v3380, 7
    %v3384 = vsel %vm3352, %v3383, %v3382
    %v3385 = vsel %vm3354, %v3383, %v3384
    %v3386 = vsel %vm3356, %v3383, %v3385
    %v3387 = vsel %vm3358, %v3383, %v3386
    %3388 = vrot.lane.b32.xlu0 %v3387, 64
    %v3389 = vpop.permute.xlu0 %3388
    %vm3391 = vcmask 1041920
    %3392 = vst.msk [vmem:[#allocation4] sm:$0x3] %vm3391, %v3389
    %v3393 = vld [vmem:[#allocation3 + $0x2] sm:$0x1]
    %v3394 = vld [vmem:[#allocation3 + $0x42] sm:$0x1]
    %v3398 = vunpack.c.l.s4 1983009808
    %v3399 = vunpack.c.0.s8 %v3398
    %v3400 = vlaneseq
    %v3401 = vshrl.u32 %v3400, 7
    %v3402 = vsub.s32 %v3399, %v3401
    %v3403 = vrot.slane %v3393, %v3402
    %v3405 = vunpack.c.l.s4 1983009808
    %v3406 = vunpack.c.0.s8 %v3405
    %v3407 = vlaneseq
    %v3408 = vshrl.u32 %v3407, 7
    %v3409 = vsub.s32 %v3406, %v3408
    %v3410 = vrot.slane %v3394, %v3409
    %v3411 = vsel %vm3347, %v3403, %v3403
    %v3412 = vsel %vm3349, %v3403, %v3411
    %v3413 = vrot.slane %v3410, 7
    %v3414 = vsel %vm3352, %v3413, %v3412
    %v3415 = vsel %vm3354, %v3413, %v3414
    %v3416 = vsel %vm3356, %v3413, %v3415
    %v3417 = vsel %vm3358, %v3413, %v3416
    %3419 = vst.msk [vmem:[#allocation4 + $0x2] sm:$0x3] %vm3361, %v3417
    %v3420 = vld [vmem:[#allocation3 + $0x3] sm:$0x1]
    %v3421 = vld [vmem:[#allocation3 + $0x43] sm:$0x1]
    %v3425 = vunpack.c.l.s4 1983009808
    %v3426 = vunpack.c.0.s8 %v3425
    %v3427 = vlaneseq
    %v3428 = vshrl.u32 %v3427, 7
    %v3429 = vsub.s32 %v3426, %v3428
    %v3430 = vrot.slane %v3420, %v3429
    %v3432 = vunpack.c.l.s4 1983009808
    %v3433 = vunpack.c.0.s8 %v3432
    %v3434 = vlaneseq
    %v3435 = vshrl.u32 %v3434, 7
    %v3436 = vsub.s32 %v3433, %v3435
    %v3437 = vrot.slane %v3421, %v3436
    %v3438 = vsel %vm3347, %v3430, %v3430
    %v3439 = vsel %vm3349, %v3430, %v3438
    %v3440 = vrot.slane %v3437, 7
    %v3441 = vsel %vm3352, %v3440, %v3439
    %v3442 = vsel %vm3354, %v3440, %v3441
    %v3443 = vsel %vm3356, %v3440, %v3442
    %v3444 = vsel %vm3358, %v3440, %v3443
    %3445 = vrot.lane.b32.xlu0 %v3444, 64
    %v3446 = vpop.permute.xlu0 %3445
    %3448 = vst.msk [vmem:[#allocation4 + $0x2] sm:$0x3] %vm3391, %v3446
    %v3449 = vld [vmem:[#allocation3 + $0x4] sm:$0x1]
    %v3450 = vld [vmem:[#allocation3 + $0x44] sm:$0x1]
    %v3454 = vunpack.c.l.s4 1983009808
    %v3455 = vunpack.c.0.s8 %v3454
    %v3456 = vlaneseq
    %v3457 = vshrl.u32 %v3456, 7
    %v3458 = vsub.s32 %v3455, %v3457
    %v3459 = vrot.slane %v3449, %v3458
    %v3461 = vunpack.c.l.s4 1983009808
    %v3462 = vunpack.c.0.s8 %v3461
    %v3463 = vlaneseq
    %v3464 = vshrl.u32 %v3463, 7
    %v3465 = vsub.s32 %v3462, %v3464
    %v3466 = vrot.slane %v3450, %v3465
    %v3467 = vsel %vm3347, %v3459, %v3459
    %v3468 = vsel %vm3349, %v3459, %v3467
    %v3469 = vrot.slane %v3466, 7
    %v3470 = vsel %vm3352, %v3469, %v3468
    %v3471 = vsel %vm3354, %v3469, %v3470
    %v3472 = vsel %vm3356, %v3469, %v3471
    %v3473 = vsel %vm3358, %v3469, %v3472
    %3475 = vst.msk [vmem:[#allocation4 + $0x4] sm:$0x3] %vm3361, %v3473
    %v3476 = vld [vmem:[#allocation3 + $0x5] sm:$0x1]
    %v3477 = vld [vmem:[#allocation3 + $0x45] sm:$0x1]
    %v3481 = vunpack.c.l.s4 1983009808
    %v3482 = vunpack.c.0.s8 %v3481
    %v3483 = vlaneseq
    %v3484 = vshrl.u32 %v3483, 7
    %v3485 = vsub.s32 %v3482, %v3484
    %v3486 = vrot.slane %v3476, %v3485
    %v3488 = vunpack.c.l.s4 1983009808
    %v3489 = vunpack.c.0.s8 %v3488
    %v3490 = vlaneseq
    %v3491 = vshrl.u32 %v3490, 7
    %v3492 = vsub.s32 %v3489, %v3491
    %v3493 = vrot.slane %v3477, %v3492
    %v3494 = vsel %vm3347, %v3486, %v3486
    %v3495 = vsel %vm3349, %v3486, %v3494
    %v3496 = vrot.slane %v3493, 7
    %v3497 = vsel %vm3352, %v3496, %v3495
    %v3498 = vsel %vm3354, %v3496, %v3497
    %v3499 = vsel %vm3356, %v3496, %v3498
    %v3500 = vsel %vm3358, %v3496, %v3499
    %3501 = vrot.lane.b32.xlu0 %v3500, 64
    %v3502 = vpop.permute.xlu0 %3501
    %3504 = vst.msk [vmem:[#allocation4 + $0x4] sm:$0x3] %vm3391, %v3502
    %v3505 = vld [vmem:[#allocation3 + $0x6] sm:$0x1]
    %v3506 = vld [vmem:[#allocation3 + $0x46] sm:$0x1]
    %v3510 = vunpack.c.l.s4 1983009808
    %v3511 = vunpack.c.0.s8 %v3510
    %v3512 = vlaneseq
    %v3513 = vshrl.u32 %v3512, 7
    %v3514 = vsub.s32 %v3511, %v3513
    %v3515 = vrot.slane %v3505, %v3514
    %v3517 = vunpack.c.l.s4 1983009808
    %v3518 = vunpack.c.0.s8 %v3517
    %v3519 = vlaneseq
    %v3520 = vshrl.u32 %v3519, 7
    %v3521 = vsub.s32 %v3518, %v3520
    %v3522 = vrot.slane %v3506, %v3521
    %v3523 = vsel %vm3347, %v3515, %v3515
    %v3524 = vsel %vm3349, %v3515, %v3523
    %v3525 = vrot.slane %v3522, 7
    %v3526 = vsel %vm3352, %v3525, %v3524
    %v3527 = vsel %vm3354, %v3525, %v3526
    %v3528 = vsel %vm3356, %v3525, %v3527
    %v3529 = vsel %vm3358, %v3525, %v3528
    %3531 = vst.msk [vmem:[#allocation4 + $0x6] sm:$0x3] %vm3361, %v3529
    %v3532 = vld [vmem:[#allocation3 + $0x7] sm:$0x1]
    %v3533 = vld [vmem:[#allocation3 + $0x47] sm:$0x1]
    %v3537 = vunpack.c.l.s4 1983009808
    %v3538 = vunpack.c.0.s8 %v3537
    %v3539 = vlaneseq
    %v3540 = vshrl.u32 %v3539, 7
    %v3541 = vsub.s32 %v3538, %v3540
    %v3542 = vrot.slane %v3532, %v3541
    %v3544 = vunpack.c.l.s4 1983009808
    %v3545 = vunpack.c.0.s8 %v3544
    %v3546 = vlaneseq
    %v3547 = vshrl.u32 %v3546, 7
    %v3548 = vsub.s32 %v3545, %v3547
    %v3549 = vrot.slane %v3533, %v3548
    %v3550 = vsel %vm3347, %v3542, %v3542
    %v3551 = vsel %vm3349, %v3542, %v3550
    %v3552 = vrot.slane %v3549, 7
    %v3553 = vsel %vm3352, %v3552, %v3551
    %v3554 = vsel %vm3354, %v3552, %v3553
    %v3555 = vsel %vm3356, %v3552, %v3554
    %v3556 = vsel %vm3358, %v3552, %v3555
    %3557 = vrot.lane.b32.xlu0 %v3556, 64
    %v3558 = vpop.permute.xlu0 %3557
    %3560 = vst.msk [vmem:[#allocation4 + $0x6] sm:$0x3] %vm3391, %v3558
    %v3561 = vld [vmem:[#allocation3 + $0x8] sm:$0x1]
    %v3562 = vld [vmem:[#allocation3 + $0x48] sm:$0x1]
    %v3566 = vunpack.c.l.s4 1983009808
    %v3567 = vunpack.c.0.s8 %v3566
    %v3568 = vlaneseq
    %v3569 = vshrl.u32 %v3568, 7
    %v3570 = vsub.s32 %v3567, %v3569
    %v3571 = vrot.slane %v3561, %v3570
    %v3573 = vunpack.c.l.s4 1983009808
    %v3574 = vunpack.c.0.s8 %v3573
    %v3575 = vlaneseq
    %v3576 = vshrl.u32 %v3575, 7
    %v3577 = vsub.s32 %v3574, %v3576
    %v3578 = vrot.slane %v3562, %v3577
    %v3579 = vsel %vm3347, %v3571, %v3571
    %v3580 = vsel %vm3349, %v3571, %v3579
    %v3581 = vrot.slane %v3578, 7
    %v3582 = vsel %vm3352, %v3581, %v3580
    %v3583 = vsel %vm3354, %v3581, %v3582
    %v3584 = vsel %vm3356, %v3581, %v3583
    %v3585 = vsel %vm3358, %v3581, %v3584
    %3587 = vst.msk [vmem:[#allocation4 + $0x8] sm:$0x3] %vm3361, %v3585
    %v3588 = vld [vmem:[#allocation3 + $0x9] sm:$0x1]
    %v3589 = vld [vmem:[#allocation3 + $0x49] sm:$0x1]
    %v3593 = vunpack.c.l.s4 1983009808
    %v3594 = vunpack.c.0.s8 %v3593
    %v3595 = vlaneseq
    %v3596 = vshrl.u32 %v3595, 7
    %v3597 = vsub.s32 %v3594, %v3596
    %v3598 = vrot.slane %v3588, %v3597
    %v3600 = vunpack.c.l.s4 1983009808
    %v3601 = vunpack.c.0.s8 %v3600
    %v3602 = vlaneseq
    %v3603 = vshrl.u32 %v3602, 7
    %v3604 = vsub.s32 %v3601, %v3603
    %v3605 = vrot.slane %v3589, %v3604
    %v3606 = vsel %vm3347, %v3598, %v3598
    %v3607 = vsel %vm3349, %v3598, %v3606
    %v3608 = vrot.slane %v3605, 7
    %v3609 = vsel %vm3352, %v3608, %v3607
    %v3610 = vsel %vm3354, %v3608, %v3609
    %v3611 = vsel %vm3356, %v3608, %v3610
    %v3612 = vsel %vm3358, %v3608, %v3611
    %3613 = vrot.lane.b32.xlu0 %v3612, 64
    %v3614 = vpop.permute.xlu0 %3613
    %3616 = vst.msk [vmem:[#allocation4 + $0x8] sm:$0x3] %vm3391, %v3614
    %v3617 = vld [vmem:[#allocation3 + $0xa] sm:$0x1]
    %v3618 = vld [vmem:[#allocation3 + $0x4a] sm:$0x1]
    %v3622 = vunpack.c.l.s4 1983009808
    %v3623 = vunpack.c.0.s8 %v3622
    %v3624 = vlaneseq
    %v3625 = vshrl.u32 %v3624, 7
    %v3626 = vsub.s32 %v3623, %v3625
    %v3627 = vrot.slane %v3617, %v3626
    %v3629 = vunpack.c.l.s4 1983009808
    %v3630 = vunpack.c.0.s8 %v3629
    %v3631 = vlaneseq
    %v3632 = vshrl.u32 %v3631, 7
    %v3633 = vsub.s32 %v3630, %v3632
    %v3634 = vrot.slane %v3618, %v3633
    %v3635 = vsel %vm3347, %v3627, %v3627
    %v3636 = vsel %vm3349, %v3627, %v3635
    %v3637 = vrot.slane %v3634, 7
    %v3638 = vsel %vm3352, %v3637, %v3636
    %v3639 = vsel %vm3354, %v3637, %v3638
    %v3640 = vsel %vm3356, %v3637, %v3639
    %v3641 = vsel %vm3358, %v3637, %v3640
    %3643 = vst.msk [vmem:[#allocation4 + $0xa] sm:$0x3] %vm3361, %v3641
    %v3644 = vld [vmem:[#allocation3 + $0xb] sm:$0x1]
    %v3645 = vld [vmem:[#allocation3 + $0x4b] sm:$0x1]
    %v3649 = vunpack.c.l.s4 1983009808
    %v3650 = vunpack.c.0.s8 %v3649
    %v3651 = vlaneseq
    %v3652 = vshrl.u32 %v3651, 7
    %v3653 = vsub.s32 %v3650, %v3652
    %v3654 = vrot.slane %v3644, %v3653
    %v3656 = vunpack.c.l.s4 1983009808
    %v3657 = vunpack.c.0.s8 %v3656
    %v3658 = vlaneseq
    %v3659 = vshrl.u32 %v3658, 7
    %v3660 = vsub.s32 %v3657, %v3659
    %v3661 = vrot.slane %v3645, %v3660
    %v3662 = vsel %vm3347, %v3654, %v3654
    %v3663 = vsel %vm3349, %v3654, %v3662
    %v3664 = vrot.slane %v3661, 7
    %v3665 = vsel %vm3352, %v3664, %v3663
    %v3666 = vsel %vm3354, %v3664, %v3665
    %v3667 = vsel %vm3356, %v3664, %v3666
    %v3668 = vsel %vm3358, %v3664, %v3667
    %3669 = vrot.lane.b32.xlu0 %v3668, 64
    %v3670 = vpop.permute.xlu0 %3669
    %3672 = vst.msk [vmem:[#allocation4 + $0xa] sm:$0x3] %vm3391, %v3670
    %v3673 = vld [vmem:[#allocation3 + $0xc] sm:$0x1]
    %v3674 = vld [vmem:[#allocation3 + $0x4c] sm:$0x1]
    %v3678 = vunpack.c.l.s4 1983009808
    %v3679 = vunpack.c.0.s8 %v3678
    %v3680 = vlaneseq
    %v3681 = vshrl.u32 %v3680, 7
    %v3682 = vsub.s32 %v3679, %v3681
    %v3683 = vrot.slane %v3673, %v3682
    %v3685 = vunpack.c.l.s4 1983009808
    %v3686 = vunpack.c.0.s8 %v3685
    %v3687 = vlaneseq
    %v3688 = vshrl.u32 %v3687, 7
    %v3689 = vsub.s32 %v3686, %v3688
    %v3690 = vrot.slane %v3674, %v3689
    %v3691 = vsel %vm3347, %v3683, %v3683
    %v3692 = vsel %vm3349, %v3683, %v3691
    %v3693 = vrot.slane %v3690, 7
    %v3694 = vsel %vm3352, %v3693, %v3692
    %v3695 = vsel %vm3354, %v3693, %v3694
    %v3696 = vsel %vm3356, %v3693, %v3695
    %v3697 = vsel %vm3358, %v3693, %v3696
    %3699 = vst.msk [vmem:[#allocation4 + $0xc] sm:$0x3] %vm3361, %v3697
    %v3700 = vld [vmem:[#allocation3 + $0xd] sm:$0x1]
    %v3701 = vld [vmem:[#allocation3 + $0x4d] sm:$0x1]
    %v3705 = vunpack.c.l.s4 1983009808
    %v3706 = vunpack.c.0.s8 %v3705
    %v3707 = vlaneseq
    %v3708 = vshrl.u32 %v3707, 7
    %v3709 = vsub.s32 %v3706, %v3708
    %v3710 = vrot.slane %v3700, %v3709
    %v3712 = vunpack.c.l.s4 1983009808
    %v3713 = vunpack.c.0.s8 %v3712
    %v3714 = vlaneseq
    %v3715 = vshrl.u32 %v3714, 7
    %v3716 = vsub.s32 %v3713, %v3715
    %v3717 = vrot.slane %v3701, %v3716
    %v3718 = vsel %vm3347, %v3710, %v3710
    %v3719 = vsel %vm3349, %v3710, %v3718
    %v3720 = vrot.slane %v3717, 7
    %v3721 = vsel %vm3352, %v3720, %v3719
    %v3722 = vsel %vm3354, %v3720, %v3721
    %v3723 = vsel %vm3356, %v3720, %v3722
    %v3724 = vsel %vm3358, %v3720, %v3723
    %3725 = vrot.lane.b32.xlu0 %v3724, 64
    %v3726 = vpop.permute.xlu0 %3725
    %3728 = vst.msk [vmem:[#allocation4 + $0xc] sm:$0x3] %vm3391, %v3726
    %v3729 = vld [vmem:[#allocation3 + $0xe] sm:$0x1]
    %v3730 = vld [vmem:[#allocation3 + $0x4e] sm:$0x1]
    %v3734 = vunpack.c.l.s4 1983009808
    %v3735 = vunpack.c.0.s8 %v3734
    %v3736 = vlaneseq
    %v3737 = vshrl.u32 %v3736, 7
    %v3738 = vsub.s32 %v3735, %v3737
    %v3739 = vrot.slane %v3729, %v3738
    %v3741 = vunpack.c.l.s4 1983009808
    %v3742 = vunpack.c.0.s8 %v3741
    %v3743 = vlaneseq
    %v3744 = vshrl.u32 %v3743, 7
    %v3745 = vsub.s32 %v3742, %v3744
    %v3746 = vrot.slane %v3730, %v3745
    %v3747 = vsel %vm3347, %v3739, %v3739
    %v3748 = vsel %vm3349, %v3739, %v3747
    %v3749 = vrot.slane %v3746, 7
    %v3750 = vsel %vm3352, %v3749, %v3748
    %v3751 = vsel %vm3354, %v3749, %v3750
    %v3752 = vsel %vm3356, %v3749, %v3751
    %v3753 = vsel %vm3358, %v3749, %v3752
    %3755 = vst.msk [vmem:[#allocation4 + $0xe] sm:$0x3] %vm3361, %v3753
    %v3756 = vld [vmem:[#allocation3 + $0xf] sm:$0x1]
    %v3757 = vld [vmem:[#allocation3 + $0x4f] sm:$0x1]
    %v3761 = vunpack.c.l.s4 1983009808
    %v3762 = vunpack.c.0.s8 %v3761
    %v3763 = vlaneseq
    %v3764 = vshrl.u32 %v3763, 7
    %v3765 = vsub.s32 %v3762, %v3764
    %v3766 = vrot.slane %v3756, %v3765
    %v3768 = vunpack.c.l.s4 1983009808
    %v3769 = vunpack.c.0.s8 %v3768
    %v3770 = vlaneseq
    %v3771 = vshrl.u32 %v3770, 7
    %v3772 = vsub.s32 %v3769, %v3771
    %v3773 = vrot.slane %v3757, %v3772
    %v3774 = vsel %vm3347, %v3766, %v3766
    %v3775 = vsel %vm3349, %v3766, %v3774
    %v3776 = vrot.slane %v3773, 7
    %v3777 = vsel %vm3352, %v3776, %v3775
    %v3778 = vsel %vm3354, %v3776, %v3777
    %v3779 = vsel %vm3356, %v3776, %v3778
    %v3780 = vsel %vm3358, %v3776, %v3779
    %3781 = vrot.lane.b32.xlu0 %v3780, 64
    %v3782 = vpop.permute.xlu0 %3781
    %3784 = vst.msk [vmem:[#allocation4 + $0xe] sm:$0x3] %vm3391, %v3782
    %v3785 = vld [vmem:[#allocation3 + $0x10] sm:$0x1]
    %v3786 = vld [vmem:[#allocation3 + $0x50] sm:$0x1]
    %v3790 = vunpack.c.l.s4 1983009808
    %v3791 = vunpack.c.0.s8 %v3790
    %v3792 = vlaneseq
    %v3793 = vshrl.u32 %v3792, 7
    %v3794 = vsub.s32 %v3791, %v3793
    %v3795 = vrot.slane %v3785, %v3794
    %v3797 = vunpack.c.l.s4 1983009808
    %v3798 = vunpack.c.0.s8 %v3797
    %v3799 = vlaneseq
    %v3800 = vshrl.u32 %v3799, 7
    %v3801 = vsub.s32 %v3798, %v3800
    %v3802 = vrot.slane %v3786, %v3801
    %v3803 = vsel %vm3347, %v3795, %v3795
    %v3804 = vsel %vm3349, %v3795, %v3803
    %v3805 = vrot.slane %v3802, 7
    %v3806 = vsel %vm3352, %v3805, %v3804
    %v3807 = vsel %vm3354, %v3805, %v3806
    %v3808 = vsel %vm3356, %v3805, %v3807
    %v3809 = vsel %vm3358, %v3805, %v3808
    %3811 = vst.msk [vmem:[#allocation4 + $0x10] sm:$0x3] %vm3361, %v3809
    %v3812 = vld [vmem:[#allocation3 + $0x11] sm:$0x1]
    %v3813 = vld [vmem:[#allocation3 + $0x51] sm:$0x1]
    %v3817 = vunpack.c.l.s4 1983009808
    %v3818 = vunpack.c.0.s8 %v3817
    %v3819 = vlaneseq
    %v3820 = vshrl.u32 %v3819, 7
    %v3821 = vsub.s32 %v3818, %v3820
    %v3822 = vrot.slane %v3812, %v3821
    %v3824 = vunpack.c.l.s4 1983009808
    %v3825 = vunpack.c.0.s8 %v3824
    %v3826 = vlaneseq
    %v3827 = vshrl.u32 %v3826, 7
    %v3828 = vsub.s32 %v3825, %v3827
    %v3829 = vrot.slane %v3813, %v3828
    %v3830 = vsel %vm3347, %v3822, %v3822
    %v3831 = vsel %vm3349, %v3822, %v3830
    %v3832 = vrot.slane %v3829, 7
    %v3833 = vsel %vm3352, %v3832, %v3831
    %v3834 = vsel %vm3354, %v3832, %v3833
    %v3835 = vsel %vm3356, %v3832, %v3834
    %v3836 = vsel %vm3358, %v3832, %v3835
    %3837 = vrot.lane.b32.xlu0 %v3836, 64
    %v3838 = vpop.permute.xlu0 %3837
    %3840 = vst.msk [vmem:[#allocation4 + $0x10] sm:$0x3] %vm3391, %v3838
    %v3841 = vld [vmem:[#allocation3 + $0x12] sm:$0x1]
    %v3842 = vld [vmem:[#allocation3 + $0x52] sm:$0x1]
    %v3846 = vunpack.c.l.s4 1983009808
    %v3847 = vunpack.c.0.s8 %v3846
    %v3848 = vlaneseq
    %v3849 = vshrl.u32 %v3848, 7
    %v3850 = vsub.s32 %v3847, %v3849
    %v3851 = vrot.slane %v3841, %v3850
    %v3853 = vunpack.c.l.s4 1983009808
    %v3854 = vunpack.c.0.s8 %v3853
    %v3855 = vlaneseq
    %v3856 = vshrl.u32 %v3855, 7
    %v3857 = vsub.s32 %v3854, %v3856
    %v3858 = vrot.slane %v3842, %v3857
    %v3859 = vsel %vm3347, %v3851, %v3851
    %v3860 = vsel %vm3349, %v3851, %v3859
    %v3861 = vrot.slane %v3858, 7
    %v3862 = vsel %vm3352, %v3861, %v3860
    %v3863 = vsel %vm3354, %v3861, %v3862
    %v3864 = vsel %vm3356, %v3861, %v3863
    %v3865 = vsel %vm3358, %v3861, %v3864
    %3867 = vst.msk [vmem:[#allocation4 + $0x12] sm:$0x3] %vm3361, %v3865
    %v3868 = vld [vmem:[#allocation3 + $0x13] sm:$0x1]
    %v3869 = vld [vmem:[#allocation3 + $0x53] sm:$0x1]
    %v3873 = vunpack.c.l.s4 1983009808
    %v3874 = vunpack.c.0.s8 %v3873
    %v3875 = vlaneseq
    %v3876 = vshrl.u32 %v3875, 7
    %v3877 = vsub.s32 %v3874, %v3876
    %v3878 = vrot.slane %v3868, %v3877
    %v3880 = vunpack.c.l.s4 1983009808
    %v3881 = vunpack.c.0.s8 %v3880
    %v3882 = vlaneseq
    %v3883 = vshrl.u32 %v3882, 7
    %v3884 = vsub.s32 %v3881, %v3883
    %v3885 = vrot.slane %v3869, %v3884
    %v3886 = vsel %vm3347, %v3878, %v3878
    %v3887 = vsel %vm3349, %v3878, %v3886
    %v3888 = vrot.slane %v3885, 7
    %v3889 = vsel %vm3352, %v3888, %v3887
    %v3890 = vsel %vm3354, %v3888, %v3889
    %v3891 = vsel %vm3356, %v3888, %v3890
    %v3892 = vsel %vm3358, %v3888, %v3891
    %3893 = vrot.lane.b32.xlu0 %v3892, 64
    %v3894 = vpop.permute.xlu0 %3893
    %3896 = vst.msk [vmem:[#allocation4 + $0x12] sm:$0x3] %vm3391, %v3894
    %v3897 = vld [vmem:[#allocation3 + $0x14] sm:$0x1]
    %v3898 = vld [vmem:[#allocation3 + $0x54] sm:$0x1]
    %v3902 = vunpack.c.l.s4 1983009808
    %v3903 = vunpack.c.0.s8 %v3902
    %v3904 = vlaneseq
    %v3905 = vshrl.u32 %v3904, 7
    %v3906 = vsub.s32 %v3903, %v3905
    %v3907 = vrot.slane %v3897, %v3906
    %v3909 = vunpack.c.l.s4 1983009808
    %v3910 = vunpack.c.0.s8 %v3909
    %v3911 = vlaneseq
    %v3912 = vshrl.u32 %v3911, 7
    %v3913 = vsub.s32 %v3910, %v3912
    %v3914 = vrot.slane %v3898, %v3913
    %v3915 = vsel %vm3347, %v3907, %v3907
    %v3916 = vsel %vm3349, %v3907, %v3915
    %v3917 = vrot.slane %v3914, 7
    %v3918 = vsel %vm3352, %v3917, %v3916
    %v3919 = vsel %vm3354, %v3917, %v3918
    %v3920 = vsel %vm3356, %v3917, %v3919
    %v3921 = vsel %vm3358, %v3917, %v3920
    %3923 = vst.msk [vmem:[#allocation4 + $0x14] sm:$0x3] %vm3361, %v3921
    %v3924 = vld [vmem:[#allocation3 + $0x15] sm:$0x1]
    %v3925 = vld [vmem:[#allocation3 + $0x55] sm:$0x1]
    %v3929 = vunpack.c.l.s4 1983009808
    %v3930 = vunpack.c.0.s8 %v3929
    %v3931 = vlaneseq
    %v3932 = vshrl.u32 %v3931, 7
    %v3933 = vsub.s32 %v3930, %v3932
    %v3934 = vrot.slane %v3924, %v3933
    %v3936 = vunpack.c.l.s4 1983009808
    %v3937 = vunpack.c.0.s8 %v3936
    %v3938 = vlaneseq
    %v3939 = vshrl.u32 %v3938, 7
    %v3940 = vsub.s32 %v3937, %v3939
    %v3941 = vrot.slane %v3925, %v3940
    %v3942 = vsel %vm3347, %v3934, %v3934
    %v3943 = vsel %vm3349, %v3934, %v3942
    %v3944 = vrot.slane %v3941, 7
    %v3945 = vsel %vm3352, %v3944, %v3943
    %v3946 = vsel %vm3354, %v3944, %v3945
    %v3947 = vsel %vm3356, %v3944, %v3946
    %v3948 = vsel %vm3358, %v3944, %v3947
    %3949 = vrot.lane.b32.xlu0 %v3948, 64
    %v3950 = vpop.permute.xlu0 %3949
    %3952 = vst.msk [vmem:[#allocation4 + $0x14] sm:$0x3] %vm3391, %v3950
    %v3953 = vld [vmem:[#allocation3 + $0x16] sm:$0x1]
    %v3954 = vld [vmem:[#allocation3 + $0x56] sm:$0x1]
    %v3958 = vunpack.c.l.s4 1983009808
    %v3959 = vunpack.c.0.s8 %v3958
    %v3960 = vlaneseq
    %v3961 = vshrl.u32 %v3960, 7
    %v3962 = vsub.s32 %v3959, %v3961
    %v3963 = vrot.slane %v3953, %v3962
    %v3965 = vunpack.c.l.s4 1983009808
    %v3966 = vunpack.c.0.s8 %v3965
    %v3967 = vlaneseq
    %v3968 = vshrl.u32 %v3967, 7
    %v3969 = vsub.s32 %v3966, %v3968
    %v3970 = vrot.slane %v3954, %v3969
    %v3971 = vsel %vm3347, %v3963, %v3963
    %v3972 = vsel %vm3349, %v3963, %v3971
    %v3973 = vrot.slane %v3970, 7
    %v3974 = vsel %vm3352, %v3973, %v3972
    %v3975 = vsel %vm3354, %v3973, %v3974
    %v3976 = vsel %vm3356, %v3973, %v3975
    %v3977 = vsel %vm3358, %v3973, %v3976
    %3979 = vst.msk [vmem:[#allocation4 + $0x16] sm:$0x3] %vm3361, %v3977
    %v3980 = vld [vmem:[#allocation3 + $0x17] sm:$0x1]
    %v3981 = vld [vmem:[#allocation3 + $0x57] sm:$0x1]
    %v3985 = vunpack.c.l.s4 1983009808
    %v3986 = vunpack.c.0.s8 %v3985
    %v3987 = vlaneseq
    %v3988 = vshrl.u32 %v3987, 7
    %v3989 = vsub.s32 %v3986, %v3988
    %v3990 = vrot.slane %v3980, %v3989
    %v3992 = vunpack.c.l.s4 1983009808
    %v3993 = vunpack.c.0.s8 %v3992
    %v3994 = vlaneseq
    %v3995 = vshrl.u32 %v3994, 7
    %v3996 = vsub.s32 %v3993, %v3995
    %v3997 = vrot.slane %v3981, %v3996
    %v3998 = vsel %vm3347, %v3990, %v3990
    %v3999 = vsel %vm3349, %v3990, %v3998
    %v4000 = vrot.slane %v3997, 7
    %v4001 = vsel %vm3352, %v4000, %v3999
    %v4002 = vsel %vm3354, %v4000, %v4001
    %v4003 = vsel %vm3356, %v4000, %v4002
    %v4004 = vsel %vm3358, %v4000, %v4003
    %4005 = vrot.lane.b32.xlu0 %v4004, 64
    %v4006 = vpop.permute.xlu0 %4005
    %4008 = vst.msk [vmem:[#allocation4 + $0x16] sm:$0x3] %vm3391, %v4006
    %v4009 = vld [vmem:[#allocation3 + $0x18] sm:$0x1]
    %v4010 = vld [vmem:[#allocation3 + $0x58] sm:$0x1]
    %v4014 = vunpack.c.l.s4 1983009808
    %v4015 = vunpack.c.0.s8 %v4014
    %v4016 = vlaneseq
    %v4017 = vshrl.u32 %v4016, 7
    %v4018 = vsub.s32 %v4015, %v4017
    %v4019 = vrot.slane %v4009, %v4018
    %v4021 = vunpack.c.l.s4 1983009808
    %v4022 = vunpack.c.0.s8 %v4021
    %v4023 = vlaneseq
    %v4024 = vshrl.u32 %v4023, 7
    %v4025 = vsub.s32 %v4022, %v4024
    %v4026 = vrot.slane %v4010, %v4025
    %v4027 = vsel %vm3347, %v4019, %v4019
    %v4028 = vsel %vm3349, %v4019, %v4027
    %v4029 = vrot.slane %v4026, 7
    %v4030 = vsel %vm3352, %v4029, %v4028
    %v4031 = vsel %vm3354, %v4029, %v4030
    %v4032 = vsel %vm3356, %v4029, %v4031
    %v4033 = vsel %vm3358, %v4029, %v4032
    %4035 = vst.msk [vmem:[#allocation4 + $0x18] sm:$0x3] %vm3361, %v4033
    %v4036 = vld [vmem:[#allocation3 + $0x19] sm:$0x1]
    %v4037 = vld [vmem:[#allocation3 + $0x59] sm:$0x1]
    %v4041 = vunpack.c.l.s4 1983009808
    %v4042 = vunpack.c.0.s8 %v4041
    %v4043 = vlaneseq
    %v4044 = vshrl.u32 %v4043, 7
    %v4045 = vsub.s32 %v4042, %v4044
    %v4046 = vrot.slane %v4036, %v4045
    %v4048 = vunpack.c.l.s4 1983009808
    %v4049 = vunpack.c.0.s8 %v4048
    %v4050 = vlaneseq
    %v4051 = vshrl.u32 %v4050, 7
    %v4052 = vsub.s32 %v4049, %v4051
    %v4053 = vrot.slane %v4037, %v4052
    %v4054 = vsel %vm3347, %v4046, %v4046
    %v4055 = vsel %vm3349, %v4046, %v4054
    %v4056 = vrot.slane %v4053, 7
    %v4057 = vsel %vm3352, %v4056, %v4055
    %v4058 = vsel %vm3354, %v4056, %v4057
    %v4059 = vsel %vm3356, %v4056, %v4058
    %v4060 = vsel %vm3358, %v4056, %v4059
    %4061 = vrot.lane.b32.xlu0 %v4060, 64
    %v4062 = vpop.permute.xlu0 %4061
    %4064 = vst.msk [vmem:[#allocation4 + $0x18] sm:$0x3] %vm3391, %v4062
    %v4065 = vld [vmem:[#allocation3 + $0x1a] sm:$0x1]
    %v4066 = vld [vmem:[#allocation3 + $0x5a] sm:$0x1]
    %v4070 = vunpack.c.l.s4 1983009808
    %v4071 = vunpack.c.0.s8 %v4070
    %v4072 = vlaneseq
    %v4073 = vshrl.u32 %v4072, 7
    %v4074 = vsub.s32 %v4071, %v4073
    %v4075 = vrot.slane %v4065, %v4074
    %v4077 = vunpack.c.l.s4 1983009808
    %v4078 = vunpack.c.0.s8 %v4077
    %v4079 = vlaneseq
    %v4080 = vshrl.u32 %v4079, 7
    %v4081 = vsub.s32 %v4078, %v4080
    %v4082 = vrot.slane %v4066, %v4081
    %v4083 = vsel %vm3347, %v4075, %v4075
    %v4084 = vsel %vm3349, %v4075, %v4083
    %v4085 = vrot.slane %v4082, 7
    %v4086 = vsel %vm3352, %v4085, %v4084
    %v4087 = vsel %vm3354, %v4085, %v4086
    %v4088 = vsel %vm3356, %v4085, %v4087
    %v4089 = vsel %vm3358, %v4085, %v4088
    %4091 = vst.msk [vmem:[#allocation4 + $0x1a] sm:$0x3] %vm3361, %v4089
    %v4092 = vld [vmem:[#allocation3 + $0x1b] sm:$0x1]
    %v4093 = vld [vmem:[#allocation3 + $0x5b] sm:$0x1]
    %v4097 = vunpack.c.l.s4 1983009808
    %v4098 = vunpack.c.0.s8 %v4097
    %v4099 = vlaneseq
    %v4100 = vshrl.u32 %v4099, 7
    %v4101 = vsub.s32 %v4098, %v4100
    %v4102 = vrot.slane %v4092, %v4101
    %v4104 = vunpack.c.l.s4 1983009808
    %v4105 = vunpack.c.0.s8 %v4104
    %v4106 = vlaneseq
    %v4107 = vshrl.u32 %v4106, 7
    %v4108 = vsub.s32 %v4105, %v4107
    %v4109 = vrot.slane %v4093, %v4108
    %v4110 = vsel %vm3347, %v4102, %v4102
    %v4111 = vsel %vm3349, %v4102, %v4110
    %v4112 = vrot.slane %v4109, 7
    %v4113 = vsel %vm3352, %v4112, %v4111
    %v4114 = vsel %vm3354, %v4112, %v4113
    %v4115 = vsel %vm3356, %v4112, %v4114
    %v4116 = vsel %vm3358, %v4112, %v4115
    %4117 = vrot.lane.b32.xlu0 %v4116, 64
    %v4118 = vpop.permute.xlu0 %4117
    %4120 = vst.msk [vmem:[#allocation4 + $0x1a] sm:$0x3] %vm3391, %v4118
    %v4121 = vld [vmem:[#allocation3 + $0x1c] sm:$0x1]
    %v4122 = vld [vmem:[#allocation3 + $0x5c] sm:$0x1]
    %v4126 = vunpack.c.l.s4 1983009808
    %v4127 = vunpack.c.0.s8 %v4126
    %v4128 = vlaneseq
    %v4129 = vshrl.u32 %v4128, 7
    %v4130 = vsub.s32 %v4127, %v4129
    %v4131 = vrot.slane %v4121, %v4130
    %v4133 = vunpack.c.l.s4 1983009808
    %v4134 = vunpack.c.0.s8 %v4133
    %v4135 = vlaneseq
    %v4136 = vshrl.u32 %v4135, 7
    %v4137 = vsub.s32 %v4134, %v4136
    %v4138 = vrot.slane %v4122, %v4137
    %v4139 = vsel %vm3347, %v4131, %v4131
    %v4140 = vsel %vm3349, %v4131, %v4139
    %v4141 = vrot.slane %v4138, 7
    %v4142 = vsel %vm3352, %v4141, %v4140
    %v4143 = vsel %vm3354, %v4141, %v4142
    %v4144 = vsel %vm3356, %v4141, %v4143
    %v4145 = vsel %vm3358, %v4141, %v4144
    %4147 = vst.msk [vmem:[#allocation4 + $0x1c] sm:$0x3] %vm3361, %v4145
    %v4148 = vld [vmem:[#allocation3 + $0x1d] sm:$0x1]
    %v4149 = vld [vmem:[#allocation3 + $0x5d] sm:$0x1]
    %v4153 = vunpack.c.l.s4 1983009808
    %v4154 = vunpack.c.0.s8 %v4153
    %v4155 = vlaneseq
    %v4156 = vshrl.u32 %v4155, 7
    %v4157 = vsub.s32 %v4154, %v4156
    %v4158 = vrot.slane %v4148, %v4157
    %v4160 = vunpack.c.l.s4 1983009808
    %v4161 = vunpack.c.0.s8 %v4160
    %v4162 = vlaneseq
    %v4163 = vshrl.u32 %v4162, 7
    %v4164 = vsub.s32 %v4161, %v4163
    %v4165 = vrot.slane %v4149, %v4164
    %v4166 = vsel %vm3347, %v4158, %v4158
    %v4167 = vsel %vm3349, %v4158, %v4166
    %v4168 = vrot.slane %v4165, 7
    %v4169 = vsel %vm3352, %v4168, %v4167
    %v4170 = vsel %vm3354, %v4168, %v4169
    %v4171 = vsel %vm3356, %v4168, %v4170
    %v4172 = vsel %vm3358, %v4168, %v4171
    %4173 = vrot.lane.b32.xlu0 %v4172, 64
    %v4174 = vpop.permute.xlu0 %4173
    %4176 = vst.msk [vmem:[#allocation4 + $0x1c] sm:$0x3] %vm3391, %v4174
    %v4177 = vld [vmem:[#allocation3 + $0x1e] sm:$0x1]
    %v4178 = vld [vmem:[#allocation3 + $0x5e] sm:$0x1]
    %v4182 = vunpack.c.l.s4 1983009808
    %v4183 = vunpack.c.0.s8 %v4182
    %v4184 = vlaneseq
    %v4185 = vshrl.u32 %v4184, 7
    %v4186 = vsub.s32 %v4183, %v4185
    %v4187 = vrot.slane %v4177, %v4186
    %v4189 = vunpack.c.l.s4 1983009808
    %v4190 = vunpack.c.0.s8 %v4189
    %v4191 = vlaneseq
    %v4192 = vshrl.u32 %v4191, 7
    %v4193 = vsub.s32 %v4190, %v4192
    %v4194 = vrot.slane %v4178, %v4193
    %v4195 = vsel %vm3347, %v4187, %v4187
    %v4196 = vsel %vm3349, %v4187, %v4195
    %v4197 = vrot.slane %v4194, 7
    %v4198 = vsel %vm3352, %v4197, %v4196
    %v4199 = vsel %vm3354, %v4197, %v4198
    %v4200 = vsel %vm3356, %v4197, %v4199
    %v4201 = vsel %vm3358, %v4197, %v4200
    %4203 = vst.msk [vmem:[#allocation4 + $0x1e] sm:$0x3] %vm3361, %v4201
    %v4204 = vld [vmem:[#allocation3 + $0x1f] sm:$0x1]
    %v4205 = vld [vmem:[#allocation3 + $0x5f] sm:$0x1]
    %v4209 = vunpack.c.l.s4 1983009808
    %v4210 = vunpack.c.0.s8 %v4209
    %v4211 = vlaneseq
    %v4212 = vshrl.u32 %v4211, 7
    %v4213 = vsub.s32 %v4210, %v4212
    %v4214 = vrot.slane %v4204, %v4213
    %v4216 = vunpack.c.l.s4 1983009808
    %v4217 = vunpack.c.0.s8 %v4216
    %v4218 = vlaneseq
    %v4219 = vshrl.u32 %v4218, 7
    %v4220 = vsub.s32 %v4217, %v4219
    %v4221 = vrot.slane %v4205, %v4220
    %v4222 = vsel %vm3347, %v4214, %v4214
    %v4223 = vsel %vm3349, %v4214, %v4222
    %v4224 = vrot.slane %v4221, 7
    %v4225 = vsel %vm3352, %v4224, %v4223
    %v4226 = vsel %vm3354, %v4224, %v4225
    %v4227 = vsel %vm3356, %v4224, %v4226
    %v4228 = vsel %vm3358, %v4224, %v4227
    %4229 = vrot.lane.b32.xlu0 %v4228, 64
    %v4230 = vpop.permute.xlu0 %4229
    %4232 = vst.msk [vmem:[#allocation4 + $0x1e] sm:$0x3] %vm3391, %v4230
    %v4233 = vld [vmem:[#allocation3 + $0x20] sm:$0x1]
    %v4234 = vld [vmem:[#allocation3 + $0x60] sm:$0x1]
    %v4238 = vunpack.c.l.s4 1983009808
    %v4239 = vunpack.c.0.s8 %v4238
    %v4240 = vlaneseq
    %v4241 = vshrl.u32 %v4240, 7
    %v4242 = vsub.s32 %v4239, %v4241
    %v4243 = vrot.slane %v4233, %v4242
    %v4245 = vunpack.c.l.s4 1983009808
    %v4246 = vunpack.c.0.s8 %v4245
    %v4247 = vlaneseq
    %v4248 = vshrl.u32 %v4247, 7
    %v4249 = vsub.s32 %v4246, %v4248
    %v4250 = vrot.slane %v4234, %v4249
    %v4251 = vsel %vm3347, %v4243, %v4243
    %v4252 = vsel %vm3349, %v4243, %v4251
    %v4253 = vrot.slane %v4250, 7
    %v4254 = vsel %vm3352, %v4253, %v4252
    %v4255 = vsel %vm3354, %v4253, %v4254
    %v4256 = vsel %vm3356, %v4253, %v4255
    %v4257 = vsel %vm3358, %v4253, %v4256
    %4259 = vst.msk [vmem:[#allocation4 + $0x20] sm:$0x3] %vm3361, %v4257
    %v4260 = vld [vmem:[#allocation3 + $0x21] sm:$0x1]
    %v4261 = vld [vmem:[#allocation3 + $0x61] sm:$0x1]
    %v4265 = vunpack.c.l.s4 1983009808
    %v4266 = vunpack.c.0.s8 %v4265
    %v4267 = vlaneseq
    %v4268 = vshrl.u32 %v4267, 7
    %v4269 = vsub.s32 %v4266, %v4268
    %v4270 = vrot.slane %v4260, %v4269
    %v4272 = vunpack.c.l.s4 1983009808
    %v4273 = vunpack.c.0.s8 %v4272
    %v4274 = vlaneseq
    %v4275 = vshrl.u32 %v4274, 7
    %v4276 = vsub.s32 %v4273, %v4275
    %v4277 = vrot.slane %v4261, %v4276
    %v4278 = vsel %vm3347, %v4270, %v4270
    %v4279 = vsel %vm3349, %v4270, %v4278
    %v4280 = vrot.slane %v4277, 7
    %v4281 = vsel %vm3352, %v4280, %v4279
    %v4282 = vsel %vm3354, %v4280, %v4281
    %v4283 = vsel %vm3356, %v4280, %v4282
    %v4284 = vsel %vm3358, %v4280, %v4283
    %4285 = vrot.lane.b32.xlu0 %v4284, 64
    %v4286 = vpop.permute.xlu0 %4285
    %4288 = vst.msk [vmem:[#allocation4 + $0x20] sm:$0x3] %vm3391, %v4286
    %v4289 = vld [vmem:[#allocation3 + $0x22] sm:$0x1]
    %v4290 = vld [vmem:[#allocation3 + $0x62] sm:$0x1]
    %v4294 = vunpack.c.l.s4 1983009808
    %v4295 = vunpack.c.0.s8 %v4294
    %v4296 = vlaneseq
    %v4297 = vshrl.u32 %v4296, 7
    %v4298 = vsub.s32 %v4295, %v4297
    %v4299 = vrot.slane %v4289, %v4298
    %v4301 = vunpack.c.l.s4 1983009808
    %v4302 = vunpack.c.0.s8 %v4301
    %v4303 = vlaneseq
    %v4304 = vshrl.u32 %v4303, 7
    %v4305 = vsub.s32 %v4302, %v4304
    %v4306 = vrot.slane %v4290, %v4305
    %v4307 = vsel %vm3347, %v4299, %v4299
    %v4308 = vsel %vm3349, %v4299, %v4307
    %v4309 = vrot.slane %v4306, 7
    %v4310 = vsel %vm3352, %v4309, %v4308
    %v4311 = vsel %vm3354, %v4309, %v4310
    %v4312 = vsel %vm3356, %v4309, %v4311
    %v4313 = vsel %vm3358, %v4309, %v4312
    %4315 = vst.msk [vmem:[#allocation4 + $0x22] sm:$0x3] %vm3361, %v4313
    %v4316 = vld [vmem:[#allocation3 + $0x23] sm:$0x1]
    %v4317 = vld [vmem:[#allocation3 + $0x63] sm:$0x1]
    %v4321 = vunpack.c.l.s4 1983009808
    %v4322 = vunpack.c.0.s8 %v4321
    %v4323 = vlaneseq
    %v4324 = vshrl.u32 %v4323, 7
    %v4325 = vsub.s32 %v4322, %v4324
    %v4326 = vrot.slane %v4316, %v4325
    %v4328 = vunpack.c.l.s4 1983009808
    %v4329 = vunpack.c.0.s8 %v4328
    %v4330 = vlaneseq
    %v4331 = vshrl.u32 %v4330, 7
    %v4332 = vsub.s32 %v4329, %v4331
    %v4333 = vrot.slane %v4317, %v4332
    %v4334 = vsel %vm3347, %v4326, %v4326
    %v4335 = vsel %vm3349, %v4326, %v4334
    %v4336 = vrot.slane %v4333, 7
    %v4337 = vsel %vm3352, %v4336, %v4335
    %v4338 = vsel %vm3354, %v4336, %v4337
    %v4339 = vsel %vm3356, %v4336, %v4338
    %v4340 = vsel %vm3358, %v4336, %v4339
    %4341 = vrot.lane.b32.xlu0 %v4340, 64
    %v4342 = vpop.permute.xlu0 %4341
    %4344 = vst.msk [vmem:[#allocation4 + $0x22] sm:$0x3] %vm3391, %v4342
    %v4345 = vld [vmem:[#allocation3 + $0x24] sm:$0x1]
    %v4346 = vld [vmem:[#allocation3 + $0x64] sm:$0x1]
    %v4350 = vunpack.c.l.s4 1983009808
    %v4351 = vunpack.c.0.s8 %v4350
    %v4352 = vlaneseq
    %v4353 = vshrl.u32 %v4352, 7
    %v4354 = vsub.s32 %v4351, %v4353
    %v4355 = vrot.slane %v4345, %v4354
    %v4357 = vunpack.c.l.s4 1983009808
    %v4358 = vunpack.c.0.s8 %v4357
    %v4359 = vlaneseq
    %v4360 = vshrl.u32 %v4359, 7
    %v4361 = vsub.s32 %v4358, %v4360
    %v4362 = vrot.slane %v4346, %v4361
    %v4363 = vsel %vm3347, %v4355, %v4355
    %v4364 = vsel %vm3349, %v4355, %v4363
    %v4365 = vrot.slane %v4362, 7
    %v4366 = vsel %vm3352, %v4365, %v4364
    %v4367 = vsel %vm3354, %v4365, %v4366
    %v4368 = vsel %vm3356, %v4365, %v4367
    %v4369 = vsel %vm3358, %v4365, %v4368
    %4371 = vst.msk [vmem:[#allocation4 + $0x24] sm:$0x3] %vm3361, %v4369
    %v4372 = vld [vmem:[#allocation3 + $0x25] sm:$0x1]
    %v4373 = vld [vmem:[#allocation3 + $0x65] sm:$0x1]
    %v4377 = vunpack.c.l.s4 1983009808
    %v4378 = vunpack.c.0.s8 %v4377
    %v4379 = vlaneseq
    %v4380 = vshrl.u32 %v4379, 7
    %v4381 = vsub.s32 %v4378, %v4380
    %v4382 = vrot.slane %v4372, %v4381
    %v4384 = vunpack.c.l.s4 1983009808
    %v4385 = vunpack.c.0.s8 %v4384
    %v4386 = vlaneseq
    %v4387 = vshrl.u32 %v4386, 7
    %v4388 = vsub.s32 %v4385, %v4387
    %v4389 = vrot.slane %v4373, %v4388
    %v4390 = vsel %vm3347, %v4382, %v4382
    %v4391 = vsel %vm3349, %v4382, %v4390
    %v4392 = vrot.slane %v4389, 7
    %v4393 = vsel %vm3352, %v4392, %v4391
    %v4394 = vsel %vm3354, %v4392, %v4393
    %v4395 = vsel %vm3356, %v4392, %v4394
    %v4396 = vsel %vm3358, %v4392, %v4395
    %4397 = vrot.lane.b32.xlu0 %v4396, 64
    %v4398 = vpop.permute.xlu0 %4397
    %4400 = vst.msk [vmem:[#allocation4 + $0x24] sm:$0x3] %vm3391, %v4398
    %v4401 = vld [vmem:[#allocation3 + $0x26] sm:$0x1]
    %v4402 = vld [vmem:[#allocation3 + $0x66] sm:$0x1]
    %v4406 = vunpack.c.l.s4 1983009808
    %v4407 = vunpack.c.0.s8 %v4406
    %v4408 = vlaneseq
    %v4409 = vshrl.u32 %v4408, 7
    %v4410 = vsub.s32 %v4407, %v4409
    %v4411 = vrot.slane %v4401, %v4410
    %v4413 = vunpack.c.l.s4 1983009808
    %v4414 = vunpack.c.0.s8 %v4413
    %v4415 = vlaneseq
    %v4416 = vshrl.u32 %v4415, 7
    %v4417 = vsub.s32 %v4414, %v4416
    %v4418 = vrot.slane %v4402, %v4417
    %v4419 = vsel %vm3347, %v4411, %v4411
    %v4420 = vsel %vm3349, %v4411, %v4419
    %v4421 = vrot.slane %v4418, 7
    %v4422 = vsel %vm3352, %v4421, %v4420
    %v4423 = vsel %vm3354, %v4421, %v4422
    %v4424 = vsel %vm3356, %v4421, %v4423
    %v4425 = vsel %vm3358, %v4421, %v4424
    %4427 = vst.msk [vmem:[#allocation4 + $0x26] sm:$0x3] %vm3361, %v4425
    %v4428 = vld [vmem:[#allocation3 + $0x27] sm:$0x1]
    %v4429 = vld [vmem:[#allocation3 + $0x67] sm:$0x1]
    %v4433 = vunpack.c.l.s4 1983009808
    %v4434 = vunpack.c.0.s8 %v4433
    %v4435 = vlaneseq
    %v4436 = vshrl.u32 %v4435, 7
    %v4437 = vsub.s32 %v4434, %v4436
    %v4438 = vrot.slane %v4428, %v4437
    %v4440 = vunpack.c.l.s4 1983009808
    %v4441 = vunpack.c.0.s8 %v4440
    %v4442 = vlaneseq
    %v4443 = vshrl.u32 %v4442, 7
    %v4444 = vsub.s32 %v4441, %v4443
    %v4445 = vrot.slane %v4429, %v4444
    %v4446 = vsel %vm3347, %v4438, %v4438
    %v4447 = vsel %vm3349, %v4438, %v4446
    %v4448 = vrot.slane %v4445, 7
    %v4449 = vsel %vm3352, %v4448, %v4447
    %v4450 = vsel %vm3354, %v4448, %v4449
    %v4451 = vsel %vm3356, %v4448, %v4450
    %v4452 = vsel %vm3358, %v4448, %v4451
    %4453 = vrot.lane.b32.xlu0 %v4452, 64
    %v4454 = vpop.permute.xlu0 %4453
    %4456 = vst.msk [vmem:[#allocation4 + $0x26] sm:$0x3] %vm3391, %v4454
    %v4457 = vld [vmem:[#allocation3 + $0x28] sm:$0x1]
    %v4458 = vld [vmem:[#allocation3 + $0x68] sm:$0x1]
    %v4462 = vunpack.c.l.s4 1983009808
    %v4463 = vunpack.c.0.s8 %v4462
    %v4464 = vlaneseq
    %v4465 = vshrl.u32 %v4464, 7
    %v4466 = vsub.s32 %v4463, %v4465
    %v4467 = vrot.slane %v4457, %v4466
    %v4469 = vunpack.c.l.s4 1983009808
    %v4470 = vunpack.c.0.s8 %v4469
    %v4471 = vlaneseq
    %v4472 = vshrl.u32 %v4471, 7
    %v4473 = vsub.s32 %v4470, %v4472
    %v4474 = vrot.slane %v4458, %v4473
    %v4475 = vsel %vm3347, %v4467, %v4467
    %v4476 = vsel %vm3349, %v4467, %v4475
    %v4477 = vrot.slane %v4474, 7
    %v4478 = vsel %vm3352, %v4477, %v4476
    %v4479 = vsel %vm3354, %v4477, %v4478
    %v4480 = vsel %vm3356, %v4477, %v4479
    %v4481 = vsel %vm3358, %v4477, %v4480
    %4483 = vst.msk [vmem:[#allocation4 + $0x28] sm:$0x3] %vm3361, %v4481
    %v4484 = vld [vmem:[#allocation3 + $0x29] sm:$0x1]
    %v4485 = vld [vmem:[#allocation3 + $0x69] sm:$0x1]
    %v4489 = vunpack.c.l.s4 1983009808
    %v4490 = vunpack.c.0.s8 %v4489
    %v4491 = vlaneseq
    %v4492 = vshrl.u32 %v4491, 7
    %v4493 = vsub.s32 %v4490, %v4492
    %v4494 = vrot.slane %v4484, %v4493
    %v4496 = vunpack.c.l.s4 1983009808
    %v4497 = vunpack.c.0.s8 %v4496
    %v4498 = vlaneseq
    %v4499 = vshrl.u32 %v4498, 7
    %v4500 = vsub.s32 %v4497, %v4499
    %v4501 = vrot.slane %v4485, %v4500
    %v4502 = vsel %vm3347, %v4494, %v4494
    %v4503 = vsel %vm3349, %v4494, %v4502
    %v4504 = vrot.slane %v4501, 7
    %v4505 = vsel %vm3352, %v4504, %v4503
    %v4506 = vsel %vm3354, %v4504, %v4505
    %v4507 = vsel %vm3356, %v4504, %v4506
    %v4508 = vsel %vm3358, %v4504, %v4507
    %4509 = vrot.lane.b32.xlu0 %v4508, 64
    %v4510 = vpop.permute.xlu0 %4509
    %4512 = vst.msk [vmem:[#allocation4 + $0x28] sm:$0x3] %vm3391, %v4510
    %v4513 = vld [vmem:[#allocation3 + $0x2a] sm:$0x1]
    %v4514 = vld [vmem:[#allocation3 + $0x6a] sm:$0x1]
    %v4518 = vunpack.c.l.s4 1983009808
    %v4519 = vunpack.c.0.s8 %v4518
    %v4520 = vlaneseq
    %v4521 = vshrl.u32 %v4520, 7
    %v4522 = vsub.s32 %v4519, %v4521
    %v4523 = vrot.slane %v4513, %v4522
    %v4525 = vunpack.c.l.s4 1983009808
    %v4526 = vunpack.c.0.s8 %v4525
    %v4527 = vlaneseq
    %v4528 = vshrl.u32 %v4527, 7
    %v4529 = vsub.s32 %v4526, %v4528
    %v4530 = vrot.slane %v4514, %v4529
    %v4531 = vsel %vm3347, %v4523, %v4523
    %v4532 = vsel %vm3349, %v4523, %v4531
    %v4533 = vrot.slane %v4530, 7
    %v4534 = vsel %vm3352, %v4533, %v4532
    %v4535 = vsel %vm3354, %v4533, %v4534
    %v4536 = vsel %vm3356, %v4533, %v4535
    %v4537 = vsel %vm3358, %v4533, %v4536
    %4539 = vst.msk [vmem:[#allocation4 + $0x2a] sm:$0x3] %vm3361, %v4537
    %v4540 = vld [vmem:[#allocation3 + $0x2b] sm:$0x1]
    %v4541 = vld [vmem:[#allocation3 + $0x6b] sm:$0x1]
    %v4545 = vunpack.c.l.s4 1983009808
    %v4546 = vunpack.c.0.s8 %v4545
    %v4547 = vlaneseq
    %v4548 = vshrl.u32 %v4547, 7
    %v4549 = vsub.s32 %v4546, %v4548
    %v4550 = vrot.slane %v4540, %v4549
    %v4552 = vunpack.c.l.s4 1983009808
    %v4553 = vunpack.c.0.s8 %v4552
    %v4554 = vlaneseq
    %v4555 = vshrl.u32 %v4554, 7
    %v4556 = vsub.s32 %v4553, %v4555
    %v4557 = vrot.slane %v4541, %v4556
    %v4558 = vsel %vm3347, %v4550, %v4550
    %v4559 = vsel %vm3349, %v4550, %v4558
    %v4560 = vrot.slane %v4557, 7
    %v4561 = vsel %vm3352, %v4560, %v4559
    %v4562 = vsel %vm3354, %v4560, %v4561
    %v4563 = vsel %vm3356, %v4560, %v4562
    %v4564 = vsel %vm3358, %v4560, %v4563
    %4565 = vrot.lane.b32.xlu0 %v4564, 64
    %v4566 = vpop.permute.xlu0 %4565
    %4568 = vst.msk [vmem:[#allocation4 + $0x2a] sm:$0x3] %vm3391, %v4566
    %v4569 = vld [vmem:[#allocation3 + $0x2c] sm:$0x1]
    %v4570 = vld [vmem:[#allocation3 + $0x6c] sm:$0x1]
    %v4574 = vunpack.c.l.s4 1983009808
    %v4575 = vunpack.c.0.s8 %v4574
    %v4576 = vlaneseq
    %v4577 = vshrl.u32 %v4576, 7
    %v4578 = vsub.s32 %v4575, %v4577
    %v4579 = vrot.slane %v4569, %v4578
    %v4581 = vunpack.c.l.s4 1983009808
    %v4582 = vunpack.c.0.s8 %v4581
    %v4583 = vlaneseq
    %v4584 = vshrl.u32 %v4583, 7
    %v4585 = vsub.s32 %v4582, %v4584
    %v4586 = vrot.slane %v4570, %v4585
    %v4587 = vsel %vm3347, %v4579, %v4579
    %v4588 = vsel %vm3349, %v4579, %v4587
    %v4589 = vrot.slane %v4586, 7
    %v4590 = vsel %vm3352, %v4589, %v4588
    %v4591 = vsel %vm3354, %v4589, %v4590
    %v4592 = vsel %vm3356, %v4589, %v4591
    %v4593 = vsel %vm3358, %v4589, %v4592
    %4595 = vst.msk [vmem:[#allocation4 + $0x2c] sm:$0x3] %vm3361, %v4593
    %v4596 = vld [vmem:[#allocation3 + $0x2d] sm:$0x1]
    %v4597 = vld [vmem:[#allocation3 + $0x6d] sm:$0x1]
    %v4601 = vunpack.c.l.s4 1983009808
    %v4602 = vunpack.c.0.s8 %v4601
    %v4603 = vlaneseq
    %v4604 = vshrl.u32 %v4603, 7
    %v4605 = vsub.s32 %v4602, %v4604
    %v4606 = vrot.slane %v4596, %v4605
    %v4608 = vunpack.c.l.s4 1983009808
    %v4609 = vunpack.c.0.s8 %v4608
    %v4610 = vlaneseq
    %v4611 = vshrl.u32 %v4610, 7
    %v4612 = vsub.s32 %v4609, %v4611
    %v4613 = vrot.slane %v4597, %v4612
    %v4614 = vsel %vm3347, %v4606, %v4606
    %v4615 = vsel %vm3349, %v4606, %v4614
    %v4616 = vrot.slane %v4613, 7
    %v4617 = vsel %vm3352, %v4616, %v4615
    %v4618 = vsel %vm3354, %v4616, %v4617
    %v4619 = vsel %vm3356, %v4616, %v4618
    %v4620 = vsel %vm3358, %v4616, %v4619
    %4621 = vrot.lane.b32.xlu0 %v4620, 64
    %v4622 = vpop.permute.xlu0 %4621
    %4624 = vst.msk [vmem:[#allocation4 + $0x2c] sm:$0x3] %vm3391, %v4622
    %v4625 = vld [vmem:[#allocation3 + $0x2e] sm:$0x1]
    %v4626 = vld [vmem:[#allocation3 + $0x6e] sm:$0x1]
    %v4630 = vunpack.c.l.s4 1983009808
    %v4631 = vunpack.c.0.s8 %v4630
    %v4632 = vlaneseq
    %v4633 = vshrl.u32 %v4632, 7
    %v4634 = vsub.s32 %v4631, %v4633
    %v4635 = vrot.slane %v4625, %v4634
    %v4637 = vunpack.c.l.s4 1983009808
    %v4638 = vunpack.c.0.s8 %v4637
    %v4639 = vlaneseq
    %v4640 = vshrl.u32 %v4639, 7
    %v4641 = vsub.s32 %v4638, %v4640
    %v4642 = vrot.slane %v4626, %v4641
    %v4643 = vsel %vm3347, %v4635, %v4635
    %v4644 = vsel %vm3349, %v4635, %v4643
    %v4645 = vrot.slane %v4642, 7
    %v4646 = vsel %vm3352, %v4645, %v4644
    %v4647 = vsel %vm3354, %v4645, %v4646
    %v4648 = vsel %vm3356, %v4645, %v4647
    %v4649 = vsel %vm3358, %v4645, %v4648
    %4651 = vst.msk [vmem:[#allocation4 + $0x2e] sm:$0x3] %vm3361, %v4649
    %v4652 = vld [vmem:[#allocation3 + $0x2f] sm:$0x1]
    %v4653 = vld [vmem:[#allocation3 + $0x6f] sm:$0x1]
    %v4657 = vunpack.c.l.s4 1983009808
    %v4658 = vunpack.c.0.s8 %v4657
    %v4659 = vlaneseq
    %v4660 = vshrl.u32 %v4659, 7
    %v4661 = vsub.s32 %v4658, %v4660
    %v4662 = vrot.slane %v4652, %v4661
    %v4664 = vunpack.c.l.s4 1983009808
    %v4665 = vunpack.c.0.s8 %v4664
    %v4666 = vlaneseq
    %v4667 = vshrl.u32 %v4666, 7
    %v4668 = vsub.s32 %v4665, %v4667
    %v4669 = vrot.slane %v4653, %v4668
    %v4670 = vsel %vm3347, %v4662, %v4662
    %v4671 = vsel %vm3349, %v4662, %v4670
    %v4672 = vrot.slane %v4669, 7
    %v4673 = vsel %vm3352, %v4672, %v4671
    %v4674 = vsel %vm3354, %v4672, %v4673
    %v4675 = vsel %vm3356, %v4672, %v4674
    %v4676 = vsel %vm3358, %v4672, %v4675
    %4677 = vrot.lane.b32.xlu0 %v4676, 64
    %v4678 = vpop.permute.xlu0 %4677
    %4680 = vst.msk [vmem:[#allocation4 + $0x2e] sm:$0x3] %vm3391, %v4678
    %v4681 = vld [vmem:[#allocation3 + $0x30] sm:$0x1]
    %v4682 = vld [vmem:[#allocation3 + $0x70] sm:$0x1]
    %v4686 = vunpack.c.l.s4 1983009808
    %v4687 = vunpack.c.0.s8 %v4686
    %v4688 = vlaneseq
    %v4689 = vshrl.u32 %v4688, 7
    %v4690 = vsub.s32 %v4687, %v4689
    %v4691 = vrot.slane %v4681, %v4690
    %v4693 = vunpack.c.l.s4 1983009808
    %v4694 = vunpack.c.0.s8 %v4693
    %v4695 = vlaneseq
    %v4696 = vshrl.u32 %v4695, 7
    %v4697 = vsub.s32 %v4694, %v4696
    %v4698 = vrot.slane %v4682, %v4697
    %v4699 = vsel %vm3347, %v4691, %v4691
    %v4700 = vsel %vm3349, %v4691, %v4699
    %v4701 = vrot.slane %v4698, 7
    %v4702 = vsel %vm3352, %v4701, %v4700
    %v4703 = vsel %vm3354, %v4701, %v4702
    %v4704 = vsel %vm3356, %v4701, %v4703
    %v4705 = vsel %vm3358, %v4701, %v4704
    %4707 = vst.msk [vmem:[#allocation4 + $0x30] sm:$0x3] %vm3361, %v4705
    %v4708 = vld [vmem:[#allocation3 + $0x31] sm:$0x1]
    %v4709 = vld [vmem:[#allocation3 + $0x71] sm:$0x1]
    %v4713 = vunpack.c.l.s4 1983009808
    %v4714 = vunpack.c.0.s8 %v4713
    %v4715 = vlaneseq
    %v4716 = vshrl.u32 %v4715, 7
    %v4717 = vsub.s32 %v4714, %v4716
    %v4718 = vrot.slane %v4708, %v4717
    %v4720 = vunpack.c.l.s4 1983009808
    %v4721 = vunpack.c.0.s8 %v4720
    %v4722 = vlaneseq
    %v4723 = vshrl.u32 %v4722, 7
    %v4724 = vsub.s32 %v4721, %v4723
    %v4725 = vrot.slane %v4709, %v4724
    %v4726 = vsel %vm3347, %v4718, %v4718
    %v4727 = vsel %vm3349, %v4718, %v4726
    %v4728 = vrot.slane %v4725, 7
    %v4729 = vsel %vm3352, %v4728, %v4727
    %v4730 = vsel %vm3354, %v4728, %v4729
    %v4731 = vsel %vm3356, %v4728, %v4730
    %v4732 = vsel %vm3358, %v4728, %v4731
    %4733 = vrot.lane.b32.xlu0 %v4732, 64
    %v4734 = vpop.permute.xlu0 %4733
    %4736 = vst.msk [vmem:[#allocation4 + $0x30] sm:$0x3] %vm3391, %v4734
    %v4737 = vld [vmem:[#allocation3 + $0x32] sm:$0x1]
    %v4738 = vld [vmem:[#allocation3 + $0x72] sm:$0x1]
    %v4742 = vunpack.c.l.s4 1983009808
    %v4743 = vunpack.c.0.s8 %v4742
    %v4744 = vlaneseq
    %v4745 = vshrl.u32 %v4744, 7
    %v4746 = vsub.s32 %v4743, %v4745
    %v4747 = vrot.slane %v4737, %v4746
    %v4749 = vunpack.c.l.s4 1983009808
    %v4750 = vunpack.c.0.s8 %v4749
    %v4751 = vlaneseq
    %v4752 = vshrl.u32 %v4751, 7
    %v4753 = vsub.s32 %v4750, %v4752
    %v4754 = vrot.slane %v4738, %v4753
    %v4755 = vsel %vm3347, %v4747, %v4747
    %v4756 = vsel %vm3349, %v4747, %v4755
    %v4757 = vrot.slane %v4754, 7
    %v4758 = vsel %vm3352, %v4757, %v4756
    %v4759 = vsel %vm3354, %v4757, %v4758
    %v4760 = vsel %vm3356, %v4757, %v4759
    %v4761 = vsel %vm3358, %v4757, %v4760
    %4763 = vst.msk [vmem:[#allocation4 + $0x32] sm:$0x3] %vm3361, %v4761
    %v4764 = vld [vmem:[#allocation3 + $0x33] sm:$0x1]
    %v4765 = vld [vmem:[#allocation3 + $0x73] sm:$0x1]
    %v4769 = vunpack.c.l.s4 1983009808
    %v4770 = vunpack.c.0.s8 %v4769
    %v4771 = vlaneseq
    %v4772 = vshrl.u32 %v4771, 7
    %v4773 = vsub.s32 %v4770, %v4772
    %v4774 = vrot.slane %v4764, %v4773
    %v4776 = vunpack.c.l.s4 1983009808
    %v4777 = vunpack.c.0.s8 %v4776
    %v4778 = vlaneseq
    %v4779 = vshrl.u32 %v4778, 7
    %v4780 = vsub.s32 %v4777, %v4779
    %v4781 = vrot.slane %v4765, %v4780
    %v4782 = vsel %vm3347, %v4774, %v4774
    %v4783 = vsel %vm3349, %v4774, %v4782
    %v4784 = vrot.slane %v4781, 7
    %v4785 = vsel %vm3352, %v4784, %v4783
    %v4786 = vsel %vm3354, %v4784, %v4785
    %v4787 = vsel %vm3356, %v4784, %v4786
    %v4788 = vsel %vm3358, %v4784, %v4787
    %4789 = vrot.lane.b32.xlu0 %v4788, 64
    %v4790 = vpop.permute.xlu0 %4789
    %4792 = vst.msk [vmem:[#allocation4 + $0x32] sm:$0x3] %vm3391, %v4790
    %v4793 = vld [vmem:[#allocation3 + $0x34] sm:$0x1]
    %v4794 = vld [vmem:[#allocation3 + $0x74] sm:$0x1]
    %v4798 = vunpack.c.l.s4 1983009808
    %v4799 = vunpack.c.0.s8 %v4798
    %v4800 = vlaneseq
    %v4801 = vshrl.u32 %v4800, 7
    %v4802 = vsub.s32 %v4799, %v4801
    %v4803 = vrot.slane %v4793, %v4802
    %v4805 = vunpack.c.l.s4 1983009808
    %v4806 = vunpack.c.0.s8 %v4805
    %v4807 = vlaneseq
    %v4808 = vshrl.u32 %v4807, 7
    %v4809 = vsub.s32 %v4806, %v4808
    %v4810 = vrot.slane %v4794, %v4809
    %v4811 = vsel %vm3347, %v4803, %v4803
    %v4812 = vsel %vm3349, %v4803, %v4811
    %v4813 = vrot.slane %v4810, 7
    %v4814 = vsel %vm3352, %v4813, %v4812
    %v4815 = vsel %vm3354, %v4813, %v4814
    %v4816 = vsel %vm3356, %v4813, %v4815
    %v4817 = vsel %vm3358, %v4813, %v4816
    %4819 = vst.msk [vmem:[#allocation4 + $0x34] sm:$0x3] %vm3361, %v4817
    %v4820 = vld [vmem:[#allocation3 + $0x35] sm:$0x1]
    %v4821 = vld [vmem:[#allocation3 + $0x75] sm:$0x1]
    %v4825 = vunpack.c.l.s4 1983009808
    %v4826 = vunpack.c.0.s8 %v4825
    %v4827 = vlaneseq
    %v4828 = vshrl.u32 %v4827, 7
    %v4829 = vsub.s32 %v4826, %v4828
    %v4830 = vrot.slane %v4820, %v4829
    %v4832 = vunpack.c.l.s4 1983009808
    %v4833 = vunpack.c.0.s8 %v4832
    %v4834 = vlaneseq
    %v4835 = vshrl.u32 %v4834, 7
    %v4836 = vsub.s32 %v4833, %v4835
    %v4837 = vrot.slane %v4821, %v4836
    %v4838 = vsel %vm3347, %v4830, %v4830
    %v4839 = vsel %vm3349, %v4830, %v4838
    %v4840 = vrot.slane %v4837, 7
    %v4841 = vsel %vm3352, %v4840, %v4839
    %v4842 = vsel %vm3354, %v4840, %v4841
    %v4843 = vsel %vm3356, %v4840, %v4842
    %v4844 = vsel %vm3358, %v4840, %v4843
    %4845 = vrot.lane.b32.xlu0 %v4844, 64
    %v4846 = vpop.permute.xlu0 %4845
    %4848 = vst.msk [vmem:[#allocation4 + $0x34] sm:$0x3] %vm3391, %v4846
    %v4849 = vld [vmem:[#allocation3 + $0x36] sm:$0x1]
    %v4850 = vld [vmem:[#allocation3 + $0x76] sm:$0x1]
    %v4854 = vunpack.c.l.s4 1983009808
    %v4855 = vunpack.c.0.s8 %v4854
    %v4856 = vlaneseq
    %v4857 = vshrl.u32 %v4856, 7
    %v4858 = vsub.s32 %v4855, %v4857
    %v4859 = vrot.slane %v4849, %v4858
    %v4861 = vunpack.c.l.s4 1983009808
    %v4862 = vunpack.c.0.s8 %v4861
    %v4863 = vlaneseq
    %v4864 = vshrl.u32 %v4863, 7
    %v4865 = vsub.s32 %v4862, %v4864
    %v4866 = vrot.slane %v4850, %v4865
    %v4867 = vsel %vm3347, %v4859, %v4859
    %v4868 = vsel %vm3349, %v4859, %v4867
    %v4869 = vrot.slane %v4866, 7
    %v4870 = vsel %vm3352, %v4869, %v4868
    %v4871 = vsel %vm3354, %v4869, %v4870
    %v4872 = vsel %vm3356, %v4869, %v4871
    %v4873 = vsel %vm3358, %v4869, %v4872
    %4875 = vst.msk [vmem:[#allocation4 + $0x36] sm:$0x3] %vm3361, %v4873
    %v4876 = vld [vmem:[#allocation3 + $0x37] sm:$0x1]
    %v4877 = vld [vmem:[#allocation3 + $0x77] sm:$0x1]
    %v4881 = vunpack.c.l.s4 1983009808
    %v4882 = vunpack.c.0.s8 %v4881
    %v4883 = vlaneseq
    %v4884 = vshrl.u32 %v4883, 7
    %v4885 = vsub.s32 %v4882, %v4884
    %v4886 = vrot.slane %v4876, %v4885
    %v4888 = vunpack.c.l.s4 1983009808
    %v4889 = vunpack.c.0.s8 %v4888
    %v4890 = vlaneseq
    %v4891 = vshrl.u32 %v4890, 7
    %v4892 = vsub.s32 %v4889, %v4891
    %v4893 = vrot.slane %v4877, %v4892
    %v4894 = vsel %vm3347, %v4886, %v4886
    %v4895 = vsel %vm3349, %v4886, %v4894
    %v4896 = vrot.slane %v4893, 7
    %v4897 = vsel %vm3352, %v4896, %v4895
    %v4898 = vsel %vm3354, %v4896, %v4897
    %v4899 = vsel %vm3356, %v4896, %v4898
    %v4900 = vsel %vm3358, %v4896, %v4899
    %4901 = vrot.lane.b32.xlu0 %v4900, 64
    %v4902 = vpop.permute.xlu0 %4901
    %4904 = vst.msk [vmem:[#allocation4 + $0x36] sm:$0x3] %vm3391, %v4902
    %v4905 = vld [vmem:[#allocation3 + $0x38] sm:$0x1]
    %v4906 = vld [vmem:[#allocation3 + $0x78] sm:$0x1]
    %v4910 = vunpack.c.l.s4 1983009808
    %v4911 = vunpack.c.0.s8 %v4910
    %v4912 = vlaneseq
    %v4913 = vshrl.u32 %v4912, 7
    %v4914 = vsub.s32 %v4911, %v4913
    %v4915 = vrot.slane %v4905, %v4914
    %v4917 = vunpack.c.l.s4 1983009808
    %v4918 = vunpack.c.0.s8 %v4917
    %v4919 = vlaneseq
    %v4920 = vshrl.u32 %v4919, 7
    %v4921 = vsub.s32 %v4918, %v4920
    %v4922 = vrot.slane %v4906, %v4921
    %v4923 = vsel %vm3347, %v4915, %v4915
    %v4924 = vsel %vm3349, %v4915, %v4923
    %v4925 = vrot.slane %v4922, 7
    %v4926 = vsel %vm3352, %v4925, %v4924
    %v4927 = vsel %vm3354, %v4925, %v4926
    %v4928 = vsel %vm3356, %v4925, %v4927
    %v4929 = vsel %vm3358, %v4925, %v4928
    %4931 = vst.msk [vmem:[#allocation4 + $0x38] sm:$0x3] %vm3361, %v4929
    %v4932 = vld [vmem:[#allocation3 + $0x39] sm:$0x1]
    %v4933 = vld [vmem:[#allocation3 + $0x79] sm:$0x1]
    %v4937 = vunpack.c.l.s4 1983009808
    %v4938 = vunpack.c.0.s8 %v4937
    %v4939 = vlaneseq
    %v4940 = vshrl.u32 %v4939, 7
    %v4941 = vsub.s32 %v4938, %v4940
    %v4942 = vrot.slane %v4932, %v4941
    %v4944 = vunpack.c.l.s4 1983009808
    %v4945 = vunpack.c.0.s8 %v4944
    %v4946 = vlaneseq
    %v4947 = vshrl.u32 %v4946, 7
    %v4948 = vsub.s32 %v4945, %v4947
    %v4949 = vrot.slane %v4933, %v4948
    %v4950 = vsel %vm3347, %v4942, %v4942
    %v4951 = vsel %vm3349, %v4942, %v4950
    %v4952 = vrot.slane %v4949, 7
    %v4953 = vsel %vm3352, %v4952, %v4951
    %v4954 = vsel %vm3354, %v4952, %v4953
    %v4955 = vsel %vm3356, %v4952, %v4954
    %v4956 = vsel %vm3358, %v4952, %v4955
    %4957 = vrot.lane.b32.xlu0 %v4956, 64
    %v4958 = vpop.permute.xlu0 %4957
    %4960 = vst.msk [vmem:[#allocation4 + $0x38] sm:$0x3] %vm3391, %v4958
    %v4961 = vld [vmem:[#allocation3 + $0x3a] sm:$0x1]
    %v4962 = vld [vmem:[#allocation3 + $0x7a] sm:$0x1]
    %v4966 = vunpack.c.l.s4 1983009808
    %v4967 = vunpack.c.0.s8 %v4966
    %v4968 = vlaneseq
    %v4969 = vshrl.u32 %v4968, 7
    %v4970 = vsub.s32 %v4967, %v4969
    %v4971 = vrot.slane %v4961, %v4970
    %v4973 = vunpack.c.l.s4 1983009808
    %v4974 = vunpack.c.0.s8 %v4973
    %v4975 = vlaneseq
    %v4976 = vshrl.u32 %v4975, 7
    %v4977 = vsub.s32 %v4974, %v4976
    %v4978 = vrot.slane %v4962, %v4977
    %v4979 = vsel %vm3347, %v4971, %v4971
    %v4980 = vsel %vm3349, %v4971, %v4979
    %v4981 = vrot.slane %v4978, 7
    %v4982 = vsel %vm3352, %v4981, %v4980
    %v4983 = vsel %vm3354, %v4981, %v4982
    %v4984 = vsel %vm3356, %v4981, %v4983
    %v4985 = vsel %vm3358, %v4981, %v4984
    %4987 = vst.msk [vmem:[#allocation4 + $0x3a] sm:$0x3] %vm3361, %v4985
    %v4988 = vld [vmem:[#allocation3 + $0x3b] sm:$0x1]
    %v4989 = vld [vmem:[#allocation3 + $0x7b] sm:$0x1]
    %v4993 = vunpack.c.l.s4 1983009808
    %v4994 = vunpack.c.0.s8 %v4993
    %v4995 = vlaneseq
    %v4996 = vshrl.u32 %v4995, 7
    %v4997 = vsub.s32 %v4994, %v4996
    %v4998 = vrot.slane %v4988, %v4997
    %v5000 = vunpack.c.l.s4 1983009808
    %v5001 = vunpack.c.0.s8 %v5000
    %v5002 = vlaneseq
    %v5003 = vshrl.u32 %v5002, 7
    %v5004 = vsub.s32 %v5001, %v5003
    %v5005 = vrot.slane %v4989, %v5004
    %v5006 = vsel %vm3347, %v4998, %v4998
    %v5007 = vsel %vm3349, %v4998, %v5006
    %v5008 = vrot.slane %v5005, 7
    %v5009 = vsel %vm3352, %v5008, %v5007
    %v5010 = vsel %vm3354, %v5008, %v5009
    %v5011 = vsel %vm3356, %v5008, %v5010
    %v5012 = vsel %vm3358, %v5008, %v5011
    %5013 = vrot.lane.b32.xlu0 %v5012, 64
    %v5014 = vpop.permute.xlu0 %5013
    %5016 = vst.msk [vmem:[#allocation4 + $0x3a] sm:$0x3] %vm3391, %v5014
    %v5017 = vld [vmem:[#allocation3 + $0x3c] sm:$0x1]
    %v5018 = vld [vmem:[#allocation3 + $0x7c] sm:$0x1]
    %v5022 = vunpack.c.l.s4 1983009808
    %v5023 = vunpack.c.0.s8 %v5022
    %v5024 = vlaneseq
    %v5025 = vshrl.u32 %v5024, 7
    %v5026 = vsub.s32 %v5023, %v5025
    %v5027 = vrot.slane %v5017, %v5026
    %v5029 = vunpack.c.l.s4 1983009808
    %v5030 = vunpack.c.0.s8 %v5029
    %v5031 = vlaneseq
    %v5032 = vshrl.u32 %v5031, 7
    %v5033 = vsub.s32 %v5030, %v5032
    %v5034 = vrot.slane %v5018, %v5033
    %v5035 = vsel %vm3347, %v5027, %v5027
    %v5036 = vsel %vm3349, %v5027, %v5035
    %v5037 = vrot.slane %v5034, 7
    %v5038 = vsel %vm3352, %v5037, %v5036
    %v5039 = vsel %vm3354, %v5037, %v5038
    %v5040 = vsel %vm3356, %v5037, %v5039
    %v5041 = vsel %vm3358, %v5037, %v5040
    %5043 = vst.msk [vmem:[#allocation4 + $0x3c] sm:$0x3] %vm3361, %v5041
    %v5044 = vld [vmem:[#allocation3 + $0x3d] sm:$0x1]
    %v5045 = vld [vmem:[#allocation3 + $0x7d] sm:$0x1]
    %v5049 = vunpack.c.l.s4 1983009808
    %v5050 = vunpack.c.0.s8 %v5049
    %v5051 = vlaneseq
    %v5052 = vshrl.u32 %v5051, 7
    %v5053 = vsub.s32 %v5050, %v5052
    %v5054 = vrot.slane %v5044, %v5053
    %v5056 = vunpack.c.l.s4 1983009808
    %v5057 = vunpack.c.0.s8 %v5056
    %v5058 = vlaneseq
    %v5059 = vshrl.u32 %v5058, 7
    %v5060 = vsub.s32 %v5057, %v5059
    %v5061 = vrot.slane %v5045, %v5060
    %v5062 = vsel %vm3347, %v5054, %v5054
    %v5063 = vsel %vm3349, %v5054, %v5062
    %v5064 = vrot.slane %v5061, 7
    %v5065 = vsel %vm3352, %v5064, %v5063
    %v5066 = vsel %vm3354, %v5064, %v5065
    %v5067 = vsel %vm3356, %v5064, %v5066
    %v5068 = vsel %vm3358, %v5064, %v5067
    %5069 = vrot.lane.b32.xlu0 %v5068, 64
    %v5070 = vpop.permute.xlu0 %5069
    %5072 = vst.msk [vmem:[#allocation4 + $0x3c] sm:$0x3] %vm3391, %v5070
    %v5073 = vld [vmem:[#allocation3 + $0x3e] sm:$0x1]
    %v5074 = vld [vmem:[#allocation3 + $0x7e] sm:$0x1]
    %v5078 = vunpack.c.l.s4 1983009808
    %v5079 = vunpack.c.0.s8 %v5078
    %v5080 = vlaneseq
    %v5081 = vshrl.u32 %v5080, 7
    %v5082 = vsub.s32 %v5079, %v5081
    %v5083 = vrot.slane %v5073, %v5082
    %v5085 = vunpack.c.l.s4 1983009808
    %v5086 = vunpack.c.0.s8 %v5085
    %v5087 = vlaneseq
    %v5088 = vshrl.u32 %v5087, 7
    %v5089 = vsub.s32 %v5086, %v5088
    %v5090 = vrot.slane %v5074, %v5089
    %v5091 = vsel %vm3347, %v5083, %v5083
    %v5092 = vsel %vm3349, %v5083, %v5091
    %v5093 = vrot.slane %v5090, 7
    %v5094 = vsel %vm3352, %v5093, %v5092
    %v5095 = vsel %vm3354, %v5093, %v5094
    %v5096 = vsel %vm3356, %v5093, %v5095
    %v5097 = vsel %vm3358, %v5093, %v5096
    %5099 = vst.msk [vmem:[#allocation4 + $0x3e] sm:$0x3] %vm3361, %v5097
    %v5100 = vld [vmem:[#allocation3 + $0x3f] sm:$0x1]
    %v5101 = vld [vmem:[#allocation3 + $0x7f] sm:$0x1]
    %v5105 = vunpack.c.l.s4 1983009808
    %v5106 = vunpack.c.0.s8 %v5105
    %v5107 = vlaneseq
    %v5108 = vshrl.u32 %v5107, 7
    %v5109 = vsub.s32 %v5106, %v5108
    %v5110 = vrot.slane %v5100, %v5109
    %v5112 = vunpack.c.l.s4 1983009808
    %v5113 = vunpack.c.0.s8 %v5112
    %v5114 = vlaneseq
    %v5115 = vshrl.u32 %v5114, 7
    %v5116 = vsub.s32 %v5113, %v5115
    %v5117 = vrot.slane %v5101, %v5116
    %v5118 = vsel %vm3347, %v5110, %v5110
    %v5119 = vsel %vm3349, %v5110, %v5118
    %v5120 = vrot.slane %v5117, 7
    %v5121 = vsel %vm3352, %v5120, %v5119
    %v5122 = vsel %vm3354, %v5120, %v5121
    %v5123 = vsel %vm3356, %v5120, %v5122
    %v5124 = vsel %vm3358, %v5120, %v5123
    %5125 = vrot.lane.b32.xlu0 %v5124, 64
    %v5126 = vpop.permute.xlu0 %5125
    %5128 = vst.msk [vmem:[#allocation4 + $0x3e] sm:$0x3] %vm3391, %v5126
    %v5129 = vld [vmem:[#allocation4] sm:$0xff]
    %v5130 = vld [vmem:[#allocation4 + $0x8] sm:$0xff]
    %v5131 = vld [vmem:[#allocation4 + $0x10] sm:$0xff]
    %v5132 = vld [vmem:[#allocation4 + $0x18] sm:$0xff]
    %v5133 = vld [vmem:[#allocation4 + $0x20] sm:$0xff]
    %v5134 = vld [vmem:[#allocation4 + $0x28] sm:$0xff]
    %v5135 = vld [vmem:[#allocation4 + $0x30] sm:$0xff]
    %v5136 = vld [vmem:[#allocation4 + $0x38] sm:$0xff]
    %v5145 = vcombine.high %v5129, %v5129
    %v5147 = vunpack.c.l.s4 1983009808
    %v5148 = vunpack.c.0.s8 %v5147
    %v5149 = vlaneseq
    %v5150 = vshrl.u32 %v5149, 7
    %v5151 = vsub.s32 %v5148, %v5150
    %v5152 = vrot.slane %v5129, %v5151
    %v5154 = vunpack.c.l.s4 1983009808
    %v5155 = vunpack.c.0.s8 %v5154
    %v5156 = vlaneseq
    %v5157 = vshrl.u32 %v5156, 7
    %v5158 = vsub.s32 %v5155, %v5157
    %v5159 = vrot.slane %v5145, %v5158
    %v5160 = vcombine.high %v5152, %v5152
    %v5161 = vcombine.high %v5159, %v5159
    %v5162 = vcombine.high %v5130, %v5130
    %v5164 = vunpack.c.l.s4 1983009808
    %v5165 = vunpack.c.0.s8 %v5164
    %v5166 = vlaneseq
    %v5167 = vshrl.u32 %v5166, 7
    %v5168 = vsub.s32 %v5165, %v5167
    %v5169 = vrot.slane %v5130, %v5168
    %v5171 = vunpack.c.l.s4 1983009808
    %v5172 = vunpack.c.0.s8 %v5171
    %v5173 = vlaneseq
    %v5174 = vshrl.u32 %v5173, 7
    %v5175 = vsub.s32 %v5172, %v5174
    %v5176 = vrot.slane %v5162, %v5175
    %v5177 = vcombine.high %v5169, %v5169
    %v5178 = vcombine.high %v5176, %v5176
    %v5179 = vcombine.high %v5131, %v5131
    %v5181 = vunpack.c.l.s4 1983009808
    %v5182 = vunpack.c.0.s8 %v5181
    %v5183 = vlaneseq
    %v5184 = vshrl.u32 %v5183, 7
    %v5185 = vsub.s32 %v5182, %v5184
    %v5186 = vrot.slane %v5131, %v5185
    %v5188 = vunpack.c.l.s4 1983009808
    %v5189 = vunpack.c.0.s8 %v5188
    %v5190 = vlaneseq
    %v5191 = vshrl.u32 %v5190, 7
    %v5192 = vsub.s32 %v5189, %v5191
    %v5193 = vrot.slane %v5179, %v5192
    %v5194 = vcombine.high %v5186, %v5186
    %v5195 = vcombine.high %v5193, %v5193
    %v5196 = vcombine.high %v5132, %v5132
    %v5198 = vunpack.c.l.s4 1983009808
    %v5199 = vunpack.c.0.s8 %v5198
    %v5200 = vlaneseq
    %v5201 = vshrl.u32 %v5200, 7
    %v5202 = vsub.s32 %v5199, %v5201
    %v5203 = vrot.slane %v5132, %v5202
    %v5205 = vunpack.c.l.s4 1983009808
    %v5206 = vunpack.c.0.s8 %v5205
    %v5207 = vlaneseq
    %v5208 = vshrl.u32 %v5207, 7
    %v5209 = vsub.s32 %v5206, %v5208
    %v5210 = vrot.slane %v5196, %v5209
    %v5211 = vcombine.high %v5203, %v5203
    %v5212 = vcombine.high %v5210, %v5210
    %v5213 = vcombine.high %v5133, %v5133
    %v5215 = vunpack.c.l.s4 1983009808
    %v5216 = vunpack.c.0.s8 %v5215
    %v5217 = vlaneseq
    %v5218 = vshrl.u32 %v5217, 7
    %v5219 = vsub.s32 %v5216, %v5218
    %v5220 = vrot.slane %v5133, %v5219
    %v5222 = vunpack.c.l.s4 1983009808
    %v5223 = vunpack.c.0.s8 %v5222
    %v5224 = vlaneseq
    %v5225 = vshrl.u32 %v5224, 7
    %v5226 = vsub.s32 %v5223, %v5225
    %v5227 = vrot.slane %v5213, %v5226
    %v5228 = vcombine.high %v5220, %v5220
    %v5229 = vcombine.high %v5227, %v5227
    %v5230 = vcombine.high %v5134, %v5134
    %v5232 = vunpack.c.l.s4 1983009808
    %v5233 = vunpack.c.0.s8 %v5232
    %v5234 = vlaneseq
    %v5235 = vshrl.u32 %v5234, 7
    %v5236 = vsub.s32 %v5233, %v5235
    %v5237 = vrot.slane %v5134, %v5236
    %v5239 = vunpack.c.l.s4 1983009808
    %v5240 = vunpack.c.0.s8 %v5239
    %v5241 = vlaneseq
    %v5242 = vshrl.u32 %v5241, 7
    %v5243 = vsub.s32 %v5240, %v5242
    %v5244 = vrot.slane %v5230, %v5243
    %v5245 = vcombine.high %v5237, %v5237
    %v5246 = vcombine.high %v5244, %v5244
    %v5247 = vcombine.high %v5135, %v5135
    %v5249 = vunpack.c.l.s4 1983009808
    %v5250 = vunpack.c.0.s8 %v5249
    %v5251 = vlaneseq
    %v5252 = vshrl.u32 %v5251, 7
    %v5253 = vsub.s32 %v5250, %v5252
    %v5254 = vrot.slane %v5135, %v5253
    %v5256 = vunpack.c.l.s4 1983009808
    %v5257 = vunpack.c.0.s8 %v5256
    %v5258 = vlaneseq
    %v5259 = vshrl.u32 %v5258, 7
    %v5260 = vsub.s32 %v5257, %v5259
    %v5261 = vrot.slane %v5247, %v5260
    %v5262 = vcombine.high %v5254, %v5254
    %v5263 = vcombine.high %v5261, %v5261
    %v5264 = vcombine.high %v5136, %v5136
    %v5266 = vunpack.c.l.s4 1983009808
    %v5267 = vunpack.c.0.s8 %v5266
    %v5268 = vlaneseq
    %v5269 = vshrl.u32 %v5268, 7
    %v5270 = vsub.s32 %v5267, %v5269
    %v5271 = vrot.slane %v5136, %v5270
    %v5273 = vunpack.c.l.s4 1983009808
    %v5274 = vunpack.c.0.s8 %v5273
    %v5275 = vlaneseq
    %v5276 = vshrl.u32 %v5275, 7
    %v5277 = vsub.s32 %v5274, %v5276
    %v5278 = vrot.slane %v5264, %v5277
    %v5279 = vcombine.high %v5271, %v5271
    %v5280 = vcombine.high %v5278, %v5278
    %v5313 = vpack.c.bf16 %v5152, %v5152
    %v5314 = vpack.c.bf16 %v5160, %v5160
    %v5315 = vpack.c.bf16 %v5159, %v5159
    %v5316 = vpack.c.bf16 %v5161, %v5161
    %v5317 = vpack.c.bf16 %v5169, %v5169
    %v5318 = vpack.c.bf16 %v5177, %v5177
    %v5319 = vpack.c.bf16 %v5176, %v5176
    %v5320 = vpack.c.bf16 %v5178, %v5178
    %v5321 = vpack.c.bf16 %v5186, %v5186
    %v5322 = vpack.c.bf16 %v5194, %v5194
    %v5323 = vpack.c.bf16 %v5193, %v5193
    %v5324 = vpack.c.bf16 %v5195, %v5195
    %v5325 = vpack.c.bf16 %v5203, %v5203
    %v5326 = vpack.c.bf16 %v5211, %v5211
    %v5327 = vpack.c.bf16 %v5210, %v5210
    %v5328 = vpack.c.bf16 %v5212, %v5212
    %v5329 = vpack.c.bf16 %v5220, %v5220
    %v5330 = vpack.c.bf16 %v5228, %v5228
    %v5331 = vpack.c.bf16 %v5227, %v5227
    %v5332 = vpack.c.bf16 %v5229, %v5229
    %v5333 = vpack.c.bf16 %v5237, %v5237
    %v5334 = vpack.c.bf16 %v5245, %v5245
    %v5335 = vpack.c.bf16 %v5244, %v5244
    %v5336 = vpack.c.bf16 %v5246, %v5246
    %v5337 = vpack.c.bf16 %v5254, %v5254
    %v5338 = vpack.c.bf16 %v5262, %v5262
    %v5339 = vpack.c.bf16 %v5261, %v5261
    %v5340 = vpack.c.bf16 %v5263, %v5263
    %v5341 = vpack.c.bf16 %v5271, %v5271
    %v5342 = vpack.c.bf16 %v5279, %v5279
    %v5343 = vpack.c.bf16 %v5278, %v5278
    %v5344 = vpack.c.bf16 %v5280, %v5280
    %v5345 = vld [vmem:[#allocation12] sm:$0xff]
    %v5346 = vld [vmem:[#allocation12 + $0x8] sm:$0xff]
    %v5347 = vld [vmem:[#allocation12 + $0x10] sm:$0xff]
    %v5348 = vld [vmem:[#allocation12 + $0x18] sm:$0xff]
    %v5349 = vld [vmem:[#allocation12 + $0x20] sm:$0xff]
    %v5350 = vld [vmem:[#allocation12 + $0x28] sm:$0xff]
    %v5351 = vld [vmem:[#allocation12 + $0x30] sm:$0xff]
    %v5352 = vld [vmem:[#allocation12 + $0x38] sm:$0xff]
    %v5353 = vld [vmem:[#allocation12 + $0x40] sm:$0xff]
    %v5354 = vld [vmem:[#allocation12 + $0x48] sm:$0xff]
    %v5355 = vld [vmem:[#allocation12 + $0x50] sm:$0xff]
    %v5356 = vld [vmem:[#allocation12 + $0x58] sm:$0xff]
    %v5357 = vld [vmem:[#allocation12 + $0x60] sm:$0xff]
    %v5358 = vld [vmem:[#allocation12 + $0x68] sm:$0xff]
    %v5359 = vld [vmem:[#allocation12 + $0x70] sm:$0xff]
    %v5360 = vld [vmem:[#allocation12 + $0x78] sm:$0xff]
    %v5361 = vld [vmem:[#allocation12 + $0x80] sm:$0xff]
    %v5362 = vld [vmem:[#allocation12 + $0x88] sm:$0xff]
    %v5363 = vld [vmem:[#allocation12 + $0x90] sm:$0xff]
    %v5364 = vld [vmem:[#allocation12 + $0x98] sm:$0xff]
    %v5365 = vld [vmem:[#allocation12 + $0xa0] sm:$0xff]
    %v5366 = vld [vmem:[#allocation12 + $0xa8] sm:$0xff]
    %v5367 = vld [vmem:[#allocation12 + $0xb0] sm:$0xff]
    %v5368 = vld [vmem:[#allocation12 + $0xb8] sm:$0xff]
    %v5369 = vld [vmem:[#allocation12 + $0xc0] sm:$0xff]
    %v5370 = vld [vmem:[#allocation12 + $0xc8] sm:$0xff]
    %v5371 = vld [vmem:[#allocation12 + $0xd0] sm:$0xff]
    %v5372 = vld [vmem:[#allocation12 + $0xd8] sm:$0xff]
    %v5373 = vld [vmem:[#allocation12 + $0xe0] sm:$0xff]
    %v5374 = vld [vmem:[#allocation12 + $0xe8] sm:$0xff]
    %v5375 = vld [vmem:[#allocation12 + $0xf0] sm:$0xff]
    %v5376 = vld [vmem:[#allocation12 + $0xf8] sm:$0xff]
    %v5377 = vld [vmem:[#allocation12 + $0x100] sm:$0xff]
    %v5378 = vld [vmem:[#allocation12 + $0x108] sm:$0xff]
    %v5379 = vld [vmem:[#allocation12 + $0x110] sm:$0xff]
    %v5380 = vld [vmem:[#allocation12 + $0x118] sm:$0xff]
    %v5381 = vld [vmem:[#allocation12 + $0x120] sm:$0xff]
    %v5382 = vld [vmem:[#allocation12 + $0x128] sm:$0xff]
    %v5383 = vld [vmem:[#allocation12 + $0x130] sm:$0xff]
    %v5384 = vld [vmem:[#allocation12 + $0x138] sm:$0xff]
    %v5385 = vld [vmem:[#allocation12 + $0x140] sm:$0xff]
    %v5386 = vld [vmem:[#allocation12 + $0x148] sm:$0xff]
    %v5387 = vld [vmem:[#allocation12 + $0x150] sm:$0xff]
    %v5388 = vld [vmem:[#allocation12 + $0x158] sm:$0xff]
    %v5389 = vld [vmem:[#allocation12 + $0x160] sm:$0xff]
    %v5390 = vld [vmem:[#allocation12 + $0x168] sm:$0xff]
    %v5391 = vld [vmem:[#allocation12 + $0x170] sm:$0xff]
    %v5392 = vld [vmem:[#allocation12 + $0x178] sm:$0xff]
    %v5393 = vld [vmem:[#allocation12 + $0x180] sm:$0xff]
    %v5394 = vld [vmem:[#allocation12 + $0x188] sm:$0xff]
    %v5395 = vld [vmem:[#allocation12 + $0x190] sm:$0xff]
    %v5396 = vld [vmem:[#allocation12 + $0x198] sm:$0xff]
    %v5397 = vld [vmem:[#allocation12 + $0x1a0] sm:$0xff]
    %v5398 = vld [vmem:[#allocation12 + $0x1a8] sm:$0xff]
    %v5399 = vld [vmem:[#allocation12 + $0x1b0] sm:$0xff]
    %v5400 = vld [vmem:[#allocation12 + $0x1b8] sm:$0xff]
    %v5401 = vld [vmem:[#allocation12 + $0x1c0] sm:$0xff]
    %v5402 = vld [vmem:[#allocation12 + $0x1c8] sm:$0xff]
    %v5403 = vld [vmem:[#allocation12 + $0x1d0] sm:$0xff]
    %v5404 = vld [vmem:[#allocation12 + $0x1d8] sm:$0xff]
    %v5405 = vld [vmem:[#allocation12 + $0x1e0] sm:$0xff]
    %v5406 = vld [vmem:[#allocation12 + $0x1e8] sm:$0xff]
    %v5407 = vld [vmem:[#allocation12 + $0x1f0] sm:$0xff]
    %v5408 = vld [vmem:[#allocation12 + $0x1f8] sm:$0xff]
    %v5409 = vld [vmem:[#allocation12 + $0x200] sm:$0xff]
    %v5410 = vld [vmem:[#allocation12 + $0x208] sm:$0xff]
    %v5411 = vld [vmem:[#allocation12 + $0x210] sm:$0xff]
    %v5412 = vld [vmem:[#allocation12 + $0x218] sm:$0xff]
    %v5413 = vld [vmem:[#allocation12 + $0x220] sm:$0xff]
    %v5414 = vld [vmem:[#allocation12 + $0x228] sm:$0xff]
    %v5415 = vld [vmem:[#allocation12 + $0x230] sm:$0xff]
    %v5416 = vld [vmem:[#allocation12 + $0x238] sm:$0xff]
    %v5417 = vld [vmem:[#allocation12 + $0x240] sm:$0xff]
    %v5418 = vld [vmem:[#allocation12 + $0x248] sm:$0xff]
    %v5419 = vld [vmem:[#allocation12 + $0x250] sm:$0xff]
    %v5420 = vld [vmem:[#allocation12 + $0x258] sm:$0xff]
    %v5421 = vld [vmem:[#allocation12 + $0x260] sm:$0xff]
    %v5422 = vld [vmem:[#allocation12 + $0x268] sm:$0xff]
    %v5423 = vld [vmem:[#allocation12 + $0x270] sm:$0xff]
    %v5424 = vld [vmem:[#allocation12 + $0x278] sm:$0xff]
    %v5425 = vld [vmem:[#allocation12 + $0x280] sm:$0xff]
    %v5426 = vld [vmem:[#allocation12 + $0x288] sm:$0xff]
    %v5427 = vld [vmem:[#allocation12 + $0x290] sm:$0xff]
    %v5428 = vld [vmem:[#allocation12 + $0x298] sm:$0xff]
    %v5429 = vld [vmem:[#allocation12 + $0x2a0] sm:$0xff]
    %v5430 = vld [vmem:[#allocation12 + $0x2a8] sm:$0xff]
    %v5431 = vld [vmem:[#allocation12 + $0x2b0] sm:$0xff]
    %v5432 = vld [vmem:[#allocation12 + $0x2b8] sm:$0xff]
    %v5433 = vld [vmem:[#allocation12 + $0x2c0] sm:$0xff]
    %v5434 = vld [vmem:[#allocation12 + $0x2c8] sm:$0xff]
    %v5435 = vld [vmem:[#allocation12 + $0x2d0] sm:$0xff]
    %v5436 = vld [vmem:[#allocation12 + $0x2d8] sm:$0xff]
    %v5437 = vld [vmem:[#allocation12 + $0x2e0] sm:$0xff]
    %v5438 = vld [vmem:[#allocation12 + $0x2e8] sm:$0xff]
    %v5439 = vld [vmem:[#allocation12 + $0x2f0] sm:$0xff]
    %v5440 = vld [vmem:[#allocation12 + $0x2f8] sm:$0xff]
    %v5441 = vld [vmem:[#allocation12 + $0x300] sm:$0xff]
    %v5442 = vld [vmem:[#allocation12 + $0x308] sm:$0xff]
    %v5443 = vld [vmem:[#allocation12 + $0x310] sm:$0xff]
    %v5444 = vld [vmem:[#allocation12 + $0x318] sm:$0xff]
    %v5445 = vld [vmem:[#allocation12 + $0x320] sm:$0xff]
    %v5446 = vld [vmem:[#allocation12 + $0x328] sm:$0xff]
    %v5447 = vld [vmem:[#allocation12 + $0x330] sm:$0xff]
    %v5448 = vld [vmem:[#allocation12 + $0x338] sm:$0xff]
    %v5449 = vld [vmem:[#allocation12 + $0x340] sm:$0xff]
    %v5450 = vld [vmem:[#allocation12 + $0x348] sm:$0xff]
    %v5451 = vld [vmem:[#allocation12 + $0x350] sm:$0xff]
    %v5452 = vld [vmem:[#allocation12 + $0x358] sm:$0xff]
    %v5453 = vld [vmem:[#allocation12 + $0x360] sm:$0xff]
    %v5454 = vld [vmem:[#allocation12 + $0x368] sm:$0xff]
    %v5455 = vld [vmem:[#allocation12 + $0x370] sm:$0xff]
    %v5456 = vld [vmem:[#allocation12 + $0x378] sm:$0xff]
    %v5457 = vld [vmem:[#allocation12 + $0x380] sm:$0xff]
    %v5458 = vld [vmem:[#allocation12 + $0x388] sm:$0xff]
    %v5459 = vld [vmem:[#allocation12 + $0x390] sm:$0xff]
    %v5460 = vld [vmem:[#allocation12 + $0x398] sm:$0xff]
    %v5461 = vld [vmem:[#allocation12 + $0x3a0] sm:$0xff]
    %v5462 = vld [vmem:[#allocation12 + $0x3a8] sm:$0xff]
    %v5463 = vld [vmem:[#allocation12 + $0x3b0] sm:$0xff]
    %v5464 = vld [vmem:[#allocation12 + $0x3b8] sm:$0xff]
    %v5465 = vld [vmem:[#allocation12 + $0x3c0] sm:$0xff]
    %v5466 = vld [vmem:[#allocation12 + $0x3c8] sm:$0xff]
    %v5467 = vld [vmem:[#allocation12 + $0x3d0] sm:$0xff]
    %v5468 = vld [vmem:[#allocation12 + $0x3d8] sm:$0xff]
    %v5469 = vld [vmem:[#allocation12 + $0x3e0] sm:$0xff]
    %v5470 = vld [vmem:[#allocation12 + $0x3e8] sm:$0xff]
    %v5471 = vld [vmem:[#allocation12 + $0x3f0] sm:$0xff]
    %v5472 = vld [vmem:[#allocation12 + $0x3f8] sm:$0xff]
    %v5473 = vld [vmem:[#allocation12 + $0x400] sm:$0xff]
    %v5474 = vld [vmem:[#allocation12 + $0x408] sm:$0xff]
    %v5475 = vld [vmem:[#allocation12 + $0x410] sm:$0xff]
    %v5476 = vld [vmem:[#allocation12 + $0x418] sm:$0xff]
    %v5477 = vld [vmem:[#allocation12 + $0x420] sm:$0xff]
    %v5478 = vld [vmem:[#allocation12 + $0x428] sm:$0xff]
    %v5479 = vld [vmem:[#allocation12 + $0x430] sm:$0xff]
    %v5480 = vld [vmem:[#allocation12 + $0x438] sm:$0xff]
    %v5481 = vld [vmem:[#allocation12 + $0x440] sm:$0xff]
    %v5482 = vld [vmem:[#allocation12 + $0x448] sm:$0xff]
    %v5483 = vld [vmem:[#allocation12 + $0x450] sm:$0xff]
    %v5484 = vld [vmem:[#allocation12 + $0x458] sm:$0xff]
    %v5485 = vld [vmem:[#allocation12 + $0x460] sm:$0xff]
    %v5486 = vld [vmem:[#allocation12 + $0x468] sm:$0xff]
    %v5487 = vld [vmem:[#allocation12 + $0x470] sm:$0xff]
    %v5488 = vld [vmem:[#allocation12 + $0x478] sm:$0xff]
    %v5489 = vld [vmem:[#allocation12 + $0x480] sm:$0xff]
    %v5490 = vld [vmem:[#allocation12 + $0x488] sm:$0xff]
    %v5491 = vld [vmem:[#allocation12 + $0x490] sm:$0xff]
    %v5492 = vld [vmem:[#allocation12 + $0x498] sm:$0xff]
    %v5493 = vld [vmem:[#allocation12 + $0x4a0] sm:$0xff]
    %v5494 = vld [vmem:[#allocation12 + $0x4a8] sm:$0xff]
    %v5495 = vld [vmem:[#allocation12 + $0x4b0] sm:$0xff]
    %v5496 = vld [vmem:[#allocation12 + $0x4b8] sm:$0xff]
    %v5497 = vld [vmem:[#allocation12 + $0x4c0] sm:$0xff]
    %v5498 = vld [vmem:[#allocation12 + $0x4c8] sm:$0xff]
    %v5499 = vld [vmem:[#allocation12 + $0x4d0] sm:$0xff]
    %v5500 = vld [vmem:[#allocation12 + $0x4d8] sm:$0xff]
    %v5501 = vld [vmem:[#allocation12 + $0x4e0] sm:$0xff]
    %v5502 = vld [vmem:[#allocation12 + $0x4e8] sm:$0xff]
    %v5503 = vld [vmem:[#allocation12 + $0x4f0] sm:$0xff]
    %v5504 = vld [vmem:[#allocation12 + $0x4f8] sm:$0xff]
    %v5505 = vld [vmem:[#allocation12 + $0x500] sm:$0xff]
    %v5506 = vld [vmem:[#allocation12 + $0x508] sm:$0xff]
    %v5507 = vld [vmem:[#allocation12 + $0x510] sm:$0xff]
    %v5508 = vld [vmem:[#allocation12 + $0x518] sm:$0xff]
    %v5509 = vld [vmem:[#allocation12 + $0x520] sm:$0xff]
    %v5510 = vld [vmem:[#allocation12 + $0x528] sm:$0xff]
    %v5511 = vld [vmem:[#allocation12 + $0x530] sm:$0xff]
    %v5512 = vld [vmem:[#allocation12 + $0x538] sm:$0xff]
    %v5513 = vld [vmem:[#allocation12 + $0x540] sm:$0xff]
    %v5514 = vld [vmem:[#allocation12 + $0x548] sm:$0xff]
    %v5515 = vld [vmem:[#allocation12 + $0x550] sm:$0xff]
    %v5516 = vld [vmem:[#allocation12 + $0x558] sm:$0xff]
    %v5517 = vld [vmem:[#allocation12 + $0x560] sm:$0xff]
    %v5518 = vld [vmem:[#allocation12 + $0x568] sm:$0xff]
    %v5519 = vld [vmem:[#allocation12 + $0x570] sm:$0xff]
    %v5520 = vld [vmem:[#allocation12 + $0x578] sm:$0xff]
    %v5521 = vld [vmem:[#allocation12 + $0x580] sm:$0xff]
    %v5522 = vld [vmem:[#allocation12 + $0x588] sm:$0xff]
    %v5523 = vld [vmem:[#allocation12 + $0x590] sm:$0xff]
    %v5524 = vld [vmem:[#allocation12 + $0x598] sm:$0xff]
    %v5525 = vld [vmem:[#allocation12 + $0x5a0] sm:$0xff]
    %v5526 = vld [vmem:[#allocation12 + $0x5a8] sm:$0xff]
    %v5527 = vld [vmem:[#allocation12 + $0x5b0] sm:$0xff]
    %v5528 = vld [vmem:[#allocation12 + $0x5b8] sm:$0xff]
    %v5529 = vld [vmem:[#allocation12 + $0x5c0] sm:$0xff]
    %v5530 = vld [vmem:[#allocation12 + $0x5c8] sm:$0xff]
    %v5531 = vld [vmem:[#allocation12 + $0x5d0] sm:$0xff]
    %v5532 = vld [vmem:[#allocation12 + $0x5d8] sm:$0xff]
    %v5533 = vld [vmem:[#allocation12 + $0x5e0] sm:$0xff]
    %v5534 = vld [vmem:[#allocation12 + $0x5e8] sm:$0xff]
    %v5535 = vld [vmem:[#allocation12 + $0x5f0] sm:$0xff]
    %v5536 = vld [vmem:[#allocation12 + $0x5f8] sm:$0xff]
    %v5537 = vld [vmem:[#allocation12 + $0x600] sm:$0xff]
    %v5538 = vld [vmem:[#allocation12 + $0x608] sm:$0xff]
    %v5539 = vld [vmem:[#allocation12 + $0x610] sm:$0xff]
    %v5540 = vld [vmem:[#allocation12 + $0x618] sm:$0xff]
    %v5541 = vld [vmem:[#allocation12 + $0x620] sm:$0xff]
    %v5542 = vld [vmem:[#allocation12 + $0x628] sm:$0xff]
    %v5543 = vld [vmem:[#allocation12 + $0x630] sm:$0xff]
    %v5544 = vld [vmem:[#allocation12 + $0x638] sm:$0xff]
    %v5545 = vld [vmem:[#allocation12 + $0x640] sm:$0xff]
    %v5546 = vld [vmem:[#allocation12 + $0x648] sm:$0xff]
    %v5547 = vld [vmem:[#allocation12 + $0x650] sm:$0xff]
    %v5548 = vld [vmem:[#allocation12 + $0x658] sm:$0xff]
    %v5549 = vld [vmem:[#allocation12 + $0x660] sm:$0xff]
    %v5550 = vld [vmem:[#allocation12 + $0x668] sm:$0xff]
    %v5551 = vld [vmem:[#allocation12 + $0x670] sm:$0xff]
    %v5552 = vld [vmem:[#allocation12 + $0x678] sm:$0xff]
    %v5553 = vld [vmem:[#allocation12 + $0x680] sm:$0xff]
    %v5554 = vld [vmem:[#allocation12 + $0x688] sm:$0xff]
    %v5555 = vld [vmem:[#allocation12 + $0x690] sm:$0xff]
    %v5556 = vld [vmem:[#allocation12 + $0x698] sm:$0xff]
    %v5557 = vld [vmem:[#allocation12 + $0x6a0] sm:$0xff]
    %v5558 = vld [vmem:[#allocation12 + $0x6a8] sm:$0xff]
    %v5559 = vld [vmem:[#allocation12 + $0x6b0] sm:$0xff]
    %v5560 = vld [vmem:[#allocation12 + $0x6b8] sm:$0xff]
    %v5561 = vld [vmem:[#allocation12 + $0x6c0] sm:$0xff]
    %v5562 = vld [vmem:[#allocation12 + $0x6c8] sm:$0xff]
    %v5563 = vld [vmem:[#allocation12 + $0x6d0] sm:$0xff]
    %v5564 = vld [vmem:[#allocation12 + $0x6d8] sm:$0xff]
    %v5565 = vld [vmem:[#allocation12 + $0x6e0] sm:$0xff]
    %v5566 = vld [vmem:[#allocation12 + $0x6e8] sm:$0xff]
    %v5567 = vld [vmem:[#allocation12 + $0x6f0] sm:$0xff]
    %v5568 = vld [vmem:[#allocation12 + $0x6f8] sm:$0xff]
    %v5569 = vld [vmem:[#allocation12 + $0x700] sm:$0xff]
    %v5570 = vld [vmem:[#allocation12 + $0x708] sm:$0xff]
    %v5571 = vld [vmem:[#allocation12 + $0x710] sm:$0xff]
    %v5572 = vld [vmem:[#allocation12 + $0x718] sm:$0xff]
    %v5573 = vld [vmem:[#allocation12 + $0x720] sm:$0xff]
    %v5574 = vld [vmem:[#allocation12 + $0x728] sm:$0xff]
    %v5575 = vld [vmem:[#allocation12 + $0x730] sm:$0xff]
    %v5576 = vld [vmem:[#allocation12 + $0x738] sm:$0xff]
    %v5577 = vld [vmem:[#allocation12 + $0x740] sm:$0xff]
    %v5578 = vld [vmem:[#allocation12 + $0x748] sm:$0xff]
    %v5579 = vld [vmem:[#allocation12 + $0x750] sm:$0xff]
    %v5580 = vld [vmem:[#allocation12 + $0x758] sm:$0xff]
    %v5581 = vld [vmem:[#allocation12 + $0x760] sm:$0xff]
    %v5582 = vld [vmem:[#allocation12 + $0x768] sm:$0xff]
    %v5583 = vld [vmem:[#allocation12 + $0x770] sm:$0xff]
    %v5584 = vld [vmem:[#allocation12 + $0x778] sm:$0xff]
    %v5585 = vld [vmem:[#allocation12 + $0x780] sm:$0xff]
    %v5586 = vld [vmem:[#allocation12 + $0x788] sm:$0xff]
    %v5587 = vld [vmem:[#allocation12 + $0x790] sm:$0xff]
    %v5588 = vld [vmem:[#allocation12 + $0x798] sm:$0xff]
    %v5589 = vld [vmem:[#allocation12 + $0x7a0] sm:$0xff]
    %v5590 = vld [vmem:[#allocation12 + $0x7a8] sm:$0xff]
    %v5591 = vld [vmem:[#allocation12 + $0x7b0] sm:$0xff]
    %v5592 = vld [vmem:[#allocation12 + $0x7b8] sm:$0xff]
    %v5593 = vld [vmem:[#allocation12 + $0x7c0] sm:$0xff]
    %v5594 = vld [vmem:[#allocation12 + $0x7c8] sm:$0xff]
    %v5595 = vld [vmem:[#allocation12 + $0x7d0] sm:$0xff]
    %v5596 = vld [vmem:[#allocation12 + $0x7d8] sm:$0xff]
    %v5597 = vld [vmem:[#allocation12 + $0x7e0] sm:$0xff]
    %v5598 = vld [vmem:[#allocation12 + $0x7e8] sm:$0xff]
    %v5599 = vld [vmem:[#allocation12 + $0x7f0] sm:$0xff]
    %v5600 = vld [vmem:[#allocation12 + $0x7f8] sm:$0xff]
    %v5601 = vld [vmem:[#allocation12 + $0x800] sm:$0xff]
    %v5602 = vld [vmem:[#allocation12 + $0x808] sm:$0xff]
    %v5603 = vld [vmem:[#allocation12 + $0x810] sm:$0xff]
    %v5604 = vld [vmem:[#allocation12 + $0x818] sm:$0xff]
    %v5605 = vld [vmem:[#allocation12 + $0x820] sm:$0xff]
    %v5606 = vld [vmem:[#allocation12 + $0x828] sm:$0xff]
    %v5607 = vld [vmem:[#allocation12 + $0x830] sm:$0xff]
    %v5608 = vld [vmem:[#allocation12 + $0x838] sm:$0xff]
    %v5609 = vld [vmem:[#allocation12 + $0x840] sm:$0xff]
    %v5610 = vld [vmem:[#allocation12 + $0x848] sm:$0xff]
    %v5611 = vld [vmem:[#allocation12 + $0x850] sm:$0xff]
    %v5612 = vld [vmem:[#allocation12 + $0x858] sm:$0xff]
    %v5613 = vld [vmem:[#allocation12 + $0x860] sm:$0xff]
    %v5614 = vld [vmem:[#allocation12 + $0x868] sm:$0xff]
    %v5615 = vld [vmem:[#allocation12 + $0x870] sm:$0xff]
    %v5616 = vld [vmem:[#allocation12 + $0x878] sm:$0xff]
    %v5617 = vld [vmem:[#allocation12 + $0x880] sm:$0xff]
    %v5618 = vld [vmem:[#allocation12 + $0x888] sm:$0xff]
    %v5619 = vld [vmem:[#allocation12 + $0x890] sm:$0xff]
    %v5620 = vld [vmem:[#allocation12 + $0x898] sm:$0xff]
    %v5621 = vld [vmem:[#allocation12 + $0x8a0] sm:$0xff]
    %v5622 = vld [vmem:[#allocation12 + $0x8a8] sm:$0xff]
    %v5623 = vld [vmem:[#allocation12 + $0x8b0] sm:$0xff]
    %v5624 = vld [vmem:[#allocation12 + $0x8b8] sm:$0xff]
    %v5625 = vld [vmem:[#allocation12 + $0x8c0] sm:$0xff]
    %v5626 = vld [vmem:[#allocation12 + $0x8c8] sm:$0xff]
    %v5627 = vld [vmem:[#allocation12 + $0x8d0] sm:$0xff]
    %v5628 = vld [vmem:[#allocation12 + $0x8d8] sm:$0xff]
    %v5629 = vld [vmem:[#allocation12 + $0x8e0] sm:$0xff]
    %v5630 = vld [vmem:[#allocation12 + $0x8e8] sm:$0xff]
    %v5631 = vld [vmem:[#allocation12 + $0x8f0] sm:$0xff]
    %v5632 = vld [vmem:[#allocation12 + $0x8f8] sm:$0xff]
    %v5633 = vld [vmem:[#allocation12 + $0x900] sm:$0xff]
    %v5634 = vld [vmem:[#allocation12 + $0x908] sm:$0xff]
    %v5635 = vld [vmem:[#allocation12 + $0x910] sm:$0xff]
    %v5636 = vld [vmem:[#allocation12 + $0x918] sm:$0xff]
    %v5637 = vld [vmem:[#allocation12 + $0x920] sm:$0xff]
    %v5638 = vld [vmem:[#allocation12 + $0x928] sm:$0xff]
    %v5639 = vld [vmem:[#allocation12 + $0x930] sm:$0xff]
    %v5640 = vld [vmem:[#allocation12 + $0x938] sm:$0xff]
    %v5641 = vld [vmem:[#allocation12 + $0x940] sm:$0xff]
    %v5642 = vld [vmem:[#allocation12 + $0x948] sm:$0xff]
    %v5643 = vld [vmem:[#allocation12 + $0x950] sm:$0xff]
    %v5644 = vld [vmem:[#allocation12 + $0x958] sm:$0xff]
    %v5645 = vld [vmem:[#allocation12 + $0x960] sm:$0xff]
    %v5646 = vld [vmem:[#allocation12 + $0x968] sm:$0xff]
    %v5647 = vld [vmem:[#allocation12 + $0x970] sm:$0xff]
    %v5648 = vld [vmem:[#allocation12 + $0x978] sm:$0xff]
    %v5649 = vld [vmem:[#allocation12 + $0x980] sm:$0xff]
    %v5650 = vld [vmem:[#allocation12 + $0x988] sm:$0xff]
    %v5651 = vld [vmem:[#allocation12 + $0x990] sm:$0xff]
    %v5652 = vld [vmem:[#allocation12 + $0x998] sm:$0xff]
    %v5653 = vld [vmem:[#allocation12 + $0x9a0] sm:$0xff]
    %v5654 = vld [vmem:[#allocation12 + $0x9a8] sm:$0xff]
    %v5655 = vld [vmem:[#allocation12 + $0x9b0] sm:$0xff]
    %v5656 = vld [vmem:[#allocation12 + $0x9b8] sm:$0xff]
    %v5657 = vld [vmem:[#allocation12 + $0x9c0] sm:$0xff]
    %v5658 = vld [vmem:[#allocation12 + $0x9c8] sm:$0xff]
    %v5659 = vld [vmem:[#allocation12 + $0x9d0] sm:$0xff]
    %v5660 = vld [vmem:[#allocation12 + $0x9d8] sm:$0xff]
    %v5661 = vld [vmem:[#allocation12 + $0x9e0] sm:$0xff]
    %v5662 = vld [vmem:[#allocation12 + $0x9e8] sm:$0xff]
    %v5663 = vld [vmem:[#allocation12 + $0x9f0] sm:$0xff]
    %v5664 = vld [vmem:[#allocation12 + $0x9f8] sm:$0xff]
    %v5665 = vld [vmem:[#allocation12 + $0xa00] sm:$0xff]
    %v5666 = vld [vmem:[#allocation12 + $0xa08] sm:$0xff]
    %v5667 = vld [vmem:[#allocation12 + $0xa10] sm:$0xff]
    %v5668 = vld [vmem:[#allocation12 + $0xa18] sm:$0xff]
    %v5669 = vld [vmem:[#allocation12 + $0xa20] sm:$0xff]
    %v5670 = vld [vmem:[#allocation12 + $0xa28] sm:$0xff]
    %v5671 = vld [vmem:[#allocation12 + $0xa30] sm:$0xff]
    %v5672 = vld [vmem:[#allocation12 + $0xa38] sm:$0xff]
    %v5673 = vld [vmem:[#allocation12 + $0xa40] sm:$0xff]
    %v5674 = vld [vmem:[#allocation12 + $0xa48] sm:$0xff]
    %v5675 = vld [vmem:[#allocation12 + $0xa50] sm:$0xff]
    %v5676 = vld [vmem:[#allocation12 + $0xa58] sm:$0xff]
    %v5677 = vld [vmem:[#allocation12 + $0xa60] sm:$0xff]
    %v5678 = vld [vmem:[#allocation12 + $0xa68] sm:$0xff]
    %v5679 = vld [vmem:[#allocation12 + $0xa70] sm:$0xff]
    %v5680 = vld [vmem:[#allocation12 + $0xa78] sm:$0xff]
    %v5681 = vld [vmem:[#allocation12 + $0xa80] sm:$0xff]
    %v5682 = vld [vmem:[#allocation12 + $0xa88] sm:$0xff]
    %v5683 = vld [vmem:[#allocation12 + $0xa90] sm:$0xff]
    %v5684 = vld [vmem:[#allocation12 + $0xa98] sm:$0xff]
    %v5685 = vld [vmem:[#allocation12 + $0xaa0] sm:$0xff]
    %v5686 = vld [vmem:[#allocation12 + $0xaa8] sm:$0xff]
    %v5687 = vld [vmem:[#allocation12 + $0xab0] sm:$0xff]
    %v5688 = vld [vmem:[#allocation12 + $0xab8] sm:$0xff]
    %v5689 = vld [vmem:[#allocation12 + $0xac0] sm:$0xff]
    %v5690 = vld [vmem:[#allocation12 + $0xac8] sm:$0xff]
    %v5691 = vld [vmem:[#allocation12 + $0xad0] sm:$0xff]
    %v5692 = vld [vmem:[#allocation12 + $0xad8] sm:$0xff]
    %v5693 = vld [vmem:[#allocation12 + $0xae0] sm:$0xff]
    %v5694 = vld [vmem:[#allocation12 + $0xae8] sm:$0xff]
    %v5695 = vld [vmem:[#allocation12 + $0xaf0] sm:$0xff]
    %v5696 = vld [vmem:[#allocation12 + $0xaf8] sm:$0xff]
    %v5697 = vld [vmem:[#allocation12 + $0xb00] sm:$0xff]
    %v5698 = vld [vmem:[#allocation12 + $0xb08] sm:$0xff]
    %v5699 = vld [vmem:[#allocation12 + $0xb10] sm:$0xff]
    %v5700 = vld [vmem:[#allocation12 + $0xb18] sm:$0xff]
    %v5701 = vld [vmem:[#allocation12 + $0xb20] sm:$0xff]
    %v5702 = vld [vmem:[#allocation12 + $0xb28] sm:$0xff]
    %v5703 = vld [vmem:[#allocation12 + $0xb30] sm:$0xff]
    %v5704 = vld [vmem:[#allocation12 + $0xb38] sm:$0xff]
    %v5705 = vld [vmem:[#allocation12 + $0xb40] sm:$0xff]
    %v5706 = vld [vmem:[#allocation12 + $0xb48] sm:$0xff]
    %v5707 = vld [vmem:[#allocation12 + $0xb50] sm:$0xff]
    %v5708 = vld [vmem:[#allocation12 + $0xb58] sm:$0xff]
    %v5709 = vld [vmem:[#allocation12 + $0xb60] sm:$0xff]
    %v5710 = vld [vmem:[#allocation12 + $0xb68] sm:$0xff]
    %v5711 = vld [vmem:[#allocation12 + $0xb70] sm:$0xff]
    %v5712 = vld [vmem:[#allocation12 + $0xb78] sm:$0xff]
    %v5713 = vld [vmem:[#allocation12 + $0xb80] sm:$0xff]
    %v5714 = vld [vmem:[#allocation12 + $0xb88] sm:$0xff]
    %v5715 = vld [vmem:[#allocation12 + $0xb90] sm:$0xff]
    %v5716 = vld [vmem:[#allocation12 + $0xb98] sm:$0xff]
    %v5717 = vld [vmem:[#allocation12 + $0xba0] sm:$0xff]
    %v5718 = vld [vmem:[#allocation12 + $0xba8] sm:$0xff]
    %v5719 = vld [vmem:[#allocation12 + $0xbb0] sm:$0xff]
    %v5720 = vld [vmem:[#allocation12 + $0xbb8] sm:$0xff]
    %v5721 = vld [vmem:[#allocation12 + $0xbc0] sm:$0xff]
    %v5722 = vld [vmem:[#allocation12 + $0xbc8] sm:$0xff]
    %v5723 = vld [vmem:[#allocation12 + $0xbd0] sm:$0xff]
    %v5724 = vld [vmem:[#allocation12 + $0xbd8] sm:$0xff]
    %v5725 = vld [vmem:[#allocation12 + $0xbe0] sm:$0xff]
    %v5726 = vld [vmem:[#allocation12 + $0xbe8] sm:$0xff]
    %v5727 = vld [vmem:[#allocation12 + $0xbf0] sm:$0xff]
    %v5728 = vld [vmem:[#allocation12 + $0xbf8] sm:$0xff]
    %v5729 = vld [vmem:[#allocation12 + $0xc00] sm:$0xff]
    %v5730 = vld [vmem:[#allocation12 + $0xc08] sm:$0xff]
    %v5731 = vld [vmem:[#allocation12 + $0xc10] sm:$0xff]
    %v5732 = vld [vmem:[#allocation12 + $0xc18] sm:$0xff]
    %v5733 = vld [vmem:[#allocation12 + $0xc20] sm:$0xff]
    %v5734 = vld [vmem:[#allocation12 + $0xc28] sm:$0xff]
    %v5735 = vld [vmem:[#allocation12 + $0xc30] sm:$0xff]
    %v5736 = vld [vmem:[#allocation12 + $0xc38] sm:$0xff]
    %v5737 = vld [vmem:[#allocation12 + $0xc40] sm:$0xff]
    %v5738 = vld [vmem:[#allocation12 + $0xc48] sm:$0xff]
    %v5739 = vld [vmem:[#allocation12 + $0xc50] sm:$0xff]
    %v5740 = vld [vmem:[#allocation12 + $0xc58] sm:$0xff]
    %v5741 = vld [vmem:[#allocation12 + $0xc60] sm:$0xff]
    %v5742 = vld [vmem:[#allocation12 + $0xc68] sm:$0xff]
    %v5743 = vld [vmem:[#allocation12 + $0xc70] sm:$0xff]
    %v5744 = vld [vmem:[#allocation12 + $0xc78] sm:$0xff]
    %v5745 = vld [vmem:[#allocation12 + $0xc80] sm:$0xff]
    %v5746 = vld [vmem:[#allocation12 + $0xc88] sm:$0xff]
    %v5747 = vld [vmem:[#allocation12 + $0xc90] sm:$0xff]
    %v5748 = vld [vmem:[#allocation12 + $0xc98] sm:$0xff]
    %v5749 = vld [vmem:[#allocation12 + $0xca0] sm:$0xff]
    %v5750 = vld [vmem:[#allocation12 + $0xca8] sm:$0xff]
    %v5751 = vld [vmem:[#allocation12 + $0xcb0] sm:$0xff]
    %v5752 = vld [vmem:[#allocation12 + $0xcb8] sm:$0xff]
    %v5753 = vld [vmem:[#allocation12 + $0xcc0] sm:$0xff]
    %v5754 = vld [vmem:[#allocation12 + $0xcc8] sm:$0xff]
    %v5755 = vld [vmem:[#allocation12 + $0xcd0] sm:$0xff]
    %v5756 = vld [vmem:[#allocation12 + $0xcd8] sm:$0xff]
    %v5757 = vld [vmem:[#allocation12 + $0xce0] sm:$0xff]
    %v5758 = vld [vmem:[#allocation12 + $0xce8] sm:$0xff]
    %v5759 = vld [vmem:[#allocation12 + $0xcf0] sm:$0xff]
    %v5760 = vld [vmem:[#allocation12 + $0xcf8] sm:$0xff]
    %v5761 = vld [vmem:[#allocation12 + $0xd00] sm:$0xff]
    %v5762 = vld [vmem:[#allocation12 + $0xd08] sm:$0xff]
    %v5763 = vld [vmem:[#allocation12 + $0xd10] sm:$0xff]
    %v5764 = vld [vmem:[#allocation12 + $0xd18] sm:$0xff]
    %v5765 = vld [vmem:[#allocation12 + $0xd20] sm:$0xff]
    %v5766 = vld [vmem:[#allocation12 + $0xd28] sm:$0xff]
    %v5767 = vld [vmem:[#allocation12 + $0xd30] sm:$0xff]
    %v5768 = vld [vmem:[#allocation12 + $0xd38] sm:$0xff]
    %v5769 = vld [vmem:[#allocation12 + $0xd40] sm:$0xff]
    %v5770 = vld [vmem:[#allocation12 + $0xd48] sm:$0xff]
    %v5771 = vld [vmem:[#allocation12 + $0xd50] sm:$0xff]
    %v5772 = vld [vmem:[#allocation12 + $0xd58] sm:$0xff]
    %v5773 = vld [vmem:[#allocation12 + $0xd60] sm:$0xff]
    %v5774 = vld [vmem:[#allocation12 + $0xd68] sm:$0xff]
    %v5775 = vld [vmem:[#allocation12 + $0xd70] sm:$0xff]
    %v5776 = vld [vmem:[#allocation12 + $0xd78] sm:$0xff]
    %v5777 = vld [vmem:[#allocation12 + $0xd80] sm:$0xff]
    %v5778 = vld [vmem:[#allocation12 + $0xd88] sm:$0xff]
    %v5779 = vld [vmem:[#allocation12 + $0xd90] sm:$0xff]
    %v5780 = vld [vmem:[#allocation12 + $0xd98] sm:$0xff]
    %v5781 = vld [vmem:[#allocation12 + $0xda0] sm:$0xff]
    %v5782 = vld [vmem:[#allocation12 + $0xda8] sm:$0xff]
    %v5783 = vld [vmem:[#allocation12 + $0xdb0] sm:$0xff]
    %v5784 = vld [vmem:[#allocation12 + $0xdb8] sm:$0xff]
    %v5785 = vld [vmem:[#allocation12 + $0xdc0] sm:$0xff]
    %v5786 = vld [vmem:[#allocation12 + $0xdc8] sm:$0xff]
    %v5787 = vld [vmem:[#allocation12 + $0xdd0] sm:$0xff]
    %v5788 = vld [vmem:[#allocation12 + $0xdd8] sm:$0xff]
    %v5789 = vld [vmem:[#allocation12 + $0xde0] sm:$0xff]
    %v5790 = vld [vmem:[#allocation12 + $0xde8] sm:$0xff]
    %v5791 = vld [vmem:[#allocation12 + $0xdf0] sm:$0xff]
    %v5792 = vld [vmem:[#allocation12 + $0xdf8] sm:$0xff]
    %v5793 = vld [vmem:[#allocation12 + $0xe00] sm:$0xff]
    %v5794 = vld [vmem:[#allocation12 + $0xe08] sm:$0xff]
    %v5795 = vld [vmem:[#allocation12 + $0xe10] sm:$0xff]
    %v5796 = vld [vmem:[#allocation12 + $0xe18] sm:$0xff]
    %v5797 = vld [vmem:[#allocation12 + $0xe20] sm:$0xff]
    %v5798 = vld [vmem:[#allocation12 + $0xe28] sm:$0xff]
    %v5799 = vld [vmem:[#allocation12 + $0xe30] sm:$0xff]
    %v5800 = vld [vmem:[#allocation12 + $0xe38] sm:$0xff]
    %v5801 = vld [vmem:[#allocation12 + $0xe40] sm:$0xff]
    %v5802 = vld [vmem:[#allocation12 + $0xe48] sm:$0xff]
    %v5803 = vld [vmem:[#allocation12 + $0xe50] sm:$0xff]
    %v5804 = vld [vmem:[#allocation12 + $0xe58] sm:$0xff]
    %v5805 = vld [vmem:[#allocation12 + $0xe60] sm:$0xff]
    %v5806 = vld [vmem:[#allocation12 + $0xe68] sm:$0xff]
    %v5807 = vld [vmem:[#allocation12 + $0xe70] sm:$0xff]
    %v5808 = vld [vmem:[#allocation12 + $0xe78] sm:$0xff]
    %v5809 = vld [vmem:[#allocation12 + $0xe80] sm:$0xff]
    %v5810 = vld [vmem:[#allocation12 + $0xe88] sm:$0xff]
    %v5811 = vld [vmem:[#allocation12 + $0xe90] sm:$0xff]
    %v5812 = vld [vmem:[#allocation12 + $0xe98] sm:$0xff]
    %v5813 = vld [vmem:[#allocation12 + $0xea0] sm:$0xff]
    %v5814 = vld [vmem:[#allocation12 + $0xea8] sm:$0xff]
    %v5815 = vld [vmem:[#allocation12 + $0xeb0] sm:$0xff]
    %v5816 = vld [vmem:[#allocation12 + $0xeb8] sm:$0xff]
    %v5817 = vld [vmem:[#allocation12 + $0xec0] sm:$0xff]
    %v5818 = vld [vmem:[#allocation12 + $0xec8] sm:$0xff]
    %v5819 = vld [vmem:[#allocation12 + $0xed0] sm:$0xff]
    %v5820 = vld [vmem:[#allocation12 + $0xed8] sm:$0xff]
    %v5821 = vld [vmem:[#allocation12 + $0xee0] sm:$0xff]
    %v5822 = vld [vmem:[#allocation12 + $0xee8] sm:$0xff]
    %v5823 = vld [vmem:[#allocation12 + $0xef0] sm:$0xff]
    %v5824 = vld [vmem:[#allocation12 + $0xef8] sm:$0xff]
    %v5825 = vld [vmem:[#allocation12 + $0xf00] sm:$0xff]
    %v5826 = vld [vmem:[#allocation12 + $0xf08] sm:$0xff]
    %v5827 = vld [vmem:[#allocation12 + $0xf10] sm:$0xff]
    %v5828 = vld [vmem:[#allocation12 + $0xf18] sm:$0xff]
    %v5829 = vld [vmem:[#allocation12 + $0xf20] sm:$0xff]
    %v5830 = vld [vmem:[#allocation12 + $0xf28] sm:$0xff]
    %v5831 = vld [vmem:[#allocation12 + $0xf30] sm:$0xff]
    %v5832 = vld [vmem:[#allocation12 + $0xf38] sm:$0xff]
    %v5833 = vld [vmem:[#allocation12 + $0xf40] sm:$0xff]
    %v5834 = vld [vmem:[#allocation12 + $0xf48] sm:$0xff]
    %v5835 = vld [vmem:[#allocation12 + $0xf50] sm:$0xff]
    %v5836 = vld [vmem:[#allocation12 + $0xf58] sm:$0xff]
    %v5837 = vld [vmem:[#allocation12 + $0xf60] sm:$0xff]
    %v5838 = vld [vmem:[#allocation12 + $0xf68] sm:$0xff]
    %v5839 = vld [vmem:[#allocation12 + $0xf70] sm:$0xff]
    %v5840 = vld [vmem:[#allocation12 + $0xf78] sm:$0xff]
    %v5841 = vld [vmem:[#allocation12 + $0xf80] sm:$0xff]
    %v5842 = vld [vmem:[#allocation12 + $0xf88] sm:$0xff]
    %v5843 = vld [vmem:[#allocation12 + $0xf90] sm:$0xff]
    %v5844 = vld [vmem:[#allocation12 + $0xf98] sm:$0xff]
    %v5845 = vld [vmem:[#allocation12 + $0xfa0] sm:$0xff]
    %v5846 = vld [vmem:[#allocation12 + $0xfa8] sm:$0xff]
    %v5847 = vld [vmem:[#allocation12 + $0xfb0] sm:$0xff]
    %v5848 = vld [vmem:[#allocation12 + $0xfb8] sm:$0xff]
    %v5849 = vld [vmem:[#allocation12 + $0xfc0] sm:$0xff]
    %v5850 = vld [vmem:[#allocation12 + $0xfc8] sm:$0xff]
    %v5851 = vld [vmem:[#allocation12 + $0xfd0] sm:$0xff]
    %v5852 = vld [vmem:[#allocation12 + $0xfd8] sm:$0xff]
    %v5853 = vld [vmem:[#allocation12 + $0xfe0] sm:$0xff]
    %v5854 = vld [vmem:[#allocation12 + $0xfe8] sm:$0xff]
    %v5855 = vld [vmem:[#allocation12 + $0xff0] sm:$0xff]
    %v5856 = vld [vmem:[#allocation12 + $0xff8] sm:$0xff]
    %v5857 = vld [vmem:[%s1] sm:$0x3]
    %v5858 = vpack.c.bf16 %v5857, %v5857
    %v5859 = vld [vmem:[#allocation13] sm:$0xff]
    %v5860 = vld [vmem:[#allocation13 + $0x8] sm:$0xff]
    %v5861 = vld [vmem:[#allocation13 + $0x10] sm:$0xff]
    %v5862 = vld [vmem:[#allocation13 + $0x18] sm:$0xff]
    %v5863 = vld [vmem:[#allocation13 + $0x20] sm:$0xff]
    %v5864 = vld [vmem:[#allocation13 + $0x28] sm:$0xff]
    %v5865 = vld [vmem:[#allocation13 + $0x30] sm:$0xff]
    %v5866 = vld [vmem:[#allocation13 + $0x38] sm:$0xff]
    %v5867 = vld [vmem:[#allocation13 + $0x40] sm:$0xff]
    %v5868 = vld [vmem:[#allocation13 + $0x48] sm:$0xff]
    %v5869 = vld [vmem:[#allocation13 + $0x50] sm:$0xff]
    %v5870 = vld [vmem:[#allocation13 + $0x58] sm:$0xff]
    %v5871 = vld [vmem:[#allocation13 + $0x60] sm:$0xff]
    %v5872 = vld [vmem:[#allocation13 + $0x68] sm:$0xff]
    %v5873 = vld [vmem:[#allocation13 + $0x70] sm:$0xff]
    %v5874 = vld [vmem:[#allocation13 + $0x78] sm:$0xff]
    %v5891 = vunpack.c.l.b16 %v5859
    %v5892 = vunpack.c.h.b16 %v5859
    %v5893 = vunpack.c.l.b16 %v5860
    %v5894 = vunpack.c.h.b16 %v5860
    %v5895 = vunpack.c.l.b16 %v5861
    %v5896 = vunpack.c.h.b16 %v5861
    %v5897 = vunpack.c.l.b16 %v5862
    %v5898 = vunpack.c.h.b16 %v5862
    %v5899 = vunpack.c.l.b16 %v5863
    %v5900 = vunpack.c.h.b16 %v5863
    %v5901 = vunpack.c.l.b16 %v5864
    %v5902 = vunpack.c.h.b16 %v5864
    %v5903 = vunpack.c.l.b16 %v5865
    %v5904 = vunpack.c.h.b16 %v5865
    %v5905 = vunpack.c.l.b16 %v5866
    %v5906 = vunpack.c.h.b16 %v5866
    %v5907 = vunpack.c.l.b16 %v5867
    %v5908 = vunpack.c.h.b16 %v5867
    %v5909 = vunpack.c.l.b16 %v5868
    %v5910 = vunpack.c.h.b16 %v5868
    %v5911 = vunpack.c.l.b16 %v5869
    %v5912 = vunpack.c.h.b16 %v5869
    %v5913 = vunpack.c.l.b16 %v5870
    %v5914 = vunpack.c.h.b16 %v5870
    %v5915 = vunpack.c.l.b16 %v5871
    %v5916 = vunpack.c.h.b16 %v5871
    %v5917 = vunpack.c.l.b16 %v5872
    %v5918 = vunpack.c.h.b16 %v5872
    %v5919 = vunpack.c.l.b16 %v5873
    %v5920 = vunpack.c.h.b16 %v5873
    %v5921 = vunpack.c.l.b16 %v5874
    %v5922 = vunpack.c.h.b16 %v5874
    %v5923 = vpack.c.b16 %v5893, %v5891
    %v5924 = vpack.c.b16 %v5894, %v5892
    %v5925 = vpack.c.b16 %v5897, %v5895
    %v5926 = vpack.c.b16 %v5898, %v5896
    %v5927 = vpack.c.b16 %v5901, %v5899
    %v5928 = vpack.c.b16 %v5902, %v5900
    %v5929 = vpack.c.b16 %v5905, %v5903
    %v5930 = vpack.c.b16 %v5906, %v5904
    %v5931 = vpack.c.b16 %v5909, %v5907
    %v5932 = vpack.c.b16 %v5910, %v5908
    %v5933 = vpack.c.b16 %v5913, %v5911
    %v5934 = vpack.c.b16 %v5914, %v5912
    %v5935 = vpack.c.b16 %v5917, %v5915
    %v5936 = vpack.c.b16 %v5918, %v5916
    %v5937 = vpack.c.b16 %v5921, %v5919
    %v5938 = vpack.c.b16 %v5922, %v5920
    %5955 = vmatprep.subr.bf16.mxu0 %v5938
    %5956 = vmatpush1.bf16.msra.mxu0 %v5937
    %5957 = vmatprep.subr.bf16.mxu0 %v5936
    %5958 = vmatpush1.bf16.msra.mxu0 %v5935
    %5959 = vmatprep.subr.bf16.mxu0 %v5934
    %5960 = vmatpush1.bf16.msra.mxu0 %v5933
    %5961 = vmatprep.subr.bf16.mxu0 %v5932
    %5962 = vmatpush1.bf16.msra.mxu0 %v5931
    %5963 = vmatprep.subr.bf16.mxu0 %v5930
    %5964 = vmatpush1.bf16.msra.mxu0 %v5929
    %5965 = vmatprep.subr.bf16.mxu0 %v5928
    %5966 = vmatpush1.bf16.msra.mxu0 %v5927
    %5967 = vmatprep.subr.bf16.mxu0 %v5926
    %5968 = vmatpush1.bf16.msra.mxu0 %v5925
    %5969 = vmatprep.subr.bf16.mxu0 %v5924
    %5970 = vmatpush1.bf16.msra.mxu0 %v5923
    %5971 = vmatprep.subr.bf16.mxu0 0
    %5972 = vmatpush2.bf16.msra.mxu0 0
    %5973 = vmatprep.subr.bf16.mxu0 0
    %5974 = vmatpush2.bf16.msra.mxu0 0
    %5975 = vmatprep.subr.bf16.mxu0 0
    %5976 = vmatpush2.bf16.msra.mxu0 0
    %5977 = vmatprep.subr.bf16.mxu0 0
    %5978 = vmatpush2.bf16.msra.mxu0 0
    %5979 = vmatprep.subr.bf16.mxu0 0
    %5980 = vmatpush2.bf16.msra.mxu0 0
    %5981 = vmatprep.subr.bf16.mxu0 0
    %5982 = vmatpush2.bf16.msra.mxu0 0
    %5983 = vmatprep.subr.bf16.mxu0 0
    %5984 = vmatpush2.bf16.msra.mxu0 0
    %5985 = vmatprep.subr.bf16.mxu0 0
    %5986 = vmatpush2.bf16.msra.mxu0 0
    %5987 = vmatprep.mubr.bf16.mxu0 0
    %5988 = vmatmul.mubr.bf16.gmra.mxu0 %v5858
    %v5989 = vpop.f32.mrf.mxu0
    %v5990 = vadd.f32 0.0, %v5989
    %v5991 = vpop.f32.mrf.mxu0
    %v5992 = vadd.f32 0.0, %v5991
    %v5993 = vpop.f32.mrf.mxu0
    %v5994 = vpop.f32.mrf.mxu0
    %5995 = vdwg.mxu0
    %v6508 = vunpack.c.l.b16 %v5345
    %v6509 = vunpack.c.h.b16 %v5345
    %v6510 = vunpack.c.l.b16 %v5346
    %v6511 = vunpack.c.h.b16 %v5346
    %v6512 = vunpack.c.l.b16 %v5347
    %v6513 = vunpack.c.h.b16 %v5347
    %v6514 = vunpack.c.l.b16 %v5348
    %v6515 = vunpack.c.h.b16 %v5348
    %v6516 = vunpack.c.l.b16 %v5349
    %v6517 = vunpack.c.h.b16 %v5349
    %v6518 = vunpack.c.l.b16 %v5350
    %v6519 = vunpack.c.h.b16 %v5350
    %v6520 = vunpack.c.l.b16 %v5351
    %v6521 = vunpack.c.h.b16 %v5351
    %v6522 = vunpack.c.l.b16 %v5352
    %v6523 = vunpack.c.h.b16 %v5352
    %v6524 = vunpack.c.l.b16 %v5353
    %v6525 = vunpack.c.h.b16 %v5353
    %v6526 = vunpack.c.l.b16 %v5354
    %v6527 = vunpack.c.h.b16 %v5354
    %v6528 = vunpack.c.l.b16 %v5355
    %v6529 = vunpack.c.h.b16 %v5355
    %v6530 = vunpack.c.l.b16 %v5356
    %v6531 = vunpack.c.h.b16 %v5356
    %v6532 = vunpack.c.l.b16 %v5357
    %v6533 = vunpack.c.h.b16 %v5357
    %v6534 = vunpack.c.l.b16 %v5358
    %v6535 = vunpack.c.h.b16 %v5358
    %v6536 = vunpack.c.l.b16 %v5359
    %v6537 = vunpack.c.h.b16 %v5359
    %v6538 = vunpack.c.l.b16 %v5360
    %v6539 = vunpack.c.h.b16 %v5360
    %v6540 = vunpack.c.l.b16 %v5361
    %v6541 = vunpack.c.h.b16 %v5361
    %v6542 = vunpack.c.l.b16 %v5362
    %v6543 = vunpack.c.h.b16 %v5362
    %v6544 = vunpack.c.l.b16 %v5363
    %v6545 = vunpack.c.h.b16 %v5363
    %v6546 = vunpack.c.l.b16 %v5364
    %v6547 = vunpack.c.h.b16 %v5364
    %v6548 = vunpack.c.l.b16 %v5365
    %v6549 = vunpack.c.h.b16 %v5365
    %v6550 = vunpack.c.l.b16 %v5366
    %v6551 = vunpack.c.h.b16 %v5366
    %v6552 = vunpack.c.l.b16 %v5367
    %v6553 = vunpack.c.h.b16 %v5367
    %v6554 = vunpack.c.l.b16 %v5368
    %v6555 = vunpack.c.h.b16 %v5368
    %v6556 = vunpack.c.l.b16 %v5369
    %v6557 = vunpack.c.h.b16 %v5369
    %v6558 = vunpack.c.l.b16 %v5370
    %v6559 = vunpack.c.h.b16 %v5370
    %v6560 = vunpack.c.l.b16 %v5371
    %v6561 = vunpack.c.h.b16 %v5371
    %v6562 = vunpack.c.l.b16 %v5372
    %v6563 = vunpack.c.h.b16 %v5372
    %v6564 = vunpack.c.l.b16 %v5373
    %v6565 = vunpack.c.h.b16 %v5373
    %v6566 = vunpack.c.l.b16 %v5374
    %v6567 = vunpack.c.h.b16 %v5374
    %v6568 = vunpack.c.l.b16 %v5375
    %v6569 = vunpack.c.h.b16 %v5375
    %v6570 = vunpack.c.l.b16 %v5376
    %v6571 = vunpack.c.h.b16 %v5376
    %v6572 = vunpack.c.l.b16 %v5377
    %v6573 = vunpack.c.h.b16 %v5377
    %v6574 = vunpack.c.l.b16 %v5378
    %v6575 = vunpack.c.h.b16 %v5378
    %v6576 = vunpack.c.l.b16 %v5379
    %v6577 = vunpack.c.h.b16 %v5379
    %v6578 = vunpack.c.l.b16 %v5380
    %v6579 = vunpack.c.h.b16 %v5380
    %v6580 = vunpack.c.l.b16 %v5381
    %v6581 = vunpack.c.h.b16 %v5381
    %v6582 = vunpack.c.l.b16 %v5382
    %v6583 = vunpack.c.h.b16 %v5382
    %v6584 = vunpack.c.l.b16 %v5383
    %v6585 = vunpack.c.h.b16 %v5383
    %v6586 = vunpack.c.l.b16 %v5384
    %v6587 = vunpack.c.h.b16 %v5384
    %v6588 = vunpack.c.l.b16 %v5385
    %v6589 = vunpack.c.h.b16 %v5385
    %v6590 = vunpack.c.l.b16 %v5386
    %v6591 = vunpack.c.h.b16 %v5386
    %v6592 = vunpack.c.l.b16 %v5387
    %v6593 = vunpack.c.h.b16 %v5387
    %v6594 = vunpack.c.l.b16 %v5388
    %v6595 = vunpack.c.h.b16 %v5388
    %v6596 = vunpack.c.l.b16 %v5389
    %v6597 = vunpack.c.h.b16 %v5389
    %v6598 = vunpack.c.l.b16 %v5390
    %v6599 = vunpack.c.h.b16 %v5390
    %v6600 = vunpack.c.l.b16 %v5391
    %v6601 = vunpack.c.h.b16 %v5391
    %v6602 = vunpack.c.l.b16 %v5392
    %v6603 = vunpack.c.h.b16 %v5392
    %v6604 = vunpack.c.l.b16 %v5393
    %v6605 = vunpack.c.h.b16 %v5393
    %v6606 = vunpack.c.l.b16 %v5394
    %v6607 = vunpack.c.h.b16 %v5394
    %v6608 = vunpack.c.l.b16 %v5395
    %v6609 = vunpack.c.h.b16 %v5395
    %v6610 = vunpack.c.l.b16 %v5396
    %v6611 = vunpack.c.h.b16 %v5396
    %v6612 = vunpack.c.l.b16 %v5397
    %v6613 = vunpack.c.h.b16 %v5397
    %v6614 = vunpack.c.l.b16 %v5398
    %v6615 = vunpack.c.h.b16 %v5398
    %v6616 = vunpack.c.l.b16 %v5399
    %v6617 = vunpack.c.h.b16 %v5399
    %v6618 = vunpack.c.l.b16 %v5400
    %v6619 = vunpack.c.h.b16 %v5400
    %v6620 = vunpack.c.l.b16 %v5401
    %v6621 = vunpack.c.h.b16 %v5401
    %v6622 = vunpack.c.l.b16 %v5402
    %v6623 = vunpack.c.h.b16 %v5402
    %v6624 = vunpack.c.l.b16 %v5403
    %v6625 = vunpack.c.h.b16 %v5403
    %v6626 = vunpack.c.l.b16 %v5404
    %v6627 = vunpack.c.h.b16 %v5404
    %v6628 = vunpack.c.l.b16 %v5405
    %v6629 = vunpack.c.h.b16 %v5405
    %v6630 = vunpack.c.l.b16 %v5406
    %v6631 = vunpack.c.h.b16 %v5406
    %v6632 = vunpack.c.l.b16 %v5407
    %v6633 = vunpack.c.h.b16 %v5407
    %v6634 = vunpack.c.l.b16 %v5408
    %v6635 = vunpack.c.h.b16 %v5408
    %v6636 = vunpack.c.l.b16 %v5409
    %v6637 = vunpack.c.h.b16 %v5409
    %v6638 = vunpack.c.l.b16 %v5410
    %v6639 = vunpack.c.h.b16 %v5410
    %v6640 = vunpack.c.l.b16 %v5411
    %v6641 = vunpack.c.h.b16 %v5411
    %v6642 = vunpack.c.l.b16 %v5412
    %v6643 = vunpack.c.h.b16 %v5412
    %v6644 = vunpack.c.l.b16 %v5413
    %v6645 = vunpack.c.h.b16 %v5413
    %v6646 = vunpack.c.l.b16 %v5414
    %v6647 = vunpack.c.h.b16 %v5414
    %v6648 = vunpack.c.l.b16 %v5415
    %v6649 = vunpack.c.h.b16 %v5415
    %v6650 = vunpack.c.l.b16 %v5416
    %v6651 = vunpack.c.h.b16 %v5416
    %v6652 = vunpack.c.l.b16 %v5417
    %v6653 = vunpack.c.h.b16 %v5417
    %v6654 = vunpack.c.l.b16 %v5418
    %v6655 = vunpack.c.h.b16 %v5418
    %v6656 = vunpack.c.l.b16 %v5419
    %v6657 = vunpack.c.h.b16 %v5419
    %v6658 = vunpack.c.l.b16 %v5420
    %v6659 = vunpack.c.h.b16 %v5420
    %v6660 = vunpack.c.l.b16 %v5421
    %v6661 = vunpack.c.h.b16 %v5421
    %v6662 = vunpack.c.l.b16 %v5422
    %v6663 = vunpack.c.h.b16 %v5422
    %v6664 = vunpack.c.l.b16 %v5423
    %v6665 = vunpack.c.h.b16 %v5423
    %v6666 = vunpack.c.l.b16 %v5424
    %v6667 = vunpack.c.h.b16 %v5424
    %v6668 = vunpack.c.l.b16 %v5425
    %v6669 = vunpack.c.h.b16 %v5425
    %v6670 = vunpack.c.l.b16 %v5426
    %v6671 = vunpack.c.h.b16 %v5426
    %v6672 = vunpack.c.l.b16 %v5427
    %v6673 = vunpack.c.h.b16 %v5427
    %v6674 = vunpack.c.l.b16 %v5428
    %v6675 = vunpack.c.h.b16 %v5428
    %v6676 = vunpack.c.l.b16 %v5429
    %v6677 = vunpack.c.h.b16 %v5429
    %v6678 = vunpack.c.l.b16 %v5430
    %v6679 = vunpack.c.h.b16 %v5430
    %v6680 = vunpack.c.l.b16 %v5431
    %v6681 = vunpack.c.h.b16 %v5431
    %v6682 = vunpack.c.l.b16 %v5432
    %v6683 = vunpack.c.h.b16 %v5432
    %v6684 = vunpack.c.l.b16 %v5433
    %v6685 = vunpack.c.h.b16 %v5433
    %v6686 = vunpack.c.l.b16 %v5434
    %v6687 = vunpack.c.h.b16 %v5434
    %v6688 = vunpack.c.l.b16 %v5435
    %v6689 = vunpack.c.h.b16 %v5435
    %v6690 = vunpack.c.l.b16 %v5436
    %v6691 = vunpack.c.h.b16 %v5436
    %v6692 = vunpack.c.l.b16 %v5437
    %v6693 = vunpack.c.h.b16 %v5437
    %v6694 = vunpack.c.l.b16 %v5438
    %v6695 = vunpack.c.h.b16 %v5438
    %v6696 = vunpack.c.l.b16 %v5439
    %v6697 = vunpack.c.h.b16 %v5439
    %v6698 = vunpack.c.l.b16 %v5440
    %v6699 = vunpack.c.h.b16 %v5440
    %v6700 = vunpack.c.l.b16 %v5441
    %v6701 = vunpack.c.h.b16 %v5441
    %v6702 = vunpack.c.l.b16 %v5442
    %v6703 = vunpack.c.h.b16 %v5442
    %v6704 = vunpack.c.l.b16 %v5443
    %v6705 = vunpack.c.h.b16 %v5443
    %v6706 = vunpack.c.l.b16 %v5444
    %v6707 = vunpack.c.h.b16 %v5444
    %v6708 = vunpack.c.l.b16 %v5445
    %v6709 = vunpack.c.h.b16 %v5445
    %v6710 = vunpack.c.l.b16 %v5446
    %v6711 = vunpack.c.h.b16 %v5446
    %v6712 = vunpack.c.l.b16 %v5447
    %v6713 = vunpack.c.h.b16 %v5447
    %v6714 = vunpack.c.l.b16 %v5448
    %v6715 = vunpack.c.h.b16 %v5448
    %v6716 = vunpack.c.l.b16 %v5449
    %v6717 = vunpack.c.h.b16 %v5449
    %v6718 = vunpack.c.l.b16 %v5450
    %v6719 = vunpack.c.h.b16 %v5450
    %v6720 = vunpack.c.l.b16 %v5451
    %v6721 = vunpack.c.h.b16 %v5451
    %v6722 = vunpack.c.l.b16 %v5452
    %v6723 = vunpack.c.h.b16 %v5452
    %v6724 = vunpack.c.l.b16 %v5453
    %v6725 = vunpack.c.h.b16 %v5453
    %v6726 = vunpack.c.l.b16 %v5454
    %v6727 = vunpack.c.h.b16 %v5454
    %v6728 = vunpack.c.l.b16 %v5455
    %v6729 = vunpack.c.h.b16 %v5455
    %v6730 = vunpack.c.l.b16 %v5456
    %v6731 = vunpack.c.h.b16 %v5456
    %v6732 = vunpack.c.l.b16 %v5457
    %v6733 = vunpack.c.h.b16 %v5457
    %v6734 = vunpack.c.l.b16 %v5458
    %v6735 = vunpack.c.h.b16 %v5458
    %v6736 = vunpack.c.l.b16 %v5459
    %v6737 = vunpack.c.h.b16 %v5459
    %v6738 = vunpack.c.l.b16 %v5460
    %v6739 = vunpack.c.h.b16 %v5460
    %v6740 = vunpack.c.l.b16 %v5461
    %v6741 = vunpack.c.h.b16 %v5461
    %v6742 = vunpack.c.l.b16 %v5462
    %v6743 = vunpack.c.h.b16 %v5462
    %v6744 = vunpack.c.l.b16 %v5463
    %v6745 = vunpack.c.h.b16 %v5463
    %v6746 = vunpack.c.l.b16 %v5464
    %v6747 = vunpack.c.h.b16 %v5464
    %v6748 = vunpack.c.l.b16 %v5465
    %v6749 = vunpack.c.h.b16 %v5465
    %v6750 = vunpack.c.l.b16 %v5466
    %v6751 = vunpack.c.h.b16 %v5466
    %v6752 = vunpack.c.l.b16 %v5467
    %v6753 = vunpack.c.h.b16 %v5467
    %v6754 = vunpack.c.l.b16 %v5468
    %v6755 = vunpack.c.h.b16 %v5468
    %v6756 = vunpack.c.l.b16 %v5469
    %v6757 = vunpack.c.h.b16 %v5469
    %v6758 = vunpack.c.l.b16 %v5470
    %v6759 = vunpack.c.h.b16 %v5470
    %v6760 = vunpack.c.l.b16 %v5471
    %v6761 = vunpack.c.h.b16 %v5471
    %v6762 = vunpack.c.l.b16 %v5472
    %v6763 = vunpack.c.h.b16 %v5472
    %v6764 = vunpack.c.l.b16 %v5473
    %v6765 = vunpack.c.h.b16 %v5473
    %v6766 = vunpack.c.l.b16 %v5474
    %v6767 = vunpack.c.h.b16 %v5474
    %v6768 = vunpack.c.l.b16 %v5475
    %v6769 = vunpack.c.h.b16 %v5475
    %v6770 = vunpack.c.l.b16 %v5476
    %v6771 = vunpack.c.h.b16 %v5476
    %v6772 = vunpack.c.l.b16 %v5477
    %v6773 = vunpack.c.h.b16 %v5477
    %v6774 = vunpack.c.l.b16 %v5478
    %v6775 = vunpack.c.h.b16 %v5478
    %v6776 = vunpack.c.l.b16 %v5479
    %v6777 = vunpack.c.h.b16 %v5479
    %v6778 = vunpack.c.l.b16 %v5480
    %v6779 = vunpack.c.h.b16 %v5480
    %v6780 = vunpack.c.l.b16 %v5481
    %v6781 = vunpack.c.h.b16 %v5481
    %v6782 = vunpack.c.l.b16 %v5482
    %v6783 = vunpack.c.h.b16 %v5482
    %v6784 = vunpack.c.l.b16 %v5483
    %v6785 = vunpack.c.h.b16 %v5483
    %v6786 = vunpack.c.l.b16 %v5484
    %v6787 = vunpack.c.h.b16 %v5484
    %v6788 = vunpack.c.l.b16 %v5485
    %v6789 = vunpack.c.h.b16 %v5485
    %v6790 = vunpack.c.l.b16 %v5486
    %v6791 = vunpack.c.h.b16 %v5486
    %v6792 = vunpack.c.l.b16 %v5487
    %v6793 = vunpack.c.h.b16 %v5487
    %v6794 = vunpack.c.l.b16 %v5488
    %v6795 = vunpack.c.h.b16 %v5488
    %v6796 = vunpack.c.l.b16 %v5489
    %v6797 = vunpack.c.h.b16 %v5489
    %v6798 = vunpack.c.l.b16 %v5490
    %v6799 = vunpack.c.h.b16 %v5490
    %v6800 = vunpack.c.l.b16 %v5491
    %v6801 = vunpack.c.h.b16 %v5491
    %v6802 = vunpack.c.l.b16 %v5492
    %v6803 = vunpack.c.h.b16 %v5492
    %v6804 = vunpack.c.l.b16 %v5493
    %v6805 = vunpack.c.h.b16 %v5493
    %v6806 = vunpack.c.l.b16 %v5494
    %v6807 = vunpack.c.h.b16 %v5494
    %v6808 = vunpack.c.l.b16 %v5495
    %v6809 = vunpack.c.h.b16 %v5495
    %v6810 = vunpack.c.l.b16 %v5496
    %v6811 = vunpack.c.h.b16 %v5496
    %v6812 = vunpack.c.l.b16 %v5497
    %v6813 = vunpack.c.h.b16 %v5497
    %v6814 = vunpack.c.l.b16 %v5498
    %v6815 = vunpack.c.h.b16 %v5498
    %v6816 = vunpack.c.l.b16 %v5499
    %v6817 = vunpack.c.h.b16 %v5499
    %v6818 = vunpack.c.l.b16 %v5500
    %v6819 = vunpack.c.h.b16 %v5500
    %v6820 = vunpack.c.l.b16 %v5501
    %v6821 = vunpack.c.h.b16 %v5501
    %v6822 = vunpack.c.l.b16 %v5502
    %v6823 = vunpack.c.h.b16 %v5502
    %v6824 = vunpack.c.l.b16 %v5503
    %v6825 = vunpack.c.h.b16 %v5503
    %v6826 = vunpack.c.l.b16 %v5504
    %v6827 = vunpack.c.h.b16 %v5504
    %v6828 = vunpack.c.l.b16 %v5505
    %v6829 = vunpack.c.h.b16 %v5505
    %v6830 = vunpack.c.l.b16 %v5506
    %v6831 = vunpack.c.h.b16 %v5506
    %v6832 = vunpack.c.l.b16 %v5507
    %v6833 = vunpack.c.h.b16 %v5507
    %v6834 = vunpack.c.l.b16 %v5508
    %v6835 = vunpack.c.h.b16 %v5508
    %v6836 = vunpack.c.l.b16 %v5509
    %v6837 = vunpack.c.h.b16 %v5509
    %v6838 = vunpack.c.l.b16 %v5510
    %v6839 = vunpack.c.h.b16 %v5510
    %v6840 = vunpack.c.l.b16 %v5511
    %v6841 = vunpack.c.h.b16 %v5511
    %v6842 = vunpack.c.l.b16 %v5512
    %v6843 = vunpack.c.h.b16 %v5512
    %v6844 = vunpack.c.l.b16 %v5513
    %v6845 = vunpack.c.h.b16 %v5513
    %v6846 = vunpack.c.l.b16 %v5514
    %v6847 = vunpack.c.h.b16 %v5514
    %v6848 = vunpack.c.l.b16 %v5515
    %v6849 = vunpack.c.h.b16 %v5515
    %v6850 = vunpack.c.l.b16 %v5516
    %v6851 = vunpack.c.h.b16 %v5516
    %v6852 = vunpack.c.l.b16 %v5517
    %v6853 = vunpack.c.h.b16 %v5517
    %v6854 = vunpack.c.l.b16 %v5518
    %v6855 = vunpack.c.h.b16 %v5518
    %v6856 = vunpack.c.l.b16 %v5519
    %v6857 = vunpack.c.h.b16 %v5519
    %v6858 = vunpack.c.l.b16 %v5520
    %v6859 = vunpack.c.h.b16 %v5520
    %v6860 = vunpack.c.l.b16 %v5521
    %v6861 = vunpack.c.h.b16 %v5521
    %v6862 = vunpack.c.l.b16 %v5522
    %v6863 = vunpack.c.h.b16 %v5522
    %v6864 = vunpack.c.l.b16 %v5523
    %v6865 = vunpack.c.h.b16 %v5523
    %v6866 = vunpack.c.l.b16 %v5524
    %v6867 = vunpack.c.h.b16 %v5524
    %v6868 = vunpack.c.l.b16 %v5525
    %v6869 = vunpack.c.h.b16 %v5525
    %v6870 = vunpack.c.l.b16 %v5526
    %v6871 = vunpack.c.h.b16 %v5526
    %v6872 = vunpack.c.l.b16 %v5527
    %v6873 = vunpack.c.h.b16 %v5527
    %v6874 = vunpack.c.l.b16 %v5528
    %v6875 = vunpack.c.h.b16 %v5528
    %v6876 = vunpack.c.l.b16 %v5529
    %v6877 = vunpack.c.h.b16 %v5529
    %v6878 = vunpack.c.l.b16 %v5530
    %v6879 = vunpack.c.h.b16 %v5530
    %v6880 = vunpack.c.l.b16 %v5531
    %v6881 = vunpack.c.h.b16 %v5531
    %v6882 = vunpack.c.l.b16 %v5532
    %v6883 = vunpack.c.h.b16 %v5532
    %v6884 = vunpack.c.l.b16 %v5533
    %v6885 = vunpack.c.h.b16 %v5533
    %v6886 = vunpack.c.l.b16 %v5534
    %v6887 = vunpack.c.h.b16 %v5534
    %v6888 = vunpack.c.l.b16 %v5535
    %v6889 = vunpack.c.h.b16 %v5535
    %v6890 = vunpack.c.l.b16 %v5536
    %v6891 = vunpack.c.h.b16 %v5536
    %v6892 = vunpack.c.l.b16 %v5537
    %v6893 = vunpack.c.h.b16 %v5537
    %v6894 = vunpack.c.l.b16 %v5538
    %v6895 = vunpack.c.h.b16 %v5538
    %v6896 = vunpack.c.l.b16 %v5539
    %v6897 = vunpack.c.h.b16 %v5539
    %v6898 = vunpack.c.l.b16 %v5540
    %v6899 = vunpack.c.h.b16 %v5540
    %v6900 = vunpack.c.l.b16 %v5541
    %v6901 = vunpack.c.h.b16 %v5541
    %v6902 = vunpack.c.l.b16 %v5542
    %v6903 = vunpack.c.h.b16 %v5542
    %v6904 = vunpack.c.l.b16 %v5543
    %v6905 = vunpack.c.h.b16 %v5543
    %v6906 = vunpack.c.l.b16 %v5544
    %v6907 = vunpack.c.h.b16 %v5544
    %v6908 = vunpack.c.l.b16 %v5545
    %v6909 = vunpack.c.h.b16 %v5545
    %v6910 = vunpack.c.l.b16 %v5546
    %v6911 = vunpack.c.h.b16 %v5546
    %v6912 = vunpack.c.l.b16 %v5547
    %v6913 = vunpack.c.h.b16 %v5547
    %v6914 = vunpack.c.l.b16 %v5548
    %v6915 = vunpack.c.h.b16 %v5548
    %v6916 = vunpack.c.l.b16 %v5549
    %v6917 = vunpack.c.h.b16 %v5549
    %v6918 = vunpack.c.l.b16 %v5550
    %v6919 = vunpack.c.h.b16 %v5550
    %v6920 = vunpack.c.l.b16 %v5551
    %v6921 = vunpack.c.h.b16 %v5551
    %v6922 = vunpack.c.l.b16 %v5552
    %v6923 = vunpack.c.h.b16 %v5552
    %v6924 = vunpack.c.l.b16 %v5553
    %v6925 = vunpack.c.h.b16 %v5553
    %v6926 = vunpack.c.l.b16 %v5554
    %v6927 = vunpack.c.h.b16 %v5554
    %v6928 = vunpack.c.l.b16 %v5555
    %v6929 = vunpack.c.h.b16 %v5555
    %v6930 = vunpack.c.l.b16 %v5556
    %v6931 = vunpack.c.h.b16 %v5556
    %v6932 = vunpack.c.l.b16 %v5557
    %v6933 = vunpack.c.h.b16 %v5557
    %v6934 = vunpack.c.l.b16 %v5558
    %v6935 = vunpack.c.h.b16 %v5558
    %v6936 = vunpack.c.l.b16 %v5559
    %v6937 = vunpack.c.h.b16 %v5559
    %v6938 = vunpack.c.l.b16 %v5560
    %v6939 = vunpack.c.h.b16 %v5560
    %v6940 = vunpack.c.l.b16 %v5561
    %v6941 = vunpack.c.h.b16 %v5561
    %v6942 = vunpack.c.l.b16 %v5562
    %v6943 = vunpack.c.h.b16 %v5562
    %v6944 = vunpack.c.l.b16 %v5563
    %v6945 = vunpack.c.h.b16 %v5563
    %v6946 = vunpack.c.l.b16 %v5564
    %v6947 = vunpack.c.h.b16 %v5564
    %v6948 = vunpack.c.l.b16 %v5565
    %v6949 = vunpack.c.h.b16 %v5565
    %v6950 = vunpack.c.l.b16 %v5566
    %v6951 = vunpack.c.h.b16 %v5566
    %v6952 = vunpack.c.l.b16 %v5567
    %v6953 = vunpack.c.h.b16 %v5567
    %v6954 = vunpack.c.l.b16 %v5568
    %v6955 = vunpack.c.h.b16 %v5568
    %v6956 = vunpack.c.l.b16 %v5569
    %v6957 = vunpack.c.h.b16 %v5569
    %v6958 = vunpack.c.l.b16 %v5570
    %v6959 = vunpack.c.h.b16 %v5570
    %v6960 = vunpack.c.l.b16 %v5571
    %v6961 = vunpack.c.h.b16 %v5571
    %v6962 = vunpack.c.l.b16 %v5572
    %v6963 = vunpack.c.h.b16 %v5572
    %v6964 = vunpack.c.l.b16 %v5573
    %v6965 = vunpack.c.h.b16 %v5573
    %v6966 = vunpack.c.l.b16 %v5574
    %v6967 = vunpack.c.h.b16 %v5574
    %v6968 = vunpack.c.l.b16 %v5575
    %v6969 = vunpack.c.h.b16 %v5575
    %v6970 = vunpack.c.l.b16 %v5576
    %v6971 = vunpack.c.h.b16 %v5576
    %v6972 = vunpack.c.l.b16 %v5577
    %v6973 = vunpack.c.h.b16 %v5577
    %v6974 = vunpack.c.l.b16 %v5578
    %v6975 = vunpack.c.h.b16 %v5578
    %v6976 = vunpack.c.l.b16 %v5579
    %v6977 = vunpack.c.h.b16 %v5579
    %v6978 = vunpack.c.l.b16 %v5580
    %v6979 = vunpack.c.h.b16 %v5580
    %v6980 = vunpack.c.l.b16 %v5581
    %v6981 = vunpack.c.h.b16 %v5581
    %v6982 = vunpack.c.l.b16 %v5582
    %v6983 = vunpack.c.h.b16 %v5582
    %v6984 = vunpack.c.l.b16 %v5583
    %v6985 = vunpack.c.h.b16 %v5583
    %v6986 = vunpack.c.l.b16 %v5584
    %v6987 = vunpack.c.h.b16 %v5584
    %v6988 = vunpack.c.l.b16 %v5585
    %v6989 = vunpack.c.h.b16 %v5585
    %v6990 = vunpack.c.l.b16 %v5586
    %v6991 = vunpack.c.h.b16 %v5586
    %v6992 = vunpack.c.l.b16 %v5587
    %v6993 = vunpack.c.h.b16 %v5587
    %v6994 = vunpack.c.l.b16 %v5588
    %v6995 = vunpack.c.h.b16 %v5588
    %v6996 = vunpack.c.l.b16 %v5589
    %v6997 = vunpack.c.h.b16 %v5589
    %v6998 = vunpack.c.l.b16 %v5590
    %v6999 = vunpack.c.h.b16 %v5590
    %v7000 = vunpack.c.l.b16 %v5591
    %v7001 = vunpack.c.h.b16 %v5591
    %v7002 = vunpack.c.l.b16 %v5592
    %v7003 = vunpack.c.h.b16 %v5592
    %v7004 = vunpack.c.l.b16 %v5593
    %v7005 = vunpack.c.h.b16 %v5593
    %v7006 = vunpack.c.l.b16 %v5594
    %v7007 = vunpack.c.h.b16 %v5594
    %v7008 = vunpack.c.l.b16 %v5595
    %v7009 = vunpack.c.h.b16 %v5595
    %v7010 = vunpack.c.l.b16 %v5596
    %v7011 = vunpack.c.h.b16 %v5596
    %v7012 = vunpack.c.l.b16 %v5597
    %v7013 = vunpack.c.h.b16 %v5597
    %v7014 = vunpack.c.l.b16 %v5598
    %v7015 = vunpack.c.h.b16 %v5598
    %v7016 = vunpack.c.l.b16 %v5599
    %v7017 = vunpack.c.h.b16 %v5599
    %v7018 = vunpack.c.l.b16 %v5600
    %v7019 = vunpack.c.h.b16 %v5600
    %v7020 = vunpack.c.l.b16 %v5601
    %v7021 = vunpack.c.h.b16 %v5601
    %v7022 = vunpack.c.l.b16 %v5602
    %v7023 = vunpack.c.h.b16 %v5602
    %v7024 = vunpack.c.l.b16 %v5603
    %v7025 = vunpack.c.h.b16 %v5603
    %v7026 = vunpack.c.l.b16 %v5604
    %v7027 = vunpack.c.h.b16 %v5604
    %v7028 = vunpack.c.l.b16 %v5605
    %v7029 = vunpack.c.h.b16 %v5605
    %v7030 = vunpack.c.l.b16 %v5606
    %v7031 = vunpack.c.h.b16 %v5606
    %v7032 = vunpack.c.l.b16 %v5607
    %v7033 = vunpack.c.h.b16 %v5607
    %v7034 = vunpack.c.l.b16 %v5608
    %v7035 = vunpack.c.h.b16 %v5608
    %v7036 = vunpack.c.l.b16 %v5609
    %v7037 = vunpack.c.h.b16 %v5609
    %v7038 = vunpack.c.l.b16 %v5610
    %v7039 = vunpack.c.h.b16 %v5610
    %v7040 = vunpack.c.l.b16 %v5611
    %v7041 = vunpack.c.h.b16 %v5611
    %v7042 = vunpack.c.l.b16 %v5612
    %v7043 = vunpack.c.h.b16 %v5612
    %v7044 = vunpack.c.l.b16 %v5613
    %v7045 = vunpack.c.h.b16 %v5613
    %v7046 = vunpack.c.l.b16 %v5614
    %v7047 = vunpack.c.h.b16 %v5614
    %v7048 = vunpack.c.l.b16 %v5615
    %v7049 = vunpack.c.h.b16 %v5615
    %v7050 = vunpack.c.l.b16 %v5616
    %v7051 = vunpack.c.h.b16 %v5616
    %v7052 = vunpack.c.l.b16 %v5617
    %v7053 = vunpack.c.h.b16 %v5617
    %v7054 = vunpack.c.l.b16 %v5618
    %v7055 = vunpack.c.h.b16 %v5618
    %v7056 = vunpack.c.l.b16 %v5619
    %v7057 = vunpack.c.h.b16 %v5619
    %v7058 = vunpack.c.l.b16 %v5620
    %v7059 = vunpack.c.h.b16 %v5620
    %v7060 = vunpack.c.l.b16 %v5621
    %v7061 = vunpack.c.h.b16 %v5621
    %v7062 = vunpack.c.l.b16 %v5622
    %v7063 = vunpack.c.h.b16 %v5622
    %v7064 = vunpack.c.l.b16 %v5623
    %v7065 = vunpack.c.h.b16 %v5623
    %v7066 = vunpack.c.l.b16 %v5624
    %v7067 = vunpack.c.h.b16 %v5624
    %v7068 = vunpack.c.l.b16 %v5625
    %v7069 = vunpack.c.h.b16 %v5625
    %v7070 = vunpack.c.l.b16 %v5626
    %v7071 = vunpack.c.h.b16 %v5626
    %v7072 = vunpack.c.l.b16 %v5627
    %v7073 = vunpack.c.h.b16 %v5627
    %v7074 = vunpack.c.l.b16 %v5628
    %v7075 = vunpack.c.h.b16 %v5628
    %v7076 = vunpack.c.l.b16 %v5629
    %v7077 = vunpack.c.h.b16 %v5629
    %v7078 = vunpack.c.l.b16 %v5630
    %v7079 = vunpack.c.h.b16 %v5630
    %v7080 = vunpack.c.l.b16 %v5631
    %v7081 = vunpack.c.h.b16 %v5631
    %v7082 = vunpack.c.l.b16 %v5632
    %v7083 = vunpack.c.h.b16 %v5632
    %v7084 = vunpack.c.l.b16 %v5633
    %v7085 = vunpack.c.h.b16 %v5633
    %v7086 = vunpack.c.l.b16 %v5634
    %v7087 = vunpack.c.h.b16 %v5634
    %v7088 = vunpack.c.l.b16 %v5635
    %v7089 = vunpack.c.h.b16 %v5635
    %v7090 = vunpack.c.l.b16 %v5636
    %v7091 = vunpack.c.h.b16 %v5636
    %v7092 = vunpack.c.l.b16 %v5637
    %v7093 = vunpack.c.h.b16 %v5637
    %v7094 = vunpack.c.l.b16 %v5638
    %v7095 = vunpack.c.h.b16 %v5638
    %v7096 = vunpack.c.l.b16 %v5639
    %v7097 = vunpack.c.h.b16 %v5639
    %v7098 = vunpack.c.l.b16 %v5640
    %v7099 = vunpack.c.h.b16 %v5640
    %v7100 = vunpack.c.l.b16 %v5641
    %v7101 = vunpack.c.h.b16 %v5641
    %v7102 = vunpack.c.l.b16 %v5642
    %v7103 = vunpack.c.h.b16 %v5642
    %v7104 = vunpack.c.l.b16 %v5643
    %v7105 = vunpack.c.h.b16 %v5643
    %v7106 = vunpack.c.l.b16 %v5644
    %v7107 = vunpack.c.h.b16 %v5644
    %v7108 = vunpack.c.l.b16 %v5645
    %v7109 = vunpack.c.h.b16 %v5645
    %v7110 = vunpack.c.l.b16 %v5646
    %v7111 = vunpack.c.h.b16 %v5646
    %v7112 = vunpack.c.l.b16 %v5647
    %v7113 = vunpack.c.h.b16 %v5647
    %v7114 = vunpack.c.l.b16 %v5648
    %v7115 = vunpack.c.h.b16 %v5648
    %v7116 = vunpack.c.l.b16 %v5649
    %v7117 = vunpack.c.h.b16 %v5649
    %v7118 = vunpack.c.l.b16 %v5650
    %v7119 = vunpack.c.h.b16 %v5650
    %v7120 = vunpack.c.l.b16 %v5651
    %v7121 = vunpack.c.h.b16 %v5651
    %v7122 = vunpack.c.l.b16 %v5652
    %v7123 = vunpack.c.h.b16 %v5652
    %v7124 = vunpack.c.l.b16 %v5653
    %v7125 = vunpack.c.h.b16 %v5653
    %v7126 = vunpack.c.l.b16 %v5654
    %v7127 = vunpack.c.h.b16 %v5654
    %v7128 = vunpack.c.l.b16 %v5655
    %v7129 = vunpack.c.h.b16 %v5655
    %v7130 = vunpack.c.l.b16 %v5656
    %v7131 = vunpack.c.h.b16 %v5656
    %v7132 = vunpack.c.l.b16 %v5657
    %v7133 = vunpack.c.h.b16 %v5657
    %v7134 = vunpack.c.l.b16 %v5658
    %v7135 = vunpack.c.h.b16 %v5658
    %v7136 = vunpack.c.l.b16 %v5659
    %v7137 = vunpack.c.h.b16 %v5659
    %v7138 = vunpack.c.l.b16 %v5660
    %v7139 = vunpack.c.h.b16 %v5660
    %v7140 = vunpack.c.l.b16 %v5661
    %v7141 = vunpack.c.h.b16 %v5661
    %v7142 = vunpack.c.l.b16 %v5662
    %v7143 = vunpack.c.h.b16 %v5662
    %v7144 = vunpack.c.l.b16 %v5663
    %v7145 = vunpack.c.h.b16 %v5663
    %v7146 = vunpack.c.l.b16 %v5664
    %v7147 = vunpack.c.h.b16 %v5664
    %v7148 = vunpack.c.l.b16 %v5665
    %v7149 = vunpack.c.h.b16 %v5665
    %v7150 = vunpack.c.l.b16 %v5666
    %v7151 = vunpack.c.h.b16 %v5666
    %v7152 = vunpack.c.l.b16 %v5667
    %v7153 = vunpack.c.h.b16 %v5667
    %v7154 = vunpack.c.l.b16 %v5668
    %v7155 = vunpack.c.h.b16 %v5668
    %v7156 = vunpack.c.l.b16 %v5669
    %v7157 = vunpack.c.h.b16 %v5669
    %v7158 = vunpack.c.l.b16 %v5670
    %v7159 = vunpack.c.h.b16 %v5670
    %v7160 = vunpack.c.l.b16 %v5671
    %v7161 = vunpack.c.h.b16 %v5671
    %v7162 = vunpack.c.l.b16 %v5672
    %v7163 = vunpack.c.h.b16 %v5672
    %v7164 = vunpack.c.l.b16 %v5673
    %v7165 = vunpack.c.h.b16 %v5673
    %v7166 = vunpack.c.l.b16 %v5674
    %v7167 = vunpack.c.h.b16 %v5674
    %v7168 = vunpack.c.l.b16 %v5675
    %v7169 = vunpack.c.h.b16 %v5675
    %v7170 = vunpack.c.l.b16 %v5676
    %v7171 = vunpack.c.h.b16 %v5676
    %v7172 = vunpack.c.l.b16 %v5677
    %v7173 = vunpack.c.h.b16 %v5677
    %v7174 = vunpack.c.l.b16 %v5678
    %v7175 = vunpack.c.h.b16 %v5678
    %v7176 = vunpack.c.l.b16 %v5679
    %v7177 = vunpack.c.h.b16 %v5679
    %v7178 = vunpack.c.l.b16 %v5680
    %v7179 = vunpack.c.h.b16 %v5680
    %v7180 = vunpack.c.l.b16 %v5681
    %v7181 = vunpack.c.h.b16 %v5681
    %v7182 = vunpack.c.l.b16 %v5682
    %v7183 = vunpack.c.h.b16 %v5682
    %v7184 = vunpack.c.l.b16 %v5683
    %v7185 = vunpack.c.h.b16 %v5683
    %v7186 = vunpack.c.l.b16 %v5684
    %v7187 = vunpack.c.h.b16 %v5684
    %v7188 = vunpack.c.l.b16 %v5685
    %v7189 = vunpack.c.h.b16 %v5685
    %v7190 = vunpack.c.l.b16 %v5686
    %v7191 = vunpack.c.h.b16 %v5686
    %v7192 = vunpack.c.l.b16 %v5687
    %v7193 = vunpack.c.h.b16 %v5687
    %v7194 = vunpack.c.l.b16 %v5688
    %v7195 = vunpack.c.h.b16 %v5688
    %v7196 = vunpack.c.l.b16 %v5689
    %v7197 = vunpack.c.h.b16 %v5689
    %v7198 = vunpack.c.l.b16 %v5690
    %v7199 = vunpack.c.h.b16 %v5690
    %v7200 = vunpack.c.l.b16 %v5691
    %v7201 = vunpack.c.h.b16 %v5691
    %v7202 = vunpack.c.l.b16 %v5692
    %v7203 = vunpack.c.h.b16 %v5692
    %v7204 = vunpack.c.l.b16 %v5693
    %v7205 = vunpack.c.h.b16 %v5693
    %v7206 = vunpack.c.l.b16 %v5694
    %v7207 = vunpack.c.h.b16 %v5694
    %v7208 = vunpack.c.l.b16 %v5695
    %v7209 = vunpack.c.h.b16 %v5695
    %v7210 = vunpack.c.l.b16 %v5696
    %v7211 = vunpack.c.h.b16 %v5696
    %v7212 = vunpack.c.l.b16 %v5697
    %v7213 = vunpack.c.h.b16 %v5697
    %v7214 = vunpack.c.l.b16 %v5698
    %v7215 = vunpack.c.h.b16 %v5698
    %v7216 = vunpack.c.l.b16 %v5699
    %v7217 = vunpack.c.h.b16 %v5699
    %v7218 = vunpack.c.l.b16 %v5700
    %v7219 = vunpack.c.h.b16 %v5700
    %v7220 = vunpack.c.l.b16 %v5701
    %v7221 = vunpack.c.h.b16 %v5701
    %v7222 = vunpack.c.l.b16 %v5702
    %v7223 = vunpack.c.h.b16 %v5702
    %v7224 = vunpack.c.l.b16 %v5703
    %v7225 = vunpack.c.h.b16 %v5703
    %v7226 = vunpack.c.l.b16 %v5704
    %v7227 = vunpack.c.h.b16 %v5704
    %v7228 = vunpack.c.l.b16 %v5705
    %v7229 = vunpack.c.h.b16 %v5705
    %v7230 = vunpack.c.l.b16 %v5706
    %v7231 = vunpack.c.h.b16 %v5706
    %v7232 = vunpack.c.l.b16 %v5707
    %v7233 = vunpack.c.h.b16 %v5707
    %v7234 = vunpack.c.l.b16 %v5708
    %v7235 = vunpack.c.h.b16 %v5708
    %v7236 = vunpack.c.l.b16 %v5709
    %v7237 = vunpack.c.h.b16 %v5709
    %v7238 = vunpack.c.l.b16 %v5710
    %v7239 = vunpack.c.h.b16 %v5710
    %v7240 = vunpack.c.l.b16 %v5711
    %v7241 = vunpack.c.h.b16 %v5711
    %v7242 = vunpack.c.l.b16 %v5712
    %v7243 = vunpack.c.h.b16 %v5712
    %v7244 = vunpack.c.l.b16 %v5713
    %v7245 = vunpack.c.h.b16 %v5713
    %v7246 = vunpack.c.l.b16 %v5714
    %v7247 = vunpack.c.h.b16 %v5714
    %v7248 = vunpack.c.l.b16 %v5715
    %v7249 = vunpack.c.h.b16 %v5715
    %v7250 = vunpack.c.l.b16 %v5716
    %v7251 = vunpack.c.h.b16 %v5716
    %v7252 = vunpack.c.l.b16 %v5717
    %v7253 = vunpack.c.h.b16 %v5717
    %v7254 = vunpack.c.l.b16 %v5718
    %v7255 = vunpack.c.h.b16 %v5718
    %v7256 = vunpack.c.l.b16 %v5719
    %v7257 = vunpack.c.h.b16 %v5719
    %v7258 = vunpack.c.l.b16 %v5720
    %v7259 = vunpack.c.h.b16 %v5720
    %v7260 = vunpack.c.l.b16 %v5721
    %v7261 = vunpack.c.h.b16 %v5721
    %v7262 = vunpack.c.l.b16 %v5722
    %v7263 = vunpack.c.h.b16 %v5722
    %v7264 = vunpack.c.l.b16 %v5723
    %v7265 = vunpack.c.h.b16 %v5723
    %v7266 = vunpack.c.l.b16 %v5724
    %v7267 = vunpack.c.h.b16 %v5724
    %v7268 = vunpack.c.l.b16 %v5725
    %v7269 = vunpack.c.h.b16 %v5725
    %v7270 = vunpack.c.l.b16 %v5726
    %v7271 = vunpack.c.h.b16 %v5726
    %v7272 = vunpack.c.l.b16 %v5727
    %v7273 = vunpack.c.h.b16 %v5727
    %v7274 = vunpack.c.l.b16 %v5728
    %v7275 = vunpack.c.h.b16 %v5728
    %v7276 = vunpack.c.l.b16 %v5729
    %v7277 = vunpack.c.h.b16 %v5729
    %v7278 = vunpack.c.l.b16 %v5730
    %v7279 = vunpack.c.h.b16 %v5730
    %v7280 = vunpack.c.l.b16 %v5731
    %v7281 = vunpack.c.h.b16 %v5731
    %v7282 = vunpack.c.l.b16 %v5732
    %v7283 = vunpack.c.h.b16 %v5732
    %v7284 = vunpack.c.l.b16 %v5733
    %v7285 = vunpack.c.h.b16 %v5733
    %v7286 = vunpack.c.l.b16 %v5734
    %v7287 = vunpack.c.h.b16 %v5734
    %v7288 = vunpack.c.l.b16 %v5735
    %v7289 = vunpack.c.h.b16 %v5735
    %v7290 = vunpack.c.l.b16 %v5736
    %v7291 = vunpack.c.h.b16 %v5736
    %v7292 = vunpack.c.l.b16 %v5737
    %v7293 = vunpack.c.h.b16 %v5737
    %v7294 = vunpack.c.l.b16 %v5738
    %v7295 = vunpack.c.h.b16 %v5738
    %v7296 = vunpack.c.l.b16 %v5739
    %v7297 = vunpack.c.h.b16 %v5739
    %v7298 = vunpack.c.l.b16 %v5740
    %v7299 = vunpack.c.h.b16 %v5740
    %v7300 = vunpack.c.l.b16 %v5741
    %v7301 = vunpack.c.h.b16 %v5741
    %v7302 = vunpack.c.l.b16 %v5742
    %v7303 = vunpack.c.h.b16 %v5742
    %v7304 = vunpack.c.l.b16 %v5743
    %v7305 = vunpack.c.h.b16 %v5743
    %v7306 = vunpack.c.l.b16 %v5744
    %v7307 = vunpack.c.h.b16 %v5744
    %v7308 = vunpack.c.l.b16 %v5745
    %v7309 = vunpack.c.h.b16 %v5745
    %v7310 = vunpack.c.l.b16 %v5746
    %v7311 = vunpack.c.h.b16 %v5746
    %v7312 = vunpack.c.l.b16 %v5747
    %v7313 = vunpack.c.h.b16 %v5747
    %v7314 = vunpack.c.l.b16 %v5748
    %v7315 = vunpack.c.h.b16 %v5748
    %v7316 = vunpack.c.l.b16 %v5749
    %v7317 = vunpack.c.h.b16 %v5749
    %v7318 = vunpack.c.l.b16 %v5750
    %v7319 = vunpack.c.h.b16 %v5750
    %v7320 = vunpack.c.l.b16 %v5751
    %v7321 = vunpack.c.h.b16 %v5751
    %v7322 = vunpack.c.l.b16 %v5752
    %v7323 = vunpack.c.h.b16 %v5752
    %v7324 = vunpack.c.l.b16 %v5753
    %v7325 = vunpack.c.h.b16 %v5753
    %v7326 = vunpack.c.l.b16 %v5754
    %v7327 = vunpack.c.h.b16 %v5754
    %v7328 = vunpack.c.l.b16 %v5755
    %v7329 = vunpack.c.h.b16 %v5755
    %v7330 = vunpack.c.l.b16 %v5756
    %v7331 = vunpack.c.h.b16 %v5756
    %v7332 = vunpack.c.l.b16 %v5757
    %v7333 = vunpack.c.h.b16 %v5757
    %v7334 = vunpack.c.l.b16 %v5758
    %v7335 = vunpack.c.h.b16 %v5758
    %v7336 = vunpack.c.l.b16 %v5759
    %v7337 = vunpack.c.h.b16 %v5759
    %v7338 = vunpack.c.l.b16 %v5760
    %v7339 = vunpack.c.h.b16 %v5760
    %v7340 = vunpack.c.l.b16 %v5761
    %v7341 = vunpack.c.h.b16 %v5761
    %v7342 = vunpack.c.l.b16 %v5762
    %v7343 = vunpack.c.h.b16 %v5762
    %v7344 = vunpack.c.l.b16 %v5763
    %v7345 = vunpack.c.h.b16 %v5763
    %v7346 = vunpack.c.l.b16 %v5764
    %v7347 = vunpack.c.h.b16 %v5764
    %v7348 = vunpack.c.l.b16 %v5765
    %v7349 = vunpack.c.h.b16 %v5765
    %v7350 = vunpack.c.l.b16 %v5766
    %v7351 = vunpack.c.h.b16 %v5766
    %v7352 = vunpack.c.l.b16 %v5767
    %v7353 = vunpack.c.h.b16 %v5767
    %v7354 = vunpack.c.l.b16 %v5768
    %v7355 = vunpack.c.h.b16 %v5768
    %v7356 = vunpack.c.l.b16 %v5769
    %v7357 = vunpack.c.h.b16 %v5769
    %v7358 = vunpack.c.l.b16 %v5770
    %v7359 = vunpack.c.h.b16 %v5770
    %v7360 = vunpack.c.l.b16 %v5771
    %v7361 = vunpack.c.h.b16 %v5771
    %v7362 = vunpack.c.l.b16 %v5772
    %v7363 = vunpack.c.h.b16 %v5772
    %v7364 = vunpack.c.l.b16 %v5773
    %v7365 = vunpack.c.h.b16 %v5773
    %v7366 = vunpack.c.l.b16 %v5774
    %v7367 = vunpack.c.h.b16 %v5774
    %v7368 = vunpack.c.l.b16 %v5775
    %v7369 = vunpack.c.h.b16 %v5775
    %v7370 = vunpack.c.l.b16 %v5776
    %v7371 = vunpack.c.h.b16 %v5776
    %v7372 = vunpack.c.l.b16 %v5777
    %v7373 = vunpack.c.h.b16 %v5777
    %v7374 = vunpack.c.l.b16 %v5778
    %v7375 = vunpack.c.h.b16 %v5778
    %v7376 = vunpack.c.l.b16 %v5779
    %v7377 = vunpack.c.h.b16 %v5779
    %v7378 = vunpack.c.l.b16 %v5780
    %v7379 = vunpack.c.h.b16 %v5780
    %v7380 = vunpack.c.l.b16 %v5781
    %v7381 = vunpack.c.h.b16 %v5781
    %v7382 = vunpack.c.l.b16 %v5782
    %v7383 = vunpack.c.h.b16 %v5782
    %v7384 = vunpack.c.l.b16 %v5783
    %v7385 = vunpack.c.h.b16 %v5783
    %v7386 = vunpack.c.l.b16 %v5784
    %v7387 = vunpack.c.h.b16 %v5784
    %v7388 = vunpack.c.l.b16 %v5785
    %v7389 = vunpack.c.h.b16 %v5785
    %v7390 = vunpack.c.l.b16 %v5786
    %v7391 = vunpack.c.h.b16 %v5786
    %v7392 = vunpack.c.l.b16 %v5787
    %v7393 = vunpack.c.h.b16 %v5787
    %v7394 = vunpack.c.l.b16 %v5788
    %v7395 = vunpack.c.h.b16 %v5788
    %v7396 = vunpack.c.l.b16 %v5789
    %v7397 = vunpack.c.h.b16 %v5789
    %v7398 = vunpack.c.l.b16 %v5790
    %v7399 = vunpack.c.h.b16 %v5790
    %v7400 = vunpack.c.l.b16 %v5791
    %v7401 = vunpack.c.h.b16 %v5791
    %v7402 = vunpack.c.l.b16 %v5792
    %v7403 = vunpack.c.h.b16 %v5792
    %v7404 = vunpack.c.l.b16 %v5793
    %v7405 = vunpack.c.h.b16 %v5793
    %v7406 = vunpack.c.l.b16 %v5794
    %v7407 = vunpack.c.h.b16 %v5794
    %v7408 = vunpack.c.l.b16 %v5795
    %v7409 = vunpack.c.h.b16 %v5795
    %v7410 = vunpack.c.l.b16 %v5796
    %v7411 = vunpack.c.h.b16 %v5796
    %v7412 = vunpack.c.l.b16 %v5797
    %v7413 = vunpack.c.h.b16 %v5797
    %v7414 = vunpack.c.l.b16 %v5798
    %v7415 = vunpack.c.h.b16 %v5798
    %v7416 = vunpack.c.l.b16 %v5799
    %v7417 = vunpack.c.h.b16 %v5799
    %v7418 = vunpack.c.l.b16 %v5800
    %v7419 = vunpack.c.h.b16 %v5800
    %v7420 = vunpack.c.l.b16 %v5801
    %v7421 = vunpack.c.h.b16 %v5801
    %v7422 = vunpack.c.l.b16 %v5802
    %v7423 = vunpack.c.h.b16 %v5802
    %v7424 = vunpack.c.l.b16 %v5803
    %v7425 = vunpack.c.h.b16 %v5803
    %v7426 = vunpack.c.l.b16 %v5804
    %v7427 = vunpack.c.h.b16 %v5804
    %v7428 = vunpack.c.l.b16 %v5805
    %v7429 = vunpack.c.h.b16 %v5805
    %v7430 = vunpack.c.l.b16 %v5806
    %v7431 = vunpack.c.h.b16 %v5806
    %v7432 = vunpack.c.l.b16 %v5807
    %v7433 = vunpack.c.h.b16 %v5807
    %v7434 = vunpack.c.l.b16 %v5808
    %v7435 = vunpack.c.h.b16 %v5808
    %v7436 = vunpack.c.l.b16 %v5809
    %v7437 = vunpack.c.h.b16 %v5809
    %v7438 = vunpack.c.l.b16 %v5810
    %v7439 = vunpack.c.h.b16 %v5810
    %v7440 = vunpack.c.l.b16 %v5811
    %v7441 = vunpack.c.h.b16 %v5811
    %v7442 = vunpack.c.l.b16 %v5812
    %v7443 = vunpack.c.h.b16 %v5812
    %v7444 = vunpack.c.l.b16 %v5813
    %v7445 = vunpack.c.h.b16 %v5813
    %v7446 = vunpack.c.l.b16 %v5814
    %v7447 = vunpack.c.h.b16 %v5814
    %v7448 = vunpack.c.l.b16 %v5815
    %v7449 = vunpack.c.h.b16 %v5815
    %v7450 = vunpack.c.l.b16 %v5816
    %v7451 = vunpack.c.h.b16 %v5816
    %v7452 = vunpack.c.l.b16 %v5817
    %v7453 = vunpack.c.h.b16 %v5817
    %v7454 = vunpack.c.l.b16 %v5818
    %v7455 = vunpack.c.h.b16 %v5818
    %v7456 = vunpack.c.l.b16 %v5819
    %v7457 = vunpack.c.h.b16 %v5819
    %v7458 = vunpack.c.l.b16 %v5820
    %v7459 = vunpack.c.h.b16 %v5820
    %v7460 = vunpack.c.l.b16 %v5821
    %v7461 = vunpack.c.h.b16 %v5821
    %v7462 = vunpack.c.l.b16 %v5822
    %v7463 = vunpack.c.h.b16 %v5822
    %v7464 = vunpack.c.l.b16 %v5823
    %v7465 = vunpack.c.h.b16 %v5823
    %v7466 = vunpack.c.l.b16 %v5824
    %v7467 = vunpack.c.h.b16 %v5824
    %v7468 = vunpack.c.l.b16 %v5825
    %v7469 = vunpack.c.h.b16 %v5825
    %v7470 = vunpack.c.l.b16 %v5826
    %v7471 = vunpack.c.h.b16 %v5826
    %v7472 = vunpack.c.l.b16 %v5827
    %v7473 = vunpack.c.h.b16 %v5827
    %v7474 = vunpack.c.l.b16 %v5828
    %v7475 = vunpack.c.h.b16 %v5828
    %v7476 = vunpack.c.l.b16 %v5829
    %v7477 = vunpack.c.h.b16 %v5829
    %v7478 = vunpack.c.l.b16 %v5830
    %v7479 = vunpack.c.h.b16 %v5830
    %v7480 = vunpack.c.l.b16 %v5831
    %v7481 = vunpack.c.h.b16 %v5831
    %v7482 = vunpack.c.l.b16 %v5832
    %v7483 = vunpack.c.h.b16 %v5832
    %v7484 = vunpack.c.l.b16 %v5833
    %v7485 = vunpack.c.h.b16 %v5833
    %v7486 = vunpack.c.l.b16 %v5834
    %v7487 = vunpack.c.h.b16 %v5834
    %v7488 = vunpack.c.l.b16 %v5835
    %v7489 = vunpack.c.h.b16 %v5835
    %v7490 = vunpack.c.l.b16 %v5836
    %v7491 = vunpack.c.h.b16 %v5836
    %v7492 = vunpack.c.l.b16 %v5837
    %v7493 = vunpack.c.h.b16 %v5837
    %v7494 = vunpack.c.l.b16 %v5838
    %v7495 = vunpack.c.h.b16 %v5838
    %v7496 = vunpack.c.l.b16 %v5839
    %v7497 = vunpack.c.h.b16 %v5839
    %v7498 = vunpack.c.l.b16 %v5840
    %v7499 = vunpack.c.h.b16 %v5840
    %v7500 = vunpack.c.l.b16 %v5841
    %v7501 = vunpack.c.h.b16 %v5841
    %v7502 = vunpack.c.l.b16 %v5842
    %v7503 = vunpack.c.h.b16 %v5842
    %v7504 = vunpack.c.l.b16 %v5843
    %v7505 = vunpack.c.h.b16 %v5843
    %v7506 = vunpack.c.l.b16 %v5844
    %v7507 = vunpack.c.h.b16 %v5844
    %v7508 = vunpack.c.l.b16 %v5845
    %v7509 = vunpack.c.h.b16 %v5845
    %v7510 = vunpack.c.l.b16 %v5846
    %v7511 = vunpack.c.h.b16 %v5846
    %v7512 = vunpack.c.l.b16 %v5847
    %v7513 = vunpack.c.h.b16 %v5847
    %v7514 = vunpack.c.l.b16 %v5848
    %v7515 = vunpack.c.h.b16 %v5848
    %v7516 = vunpack.c.l.b16 %v5849
    %v7517 = vunpack.c.h.b16 %v5849
    %v7518 = vunpack.c.l.b16 %v5850
    %v7519 = vunpack.c.h.b16 %v5850
    %v7520 = vunpack.c.l.b16 %v5851
    %v7521 = vunpack.c.h.b16 %v5851
    %v7522 = vunpack.c.l.b16 %v5852
    %v7523 = vunpack.c.h.b16 %v5852
    %v7524 = vunpack.c.l.b16 %v5853
    %v7525 = vunpack.c.h.b16 %v5853
    %v7526 = vunpack.c.l.b16 %v5854
    %v7527 = vunpack.c.h.b16 %v5854
    %v7528 = vunpack.c.l.b16 %v5855
    %v7529 = vunpack.c.h.b16 %v5855
    %v7530 = vunpack.c.l.b16 %v5856
    %v7531 = vunpack.c.h.b16 %v5856
    %v7532 = vpack.c.b16 %v6510, %v6508
    %v7533 = vpack.c.b16 %v6511, %v6509
    %v7534 = vpack.c.b16 %v6514, %v6512
    %v7535 = vpack.c.b16 %v6515, %v6513
    %v7536 = vpack.c.b16 %v6518, %v6516
    %v7537 = vpack.c.b16 %v6519, %v6517
    %v7538 = vpack.c.b16 %v6522, %v6520
    %v7539 = vpack.c.b16 %v6523, %v6521
    %v7540 = vpack.c.b16 %v6526, %v6524
    %v7541 = vpack.c.b16 %v6527, %v6525
    %v7542 = vpack.c.b16 %v6530, %v6528
    %v7543 = vpack.c.b16 %v6531, %v6529
    %v7544 = vpack.c.b16 %v6534, %v6532
    %v7545 = vpack.c.b16 %v6535, %v6533
    %v7546 = vpack.c.b16 %v6538, %v6536
    %v7547 = vpack.c.b16 %v6539, %v6537
    %v7548 = vpack.c.b16 %v6542, %v6540
    %v7549 = vpack.c.b16 %v6543, %v6541
    %v7550 = vpack.c.b16 %v6546, %v6544
    %v7551 = vpack.c.b16 %v6547, %v6545
    %v7552 = vpack.c.b16 %v6550, %v6548
    %v7553 = vpack.c.b16 %v6551, %v6549
    %v7554 = vpack.c.b16 %v6554, %v6552
    %v7555 = vpack.c.b16 %v6555, %v6553
    %v7556 = vpack.c.b16 %v6558, %v6556
    %v7557 = vpack.c.b16 %v6559, %v6557
    %v7558 = vpack.c.b16 %v6562, %v6560
    %v7559 = vpack.c.b16 %v6563, %v6561
    %v7560 = vpack.c.b16 %v6566, %v6564
    %v7561 = vpack.c.b16 %v6567, %v6565
    %v7562 = vpack.c.b16 %v6570, %v6568
    %v7563 = vpack.c.b16 %v6571, %v6569
    %v7564 = vpack.c.b16 %v6574, %v6572
    %v7565 = vpack.c.b16 %v6575, %v6573
    %v7566 = vpack.c.b16 %v6578, %v6576
    %v7567 = vpack.c.b16 %v6579, %v6577
    %v7568 = vpack.c.b16 %v6582, %v6580
    %v7569 = vpack.c.b16 %v6583, %v6581
    %v7570 = vpack.c.b16 %v6586, %v6584
    %v7571 = vpack.c.b16 %v6587, %v6585
    %v7572 = vpack.c.b16 %v6590, %v6588
    %v7573 = vpack.c.b16 %v6591, %v6589
    %v7574 = vpack.c.b16 %v6594, %v6592
    %v7575 = vpack.c.b16 %v6595, %v6593
    %v7576 = vpack.c.b16 %v6598, %v6596
    %v7577 = vpack.c.b16 %v6599, %v6597
    %v7578 = vpack.c.b16 %v6602, %v6600
    %v7579 = vpack.c.b16 %v6603, %v6601
    %v7580 = vpack.c.b16 %v6606, %v6604
    %v7581 = vpack.c.b16 %v6607, %v6605
    %v7582 = vpack.c.b16 %v6610, %v6608
    %v7583 = vpack.c.b16 %v6611, %v6609
    %v7584 = vpack.c.b16 %v6614, %v6612
    %v7585 = vpack.c.b16 %v6615, %v6613
    %v7586 = vpack.c.b16 %v6618, %v6616
    %v7587 = vpack.c.b16 %v6619, %v6617
    %v7588 = vpack.c.b16 %v6622, %v6620
    %v7589 = vpack.c.b16 %v6623, %v6621
    %v7590 = vpack.c.b16 %v6626, %v6624
    %v7591 = vpack.c.b16 %v6627, %v6625
    %v7592 = vpack.c.b16 %v6630, %v6628
    %v7593 = vpack.c.b16 %v6631, %v6629
    %v7594 = vpack.c.b16 %v6634, %v6632
    %v7595 = vpack.c.b16 %v6635, %v6633
    %v7596 = vpack.c.b16 %v6638, %v6636
    %v7597 = vpack.c.b16 %v6639, %v6637
    %v7598 = vpack.c.b16 %v6642, %v6640
    %v7599 = vpack.c.b16 %v6643, %v6641
    %v7600 = vpack.c.b16 %v6646, %v6644
    %v7601 = vpack.c.b16 %v6647, %v6645
    %v7602 = vpack.c.b16 %v6650, %v6648
    %v7603 = vpack.c.b16 %v6651, %v6649
    %v7604 = vpack.c.b16 %v6654, %v6652
    %v7605 = vpack.c.b16 %v6655, %v6653
    %v7606 = vpack.c.b16 %v6658, %v6656
    %v7607 = vpack.c.b16 %v6659, %v6657
    %v7608 = vpack.c.b16 %v6662, %v6660
    %v7609 = vpack.c.b16 %v6663, %v6661
    %v7610 = vpack.c.b16 %v6666, %v6664
    %v7611 = vpack.c.b16 %v6667, %v6665
    %v7612 = vpack.c.b16 %v6670, %v6668
    %v7613 = vpack.c.b16 %v6671, %v6669
    %v7614 = vpack.c.b16 %v6674, %v6672
    %v7615 = vpack.c.b16 %v6675, %v6673
    %v7616 = vpack.c.b16 %v6678, %v6676
    %v7617 = vpack.c.b16 %v6679, %v6677
    %v7618 = vpack.c.b16 %v6682, %v6680
    %v7619 = vpack.c.b16 %v6683, %v6681
    %v7620 = vpack.c.b16 %v6686, %v6684
    %v7621 = vpack.c.b16 %v6687, %v6685
    %v7622 = vpack.c.b16 %v6690, %v6688
    %v7623 = vpack.c.b16 %v6691, %v6689
    %v7624 = vpack.c.b16 %v6694, %v6692
    %v7625 = vpack.c.b16 %v6695, %v6693
    %v7626 = vpack.c.b16 %v6698, %v6696
    %v7627 = vpack.c.b16 %v6699, %v6697
    %v7628 = vpack.c.b16 %v6702, %v6700
    %v7629 = vpack.c.b16 %v6703, %v6701
    %v7630 = vpack.c.b16 %v6706, %v6704
    %v7631 = vpack.c.b16 %v6707, %v6705
    %v7632 = vpack.c.b16 %v6710, %v6708
    %v7633 = vpack.c.b16 %v6711, %v6709
    %v7634 = vpack.c.b16 %v6714, %v6712
    %v7635 = vpack.c.b16 %v6715, %v6713
    %v7636 = vpack.c.b16 %v6718, %v6716
    %v7637 = vpack.c.b16 %v6719, %v6717
    %v7638 = vpack.c.b16 %v6722, %v6720
    %v7639 = vpack.c.b16 %v6723, %v6721
    %v7640 = vpack.c.b16 %v6726, %v6724
    %v7641 = vpack.c.b16 %v6727, %v6725
    %v7642 = vpack.c.b16 %v6730, %v6728
    %v7643 = vpack.c.b16 %v6731, %v6729
    %v7644 = vpack.c.b16 %v6734, %v6732
    %v7645 = vpack.c.b16 %v6735, %v6733
    %v7646 = vpack.c.b16 %v6738, %v6736
    %v7647 = vpack.c.b16 %v6739, %v6737
    %v7648 = vpack.c.b16 %v6742, %v6740
    %v7649 = vpack.c.b16 %v6743, %v6741
    %v7650 = vpack.c.b16 %v6746, %v6744
    %v7651 = vpack.c.b16 %v6747, %v6745
    %v7652 = vpack.c.b16 %v6750, %v6748
    %v7653 = vpack.c.b16 %v6751, %v6749
    %v7654 = vpack.c.b16 %v6754, %v6752
    %v7655 = vpack.c.b16 %v6755, %v6753
    %v7656 = vpack.c.b16 %v6758, %v6756
    %v7657 = vpack.c.b16 %v6759, %v6757
    %v7658 = vpack.c.b16 %v6762, %v6760
    %v7659 = vpack.c.b16 %v6763, %v6761
    %v7660 = vpack.c.b16 %v6766, %v6764
    %v7661 = vpack.c.b16 %v6767, %v6765
    %v7662 = vpack.c.b16 %v6770, %v6768
    %v7663 = vpack.c.b16 %v6771, %v6769
    %v7664 = vpack.c.b16 %v6774, %v6772
    %v7665 = vpack.c.b16 %v6775, %v6773
    %v7666 = vpack.c.b16 %v6778, %v6776
    %v7667 = vpack.c.b16 %v6779, %v6777
    %v7668 = vpack.c.b16 %v6782, %v6780
    %v7669 = vpack.c.b16 %v6783, %v6781
    %v7670 = vpack.c.b16 %v6786, %v6784
    %v7671 = vpack.c.b16 %v6787, %v6785
    %v7672 = vpack.c.b16 %v6790, %v6788
    %v7673 = vpack.c.b16 %v6791, %v6789
    %v7674 = vpack.c.b16 %v6794, %v6792
    %v7675 = vpack.c.b16 %v6795, %v6793
    %v7676 = vpack.c.b16 %v6798, %v6796
    %v7677 = vpack.c.b16 %v6799, %v6797
    %v7678 = vpack.c.b16 %v6802, %v6800
    %v7679 = vpack.c.b16 %v6803, %v6801
    %v7680 = vpack.c.b16 %v6806, %v6804
    %v7681 = vpack.c.b16 %v6807, %v6805
    %v7682 = vpack.c.b16 %v6810, %v6808
    %v7683 = vpack.c.b16 %v6811, %v6809
    %v7684 = vpack.c.b16 %v6814, %v6812
    %v7685 = vpack.c.b16 %v6815, %v6813
    %v7686 = vpack.c.b16 %v6818, %v6816
    %v7687 = vpack.c.b16 %v6819, %v6817
    %v7688 = vpack.c.b16 %v6822, %v6820
    %v7689 = vpack.c.b16 %v6823, %v6821
    %v7690 = vpack.c.b16 %v6826, %v6824
    %v7691 = vpack.c.b16 %v6827, %v6825
    %v7692 = vpack.c.b16 %v6830, %v6828
    %v7693 = vpack.c.b16 %v6831, %v6829
    %v7694 = vpack.c.b16 %v6834, %v6832
    %v7695 = vpack.c.b16 %v6835, %v6833
    %v7696 = vpack.c.b16 %v6838, %v6836
    %v7697 = vpack.c.b16 %v6839, %v6837
    %v7698 = vpack.c.b16 %v6842, %v6840
    %v7699 = vpack.c.b16 %v6843, %v6841
    %v7700 = vpack.c.b16 %v6846, %v6844
    %v7701 = vpack.c.b16 %v6847, %v6845
    %v7702 = vpack.c.b16 %v6850, %v6848
    %v7703 = vpack.c.b16 %v6851, %v6849
    %v7704 = vpack.c.b16 %v6854, %v6852
    %v7705 = vpack.c.b16 %v6855, %v6853
    %v7706 = vpack.c.b16 %v6858, %v6856
    %v7707 = vpack.c.b16 %v6859, %v6857
    %v7708 = vpack.c.b16 %v6862, %v6860
    %v7709 = vpack.c.b16 %v6863, %v6861
    %v7710 = vpack.c.b16 %v6866, %v6864
    %v7711 = vpack.c.b16 %v6867, %v6865
    %v7712 = vpack.c.b16 %v6870, %v6868
    %v7713 = vpack.c.b16 %v6871, %v6869
    %v7714 = vpack.c.b16 %v6874, %v6872
    %v7715 = vpack.c.b16 %v6875, %v6873
    %v7716 = vpack.c.b16 %v6878, %v6876
    %v7717 = vpack.c.b16 %v6879, %v6877
    %v7718 = vpack.c.b16 %v6882, %v6880
    %v7719 = vpack.c.b16 %v6883, %v6881
    %v7720 = vpack.c.b16 %v6886, %v6884
    %v7721 = vpack.c.b16 %v6887, %v6885
    %v7722 = vpack.c.b16 %v6890, %v6888
    %v7723 = vpack.c.b16 %v6891, %v6889
    %v7724 = vpack.c.b16 %v6894, %v6892
    %v7725 = vpack.c.b16 %v6895, %v6893
    %v7726 = vpack.c.b16 %v6898, %v6896
    %v7727 = vpack.c.b16 %v6899, %v6897
    %v7728 = vpack.c.b16 %v6902, %v6900
    %v7729 = vpack.c.b16 %v6903, %v6901
    %v7730 = vpack.c.b16 %v6906, %v6904
    %v7731 = vpack.c.b16 %v6907, %v6905
    %v7732 = vpack.c.b16 %v6910, %v6908
    %v7733 = vpack.c.b16 %v6911, %v6909
    %v7734 = vpack.c.b16 %v6914, %v6912
    %v7735 = vpack.c.b16 %v6915, %v6913
    %v7736 = vpack.c.b16 %v6918, %v6916
    %v7737 = vpack.c.b16 %v6919, %v6917
    %v7738 = vpack.c.b16 %v6922, %v6920
    %v7739 = vpack.c.b16 %v6923, %v6921
    %v7740 = vpack.c.b16 %v6926, %v6924
    %v7741 = vpack.c.b16 %v6927, %v6925
    %v7742 = vpack.c.b16 %v6930, %v6928
    %v7743 = vpack.c.b16 %v6931, %v6929
    %v7744 = vpack.c.b16 %v6934, %v6932
    %v7745 = vpack.c.b16 %v6935, %v6933
    %v7746 = vpack.c.b16 %v6938, %v6936
    %v7747 = vpack.c.b16 %v6939, %v6937
    %v7748 = vpack.c.b16 %v6942, %v6940
    %v7749 = vpack.c.b16 %v6943, %v6941
    %v7750 = vpack.c.b16 %v6946, %v6944
    %v7751 = vpack.c.b16 %v6947, %v6945
    %v7752 = vpack.c.b16 %v6950, %v6948
    %v7753 = vpack.c.b16 %v6951, %v6949
    %v7754 = vpack.c.b16 %v6954, %v6952
    %v7755 = vpack.c.b16 %v6955, %v6953
    %v7756 = vpack.c.b16 %v6958, %v6956
    %v7757 = vpack.c.b16 %v6959, %v6957
    %v7758 = vpack.c.b16 %v6962, %v6960
    %v7759 = vpack.c.b16 %v6963, %v6961
    %v7760 = vpack.c.b16 %v6966, %v6964
    %v7761 = vpack.c.b16 %v6967, %v6965
    %v7762 = vpack.c.b16 %v6970, %v6968
    %v7763 = vpack.c.b16 %v6971, %v6969
    %v7764 = vpack.c.b16 %v6974, %v6972
    %v7765 = vpack.c.b16 %v6975, %v6973
    %v7766 = vpack.c.b16 %v6978, %v6976
    %v7767 = vpack.c.b16 %v6979, %v6977
    %v7768 = vpack.c.b16 %v6982, %v6980
    %v7769 = vpack.c.b16 %v6983, %v6981
    %v7770 = vpack.c.b16 %v6986, %v6984
    %v7771 = vpack.c.b16 %v6987, %v6985
    %v7772 = vpack.c.b16 %v6990, %v6988
    %v7773 = vpack.c.b16 %v6991, %v6989
    %v7774 = vpack.c.b16 %v6994, %v6992
    %v7775 = vpack.c.b16 %v6995, %v6993
    %v7776 = vpack.c.b16 %v6998, %v6996
    %v7777 = vpack.c.b16 %v6999, %v6997
    %v7778 = vpack.c.b16 %v7002, %v7000
    %v7779 = vpack.c.b16 %v7003, %v7001
    %v7780 = vpack.c.b16 %v7006, %v7004
    %v7781 = vpack.c.b16 %v7007, %v7005
    %v7782 = vpack.c.b16 %v7010, %v7008
    %v7783 = vpack.c.b16 %v7011, %v7009
    %v7784 = vpack.c.b16 %v7014, %v7012
    %v7785 = vpack.c.b16 %v7015, %v7013
    %v7786 = vpack.c.b16 %v7018, %v7016
    %v7787 = vpack.c.b16 %v7019, %v7017
    %v7788 = vpack.c.b16 %v7022, %v7020
    %v7789 = vpack.c.b16 %v7023, %v7021
    %v7790 = vpack.c.b16 %v7026, %v7024
    %v7791 = vpack.c.b16 %v7027, %v7025
    %v7792 = vpack.c.b16 %v7030, %v7028
    %v7793 = vpack.c.b16 %v7031, %v7029
    %v7794 = vpack.c.b16 %v7034, %v7032
    %v7795 = vpack.c.b16 %v7035, %v7033
    %v7796 = vpack.c.b16 %v7038, %v7036
    %v7797 = vpack.c.b16 %v7039, %v7037
    %v7798 = vpack.c.b16 %v7042, %v7040
    %v7799 = vpack.c.b16 %v7043, %v7041
    %v7800 = vpack.c.b16 %v7046, %v7044
    %v7801 = vpack.c.b16 %v7047, %v7045
    %v7802 = vpack.c.b16 %v7050, %v7048
    %v7803 = vpack.c.b16 %v7051, %v7049
    %v7804 = vpack.c.b16 %v7054, %v7052
    %v7805 = vpack.c.b16 %v7055, %v7053
    %v7806 = vpack.c.b16 %v7058, %v7056
    %v7807 = vpack.c.b16 %v7059, %v7057
    %v7808 = vpack.c.b16 %v7062, %v7060
    %v7809 = vpack.c.b16 %v7063, %v7061
    %v7810 = vpack.c.b16 %v7066, %v7064
    %v7811 = vpack.c.b16 %v7067, %v7065
    %v7812 = vpack.c.b16 %v7070, %v7068
    %v7813 = vpack.c.b16 %v7071, %v7069
    %v7814 = vpack.c.b16 %v7074, %v7072
    %v7815 = vpack.c.b16 %v7075, %v7073
    %v7816 = vpack.c.b16 %v7078, %v7076
    %v7817 = vpack.c.b16 %v7079, %v7077
    %v7818 = vpack.c.b16 %v7082, %v7080
    %v7819 = vpack.c.b16 %v7083, %v7081
    %v7820 = vpack.c.b16 %v7086, %v7084
    %v7821 = vpack.c.b16 %v7087, %v7085
    %v7822 = vpack.c.b16 %v7090, %v7088
    %v7823 = vpack.c.b16 %v7091, %v7089
    %v7824 = vpack.c.b16 %v7094, %v7092
    %v7825 = vpack.c.b16 %v7095, %v7093
    %v7826 = vpack.c.b16 %v7098, %v7096
    %v7827 = vpack.c.b16 %v7099, %v7097
    %v7828 = vpack.c.b16 %v7102, %v7100
    %v7829 = vpack.c.b16 %v7103, %v7101
    %v7830 = vpack.c.b16 %v7106, %v7104
    %v7831 = vpack.c.b16 %v7107, %v7105
    %v7832 = vpack.c.b16 %v7110, %v7108
    %v7833 = vpack.c.b16 %v7111, %v7109
    %v7834 = vpack.c.b16 %v7114, %v7112
    %v7835 = vpack.c.b16 %v7115, %v7113
    %v7836 = vpack.c.b16 %v7118, %v7116
    %v7837 = vpack.c.b16 %v7119, %v7117
    %v7838 = vpack.c.b16 %v7122, %v7120
    %v7839 = vpack.c.b16 %v7123, %v7121
    %v7840 = vpack.c.b16 %v7126, %v7124
    %v7841 = vpack.c.b16 %v7127, %v7125
    %v7842 = vpack.c.b16 %v7130, %v7128
    %v7843 = vpack.c.b16 %v7131, %v7129
    %v7844 = vpack.c.b16 %v7134, %v7132
    %v7845 = vpack.c.b16 %v7135, %v7133
    %v7846 = vpack.c.b16 %v7138, %v7136
    %v7847 = vpack.c.b16 %v7139, %v7137
    %v7848 = vpack.c.b16 %v7142, %v7140
    %v7849 = vpack.c.b16 %v7143, %v7141
    %v7850 = vpack.c.b16 %v7146, %v7144
    %v7851 = vpack.c.b16 %v7147, %v7145
    %v7852 = vpack.c.b16 %v7150, %v7148
    %v7853 = vpack.c.b16 %v7151, %v7149
    %v7854 = vpack.c.b16 %v7154, %v7152
    %v7855 = vpack.c.b16 %v7155, %v7153
    %v7856 = vpack.c.b16 %v7158, %v7156
    %v7857 = vpack.c.b16 %v7159, %v7157
    %v7858 = vpack.c.b16 %v7162, %v7160
    %v7859 = vpack.c.b16 %v7163, %v7161
    %v7860 = vpack.c.b16 %v7166, %v7164
    %v7861 = vpack.c.b16 %v7167, %v7165
    %v7862 = vpack.c.b16 %v7170, %v7168
    %v7863 = vpack.c.b16 %v7171, %v7169
    %v7864 = vpack.c.b16 %v7174, %v7172
    %v7865 = vpack.c.b16 %v7175, %v7173
    %v7866 = vpack.c.b16 %v7178, %v7176
    %v7867 = vpack.c.b16 %v7179, %v7177
    %v7868 = vpack.c.b16 %v7182, %v7180
    %v7869 = vpack.c.b16 %v7183, %v7181
    %v7870 = vpack.c.b16 %v7186, %v7184
    %v7871 = vpack.c.b16 %v7187, %v7185
    %v7872 = vpack.c.b16 %v7190, %v7188
    %v7873 = vpack.c.b16 %v7191, %v7189
    %v7874 = vpack.c.b16 %v7194, %v7192
    %v7875 = vpack.c.b16 %v7195, %v7193
    %v7876 = vpack.c.b16 %v7198, %v7196
    %v7877 = vpack.c.b16 %v7199, %v7197
    %v7878 = vpack.c.b16 %v7202, %v7200
    %v7879 = vpack.c.b16 %v7203, %v7201
    %v7880 = vpack.c.b16 %v7206, %v7204
    %v7881 = vpack.c.b16 %v7207, %v7205
    %v7882 = vpack.c.b16 %v7210, %v7208
    %v7883 = vpack.c.b16 %v7211, %v7209
    %v7884 = vpack.c.b16 %v7214, %v7212
    %v7885 = vpack.c.b16 %v7215, %v7213
    %v7886 = vpack.c.b16 %v7218, %v7216
    %v7887 = vpack.c.b16 %v7219, %v7217
    %v7888 = vpack.c.b16 %v7222, %v7220
    %v7889 = vpack.c.b16 %v7223, %v7221
    %v7890 = vpack.c.b16 %v7226, %v7224
    %v7891 = vpack.c.b16 %v7227, %v7225
    %v7892 = vpack.c.b16 %v7230, %v7228
    %v7893 = vpack.c.b16 %v7231, %v7229
    %v7894 = vpack.c.b16 %v7234, %v7232
    %v7895 = vpack.c.b16 %v7235, %v7233
    %v7896 = vpack.c.b16 %v7238, %v7236
    %v7897 = vpack.c.b16 %v7239, %v7237
    %v7898 = vpack.c.b16 %v7242, %v7240
    %v7899 = vpack.c.b16 %v7243, %v7241
    %v7900 = vpack.c.b16 %v7246, %v7244
    %v7901 = vpack.c.b16 %v7247, %v7245
    %v7902 = vpack.c.b16 %v7250, %v7248
    %v7903 = vpack.c.b16 %v7251, %v7249
    %v7904 = vpack.c.b16 %v7254, %v7252
    %v7905 = vpack.c.b16 %v7255, %v7253
    %v7906 = vpack.c.b16 %v7258, %v7256
    %v7907 = vpack.c.b16 %v7259, %v7257
    %v7908 = vpack.c.b16 %v7262, %v7260
    %v7909 = vpack.c.b16 %v7263, %v7261
    %v7910 = vpack.c.b16 %v7266, %v7264
    %v7911 = vpack.c.b16 %v7267, %v7265
    %v7912 = vpack.c.b16 %v7270, %v7268
    %v7913 = vpack.c.b16 %v7271, %v7269
    %v7914 = vpack.c.b16 %v7274, %v7272
    %v7915 = vpack.c.b16 %v7275, %v7273
    %v7916 = vpack.c.b16 %v7278, %v7276
    %v7917 = vpack.c.b16 %v7279, %v7277
    %v7918 = vpack.c.b16 %v7282, %v7280
    %v7919 = vpack.c.b16 %v7283, %v7281
    %v7920 = vpack.c.b16 %v7286, %v7284
    %v7921 = vpack.c.b16 %v7287, %v7285
    %v7922 = vpack.c.b16 %v7290, %v7288
    %v7923 = vpack.c.b16 %v7291, %v7289
    %v7924 = vpack.c.b16 %v7294, %v7292
    %v7925 = vpack.c.b16 %v7295, %v7293
    %v7926 = vpack.c.b16 %v7298, %v7296
    %v7927 = vpack.c.b16 %v7299, %v7297
    %v7928 = vpack.c.b16 %v7302, %v7300
    %v7929 = vpack.c.b16 %v7303, %v7301
    %v7930 = vpack.c.b16 %v7306, %v7304
    %v7931 = vpack.c.b16 %v7307, %v7305
    %v7932 = vpack.c.b16 %v7310, %v7308
    %v7933 = vpack.c.b16 %v7311, %v7309
    %v7934 = vpack.c.b16 %v7314, %v7312
    %v7935 = vpack.c.b16 %v7315, %v7313
    %v7936 = vpack.c.b16 %v7318, %v7316
    %v7937 = vpack.c.b16 %v7319, %v7317
    %v7938 = vpack.c.b16 %v7322, %v7320
    %v7939 = vpack.c.b16 %v7323, %v7321
    %v7940 = vpack.c.b16 %v7326, %v7324
    %v7941 = vpack.c.b16 %v7327, %v7325
    %v7942 = vpack.c.b16 %v7330, %v7328
    %v7943 = vpack.c.b16 %v7331, %v7329
    %v7944 = vpack.c.b16 %v7334, %v7332
    %v7945 = vpack.c.b16 %v7335, %v7333
    %v7946 = vpack.c.b16 %v7338, %v7336
    %v7947 = vpack.c.b16 %v7339, %v7337
    %v7948 = vpack.c.b16 %v7342, %v7340
    %v7949 = vpack.c.b16 %v7343, %v7341
    %v7950 = vpack.c.b16 %v7346, %v7344
    %v7951 = vpack.c.b16 %v7347, %v7345
    %v7952 = vpack.c.b16 %v7350, %v7348
    %v7953 = vpack.c.b16 %v7351, %v7349
    %v7954 = vpack.c.b16 %v7354, %v7352
    %v7955 = vpack.c.b16 %v7355, %v7353
    %v7956 = vpack.c.b16 %v7358, %v7356
    %v7957 = vpack.c.b16 %v7359, %v7357
    %v7958 = vpack.c.b16 %v7362, %v7360
    %v7959 = vpack.c.b16 %v7363, %v7361
    %v7960 = vpack.c.b16 %v7366, %v7364
    %v7961 = vpack.c.b16 %v7367, %v7365
    %v7962 = vpack.c.b16 %v7370, %v7368
    %v7963 = vpack.c.b16 %v7371, %v7369
    %v7964 = vpack.c.b16 %v7374, %v7372
    %v7965 = vpack.c.b16 %v7375, %v7373
    %v7966 = vpack.c.b16 %v7378, %v7376
    %v7967 = vpack.c.b16 %v7379, %v7377
    %v7968 = vpack.c.b16 %v7382, %v7380
    %v7969 = vpack.c.b16 %v7383, %v7381
    %v7970 = vpack.c.b16 %v7386, %v7384
    %v7971 = vpack.c.b16 %v7387, %v7385
    %v7972 = vpack.c.b16 %v7390, %v7388
    %v7973 = vpack.c.b16 %v7391, %v7389
    %v7974 = vpack.c.b16 %v7394, %v7392
    %v7975 = vpack.c.b16 %v7395, %v7393
    %v7976 = vpack.c.b16 %v7398, %v7396
    %v7977 = vpack.c.b16 %v7399, %v7397
    %v7978 = vpack.c.b16 %v7402, %v7400
    %v7979 = vpack.c.b16 %v7403, %v7401
    %v7980 = vpack.c.b16 %v7406, %v7404
    %v7981 = vpack.c.b16 %v7407, %v7405
    %v7982 = vpack.c.b16 %v7410, %v7408
    %v7983 = vpack.c.b16 %v7411, %v7409
    %v7984 = vpack.c.b16 %v7414, %v7412
    %v7985 = vpack.c.b16 %v7415, %v7413
    %v7986 = vpack.c.b16 %v7418, %v7416
    %v7987 = vpack.c.b16 %v7419, %v7417
    %v7988 = vpack.c.b16 %v7422, %v7420
    %v7989 = vpack.c.b16 %v7423, %v7421
    %v7990 = vpack.c.b16 %v7426, %v7424
    %v7991 = vpack.c.b16 %v7427, %v7425
    %v7992 = vpack.c.b16 %v7430, %v7428
    %v7993 = vpack.c.b16 %v7431, %v7429
    %v7994 = vpack.c.b16 %v7434, %v7432
    %v7995 = vpack.c.b16 %v7435, %v7433
    %v7996 = vpack.c.b16 %v7438, %v7436
    %v7997 = vpack.c.b16 %v7439, %v7437
    %v7998 = vpack.c.b16 %v7442, %v7440
    %v7999 = vpack.c.b16 %v7443, %v7441
    %v8000 = vpack.c.b16 %v7446, %v7444
    %v8001 = vpack.c.b16 %v7447, %v7445
    %v8002 = vpack.c.b16 %v7450, %v7448
    %v8003 = vpack.c.b16 %v7451, %v7449
    %v8004 = vpack.c.b16 %v7454, %v7452
    %v8005 = vpack.c.b16 %v7455, %v7453
    %v8006 = vpack.c.b16 %v7458, %v7456
    %v8007 = vpack.c.b16 %v7459, %v7457
    %v8008 = vpack.c.b16 %v7462, %v7460
    %v8009 = vpack.c.b16 %v7463, %v7461
    %v8010 = vpack.c.b16 %v7466, %v7464
    %v8011 = vpack.c.b16 %v7467, %v7465
    %v8012 = vpack.c.b16 %v7470, %v7468
    %v8013 = vpack.c.b16 %v7471, %v7469
    %v8014 = vpack.c.b16 %v7474, %v7472
    %v8015 = vpack.c.b16 %v7475, %v7473
    %v8016 = vpack.c.b16 %v7478, %v7476
    %v8017 = vpack.c.b16 %v7479, %v7477
    %v8018 = vpack.c.b16 %v7482, %v7480
    %v8019 = vpack.c.b16 %v7483, %v7481
    %v8020 = vpack.c.b16 %v7486, %v7484
    %v8021 = vpack.c.b16 %v7487, %v7485
    %v8022 = vpack.c.b16 %v7490, %v7488
    %v8023 = vpack.c.b16 %v7491, %v7489
    %v8024 = vpack.c.b16 %v7494, %v7492
    %v8025 = vpack.c.b16 %v7495, %v7493
    %v8026 = vpack.c.b16 %v7498, %v7496
    %v8027 = vpack.c.b16 %v7499, %v7497
    %v8028 = vpack.c.b16 %v7502, %v7500
    %v8029 = vpack.c.b16 %v7503, %v7501
    %v8030 = vpack.c.b16 %v7506, %v7504
    %v8031 = vpack.c.b16 %v7507, %v7505
    %v8032 = vpack.c.b16 %v7510, %v7508
    %v8033 = vpack.c.b16 %v7511, %v7509
    %v8034 = vpack.c.b16 %v7514, %v7512
    %v8035 = vpack.c.b16 %v7515, %v7513
    %v8036 = vpack.c.b16 %v7518, %v7516
    %v8037 = vpack.c.b16 %v7519, %v7517
    %v8038 = vpack.c.b16 %v7522, %v7520
    %v8039 = vpack.c.b16 %v7523, %v7521
    %v8040 = vpack.c.b16 %v7526, %v7524
    %v8041 = vpack.c.b16 %v7527, %v7525
    %v8042 = vpack.c.b16 %v7530, %v7528
    %v8043 = vpack.c.b16 %v7531, %v7529
    %8556 = vmatprep.subr.bf16.mxu0 %v7547
    %8557 = vmatpush1.bf16.msra.mxu0 %v7546
    %8558 = vmatprep.subr.bf16.mxu0 %v7545
    %8559 = vmatpush1.bf16.msra.mxu0 %v7544
    %8560 = vmatprep.subr.bf16.mxu0 %v7543
    %8561 = vmatpush1.bf16.msra.mxu0 %v7542
    %8562 = vmatprep.subr.bf16.mxu0 %v7541
    %8563 = vmatpush1.bf16.msra.mxu0 %v7540
    %8564 = vmatprep.subr.bf16.mxu0 %v7539
    %8565 = vmatpush1.bf16.msra.mxu0 %v7538
    %8566 = vmatprep.subr.bf16.mxu0 %v7537
    %8567 = vmatpush1.bf16.msra.mxu0 %v7536
    %8568 = vmatprep.subr.bf16.mxu0 %v7535
    %8569 = vmatpush1.bf16.msra.mxu0 %v7534
    %8570 = vmatprep.subr.bf16.mxu0 %v7533
    %8571 = vmatpush1.bf16.msra.mxu0 %v7532
    %8572 = vmatprep.subr.bf16.mxu0 %v7563
    %8573 = vmatpush2.bf16.msra.mxu0 %v7562
    %8574 = vmatprep.subr.bf16.mxu0 %v7561
    %8575 = vmatpush2.bf16.msra.mxu0 %v7560
    %8576 = vmatprep.subr.bf16.mxu0 %v7559
    %8577 = vmatpush2.bf16.msra.mxu0 %v7558
    %8578 = vmatprep.subr.bf16.mxu0 %v7557
    %8579 = vmatpush2.bf16.msra.mxu0 %v7556
    %8580 = vmatprep.subr.bf16.mxu0 %v7555
    %8581 = vmatpush2.bf16.msra.mxu0 %v7554
    %8582 = vmatprep.subr.bf16.mxu0 %v7553
    %8583 = vmatpush2.bf16.msra.mxu0 %v7552
    %8584 = vmatprep.subr.bf16.mxu0 %v7551
    %8585 = vmatpush2.bf16.msra.mxu0 %v7550
    %8586 = vmatprep.subr.bf16.mxu0 %v7549
    %8587 = vmatpush2.bf16.msra.mxu0 %v7548
    %8588 = vmatprep.mubr.bf16.mxu0 %v5314
    %8589 = vmatmul.mubr.bf16.gmra.mxu0 %v5313
    %v8590 = vpop.f32.mrf.mxu0
    %v8591 = vadd.f32 %v5990, %v8590
    %v8592 = vpop.f32.mrf.mxu0
    %v8593 = vadd.f32 %v5992, %v8592
    %v8594 = vpop.f32.mrf.mxu0
    %v8595 = vpop.f32.mrf.mxu0
    %8596 = vdwg.mxu0
    %8597 = vmatprep.subr.bf16.mxu0 %v7579
    %8598 = vmatpush1.bf16.msra.mxu0 %v7578
    %8599 = vmatprep.subr.bf16.mxu0 %v7577
    %8600 = vmatpush1.bf16.msra.mxu0 %v7576
    %8601 = vmatprep.subr.bf16.mxu0 %v7575
    %8602 = vmatpush1.bf16.msra.mxu0 %v7574
    %8603 = vmatprep.subr.bf16.mxu0 %v7573
    %8604 = vmatpush1.bf16.msra.mxu0 %v7572
    %8605 = vmatprep.subr.bf16.mxu0 %v7571
    %8606 = vmatpush1.bf16.msra.mxu0 %v7570
    %8607 = vmatprep.subr.bf16.mxu0 %v7569
    %8608 = vmatpush1.bf16.msra.mxu0 %v7568
    %8609 = vmatprep.subr.bf16.mxu0 %v7567
    %8610 = vmatpush1.bf16.msra.mxu0 %v7566
    %8611 = vmatprep.subr.bf16.mxu0 %v7565
    %8612 = vmatpush1.bf16.msra.mxu0 %v7564
    %8613 = vmatprep.subr.bf16.mxu0 %v7595
    %8614 = vmatpush2.bf16.msra.mxu0 %v7594
    %8615 = vmatprep.subr.bf16.mxu0 %v7593
    %8616 = vmatpush2.bf16.msra.mxu0 %v7592
    %8617 = vmatprep.subr.bf16.mxu0 %v7591
    %8618 = vmatpush2.bf16.msra.mxu0 %v7590
    %8619 = vmatprep.subr.bf16.mxu0 %v7589
    %8620 = vmatpush2.bf16.msra.mxu0 %v7588
    %8621 = vmatprep.subr.bf16.mxu0 %v7587
    %8622 = vmatpush2.bf16.msra.mxu0 %v7586
    %8623 = vmatprep.subr.bf16.mxu0 %v7585
    %8624 = vmatpush2.bf16.msra.mxu0 %v7584
    %8625 = vmatprep.subr.bf16.mxu0 %v7583
    %8626 = vmatpush2.bf16.msra.mxu0 %v7582
    %8627 = vmatprep.subr.bf16.mxu0 %v7581
    %8628 = vmatpush2.bf16.msra.mxu0 %v7580
    %8629 = vmatprep.mubr.bf16.mxu0 %v5316
    %8630 = vmatmul.mubr.bf16.gmra.mxu0 %v5315
    %v8631 = vpop.f32.mrf.mxu0
    %v8632 = vadd.f32 %v8591, %v8631
    %v8633 = vpop.f32.mrf.mxu0
    %v8634 = vadd.f32 %v8593, %v8633
    %v8635 = vpop.f32.mrf.mxu0
    %v8636 = vpop.f32.mrf.mxu0
    %8637 = vdwg.mxu0
    %8638 = vmatprep.subr.bf16.mxu0 %v7611
    %8639 = vmatpush1.bf16.msra.mxu0 %v7610
    %8640 = vmatprep.subr.bf16.mxu0 %v7609
    %8641 = vmatpush1.bf16.msra.mxu0 %v7608
    %8642 = vmatprep.subr.bf16.mxu0 %v7607
    %8643 = vmatpush1.bf16.msra.mxu0 %v7606
    %8644 = vmatprep.subr.bf16.mxu0 %v7605
    %8645 = vmatpush1.bf16.msra.mxu0 %v7604
    %8646 = vmatprep.subr.bf16.mxu0 %v7603
    %8647 = vmatpush1.bf16.msra.mxu0 %v7602
    %8648 = vmatprep.subr.bf16.mxu0 %v7601
    %8649 = vmatpush1.bf16.msra.mxu0 %v7600
    %8650 = vmatprep.subr.bf16.mxu0 %v7599
    %8651 = vmatpush1.bf16.msra.mxu0 %v7598
    %8652 = vmatprep.subr.bf16.mxu0 %v7597
    %8653 = vmatpush1.bf16.msra.mxu0 %v7596
    %8654 = vmatprep.subr.bf16.mxu0 %v7627
    %8655 = vmatpush2.bf16.msra.mxu0 %v7626
    %8656 = vmatprep.subr.bf16.mxu0 %v7625
    %8657 = vmatpush2.bf16.msra.mxu0 %v7624
    %8658 = vmatprep.subr.bf16.mxu0 %v7623
    %8659 = vmatpush2.bf16.msra.mxu0 %v7622
    %8660 = vmatprep.subr.bf16.mxu0 %v7621
    %8661 = vmatpush2.bf16.msra.mxu0 %v7620
    %8662 = vmatprep.subr.bf16.mxu0 %v7619
    %8663 = vmatpush2.bf16.msra.mxu0 %v7618
    %8664 = vmatprep.subr.bf16.mxu0 %v7617
    %8665 = vmatpush2.bf16.msra.mxu0 %v7616
    %8666 = vmatprep.subr.bf16.mxu0 %v7615
    %8667 = vmatpush2.bf16.msra.mxu0 %v7614
    %8668 = vmatprep.subr.bf16.mxu0 %v7613
    %8669 = vmatpush2.bf16.msra.mxu0 %v7612
    %8670 = vmatprep.mubr.bf16.mxu0 %v5318
    %8671 = vmatmul.mubr.bf16.gmra.mxu0 %v5317
    %v8672 = vpop.f32.mrf.mxu0
    %v8673 = vadd.f32 %v8632, %v8672
    %v8674 = vpop.f32.mrf.mxu0
    %v8675 = vadd.f32 %v8634, %v8674
    %v8676 = vpop.f32.mrf.mxu0
    %v8677 = vpop.f32.mrf.mxu0
    %8678 = vdwg.mxu0
    %8679 = vmatprep.subr.bf16.mxu0 %v7643
    %8680 = vmatpush1.bf16.msra.mxu0 %v7642
    %8681 = vmatprep.subr.bf16.mxu0 %v7641
    %8682 = vmatpush1.bf16.msra.mxu0 %v7640
    %8683 = vmatprep.subr.bf16.mxu0 %v7639
    %8684 = vmatpush1.bf16.msra.mxu0 %v7638
    %8685 = vmatprep.subr.bf16.mxu0 %v7637
    %8686 = vmatpush1.bf16.msra.mxu0 %v7636
    %8687 = vmatprep.subr.bf16.mxu0 %v7635
    %8688 = vmatpush1.bf16.msra.mxu0 %v7634
    %8689 = vmatprep.subr.bf16.mxu0 %v7633
    %8690 = vmatpush1.bf16.msra.mxu0 %v7632
    %8691 = vmatprep.subr.bf16.mxu0 %v7631
    %8692 = vmatpush1.bf16.msra.mxu0 %v7630
    %8693 = vmatprep.subr.bf16.mxu0 %v7629
    %8694 = vmatpush1.bf16.msra.mxu0 %v7628
    %8695 = vmatprep.subr.bf16.mxu0 %v7659
    %8696 = vmatpush2.bf16.msra.mxu0 %v7658
    %8697 = vmatprep.subr.bf16.mxu0 %v7657
    %8698 = vmatpush2.bf16.msra.mxu0 %v7656
    %8699 = vmatprep.subr.bf16.mxu0 %v7655
    %8700 = vmatpush2.bf16.msra.mxu0 %v7654
    %8701 = vmatprep.subr.bf16.mxu0 %v7653
    %8702 = vmatpush2.bf16.msra.mxu0 %v7652
    %8703 = vmatprep.subr.bf16.mxu0 %v7651
    %8704 = vmatpush2.bf16.msra.mxu0 %v7650
    %8705 = vmatprep.subr.bf16.mxu0 %v7649
    %8706 = vmatpush2.bf16.msra.mxu0 %v7648
    %8707 = vmatprep.subr.bf16.mxu0 %v7647
    %8708 = vmatpush2.bf16.msra.mxu0 %v7646
    %8709 = vmatprep.subr.bf16.mxu0 %v7645
    %8710 = vmatpush2.bf16.msra.mxu0 %v7644
    %8711 = vmatprep.mubr.bf16.mxu0 %v5320
    %8712 = vmatmul.mubr.bf16.gmra.mxu0 %v5319
    %v8713 = vpop.f32.mrf.mxu0
    %v8714 = vadd.f32 %v8673, %v8713
    %v8715 = vpop.f32.mrf.mxu0
    %v8716 = vadd.f32 %v8675, %v8715
    %v8717 = vpop.f32.mrf.mxu0
    %v8718 = vpop.f32.mrf.mxu0
    %8719 = vdwg.mxu0
    %8720 = vmatprep.subr.bf16.mxu0 %v7675
    %8721 = vmatpush1.bf16.msra.mxu0 %v7674
    %8722 = vmatprep.subr.bf16.mxu0 %v7673
    %8723 = vmatpush1.bf16.msra.mxu0 %v7672
    %8724 = vmatprep.subr.bf16.mxu0 %v7671
    %8725 = vmatpush1.bf16.msra.mxu0 %v7670
    %8726 = vmatprep.subr.bf16.mxu0 %v7669
    %8727 = vmatpush1.bf16.msra.mxu0 %v7668
    %8728 = vmatprep.subr.bf16.mxu0 %v7667
    %8729 = vmatpush1.bf16.msra.mxu0 %v7666
    %8730 = vmatprep.subr.bf16.mxu0 %v7665
    %8731 = vmatpush1.bf16.msra.mxu0 %v7664
    %8732 = vmatprep.subr.bf16.mxu0 %v7663
    %8733 = vmatpush1.bf16.msra.mxu0 %v7662
    %8734 = vmatprep.subr.bf16.mxu0 %v7661
    %8735 = vmatpush1.bf16.msra.mxu0 %v7660
    %8736 = vmatprep.subr.bf16.mxu0 %v7691
    %8737 = vmatpush2.bf16.msra.mxu0 %v7690
    %8738 = vmatprep.subr.bf16.mxu0 %v7689
    %8739 = vmatpush2.bf16.msra.mxu0 %v7688
    %8740 = vmatprep.subr.bf16.mxu0 %v7687
    %8741 = vmatpush2.bf16.msra.mxu0 %v7686
    %8742 = vmatprep.subr.bf16.mxu0 %v7685
    %8743 = vmatpush2.bf16.msra.mxu0 %v7684
    %8744 = vmatprep.subr.bf16.mxu0 %v7683
    %8745 = vmatpush2.bf16.msra.mxu0 %v7682
    %8746 = vmatprep.subr.bf16.mxu0 %v7681
    %8747 = vmatpush2.bf16.msra.mxu0 %v7680
    %8748 = vmatprep.subr.bf16.mxu0 %v7679
    %8749 = vmatpush2.bf16.msra.mxu0 %v7678
    %8750 = vmatprep.subr.bf16.mxu0 %v7677
    %8751 = vmatpush2.bf16.msra.mxu0 %v7676
    %8752 = vmatprep.mubr.bf16.mxu0 %v5322
    %8753 = vmatmul.mubr.bf16.gmra.mxu0 %v5321
    %v8754 = vpop.f32.mrf.mxu0
    %v8755 = vadd.f32 %v8714, %v8754
    %v8756 = vpop.f32.mrf.mxu0
    %v8757 = vadd.f32 %v8716, %v8756
    %v8758 = vpop.f32.mrf.mxu0
    %v8759 = vpop.f32.mrf.mxu0
    %8760 = vdwg.mxu0
    %8761 = vmatprep.subr.bf16.mxu0 %v7707
    %8762 = vmatpush1.bf16.msra.mxu0 %v7706
    %8763 = vmatprep.subr.bf16.mxu0 %v7705
    %8764 = vmatpush1.bf16.msra.mxu0 %v7704
    %8765 = vmatprep.subr.bf16.mxu0 %v7703
    %8766 = vmatpush1.bf16.msra.mxu0 %v7702
    %8767 = vmatprep.subr.bf16.mxu0 %v7701
    %8768 = vmatpush1.bf16.msra.mxu0 %v7700
    %8769 = vmatprep.subr.bf16.mxu0 %v7699
    %8770 = vmatpush1.bf16.msra.mxu0 %v7698
    %8771 = vmatprep.subr.bf16.mxu0 %v7697
    %8772 = vmatpush1.bf16.msra.mxu0 %v7696
    %8773 = vmatprep.subr.bf16.mxu0 %v7695
    %8774 = vmatpush1.bf16.msra.mxu0 %v7694
    %8775 = vmatprep.subr.bf16.mxu0 %v7693
    %8776 = vmatpush1.bf16.msra.mxu0 %v7692
    %8777 = vmatprep.subr.bf16.mxu0 %v7723
    %8778 = vmatpush2.bf16.msra.mxu0 %v7722
    %8779 = vmatprep.subr.bf16.mxu0 %v7721
    %8780 = vmatpush2.bf16.msra.mxu0 %v7720
    %8781 = vmatprep.subr.bf16.mxu0 %v7719
    %8782 = vmatpush2.bf16.msra.mxu0 %v7718
    %8783 = vmatprep.subr.bf16.mxu0 %v7717
    %8784 = vmatpush2.bf16.msra.mxu0 %v7716
    %8785 = vmatprep.subr.bf16.mxu0 %v7715
    %8786 = vmatpush2.bf16.msra.mxu0 %v7714
    %8787 = vmatprep.subr.bf16.mxu0 %v7713
    %8788 = vmatpush2.bf16.msra.mxu0 %v7712
    %8789 = vmatprep.subr.bf16.mxu0 %v7711
    %8790 = vmatpush2.bf16.msra.mxu0 %v7710
    %8791 = vmatprep.subr.bf16.mxu0 %v7709
    %8792 = vmatpush2.bf16.msra.mxu0 %v7708
    %8793 = vmatprep.mubr.bf16.mxu0 %v5324
    %8794 = vmatmul.mubr.bf16.gmra.mxu0 %v5323
    %v8795 = vpop.f32.mrf.mxu0
    %v8796 = vadd.f32 %v8755, %v8795
    %v8797 = vpop.f32.mrf.mxu0
    %v8798 = vadd.f32 %v8757, %v8797
    %v8799 = vpop.f32.mrf.mxu0
    %v8800 = vpop.f32.mrf.mxu0
    %8801 = vdwg.mxu0
    %8802 = vmatprep.subr.bf16.mxu0 %v7739
    %8803 = vmatpush1.bf16.msra.mxu0 %v7738
    %8804 = vmatprep.subr.bf16.mxu0 %v7737
    %8805 = vmatpush1.bf16.msra.mxu0 %v7736
    %8806 = vmatprep.subr.bf16.mxu0 %v7735
    %8807 = vmatpush1.bf16.msra.mxu0 %v7734
    %8808 = vmatprep.subr.bf16.mxu0 %v7733
    %8809 = vmatpush1.bf16.msra.mxu0 %v7732
    %8810 = vmatprep.subr.bf16.mxu0 %v7731
    %8811 = vmatpush1.bf16.msra.mxu0 %v7730
    %8812 = vmatprep.subr.bf16.mxu0 %v7729
    %8813 = vmatpush1.bf16.msra.mxu0 %v7728
    %8814 = vmatprep.subr.bf16.mxu0 %v7727
    %8815 = vmatpush1.bf16.msra.mxu0 %v7726
    %8816 = vmatprep.subr.bf16.mxu0 %v7725
    %8817 = vmatpush1.bf16.msra.mxu0 %v7724
    %8818 = vmatprep.subr.bf16.mxu0 %v7755
    %8819 = vmatpush2.bf16.msra.mxu0 %v7754
    %8820 = vmatprep.subr.bf16.mxu0 %v7753
    %8821 = vmatpush2.bf16.msra.mxu0 %v7752
    %8822 = vmatprep.subr.bf16.mxu0 %v7751
    %8823 = vmatpush2.bf16.msra.mxu0 %v7750
    %8824 = vmatprep.subr.bf16.mxu0 %v7749
    %8825 = vmatpush2.bf16.msra.mxu0 %v7748
    %8826 = vmatprep.subr.bf16.mxu0 %v7747
    %8827 = vmatpush2.bf16.msra.mxu0 %v7746
    %8828 = vmatprep.subr.bf16.mxu0 %v7745
    %8829 = vmatpush2.bf16.msra.mxu0 %v7744
    %8830 = vmatprep.subr.bf16.mxu0 %v7743
    %8831 = vmatpush2.bf16.msra.mxu0 %v7742
    %8832 = vmatprep.subr.bf16.mxu0 %v7741
    %8833 = vmatpush2.bf16.msra.mxu0 %v7740
    %8834 = vmatprep.mubr.bf16.mxu0 %v5326
    %8835 = vmatmul.mubr.bf16.gmra.mxu0 %v5325
    %v8836 = vpop.f32.mrf.mxu0
    %v8837 = vadd.f32 %v8796, %v8836
    %v8838 = vpop.f32.mrf.mxu0
    %v8839 = vadd.f32 %v8798, %v8838
    %v8840 = vpop.f32.mrf.mxu0
    %v8841 = vpop.f32.mrf.mxu0
    %8842 = vdwg.mxu0
    %8843 = vmatprep.subr.bf16.mxu0 %v7771
    %8844 = vmatpush1.bf16.msra.mxu0 %v7770
    %8845 = vmatprep.subr.bf16.mxu0 %v7769
    %8846 = vmatpush1.bf16.msra.mxu0 %v7768
    %8847 = vmatprep.subr.bf16.mxu0 %v7767
    %8848 = vmatpush1.bf16.msra.mxu0 %v7766
    %8849 = vmatprep.subr.bf16.mxu0 %v7765
    %8850 = vmatpush1.bf16.msra.mxu0 %v7764
    %8851 = vmatprep.subr.bf16.mxu0 %v7763
    %8852 = vmatpush1.bf16.msra.mxu0 %v7762
    %8853 = vmatprep.subr.bf16.mxu0 %v7761
    %8854 = vmatpush1.bf16.msra.mxu0 %v7760
    %8855 = vmatprep.subr.bf16.mxu0 %v7759
    %8856 = vmatpush1.bf16.msra.mxu0 %v7758
    %8857 = vmatprep.subr.bf16.mxu0 %v7757
    %8858 = vmatpush1.bf16.msra.mxu0 %v7756
    %8859 = vmatprep.subr.bf16.mxu0 %v7787
    %8860 = vmatpush2.bf16.msra.mxu0 %v7786
    %8861 = vmatprep.subr.bf16.mxu0 %v7785
    %8862 = vmatpush2.bf16.msra.mxu0 %v7784
    %8863 = vmatprep.subr.bf16.mxu0 %v7783
    %8864 = vmatpush2.bf16.msra.mxu0 %v7782
    %8865 = vmatprep.subr.bf16.mxu0 %v7781
    %8866 = vmatpush2.bf16.msra.mxu0 %v7780
    %8867 = vmatprep.subr.bf16.mxu0 %v7779
    %8868 = vmatpush2.bf16.msra.mxu0 %v7778
    %8869 = vmatprep.subr.bf16.mxu0 %v7777
    %8870 = vmatpush2.bf16.msra.mxu0 %v7776
    %8871 = vmatprep.subr.bf16.mxu0 %v7775
    %8872 = vmatpush2.bf16.msra.mxu0 %v7774
    %8873 = vmatprep.subr.bf16.mxu0 %v7773
    %8874 = vmatpush2.bf16.msra.mxu0 %v7772
    %8875 = vmatprep.mubr.bf16.mxu0 %v5328
    %8876 = vmatmul.mubr.bf16.gmra.mxu0 %v5327
    %v8877 = vpop.f32.mrf.mxu0
    %v8878 = vadd.f32 %v8837, %v8877
    %v8879 = vpop.f32.mrf.mxu0
    %v8880 = vadd.f32 %v8839, %v8879
    %v8881 = vpop.f32.mrf.mxu0
    %v8882 = vpop.f32.mrf.mxu0
    %8883 = vdwg.mxu0
    %8884 = vmatprep.subr.bf16.mxu0 %v7803
    %8885 = vmatpush1.bf16.msra.mxu0 %v7802
    %8886 = vmatprep.subr.bf16.mxu0 %v7801
    %8887 = vmatpush1.bf16.msra.mxu0 %v7800
    %8888 = vmatprep.subr.bf16.mxu0 %v7799
    %8889 = vmatpush1.bf16.msra.mxu0 %v7798
    %8890 = vmatprep.subr.bf16.mxu0 %v7797
    %8891 = vmatpush1.bf16.msra.mxu0 %v7796
    %8892 = vmatprep.subr.bf16.mxu0 %v7795
    %8893 = vmatpush1.bf16.msra.mxu0 %v7794
    %8894 = vmatprep.subr.bf16.mxu0 %v7793
    %8895 = vmatpush1.bf16.msra.mxu0 %v7792
    %8896 = vmatprep.subr.bf16.mxu0 %v7791
    %8897 = vmatpush1.bf16.msra.mxu0 %v7790
    %8898 = vmatprep.subr.bf16.mxu0 %v7789
    %8899 = vmatpush1.bf16.msra.mxu0 %v7788
    %8900 = vmatprep.subr.bf16.mxu0 %v7819
    %8901 = vmatpush2.bf16.msra.mxu0 %v7818
    %8902 = vmatprep.subr.bf16.mxu0 %v7817
    %8903 = vmatpush2.bf16.msra.mxu0 %v7816
    %8904 = vmatprep.subr.bf16.mxu0 %v7815
    %8905 = vmatpush2.bf16.msra.mxu0 %v7814
    %8906 = vmatprep.subr.bf16.mxu0 %v7813
    %8907 = vmatpush2.bf16.msra.mxu0 %v7812
    %8908 = vmatprep.subr.bf16.mxu0 %v7811
    %8909 = vmatpush2.bf16.msra.mxu0 %v7810
    %8910 = vmatprep.subr.bf16.mxu0 %v7809
    %8911 = vmatpush2.bf16.msra.mxu0 %v7808
    %8912 = vmatprep.subr.bf16.mxu0 %v7807
    %8913 = vmatpush2.bf16.msra.mxu0 %v7806
    %8914 = vmatprep.subr.bf16.mxu0 %v7805
    %8915 = vmatpush2.bf16.msra.mxu0 %v7804
    %8916 = vmatprep.mubr.bf16.mxu0 %v5330
    %8917 = vmatmul.mubr.bf16.gmra.mxu0 %v5329
    %v8918 = vpop.f32.mrf.mxu0
    %v8919 = vadd.f32 %v8878, %v8918
    %v8920 = vpop.f32.mrf.mxu0
    %v8921 = vadd.f32 %v8880, %v8920
    %v8922 = vpop.f32.mrf.mxu0
    %v8923 = vpop.f32.mrf.mxu0
    %8924 = vdwg.mxu0
    %8925 = vmatprep.subr.bf16.mxu0 %v7835
    %8926 = vmatpush1.bf16.msra.mxu0 %v7834
    %8927 = vmatprep.subr.bf16.mxu0 %v7833
    %8928 = vmatpush1.bf16.msra.mxu0 %v7832
    %8929 = vmatprep.subr.bf16.mxu0 %v7831
    %8930 = vmatpush1.bf16.msra.mxu0 %v7830
    %8931 = vmatprep.subr.bf16.mxu0 %v7829
    %8932 = vmatpush1.bf16.msra.mxu0 %v7828
    %8933 = vmatprep.subr.bf16.mxu0 %v7827
    %8934 = vmatpush1.bf16.msra.mxu0 %v7826
    %8935 = vmatprep.subr.bf16.mxu0 %v7825
    %8936 = vmatpush1.bf16.msra.mxu0 %v7824
    %8937 = vmatprep.subr.bf16.mxu0 %v7823
    %8938 = vmatpush1.bf16.msra.mxu0 %v7822
    %8939 = vmatprep.subr.bf16.mxu0 %v7821
    %8940 = vmatpush1.bf16.msra.mxu0 %v7820
    %8941 = vmatprep.subr.bf16.mxu0 %v7851
    %8942 = vmatpush2.bf16.msra.mxu0 %v7850
    %8943 = vmatprep.subr.bf16.mxu0 %v7849
    %8944 = vmatpush2.bf16.msra.mxu0 %v7848
    %8945 = vmatprep.subr.bf16.mxu0 %v7847
    %8946 = vmatpush2.bf16.msra.mxu0 %v7846
    %8947 = vmatprep.subr.bf16.mxu0 %v7845
    %8948 = vmatpush2.bf16.msra.mxu0 %v7844
    %8949 = vmatprep.subr.bf16.mxu0 %v7843
    %8950 = vmatpush2.bf16.msra.mxu0 %v7842
    %8951 = vmatprep.subr.bf16.mxu0 %v7841
    %8952 = vmatpush2.bf16.msra.mxu0 %v7840
    %8953 = vmatprep.subr.bf16.mxu0 %v7839
    %8954 = vmatpush2.bf16.msra.mxu0 %v7838
    %8955 = vmatprep.subr.bf16.mxu0 %v7837
    %8956 = vmatpush2.bf16.msra.mxu0 %v7836
    %8957 = vmatprep.mubr.bf16.mxu0 %v5332
    %8958 = vmatmul.mubr.bf16.gmra.mxu0 %v5331
    %v8959 = vpop.f32.mrf.mxu0
    %v8960 = vadd.f32 %v8919, %v8959
    %v8961 = vpop.f32.mrf.mxu0
    %v8962 = vadd.f32 %v8921, %v8961
    %v8963 = vpop.f32.mrf.mxu0
    %v8964 = vpop.f32.mrf.mxu0
    %8965 = vdwg.mxu0
    %8966 = vmatprep.subr.bf16.mxu0 %v7867
    %8967 = vmatpush1.bf16.msra.mxu0 %v7866
    %8968 = vmatprep.subr.bf16.mxu0 %v7865
    %8969 = vmatpush1.bf16.msra.mxu0 %v7864
    %8970 = vmatprep.subr.bf16.mxu0 %v7863
    %8971 = vmatpush1.bf16.msra.mxu0 %v7862
    %8972 = vmatprep.subr.bf16.mxu0 %v7861
    %8973 = vmatpush1.bf16.msra.mxu0 %v7860
    %8974 = vmatprep.subr.bf16.mxu0 %v7859
    %8975 = vmatpush1.bf16.msra.mxu0 %v7858
    %8976 = vmatprep.subr.bf16.mxu0 %v7857
    %8977 = vmatpush1.bf16.msra.mxu0 %v7856
    %8978 = vmatprep.subr.bf16.mxu0 %v7855
    %8979 = vmatpush1.bf16.msra.mxu0 %v7854
    %8980 = vmatprep.subr.bf16.mxu0 %v7853
    %8981 = vmatpush1.bf16.msra.mxu0 %v7852
    %8982 = vmatprep.subr.bf16.mxu0 %v7883
    %8983 = vmatpush2.bf16.msra.mxu0 %v7882
    %8984 = vmatprep.subr.bf16.mxu0 %v7881
    %8985 = vmatpush2.bf16.msra.mxu0 %v7880
    %8986 = vmatprep.subr.bf16.mxu0 %v7879
    %8987 = vmatpush2.bf16.msra.mxu0 %v7878
    %8988 = vmatprep.subr.bf16.mxu0 %v7877
    %8989 = vmatpush2.bf16.msra.mxu0 %v7876
    %8990 = vmatprep.subr.bf16.mxu0 %v7875
    %8991 = vmatpush2.bf16.msra.mxu0 %v7874
    %8992 = vmatprep.subr.bf16.mxu0 %v7873
    %8993 = vmatpush2.bf16.msra.mxu0 %v7872
    %8994 = vmatprep.subr.bf16.mxu0 %v7871
    %8995 = vmatpush2.bf16.msra.mxu0 %v7870
    %8996 = vmatprep.subr.bf16.mxu0 %v7869
    %8997 = vmatpush2.bf16.msra.mxu0 %v7868
    %8998 = vmatprep.mubr.bf16.mxu0 %v5334
    %8999 = vmatmul.mubr.bf16.gmra.mxu0 %v5333
    %v9000 = vpop.f32.mrf.mxu0
    %v9001 = vadd.f32 %v8960, %v9000
    %v9002 = vpop.f32.mrf.mxu0
    %v9003 = vadd.f32 %v8962, %v9002
    %v9004 = vpop.f32.mrf.mxu0
    %v9005 = vpop.f32.mrf.mxu0
    %9006 = vdwg.mxu0
    %9007 = vmatprep.subr.bf16.mxu0 %v7899
    %9008 = vmatpush1.bf16.msra.mxu0 %v7898
    %9009 = vmatprep.subr.bf16.mxu0 %v7897
    %9010 = vmatpush1.bf16.msra.mxu0 %v7896
    %9011 = vmatprep.subr.bf16.mxu0 %v7895
    %9012 = vmatpush1.bf16.msra.mxu0 %v7894
    %9013 = vmatprep.subr.bf16.mxu0 %v7893
    %9014 = vmatpush1.bf16.msra.mxu0 %v7892
    %9015 = vmatprep.subr.bf16.mxu0 %v7891
    %9016 = vmatpush1.bf16.msra.mxu0 %v7890
    %9017 = vmatprep.subr.bf16.mxu0 %v7889
    %9018 = vmatpush1.bf16.msra.mxu0 %v7888
    %9019 = vmatprep.subr.bf16.mxu0 %v7887
    %9020 = vmatpush1.bf16.msra.mxu0 %v7886
    %9021 = vmatprep.subr.bf16.mxu0 %v7885
    %9022 = vmatpush1.bf16.msra.mxu0 %v7884
    %9023 = vmatprep.subr.bf16.mxu0 %v7915
    %9024 = vmatpush2.bf16.msra.mxu0 %v7914
    %9025 = vmatprep.subr.bf16.mxu0 %v7913
    %9026 = vmatpush2.bf16.msra.mxu0 %v7912
    %9027 = vmatprep.subr.bf16.mxu0 %v7911
    %9028 = vmatpush2.bf16.msra.mxu0 %v7910
    %9029 = vmatprep.subr.bf16.mxu0 %v7909
    %9030 = vmatpush2.bf16.msra.mxu0 %v7908
    %9031 = vmatprep.subr.bf16.mxu0 %v7907
    %9032 = vmatpush2.bf16.msra.mxu0 %v7906
    %9033 = vmatprep.subr.bf16.mxu0 %v7905
    %9034 = vmatpush2.bf16.msra.mxu0 %v7904
    %9035 = vmatprep.subr.bf16.mxu0 %v7903
    %9036 = vmatpush2.bf16.msra.mxu0 %v7902
    %9037 = vmatprep.subr.bf16.mxu0 %v7901
    %9038 = vmatpush2.bf16.msra.mxu0 %v7900
    %9039 = vmatprep.mubr.bf16.mxu0 %v5336
    %9040 = vmatmul.mubr.bf16.gmra.mxu0 %v5335
    %v9041 = vpop.f32.mrf.mxu0
    %v9042 = vadd.f32 %v9001, %v9041
    %v9043 = vpop.f32.mrf.mxu0
    %v9044 = vadd.f32 %v9003, %v9043
    %v9045 = vpop.f32.mrf.mxu0
    %v9046 = vpop.f32.mrf.mxu0
    %9047 = vdwg.mxu0
    %9048 = vmatprep.subr.bf16.mxu0 %v7931
    %9049 = vmatpush1.bf16.msra.mxu0 %v7930
    %9050 = vmatprep.subr.bf16.mxu0 %v7929
    %9051 = vmatpush1.bf16.msra.mxu0 %v7928
    %9052 = vmatprep.subr.bf16.mxu0 %v7927
    %9053 = vmatpush1.bf16.msra.mxu0 %v7926
    %9054 = vmatprep.subr.bf16.mxu0 %v7925
    %9055 = vmatpush1.bf16.msra.mxu0 %v7924
    %9056 = vmatprep.subr.bf16.mxu0 %v7923
    %9057 = vmatpush1.bf16.msra.mxu0 %v7922
    %9058 = vmatprep.subr.bf16.mxu0 %v7921
    %9059 = vmatpush1.bf16.msra.mxu0 %v7920
    %9060 = vmatprep.subr.bf16.mxu0 %v7919
    %9061 = vmatpush1.bf16.msra.mxu0 %v7918
    %9062 = vmatprep.subr.bf16.mxu0 %v7917
    %9063 = vmatpush1.bf16.msra.mxu0 %v7916
    %9064 = vmatprep.subr.bf16.mxu0 %v7947
    %9065 = vmatpush2.bf16.msra.mxu0 %v7946
    %9066 = vmatprep.subr.bf16.mxu0 %v7945
    %9067 = vmatpush2.bf16.msra.mxu0 %v7944
    %9068 = vmatprep.subr.bf16.mxu0 %v7943
    %9069 = vmatpush2.bf16.msra.mxu0 %v7942
    %9070 = vmatprep.subr.bf16.mxu0 %v7941
    %9071 = vmatpush2.bf16.msra.mxu0 %v7940
    %9072 = vmatprep.subr.bf16.mxu0 %v7939
    %9073 = vmatpush2.bf16.msra.mxu0 %v7938
    %9074 = vmatprep.subr.bf16.mxu0 %v7937
    %9075 = vmatpush2.bf16.msra.mxu0 %v7936
    %9076 = vmatprep.subr.bf16.mxu0 %v7935
    %9077 = vmatpush2.bf16.msra.mxu0 %v7934
    %9078 = vmatprep.subr.bf16.mxu0 %v7933
    %9079 = vmatpush2.bf16.msra.mxu0 %v7932
    %9080 = vmatprep.mubr.bf16.mxu0 %v5338
    %9081 = vmatmul.mubr.bf16.gmra.mxu0 %v5337
    %v9082 = vpop.f32.mrf.mxu0
    %v9083 = vadd.f32 %v9042, %v9082
    %v9084 = vpop.f32.mrf.mxu0
    %v9085 = vadd.f32 %v9044, %v9084
    %v9086 = vpop.f32.mrf.mxu0
    %v9087 = vpop.f32.mrf.mxu0
    %9088 = vdwg.mxu0
    %9089 = vmatprep.subr.bf16.mxu0 %v7963
    %9090 = vmatpush1.bf16.msra.mxu0 %v7962
    %9091 = vmatprep.subr.bf16.mxu0 %v7961
    %9092 = vmatpush1.bf16.msra.mxu0 %v7960
    %9093 = vmatprep.subr.bf16.mxu0 %v7959
    %9094 = vmatpush1.bf16.msra.mxu0 %v7958
    %9095 = vmatprep.subr.bf16.mxu0 %v7957
    %9096 = vmatpush1.bf16.msra.mxu0 %v7956
    %9097 = vmatprep.subr.bf16.mxu0 %v7955
    %9098 = vmatpush1.bf16.msra.mxu0 %v7954
    %9099 = vmatprep.subr.bf16.mxu0 %v7953
    %9100 = vmatpush1.bf16.msra.mxu0 %v7952
    %9101 = vmatprep.subr.bf16.mxu0 %v7951
    %9102 = vmatpush1.bf16.msra.mxu0 %v7950
    %9103 = vmatprep.subr.bf16.mxu0 %v7949
    %9104 = vmatpush1.bf16.msra.mxu0 %v7948
    %9105 = vmatprep.subr.bf16.mxu0 %v7979
    %9106 = vmatpush2.bf16.msra.mxu0 %v7978
    %9107 = vmatprep.subr.bf16.mxu0 %v7977
    %9108 = vmatpush2.bf16.msra.mxu0 %v7976
    %9109 = vmatprep.subr.bf16.mxu0 %v7975
    %9110 = vmatpush2.bf16.msra.mxu0 %v7974
    %9111 = vmatprep.subr.bf16.mxu0 %v7973
    %9112 = vmatpush2.bf16.msra.mxu0 %v7972
    %9113 = vmatprep.subr.bf16.mxu0 %v7971
    %9114 = vmatpush2.bf16.msra.mxu0 %v7970
    %9115 = vmatprep.subr.bf16.mxu0 %v7969
    %9116 = vmatpush2.bf16.msra.mxu0 %v7968
    %9117 = vmatprep.subr.bf16.mxu0 %v7967
    %9118 = vmatpush2.bf16.msra.mxu0 %v7966
    %9119 = vmatprep.subr.bf16.mxu0 %v7965
    %9120 = vmatpush2.bf16.msra.mxu0 %v7964
    %9121 = vmatprep.mubr.bf16.mxu0 %v5340
    %9122 = vmatmul.mubr.bf16.gmra.mxu0 %v5339
    %v9123 = vpop.f32.mrf.mxu0
    %v9124 = vadd.f32 %v9083, %v9123
    %v9125 = vpop.f32.mrf.mxu0
    %v9126 = vadd.f32 %v9085, %v9125
    %v9127 = vpop.f32.mrf.mxu0
    %v9128 = vpop.f32.mrf.mxu0
    %9129 = vdwg.mxu0
    %9130 = vmatprep.subr.bf16.mxu0 %v7995
    %9131 = vmatpush1.bf16.msra.mxu0 %v7994
    %9132 = vmatprep.subr.bf16.mxu0 %v7993
    %9133 = vmatpush1.bf16.msra.mxu0 %v7992
    %9134 = vmatprep.subr.bf16.mxu0 %v7991
    %9135 = vmatpush1.bf16.msra.mxu0 %v7990
    %9136 = vmatprep.subr.bf16.mxu0 %v7989
    %9137 = vmatpush1.bf16.msra.mxu0 %v7988
    %9138 = vmatprep.subr.bf16.mxu0 %v7987
    %9139 = vmatpush1.bf16.msra.mxu0 %v7986
    %9140 = vmatprep.subr.bf16.mxu0 %v7985
    %9141 = vmatpush1.bf16.msra.mxu0 %v7984
    %9142 = vmatprep.subr.bf16.mxu0 %v7983
    %9143 = vmatpush1.bf16.msra.mxu0 %v7982
    %9144 = vmatprep.subr.bf16.mxu0 %v7981
    %9145 = vmatpush1.bf16.msra.mxu0 %v7980
    %9146 = vmatprep.subr.bf16.mxu0 %v8011
    %9147 = vmatpush2.bf16.msra.mxu0 %v8010
    %9148 = vmatprep.subr.bf16.mxu0 %v8009
    %9149 = vmatpush2.bf16.msra.mxu0 %v8008
    %9150 = vmatprep.subr.bf16.mxu0 %v8007
    %9151 = vmatpush2.bf16.msra.mxu0 %v8006
    %9152 = vmatprep.subr.bf16.mxu0 %v8005
    %9153 = vmatpush2.bf16.msra.mxu0 %v8004
    %9154 = vmatprep.subr.bf16.mxu0 %v8003
    %9155 = vmatpush2.bf16.msra.mxu0 %v8002
    %9156 = vmatprep.subr.bf16.mxu0 %v8001
    %9157 = vmatpush2.bf16.msra.mxu0 %v8000
    %9158 = vmatprep.subr.bf16.mxu0 %v7999
    %9159 = vmatpush2.bf16.msra.mxu0 %v7998
    %9160 = vmatprep.subr.bf16.mxu0 %v7997
    %9161 = vmatpush2.bf16.msra.mxu0 %v7996
    %9162 = vmatprep.mubr.bf16.mxu0 %v5342
    %9163 = vmatmul.mubr.bf16.gmra.mxu0 %v5341
    %v9164 = vpop.f32.mrf.mxu0
    %v9165 = vadd.f32 %v9124, %v9164
    %v9166 = vpop.f32.mrf.mxu0
    %v9167 = vadd.f32 %v9126, %v9166
    %v9168 = vpop.f32.mrf.mxu0
    %v9169 = vpop.f32.mrf.mxu0
    %9170 = vdwg.mxu0
    %9171 = vmatprep.subr.bf16.mxu0 %v8027
    %9172 = vmatpush1.bf16.msra.mxu0 %v8026
    %9173 = vmatprep.subr.bf16.mxu0 %v8025
    %9174 = vmatpush1.bf16.msra.mxu0 %v8024
    %9175 = vmatprep.subr.bf16.mxu0 %v8023
    %9176 = vmatpush1.bf16.msra.mxu0 %v8022
    %9177 = vmatprep.subr.bf16.mxu0 %v8021
    %9178 = vmatpush1.bf16.msra.mxu0 %v8020
    %9179 = vmatprep.subr.bf16.mxu0 %v8019
    %9180 = vmatpush1.bf16.msra.mxu0 %v8018
    %9181 = vmatprep.subr.bf16.mxu0 %v8017
    %9182 = vmatpush1.bf16.msra.mxu0 %v8016
    %9183 = vmatprep.subr.bf16.mxu0 %v8015
    %9184 = vmatpush1.bf16.msra.mxu0 %v8014
    %9185 = vmatprep.subr.bf16.mxu0 %v8013
    %9186 = vmatpush1.bf16.msra.mxu0 %v8012
    %9187 = vmatprep.subr.bf16.mxu0 %v8043
    %9188 = vmatpush2.bf16.msra.mxu0 %v8042
    %9189 = vmatprep.subr.bf16.mxu0 %v8041
    %9190 = vmatpush2.bf16.msra.mxu0 %v8040
    %9191 = vmatprep.subr.bf16.mxu0 %v8039
    %9192 = vmatpush2.bf16.msra.mxu0 %v8038
    %9193 = vmatprep.subr.bf16.mxu0 %v8037
    %9194 = vmatpush2.bf16.msra.mxu0 %v8036
    %9195 = vmatprep.subr.bf16.mxu0 %v8035
    %9196 = vmatpush2.bf16.msra.mxu0 %v8034
    %9197 = vmatprep.subr.bf16.mxu0 %v8033
    %9198 = vmatpush2.bf16.msra.mxu0 %v8032
    %9199 = vmatprep.subr.bf16.mxu0 %v8031
    %9200 = vmatpush2.bf16.msra.mxu0 %v8030
    %9201 = vmatprep.subr.bf16.mxu0 %v8029
    %9202 = vmatpush2.bf16.msra.mxu0 %v8028
    %9203 = vmatprep.mubr.bf16.mxu0 %v5344
    %9204 = vmatmul.mubr.bf16.gmra.mxu0 %v5343
    %v9205 = vpop.f32.mrf.mxu0
    %v9206 = vadd.f32 %v9165, %v9205
    %v9207 = vpop.f32.mrf.mxu0
    %v9208 = vadd.f32 %v9167, %v9207
    %v9209 = vpop.f32.mrf.mxu0
    %v9210 = vpop.f32.mrf.mxu0
    %9211 = vdwg.mxu0
    %v9212 = vld [vmem:[#allocation15] sm:$0x3]
    %v9214 = vlaneseq
    %v9215 = vshrl.u32 %v9214, 7
    %v9216 = vsub.s32 0, %v9215
    %v9217 = vrot.slane %v9212, %v9216
    %v9218 = vlaneseq
    %v9219 = vshrl.u32 %v9218, 7
    %v9220 = vsub.s32 1, %v9219
    %v9221 = vrot.slane %v9212, %v9220
    %v9224 = vadd.f32 %v9206, %v9217
    %v9225 = vadd.f32 %v9208, %v9221
    %v9226 = vmax.f32 %v9224, 0.0
    %v9227 = vmax.f32 %v9225, 0.0
    %v9228 = vld [vmem:[%s9] sm:$0xff]
    %v9229 = vld [vmem:[%s9 + $0x8] sm:$0xff]
    %v9230 = vld [vmem:[%s9 + $0x10] sm:$0xff]
    %v9231 = vld [vmem:[%s9 + $0x18] sm:$0xff]
    %v9232 = vld [vmem:[%s9 + $0x20] sm:$0xff]
    %v9233 = vld [vmem:[%s9 + $0x28] sm:$0xff]
    %v9234 = vld [vmem:[%s9 + $0x30] sm:$0xff]
    %v9235 = vld [vmem:[%s9 + $0x38] sm:$0xff]
    %v9236 = vld [vmem:[%s9 + $0x40] sm:$0xff]
    %v9237 = vld [vmem:[%s9 + $0x48] sm:$0xff]
    %v9238 = vld [vmem:[%s9 + $0x50] sm:$0xff]
    %v9239 = vld [vmem:[%s9 + $0x58] sm:$0xff]
    %v9240 = vld [vmem:[%s9 + $0x60] sm:$0xff]
    %v9241 = vld [vmem:[%s9 + $0x68] sm:$0xff]
    %v9242 = vld [vmem:[%s9 + $0x70] sm:$0xff]
    %v9243 = vld [vmem:[%s9 + $0x78] sm:$0xff]
    %v9244 = vld [vmem:[%s9 + $0x80] sm:$0xff]
    %v9245 = vld [vmem:[%s9 + $0x88] sm:$0xff]
    %v9246 = vld [vmem:[%s9 + $0x90] sm:$0xff]
    %v9247 = vld [vmem:[%s9 + $0x98] sm:$0xff]
    %v9248 = vld [vmem:[%s9 + $0xa0] sm:$0xff]
    %v9249 = vld [vmem:[%s9 + $0xa8] sm:$0xff]
    %v9250 = vld [vmem:[%s9 + $0xb0] sm:$0xff]
    %v9251 = vld [vmem:[%s9 + $0xb8] sm:$0xff]
    %v9252 = vld [vmem:[%s9 + $0xc0] sm:$0xff]
    %v9253 = vld [vmem:[%s9 + $0xc8] sm:$0xff]
    %v9254 = vld [vmem:[%s9 + $0xd0] sm:$0xff]
    %v9255 = vld [vmem:[%s9 + $0xd8] sm:$0xff]
    %v9256 = vld [vmem:[%s9 + $0xe0] sm:$0xff]
    %v9257 = vld [vmem:[%s9 + $0xe8] sm:$0xff]
    %v9258 = vld [vmem:[%s9 + $0xf0] sm:$0xff]
    %v9259 = vld [vmem:[%s9 + $0xf8] sm:$0xff]
    %v9260 = vld [vmem:[#allocation16] sm:$0x1]
    %v9262 = vlaneseq
    %v9263 = vshrl.u32 %v9262, 7
    %v9264 = vsub.s32 0, %v9263
    %v9265 = vrot.slane %v9260, %v9264
    %9267 = vmatprep.subr.mxu0 0.0
    %9268 = vmatpush1.msra.mxu0 %v9243
    %9269 = vmatprep.subr.mxu0 0.0
    %9270 = vmatpush1.msra.mxu0 %v9242
    %9271 = vmatprep.subr.mxu0 0.0
    %9272 = vmatpush1.msra.mxu0 %v9241
    %9273 = vmatprep.subr.mxu0 0.0
    %9274 = vmatpush1.msra.mxu0 %v9240
    %9275 = vmatprep.subr.mxu0 0.0
    %9276 = vmatpush1.msra.mxu0 %v9239
    %9277 = vmatprep.subr.mxu0 0.0
    %9278 = vmatpush1.msra.mxu0 %v9238
    %9279 = vmatprep.subr.mxu0 0.0
    %9280 = vmatpush1.msra.mxu0 %v9237
    %9281 = vmatprep.subr.mxu0 0.0
    %9282 = vmatpush1.msra.mxu0 %v9236
    %9283 = vmatprep.subr.mxu0 0.0
    %9284 = vmatpush1.msra.mxu0 %v9235
    %9285 = vmatprep.subr.mxu0 0.0
    %9286 = vmatpush1.msra.mxu0 %v9234
    %9287 = vmatprep.subr.mxu0 0.0
    %9288 = vmatpush1.msra.mxu0 %v9233
    %9289 = vmatprep.subr.mxu0 0.0
    %9290 = vmatpush1.msra.mxu0 %v9232
    %9291 = vmatprep.subr.mxu0 0.0
    %9292 = vmatpush1.msra.mxu0 %v9231
    %9293 = vmatprep.subr.mxu0 0.0
    %9294 = vmatpush1.msra.mxu0 %v9230
    %9295 = vmatprep.subr.mxu0 0.0
    %9296 = vmatpush1.msra.mxu0 %v9229
    %9297 = vmatprep.subr.mxu0 0.0
    %9298 = vmatpush1.msra.mxu0 %v9228
    %9299 = vmatprep.subr.mxu0 0.0
    %9300 = vmatpush2.msra.mxu0 %v9259
    %9301 = vmatprep.subr.mxu0 0.0
    %9302 = vmatpush2.msra.mxu0 %v9258
    %9303 = vmatprep.subr.mxu0 0.0
    %9304 = vmatpush2.msra.mxu0 %v9257
    %9305 = vmatprep.subr.mxu0 0.0
    %9306 = vmatpush2.msra.mxu0 %v9256
    %9307 = vmatprep.subr.mxu0 0.0
    %9308 = vmatpush2.msra.mxu0 %v9255
    %9309 = vmatprep.subr.mxu0 0.0
    %9310 = vmatpush2.msra.mxu0 %v9254
    %9311 = vmatprep.subr.mxu0 0.0
    %9312 = vmatpush2.msra.mxu0 %v9253
    %9313 = vmatprep.subr.mxu0 0.0
    %9314 = vmatpush2.msra.mxu0 %v9252
    %9315 = vmatprep.subr.mxu0 0.0
    %9316 = vmatpush2.msra.mxu0 %v9251
    %9317 = vmatprep.subr.mxu0 0.0
    %9318 = vmatpush2.msra.mxu0 %v9250
    %9319 = vmatprep.subr.mxu0 0.0
    %9320 = vmatpush2.msra.mxu0 %v9249
    %9321 = vmatprep.subr.mxu0 0.0
    %9322 = vmatpush2.msra.mxu0 %v9248
    %9323 = vmatprep.subr.mxu0 0.0
    %9324 = vmatpush2.msra.mxu0 %v9247
    %9325 = vmatprep.subr.mxu0 0.0
    %9326 = vmatpush2.msra.mxu0 %v9246
    %9327 = vmatprep.subr.mxu0 0.0
    %9328 = vmatpush2.msra.mxu0 %v9245
    %9329 = vmatprep.subr.mxu0 0.0
    %9330 = vmatpush2.msra.mxu0 %v9244
    %9331 = vmatprep.mubr.f32.mxu0 %v9227
    %9332 = vmatmul.mubr.f32.gmra.mxu0 %v9226
    %v9333 = vpop.f32.mrf.mxu0
    %v9334 = vadd.f32 %v9265, %v9333
    %v9335 = vpop.f32.mrf.mxu0
    %9336 = vdwg.mxu0
    %vm9337 = vcmask 25600
    %9338 = vst.msk [vmem:[%s11] sm:$0x3] %vm9337, %v9334
    // Predicated region
    $region78: #{cnn_policy_forward.1} parent=1 // pred_check
      _
    $region79: #{cnn_policy_forward.1} parent=1 // pred_check_branch
      %9340 = sbr.rel (0) target = $region81
    $region80: #{cnn_policy_forward.1} parent=1 // pred_region
      _
    $region81: #{cnn_policy_forward.1} parent=1 // pred_fallthru
      _
    // Predicated region
    $region82: #{cnn_policy_forward.1} parent=1 // pred_check
      _
    $region83: #{cnn_policy_forward.1} parent=1 // pred_check_branch
      %9342 = sbr.rel (0) target = $region85
    $region84: #{cnn_policy_forward.1} parent=1 // pred_region
      _
    $region85: #{cnn_policy_forward.1} parent=1 // pred_fallthru
      _
    %9343 = vsyncpa [#allocation6], 1
    %9344 = vsyncpa [#allocation8], 1
    %9345 = vsyncpa [#allocation11], 1
    %9346 = vsyncpa [#allocation14], 1
    %9347 = vsyncpa [#allocation17], 1

</llo_original>
